<compile_context>
chip_gen: v6e
topology: v6e:2x2x1
jax: 0.10.0
libtpu: 0.0.40
codegen_flags: <defaults>
</compile_context>

<pallas_src>
import jax
import jax.numpy as jnp
from jax.experimental import pallas as pl
from jax.experimental.pallas import tpu as pltpu


# ----------------------------------------------------------------------------
# Conv-as-matmul kernel:  Y^T(O, M) = relu(W(O, C*9) @ patches^T(C*9, M) + b).
# One grid step per conv: the whole working set is a few hundred KiB of VMEM.
# ----------------------------------------------------------------------------
def _conv_mm_kernel(w_ref, x_ref, b_ref, o_ref):
    acc = jnp.dot(w_ref[...], x_ref[...], preferred_element_type=jnp.float32)
    o_ref[...] = jnp.maximum(acc + b_ref[...], 0.0).astype(o_ref.dtype)


def conv_matmul_relu(w_mat, patches_t, b_col):
    """w_mat: (O, C*9), patches_t: (C*9, M), b_col: (O, 1) -> (O, M) f32."""
    O, K = w_mat.shape
    K2, M = patches_t.shape
    assert K == K2
    return pl.pallas_call(
        _conv_mm_kernel,
        out_shape=jax.ShapeDtypeStruct((O, M), jnp.float32),
        grid_spec=pltpu.PrefetchScalarGridSpec(
            num_scalar_prefetch=0,
            grid=(1,),
            in_specs=[
                pl.BlockSpec((O, K), lambda j: (0, 0)),
                pl.BlockSpec((K, M), lambda j: (0, 0)),
                pl.BlockSpec((O, 1), lambda j: (0, 0)),
            ],
            out_specs=pl.BlockSpec((O, M), lambda j: (0, 0)),
        ),
        compiler_params=pltpu.CompilerParams(
            dimension_semantics=("arbitrary",)),
    )(w_mat, patches_t, b_col)


# ----------------------------------------------------------------------------
# Fused fc (4096->2048, ReLU, bf16-streamed weights) + mu head (2048->latent).
# Grid step j: one contiguous bf16 weight slab -> 512-wide slice of h -> its
# partial contribution to mu.  Grid stays fully "parallel" (v7x 2-TC split);
# the (grid_n, N, L) partial sum + bias is a negligible XLA epilogue.
# ----------------------------------------------------------------------------
def _fc_head_kernel(x_ref, w_ref, b_ref, mu_w_ref, o_ref):
    j = pl.program_id(0)
    tn = w_ref.shape[2]
    xb = x_ref[...].astype(jnp.bfloat16)                     # tiny activations
    h = jnp.dot(xb, w_ref[0], preferred_element_type=jnp.float32)   # (M, tn) f32
    h = jnp.maximum(h + b_ref[...], 0.0)
    start = pl.multiple_of(j * tn, tn)
    hw = mu_w_ref[pl.ds(start, tn), :]                       # (tn, L), resident
    part = jnp.dot(h, hw, preferred_element_type=jnp.float32)        # (M, L)
    o_ref[...] = part[None, :, :].astype(o_ref.dtype)


def fc_head(x, fc_w_blk, fc_b, mu_w, mu_b):
    """x: (M, K) f32, fc_w_blk: (grid_n, K, tn) bf16 contiguous slabs,
    fc_b: (1, N) f32, mu_w: (N, L) f32, mu_b: (1, L) f32."""
    M, K = x.shape
    grid_n, K2, tn = fc_w_blk.shape
    N = grid_n * tn
    N2, L = mu_w.shape
    assert K == K2 and N == N2 and fc_b.shape == (1, N)
    parts = pl.pallas_call(
        _fc_head_kernel,
        out_shape=jax.ShapeDtypeStruct((grid_n, M, L), jnp.float32),
        grid_spec=pltpu.PrefetchScalarGridSpec(
            num_scalar_prefetch=0,
            grid=(grid_n,),
            in_specs=[
                pl.BlockSpec((M, K), lambda j: (0, 0)),         # x resident
                pl.BlockSpec((1, K, tn), lambda j: (j, 0, 0)),  # bf16 weight slab
                pl.BlockSpec((1, tn), lambda j: (0, j)),        # bias slice
                pl.BlockSpec((N, L), lambda j: (0, 0)),         # mu_w resident
            ],
            out_specs=pl.BlockSpec((1, M, L), lambda j: (j, 0, 0)),
        ),
        compiler_params=pltpu.CompilerParams(
            dimension_semantics=("parallel",),
            vmem_limit_bytes=32 * 1024 * 1024),
        cost_estimate=pl.CostEstimate(
            flops=2 * M * K * N + 2 * M * N * L,
            transcendentals=0,
            bytes_accessed=2 * K * N + 4 * (M * K + N + N * L + grid_n * M * L)),
    )(x, fc_w_blk, fc_b, mu_w)
    return jnp.sum(parts, axis=0) + mu_b                     # (M, L)


# ----------------------------------------------------------------------------
# XLA glue: transposed im2col for 3x3 / stride 2 / pad 1 conv, CNHW activations.
# Row order of patches^T is (C, kh, kw) = column order of w.reshape(O, C*3*3).
# ----------------------------------------------------------------------------
def im2col_t(x_cnhw, k=3, stride=2, pad=1):
    C, N, H, W = x_cnhw.shape
    xp = jnp.pad(x_cnhw, ((0, 0), (0, 0), (pad, pad), (pad, pad)))
    Ho = (H + 2 * pad - k) // stride + 1
    Wo = (W + 2 * pad - k) // stride + 1
    cols = []
    for u in range(k):
        for v in range(k):
            cols.append(xp[:, :, u:u + stride * Ho:stride, v:v + stride * Wo:stride])
    patches = jnp.stack(cols, axis=1)             # (C, 9, N, Ho, Wo)
    return patches.reshape(C * k * k, N * Ho * Wo), Ho, Wo


def conv2d_s2_relu(x_cnhw, w_mat, b_col):
    """PyTorch Conv2d(C->O, 3, stride=2, padding=1) + ReLU; CNHW in / CNHW out."""
    C, N, H, W = x_cnhw.shape
    O = w_mat.shape[0]
    patches_t, Ho, Wo = im2col_t(x_cnhw)
    y_t = conv_matmul_relu(w_mat, patches_t, b_col)          # (O, N*Ho*Wo)
    return y_t.reshape(O, N, Ho, Wo)


# ----------------------------------------------------------------------------
# Deterministic params.  Kernel-ready layouts are computed ONCE here.
# ----------------------------------------------------------------------------
def init_params(key, latent_dim=2, tn=512):
    keys = jax.random.split(key, 8)

    def dense_init(k, out_f, in_f):          # torch Linear layout (out, in)
        return jax.random.normal(k, (out_f, in_f), jnp.float32) / jnp.sqrt(
            jnp.float32(in_f))

    def conv_init(k, out_c, in_c):           # torch Conv2d layout (O, C, 3, 3)
        return jax.random.normal(k, (out_c, in_c, 3, 3), jnp.float32) / jnp.sqrt(
            jnp.float32(in_c * 9))

    p = {}
    for i, (name, cin, cout) in enumerate(
            [("c1", 1, 8), ("c2", 8, 16), ("c3", 16, 32), ("c4", 32, 64)]):
        w = conv_init(keys[i], cout, cin)
        p[name + "_wm"] = w.reshape(cout, cin * 9)           # (O, C*9)
        p[name + "_b"] = jnp.zeros((cout, 1), jnp.float32)

    K, N = 8 * 8 * 64, 2 ** 11
    grid_n = N // tn                                         # 4 (even: v7x 2-TC)
    fc_w = dense_init(keys[4], N, K)                         # torch (out, in)
    # Kernel-ready layout, computed once: contiguous (K, tn) bf16 slabs.
    p["fc_w_blk"] = (fc_w.T.reshape(K, grid_n, tn)
                     .transpose(1, 0, 2)
                     .astype(jnp.bfloat16))                  # (grid_n, K, tn)
    p["fc_b"] = jnp.zeros((1, N), jnp.float32)
    p["mu_w"] = dense_init(keys[5], latent_dim, N).T         # (N, latent)
    p["mu_b"] = jnp.zeros((1, latent_dim), jnp.float32)
    # l_net / d_net exist in the torch __init__ but the forward never uses them.
    p["l_w"] = dense_init(keys[6], latent_dim, N).T
    p["l_b"] = jnp.zeros((1, latent_dim), jnp.float32)
    p["d_w"] = dense_init(keys[7], latent_dim, N).T
    p["d_b"] = jnp.zeros((1, latent_dim), jnp.float32)
    return p


# ----------------------------------------------------------------------------
# Forward (mirrors the PyTorch forward; mu_net evaluated once, reused for l/d).
# ----------------------------------------------------------------------------
def encoder_forward(params, data):
    # data: (N, 1, H, W) NCHW, as PyTorch.  Convert to CNHW once (tiny).
    x = jnp.transpose(data, (1, 0, 2, 3))                    # (1,  N, 128, 128)
    x = conv2d_s2_relu(x, params["c1_wm"], params["c1_b"])   # (8,  N, 64, 64)
    x = conv2d_s2_relu(x, params["c2_wm"], params["c2_b"])   # (16, N, 32, 32)
    x = conv2d_s2_relu(x, params["c3_wm"], params["c3_b"])   # (32, N, 16, 16)
    x = conv2d_s2_relu(x, params["c4_wm"], params["c4_b"])   # (64, N,  8,  8)

    C, N, H, W = x.shape
    # torch Flatten order (N, C*H*W); this transpose is a 32 KiB op.
    flat = jnp.transpose(x, (1, 0, 2, 3)).reshape(N, C * H * W)

    mu = fc_head(flat, params["fc_w_blk"], params["fc_b"],
                 params["mu_w"], params["mu_b"])             # (N, latent)
    l = mu[:, :, None]          # forward reuses mu_net; identical values
    d = jnp.exp(mu)             # ditto: exp of the same mu_net output
    return mu, l, d


# ----------------------------------------------------------------------------
# Pure-XLA reference (same pre-laid-out / bf16-rounded params) for sanity check.
# ----------------------------------------------------------------------------
def encoder_reference(params, data):
    x = data
    for name in ["c1", "c2", "c3", "c4"]:
        wm = params[name + "_wm"]
        O, CK = wm.shape
        w4 = wm.reshape(O, CK // 9, 3, 3)
        b = params[name + "_b"].reshape(O)
        x = jax.lax.conv_general_dilated(
            x, w4, window_strides=(2, 2), padding=((1, 1), (1, 1)),
            dimension_numbers=("NCHW", "OIHW", "NCHW"))
        x = jnp.maximum(x + b[None, :, None, None], 0.0)
    flat = x.reshape(x.shape[0], -1)
    gn, K, tn = params["fc_w_blk"].shape
    fc_w = (params["fc_w_blk"].astype(jnp.float32)
            .transpose(1, 0, 2).reshape(K, gn * tn))
    h = jnp.maximum(flat @ fc_w + params["fc_b"], 0.0)
    mu = h @ params["mu_w"] + params["mu_b"]
    return mu, mu[:, :, None], jnp.exp(mu)


if __name__ == "__main__":
    key = jax.random.PRNGKey(0)
    pkey, dkey = jax.random.split(key)

    latent_dim = 2
    params = init_params(pkey, latent_dim=latent_dim)
    # Input spatial size is dictated by Linear(8*8*64, 2048): 128 / 2^4 = 8.
    data = jax.random.normal(dkey, (2, 1, 128, 128), dtype=jnp.float32)

    mu, l, d = jax.jit(encoder_forward)(params, data)
    jax.block_until_ready((mu, l, d))

    assert mu.shape == (2, latent_dim)
    assert l.shape == (2, latent_dim, 1)
    assert d.shape == (2, latent_dim)
    assert bool(jnp.all(jnp.isfinite(mu))) and bool(jnp.all(d > 0))

    # Loose-tolerance sanity check against a plain-XLA reference using the same
    # bf16-rounded fc weights (catches layout / ordering bugs; tolerance covers
    # bf16 activation rounding + MXU accumulation order).
    rmu, rl, rd = jax.jit(encoder_reference)(params, data)
    jax.block_until_ready((rmu, rl, rd))
    assert bool(jnp.allclose(mu, rmu, rtol=5e-2, atol=5e-2))
    assert bool(jnp.allclose(d, rd, rtol=5e-2, atol=5e-2))

    print("KERNEL_OK")
</pallas_src>

<mosaic_0001>
module attributes {stable_mosaic.version = 11 : i64} {
  func.func @_conv_mm_kernel(%arg0: i32, %arg1: memref<8x9xf32, #tpu.memory_space<vmem>>, %arg2: memref<9x8192xf32, #tpu.memory_space<vmem>>, %arg3: memref<8x1xf32, #tpu.memory_space<vmem>>, %arg4: memref<8x8192xf32, #tpu.memory_space<vmem>>) attributes {dimension_semantics = [#tpu.dimension_semantics<arbitrary>], iteration_bounds = array<i64: 1>, scalar_prefetch = 0 : i64, scratch_operands = 0 : i64, tpu.core_type = #tpu.core_type<tc>, window_params = [{pipeline_mode = #tpu.pipeline_mode<synchronous>, transform_indices = @transform_0, window_bounds = array<i64: 8, 9>}, {pipeline_mode = #tpu.pipeline_mode<synchronous>, transform_indices = @transform_1, window_bounds = array<i64: 9, 8192>}, {pipeline_mode = #tpu.pipeline_mode<synchronous>, transform_indices = @transform_2, window_bounds = array<i64: 8, 1>}, {pipeline_mode = #tpu.pipeline_mode<synchronous>, transform_indices = @transform_3, window_bounds = array<i64: 8, 8192>}]} {
    %c0 = arith.constant 0 : index
    %c0_0 = arith.constant 0 : index
    %0 = vector.load %arg1[%c0, %c0_0] : memref<8x9xf32, #tpu.memory_space<vmem>>, vector<8x9xf32>
    %c0_1 = arith.constant 0 : index
    %c0_2 = arith.constant 0 : index
    %1 = vector.load %arg2[%c0_1, %c0_2] : memref<9x8192xf32, #tpu.memory_space<vmem>>, vector<9x8192xf32>
    %cst = arith.constant dense<0.000000e+00> : vector<8x8192xf32>
    %2 = tpu.matmul %0, %1, %cst {dimension_numbers = #tpu.dot_dimension_numbers<[1], [0], [0], [1], [0, 0, 1, 1], [], []>} : vector<8x9xf32>, vector<9x8192xf32>, vector<8x8192xf32> -> vector<8x8192xf32>
    %c0_3 = arith.constant 0 : index
    %c0_4 = arith.constant 0 : index
    %3 = vector.load %arg3[%c0_3, %c0_4] : memref<8x1xf32, #tpu.memory_space<vmem>>, vector<8x1xf32>
    %4 = vector.broadcast %3 : vector<8x1xf32> to vector<8x8192xf32>
    %5 = arith.addf %2, %4 : vector<8x8192xf32>
    %cst_5 = arith.constant 0.000000e+00 : f32
    %6 = vector.broadcast %cst_5 : f32 to vector<8x8192xf32>
    %7 = arith.maximumf %5, %6 : vector<8x8192xf32>
    %c0_6 = arith.constant 0 : index
    %c0_7 = arith.constant 0 : index
    %8 = vector.load %arg4[%c0_6, %c0_7] : memref<8x8192xf32, #tpu.memory_space<vmem>>, vector<8x8192xf32>
    tpu.vector_store %arg4[%c0_6, %c0_7], %7 {strides = array<i32>} : memref<8x8192xf32, #tpu.memory_space<vmem>>, vector<8x8192xf32>,
    return
  }
  func.func @transform_0(%arg0: i32) -> (i32, i32) {
    %c0_i32 = arith.constant 0 : i32
    %c0_i32_0 = arith.constant 0 : i32
    %c0_i32_1 = arith.constant 0 : i32
    return %c0_i32, %c0_i32_0 : i32, i32
  }
  func.func @transform_1(%arg0: i32) -> (i32, i32) {
    %c0_i32 = arith.constant 0 : i32
    %c0_i32_0 = arith.constant 0 : i32
    %c0_i32_1 = arith.constant 0 : i32
    return %c0_i32, %c0_i32_0 : i32, i32
  }
  func.func @transform_2(%arg0: i32) -> (i32, i32) {
    %c0_i32 = arith.constant 0 : i32
    %c0_i32_0 = arith.constant 0 : i32
    %c0_i32_1 = arith.constant 0 : i32
    return %c0_i32, %c0_i32_0 : i32, i32
  }
  func.func @transform_3(%arg0: i32) -> (i32, i32) {
    %c0_i32 = arith.constant 0 : i32
    %c0_i32_0 = arith.constant 0 : i32
    %c0_i32_1 = arith.constant 0 : i32
    return %c0_i32, %c0_i32_0 : i32, i32
  }
}

module attributes {stable_mosaic.version = 11 : i64} {
  func.func @_conv_mm_kernel(%arg0: i32, %arg1: memref<16x72xf32, #tpu.memory_space<vmem>>, %arg2: memref<72x2048xf32, #tpu.memory_space<vmem>>, %arg3: memref<16x1xf32, #tpu.memory_space<vmem>>, %arg4: memref<16x2048xf32, #tpu.memory_space<vmem>>) attributes {dimension_semantics = [#tpu.dimension_semantics<arbitrary>], iteration_bounds = array<i64: 1>, scalar_prefetch = 0 : i64, scratch_operands = 0 : i64, tpu.core_type = #tpu.core_type<tc>, window_params = [{pipeline_mode = #tpu.pipeline_mode<synchronous>, transform_indices = @transform_0, window_bounds = array<i64: 16, 72>}, {pipeline_mode = #tpu.pipeline_mode<synchronous>, transform_indices = @transform_1, window_bounds = array<i64: 72, 2048>}, {pipeline_mode = #tpu.pipeline_mode<synchronous>, transform_indices = @transform_2, window_bounds = array<i64: 16, 1>}, {pipeline_mode = #tpu.pipeline_mode<synchronous>, transform_indices = @transform_3, window_bounds = array<i64: 16, 2048>}]} {
    %c0 = arith.constant 0 : index
    %c0_0 = arith.constant 0 : index
    %0 = vector.load %arg1[%c0, %c0_0] : memref<16x72xf32, #tpu.memory_space<vmem>>, vector<16x72xf32>
    %c0_1 = arith.constant 0 : index
    %c0_2 = arith.constant 0 : index
    %1 = vector.load %arg2[%c0_1, %c0_2] : memref<72x2048xf32, #tpu.memory_space<vmem>>, vector<72x2048xf32>
    %cst = arith.constant dense<0.000000e+00> : vector<16x2048xf32>
    %2 = tpu.matmul %0, %1, %cst {dimension_numbers = #tpu.dot_dimension_numbers<[1], [0], [0], [1], [0, 0, 1, 1], [], []>} : vector<16x72xf32>, vector<72x2048xf32>, vector<16x2048xf32> -> vector<16x2048xf32>
    %c0_3 = arith.constant 0 : index
    %c0_4 = arith.constant 0 : index
    %3 = vector.load %arg3[%c0_3, %c0_4] : memref<16x1xf32, #tpu.memory_space<vmem>>, vector<16x1xf32>
    %4 = vector.broadcast %3 : vector<16x1xf32> to vector<16x2048xf32>
    %5 = arith.addf %2, %4 : vector<16x2048xf32>
    %cst_5 = arith.constant 0.000000e+00 : f32
    %6 = vector.broadcast %cst_5 : f32 to vector<16x2048xf32>
    %7 = arith.maximumf %5, %6 : vector<16x2048xf32>
    %c0_6 = arith.constant 0 : index
    %c0_7 = arith.constant 0 : index
    %8 = vector.load %arg4[%c0_6, %c0_7] : memref<16x2048xf32, #tpu.memory_space<vmem>>, vector<16x2048xf32>
    tpu.vector_store %arg4[%c0_6, %c0_7], %7 {strides = array<i32>} : memref<16x2048xf32, #tpu.memory_space<vmem>>, vector<16x2048xf32>,
    return
  }
  func.func @transform_0(%arg0: i32) -> (i32, i32) {
    %c0_i32 = arith.constant 0 : i32
    %c0_i32_0 = arith.constant 0 : i32
    %c0_i32_1 = arith.constant 0 : i32
    return %c0_i32, %c0_i32_0 : i32, i32
  }
  func.func @transform_1(%arg0: i32) -> (i32, i32) {
    %c0_i32 = arith.constant 0 : i32
    %c0_i32_0 = arith.constant 0 : i32
    %c0_i32_1 = arith.constant 0 : i32
    return %c0_i32, %c0_i32_0 : i32, i32
  }
  func.func @transform_2(%arg0: i32) -> (i32, i32) {
    %c0_i32 = arith.constant 0 : i32
    %c0_i32_0 = arith.constant 0 : i32
    %c0_i32_1 = arith.constant 0 : i32
    return %c0_i32, %c0_i32_0 : i32, i32
  }
  func.func @transform_3(%arg0: i32) -> (i32, i32) {
    %c0_i32 = arith.constant 0 : i32
    %c0_i32_0 = arith.constant 0 : i32
    %c0_i32_1 = arith.constant 0 : i32
    return %c0_i32, %c0_i32_0 : i32, i32
  }
}

module attributes {stable_mosaic.version = 11 : i64} {
  func.func @_conv_mm_kernel(%arg0: i32, %arg1: memref<32x144xf32, #tpu.memory_space<vmem>>, %arg2: memref<144x512xf32, #tpu.memory_space<vmem>>, %arg3: memref<32x1xf32, #tpu.memory_space<vmem>>, %arg4: memref<32x512xf32, #tpu.memory_space<vmem>>) attributes {dimension_semantics = [#tpu.dimension_semantics<arbitrary>], iteration_bounds = array<i64: 1>, scalar_prefetch = 0 : i64, scratch_operands = 0 : i64, tpu.core_type = #tpu.core_type<tc>, window_params = [{pipeline_mode = #tpu.pipeline_mode<synchronous>, transform_indices = @transform_0, window_bounds = array<i64: 32, 144>}, {pipeline_mode = #tpu.pipeline_mode<synchronous>, transform_indices = @transform_1, window_bounds = array<i64: 144, 512>}, {pipeline_mode = #tpu.pipeline_mode<synchronous>, transform_indices = @transform_2, window_bounds = array<i64: 32, 1>}, {pipeline_mode = #tpu.pipeline_mode<synchronous>, transform_indices = @transform_3, window_bounds = array<i64: 32, 512>}]} {
    %c0 = arith.constant 0 : index
    %c0_0 = arith.constant 0 : index
    %0 = vector.load %arg1[%c0, %c0_0] : memref<32x144xf32, #tpu.memory_space<vmem>>, vector<32x144xf32>
    %c0_1 = arith.constant 0 : index
    %c0_2 = arith.constant 0 : index
    %1 = vector.load %arg2[%c0_1, %c0_2] : memref<144x512xf32, #tpu.memory_space<vmem>>, vector<144x512xf32>
    %cst = arith.constant dense<0.000000e+00> : vector<32x512xf32>
    %2 = tpu.matmul %0, %1, %cst {dimension_numbers = #tpu.dot_dimension_numbers<[1], [0], [0], [1], [0, 0, 1, 1], [], []>} : vector<32x144xf32>, vector<144x512xf32>, vector<32x512xf32> -> vector<32x512xf32>
    %c0_3 = arith.constant 0 : index
    %c0_4 = arith.constant 0 : index
    %3 = vector.load %arg3[%c0_3, %c0_4] : memref<32x1xf32, #tpu.memory_space<vmem>>, vector<32x1xf32>
    %4 = vector.broadcast %3 : vector<32x1xf32> to vector<32x512xf32>
    %5 = arith.addf %2, %4 : vector<32x512xf32>
    %cst_5 = arith.constant 0.000000e+00 : f32
    %6 = vector.broadcast %cst_5 : f32 to vector<32x512xf32>
    %7 = arith.maximumf %5, %6 : vector<32x512xf32>
    %c0_6 = arith.constant 0 : index
    %c0_7 = arith.constant 0 : index
    %8 = vector.load %arg4[%c0_6, %c0_7] : memref<32x512xf32, #tpu.memory_space<vmem>>, vector<32x512xf32>
    tpu.vector_store %arg4[%c0_6, %c0_7], %7 {strides = array<i32>} : memref<32x512xf32, #tpu.memory_space<vmem>>, vector<32x512xf32>,
    return
  }
  func.func @transform_0(%arg0: i32) -> (i32, i32) {
    %c0_i32 = arith.constant 0 : i32
    %c0_i32_0 = arith.constant 0 : i32
    %c0_i32_1 = arith.constant 0 : i32
    return %c0_i32, %c0_i32_0 : i32, i32
  }
  func.func @transform_1(%arg0: i32) -> (i32, i32) {
    %c0_i32 = arith.constant 0 : i32
    %c0_i32_0 = arith.constant 0 : i32
    %c0_i32_1 = arith.constant 0 : i32
    return %c0_i32, %c0_i32_0 : i32, i32
  }
  func.func @transform_2(%arg0: i32) -> (i32, i32) {
    %c0_i32 = arith.constant 0 : i32
    %c0_i32_0 = arith.constant 0 : i32
    %c0_i32_1 = arith.constant 0 : i32
    return %c0_i32, %c0_i32_0 : i32, i32
  }
  func.func @transform_3(%arg0: i32) -> (i32, i32) {
    %c0_i32 = arith.constant 0 : i32
    %c0_i32_0 = arith.constant 0 : i32
    %c0_i32_1 = arith.constant 0 : i32
    return %c0_i32, %c0_i32_0 : i32, i32
  }
}

module attributes {stable_mosaic.version = 11 : i64} {
  func.func @_conv_mm_kernel(%arg0: i32, %arg1: memref<64x288xf32, #tpu.memory_space<vmem>>, %arg2: memref<288x128xf32, #tpu.memory_space<vmem>>, %arg3: memref<64x1xf32, #tpu.memory_space<vmem>>, %arg4: memref<64x128xf32, #tpu.memory_space<vmem>>) attributes {dimension_semantics = [#tpu.dimension_semantics<arbitrary>], iteration_bounds = array<i64: 1>, scalar_prefetch = 0 : i64, scratch_operands = 0 : i64, tpu.core_type = #tpu.core_type<tc>, window_params = [{pipeline_mode = #tpu.pipeline_mode<synchronous>, transform_indices = @transform_0, window_bounds = array<i64: 64, 288>}, {pipeline_mode = #tpu.pipeline_mode<synchronous>, transform_indices = @transform_1, window_bounds = array<i64: 288, 128>}, {pipeline_mode = #tpu.pipeline_mode<synchronous>, transform_indices = @transform_2, window_bounds = array<i64: 64, 1>}, {pipeline_mode = #tpu.pipeline_mode<synchronous>, transform_indices = @transform_3, window_bounds = array<i64: 64, 128>}]} {
    %c0 = arith.constant 0 : index
    %c0_0 = arith.constant 0 : index
    %0 = vector.load %arg1[%c0, %c0_0] : memref<64x288xf32, #tpu.memory_space<vmem>>, vector<64x288xf32>
    %c0_1 = arith.constant 0 : index
    %c0_2 = arith.constant 0 : index
    %1 = vector.load %arg2[%c0_1, %c0_2] : memref<288x128xf32, #tpu.memory_space<vmem>>, vector<288x128xf32>
    %cst = arith.constant dense<0.000000e+00> : vector<64x128xf32>
    %2 = tpu.matmul %0, %1, %cst {dimension_numbers = #tpu.dot_dimension_numbers<[1], [0], [0], [1], [0, 0, 1, 1], [], []>} : vector<64x288xf32>, vector<288x128xf32>, vector<64x128xf32> -> vector<64x128xf32>
    %c0_3 = arith.constant 0 : index
    %c0_4 = arith.constant 0 : index
    %3 = vector.load %arg3[%c0_3, %c0_4] : memref<64x1xf32, #tpu.memory_space<vmem>>, vector<64x1xf32>
    %4 = vector.broadcast %3 : vector<64x1xf32> to vector<64x128xf32>
    %5 = arith.addf %2, %4 : vector<64x128xf32>
    %cst_5 = arith.constant 0.000000e+00 : f32
    %6 = vector.broadcast %cst_5 : f32 to vector<64x128xf32>
    %7 = arith.maximumf %5, %6 : vector<64x128xf32>
    %c0_6 = arith.constant 0 : index
    %c0_7 = arith.constant 0 : index
    %8 = vector.load %arg4[%c0_6, %c0_7] : memref<64x128xf32, #tpu.memory_space<vmem>>, vector<64x128xf32>
    tpu.vector_store %arg4[%c0_6, %c0_7], %7 {strides = array<i32>} : memref<64x128xf32, #tpu.memory_space<vmem>>, vector<64x128xf32>,
    return
  }
  func.func @transform_0(%arg0: i32) -> (i32, i32) {
    %c0_i32 = arith.constant 0 : i32
    %c0_i32_0 = arith.constant 0 : i32
    %c0_i32_1 = arith.constant 0 : i32
    return %c0_i32, %c0_i32_0 : i32, i32
  }
  func.func @transform_1(%arg0: i32) -> (i32, i32) {
    %c0_i32 = arith.constant 0 : i32
    %c0_i32_0 = arith.constant 0 : i32
    %c0_i32_1 = arith.constant 0 : i32
    return %c0_i32, %c0_i32_0 : i32, i32
  }
  func.func @transform_2(%arg0: i32) -> (i32, i32) {
    %c0_i32 = arith.constant 0 : i32
    %c0_i32_0 = arith.constant 0 : i32
    %c0_i32_1 = arith.constant 0 : i32
    return %c0_i32, %c0_i32_0 : i32, i32
  }
  func.func @transform_3(%arg0: i32) -> (i32, i32) {
    %c0_i32 = arith.constant 0 : i32
    %c0_i32_0 = arith.constant 0 : i32
    %c0_i32_1 = arith.constant 0 : i32
    return %c0_i32, %c0_i32_0 : i32, i32
  }
}

module attributes {stable_mosaic.version = 11 : i64} {
  func.func @_fc_head_kernel(%arg0: i32, %arg1: memref<2x4096xf32, #tpu.memory_space<vmem>>, %arg2: memref<1x4096x512xbf16, #tpu.memory_space<vmem>>, %arg3: memref<1x512xf32, #tpu.memory_space<vmem>>, %arg4: memref<2048x2xf32, #tpu.memory_space<vmem>>, %arg5: memref<1x2x2xf32, #tpu.memory_space<vmem>>) attributes {dimension_semantics = [#tpu.dimension_semantics<parallel>], iteration_bounds = array<i64: 4>, scalar_prefetch = 0 : i64, scratch_operands = 0 : i64, tpu.core_type = #tpu.core_type<tc>, window_params = [{pipeline_mode = #tpu.pipeline_mode<synchronous>, transform_indices = @transform_0, window_bounds = array<i64: 2, 4096>}, {transform_indices = @transform_1, window_bounds = array<i64: 1, 4096, 512>}, {transform_indices = @transform_2, window_bounds = array<i64: 1, 512>}, {pipeline_mode = #tpu.pipeline_mode<synchronous>, transform_indices = @transform_3, window_bounds = array<i64: 2048, 2>}, {transform_indices = @transform_4, window_bounds = array<i64: 1, 2, 2>}]} {
    %c0 = arith.constant 0 : index
    %c0_0 = arith.constant 0 : index
    %0 = vector.load %arg1[%c0, %c0_0] : memref<2x4096xf32, #tpu.memory_space<vmem>>, vector<2x4096xf32>
    %1 = arith.truncf %0 : vector<2x4096xf32> to vector<2x4096xbf16>
    %c0_1 = arith.constant 0 : index
    %c0_2 = arith.constant 0 : index
    %c0_3 = arith.constant 0 : index
    %2 = vector.load %arg2[%c0_1, %c0_2, %c0_3] : memref<1x4096x512xbf16, #tpu.memory_space<vmem>>, vector<1x4096x512xbf16>
    %3 = vector.shape_cast %2 : vector<1x4096x512xbf16> to vector<4096x512xbf16>
    %cst = arith.constant dense<0.000000e+00> : vector<2x512xf32>
    %4 = tpu.matmul %1, %3, %cst {dimension_numbers = #tpu.dot_dimension_numbers<[1], [0], [0], [1], [0, 0, 1, 1], [], []>} : vector<2x4096xbf16>, vector<4096x512xbf16>, vector<2x512xf32> -> vector<2x512xf32>
    %c0_4 = arith.constant 0 : index
    %c0_5 = arith.constant 0 : index
    %5 = vector.load %arg3[%c0_4, %c0_5] : memref<1x512xf32, #tpu.memory_space<vmem>>, vector<1x512xf32>
    %6 = vector.broadcast %5 : vector<1x512xf32> to vector<2x512xf32>
    %7 = arith.addf %4, %6 : vector<2x512xf32>
    %cst_6 = arith.constant 0.000000e+00 : f32
    %8 = vector.broadcast %cst_6 : f32 to vector<2x512xf32>
    %9 = arith.maximumf %7, %8 : vector<2x512xf32>
    %c512_i32 = arith.constant 512 : i32
    %10 = arith.muli %arg0, %c512_i32 : i32
    %11 = tpu.assume_multiple %10, 512 : i32
    %12 = arith.index_cast %11 : i32 to index
    %c0_7 = arith.constant 0 : index
    %13 = vector.load %arg4[%12, %c0_7] : memref<2048x2xf32, #tpu.memory_space<vmem>>, vector<512x2xf32>
    %cst_8 = arith.constant dense<0.000000e+00> : vector<2x2xf32>
    %14 = tpu.matmul %9, %13, %cst_8 {dimension_numbers = #tpu.dot_dimension_numbers<[1], [0], [0], [1], [0, 0, 1, 1], [], []>} : vector<2x512xf32>, vector<512x2xf32>, vector<2x2xf32> -> vector<2x2xf32>
    %15 = vector.shape_cast %14 : vector<2x2xf32> to vector<1x2x2xf32>
    %c0_9 = arith.constant 0 : index
    %c0_10 = arith.constant 0 : index
    %c0_11 = arith.constant 0 : index
    %16 = vector.load %arg5[%c0_9, %c0_10, %c0_11] : memref<1x2x2xf32, #tpu.memory_space<vmem>>, vector<1x2x2xf32>
    tpu.vector_store %arg5[%c0_9, %c0_10, %c0_11], %15 {strides = array<i32>} : memref<1x2x2xf32, #tpu.memory_space<vmem>>, vector<1x2x2xf32>,
    return
  }
  func.func @transform_0(%arg0: i32) -> (i32, i32) {
    %c0_i32 = arith.constant 0 : i32
    %c0_i32_0 = arith.constant 0 : i32
    %c0_i32_1 = arith.constant 0 : i32
    return %c0_i32, %c0_i32_0 : i32, i32
  }
  func.func @transform_1(%arg0: i32) -> (i32, i32, i32) {
    %c0_i32 = arith.constant 0 : i32
    %c0_i32_0 = arith.constant 0 : i32
    %c0_i32_1 = arith.constant 0 : i32
    return %arg0, %c0_i32, %c0_i32_0 : i32, i32, i32
  }
  func.func @transform_2(%arg0: i32) -> (i32, i32) {
    %c0_i32 = arith.constant 0 : i32
    %c0_i32_0 = arith.constant 0 : i32
    return %c0_i32, %arg0 : i32, i32
  }
  func.func @transform_3(%arg0: i32) -> (i32, i32) {
    %c0_i32 = arith.constant 0 : i32
    %c0_i32_0 = arith.constant 0 : i32
    %c0_i32_1 = arith.constant 0 : i32
    return %c0_i32, %c0_i32_0 : i32, i32
  }
  func.func @transform_4(%arg0: i32) -> (i32, i32, i32) {
    %c0_i32 = arith.constant 0 : i32
    %c0_i32_0 = arith.constant 0 : i32
    %c0_i32_1 = arith.constant 0 : i32
    return %arg0, %c0_i32, %c0_i32_0 : i32, i32, i32
  }
}

</mosaic_0001>

<llo_original>
// kernel: encoder_forward.5
$region0: #{encoder_forward.5}
  #allocation0 [shape = 'u32[]', space=smem, size = 0x4, offset = 0x4, fixed_abs, tag = 'smem constant byte address 0x4 - core index']
  #allocation1 [shape = 'u32[144,128]{1,0:T(1,128)}', space=vmem, size = 0x12000, scoped, tag = 'internal scratch']
  %s0 = inlined_call_operand.vmem [shape: f32[8,9], index: 0, kind: input, shape index: {}]
  %s1 = inlined_call_operand.vmem [shape: f32[9,8192], index: 1, kind: input, shape index: {}]
  %s2 = inlined_call_operand.vmem [shape: f32[8,1], index: 2, kind: input, shape index: {}]
  %s3 = inlined_call_operand.vmem [shape: f32[8,8192], index: 3, kind: output, shape index: {}]
  %s4 = sld [smem:[#allocation0]]
  $region22: #{encoder_forward.5} parent=0
    _
  %s6 = ssub.s32 1, %s4
  %s7 = scalar_select 0, %s6, %s4
  // Predicated region
  $region2: #{encoder_forward.5} parent=0 // pred_check
    _
  $region3: #{encoder_forward.5} parent=0 // pred_check_branch
    %9 = sbr.rel (0) target = $region5
  $region4: #{encoder_forward.5} parent=0 // pred_region
    _
  $region5: #{encoder_forward.5} parent=0 // pred_fallthru
    _
  // Predicated region
  $region6: #{encoder_forward.5} parent=0 // pred_check
    _
  $region7: #{encoder_forward.5} parent=0 // pred_check_branch
    %11 = sbr.rel (0) target = $region9
  $region8: #{encoder_forward.5} parent=0 // pred_region
    _
  $region9: #{encoder_forward.5} parent=0 // pred_fallthru
    _
  // Predicated region
  $region10: #{encoder_forward.5} parent=0 // pred_check
    _
  $region11: #{encoder_forward.5} parent=0 // pred_check_branch
    %13 = sbr.rel (0) target = $region13
  $region12: #{encoder_forward.5} parent=0 // pred_region
    _
  $region13: #{encoder_forward.5} parent=0 // pred_fallthru
    _
  %v14 = vld [vmem:[%s0] sm:$0xff]
  %v15 = vld [vmem:[%s1] sm:$0xff]
  %v16 = vld [vmem:[%s1 + $0x8] sm:$0xff]
  %v17 = vld [vmem:[%s1 + $0x10] sm:$0xff]
  %v18 = vld [vmem:[%s1 + $0x18] sm:$0xff]
  %v19 = vld [vmem:[%s1 + $0x20] sm:$0xff]
  %v20 = vld [vmem:[%s1 + $0x28] sm:$0xff]
  %v21 = vld [vmem:[%s1 + $0x30] sm:$0xff]
  %v22 = vld [vmem:[%s1 + $0x38] sm:$0xff]
  %v23 = vld [vmem:[%s1 + $0x40] sm:$0xff]
  %v24 = vld [vmem:[%s1 + $0x48] sm:$0xff]
  %v25 = vld [vmem:[%s1 + $0x50] sm:$0xff]
  %v26 = vld [vmem:[%s1 + $0x58] sm:$0xff]
  %v27 = vld [vmem:[%s1 + $0x60] sm:$0xff]
  %v28 = vld [vmem:[%s1 + $0x68] sm:$0xff]
  %v29 = vld [vmem:[%s1 + $0x70] sm:$0xff]
  %v30 = vld [vmem:[%s1 + $0x78] sm:$0xff]
  %v31 = vld [vmem:[%s1 + $0x80] sm:$0xff]
  %v32 = vld [vmem:[%s1 + $0x88] sm:$0xff]
  %v33 = vld [vmem:[%s1 + $0x90] sm:$0xff]
  %v34 = vld [vmem:[%s1 + $0x98] sm:$0xff]
  %v35 = vld [vmem:[%s1 + $0xa0] sm:$0xff]
  %v36 = vld [vmem:[%s1 + $0xa8] sm:$0xff]
  %v37 = vld [vmem:[%s1 + $0xb0] sm:$0xff]
  %v38 = vld [vmem:[%s1 + $0xb8] sm:$0xff]
  %v39 = vld [vmem:[%s1 + $0xc0] sm:$0xff]
  %v40 = vld [vmem:[%s1 + $0xc8] sm:$0xff]
  %v41 = vld [vmem:[%s1 + $0xd0] sm:$0xff]
  %v42 = vld [vmem:[%s1 + $0xd8] sm:$0xff]
  %v43 = vld [vmem:[%s1 + $0xe0] sm:$0xff]
  %v44 = vld [vmem:[%s1 + $0xe8] sm:$0xff]
  %v45 = vld [vmem:[%s1 + $0xf0] sm:$0xff]
  %v46 = vld [vmem:[%s1 + $0xf8] sm:$0xff]
  %v47 = vld [vmem:[%s1 + $0x100] sm:$0xff]
  %v48 = vld [vmem:[%s1 + $0x108] sm:$0xff]
  %v49 = vld [vmem:[%s1 + $0x110] sm:$0xff]
  %v50 = vld [vmem:[%s1 + $0x118] sm:$0xff]
  %v51 = vld [vmem:[%s1 + $0x120] sm:$0xff]
  %v52 = vld [vmem:[%s1 + $0x128] sm:$0xff]
  %v53 = vld [vmem:[%s1 + $0x130] sm:$0xff]
  %v54 = vld [vmem:[%s1 + $0x138] sm:$0xff]
  %v55 = vld [vmem:[%s1 + $0x140] sm:$0xff]
  %v56 = vld [vmem:[%s1 + $0x148] sm:$0xff]
  %v57 = vld [vmem:[%s1 + $0x150] sm:$0xff]
  %v58 = vld [vmem:[%s1 + $0x158] sm:$0xff]
  %v59 = vld [vmem:[%s1 + $0x160] sm:$0xff]
  %v60 = vld [vmem:[%s1 + $0x168] sm:$0xff]
  %v61 = vld [vmem:[%s1 + $0x170] sm:$0xff]
  %v62 = vld [vmem:[%s1 + $0x178] sm:$0xff]
  %v63 = vld [vmem:[%s1 + $0x180] sm:$0xff]
  %v64 = vld [vmem:[%s1 + $0x188] sm:$0xff]
  %v65 = vld [vmem:[%s1 + $0x190] sm:$0xff]
  %v66 = vld [vmem:[%s1 + $0x198] sm:$0xff]
  %v67 = vld [vmem:[%s1 + $0x1a0] sm:$0xff]
  %v68 = vld [vmem:[%s1 + $0x1a8] sm:$0xff]
  %v69 = vld [vmem:[%s1 + $0x1b0] sm:$0xff]
  %v70 = vld [vmem:[%s1 + $0x1b8] sm:$0xff]
  %v71 = vld [vmem:[%s1 + $0x1c0] sm:$0xff]
  %v72 = vld [vmem:[%s1 + $0x1c8] sm:$0xff]
  %v73 = vld [vmem:[%s1 + $0x1d0] sm:$0xff]
  %v74 = vld [vmem:[%s1 + $0x1d8] sm:$0xff]
  %v75 = vld [vmem:[%s1 + $0x1e0] sm:$0xff]
  %v76 = vld [vmem:[%s1 + $0x1e8] sm:$0xff]
  %v77 = vld [vmem:[%s1 + $0x1f0] sm:$0xff]
  %v78 = vld [vmem:[%s1 + $0x1f8] sm:$0xff]
  %v79 = vld [vmem:[%s1 + $0x200] sm:$0x1]
  %v80 = vld [vmem:[%s1 + $0x208] sm:$0x1]
  %v81 = vld [vmem:[%s1 + $0x210] sm:$0x1]
  %v82 = vld [vmem:[%s1 + $0x218] sm:$0x1]
  %v83 = vld [vmem:[%s1 + $0x220] sm:$0x1]
  %v84 = vld [vmem:[%s1 + $0x228] sm:$0x1]
  %v85 = vld [vmem:[%s1 + $0x230] sm:$0x1]
  %v86 = vld [vmem:[%s1 + $0x238] sm:$0x1]
  %v87 = vld [vmem:[%s1 + $0x240] sm:$0x1]
  %v88 = vld [vmem:[%s1 + $0x248] sm:$0x1]
  %v89 = vld [vmem:[%s1 + $0x250] sm:$0x1]
  %v90 = vld [vmem:[%s1 + $0x258] sm:$0x1]
  %v91 = vld [vmem:[%s1 + $0x260] sm:$0x1]
  %v92 = vld [vmem:[%s1 + $0x268] sm:$0x1]
  %v93 = vld [vmem:[%s1 + $0x270] sm:$0x1]
  %v94 = vld [vmem:[%s1 + $0x278] sm:$0x1]
  %v95 = vld [vmem:[%s1 + $0x280] sm:$0x1]
  %v96 = vld [vmem:[%s1 + $0x288] sm:$0x1]
  %v97 = vld [vmem:[%s1 + $0x290] sm:$0x1]
  %v98 = vld [vmem:[%s1 + $0x298] sm:$0x1]
  %v99 = vld [vmem:[%s1 + $0x2a0] sm:$0x1]
  %v100 = vld [vmem:[%s1 + $0x2a8] sm:$0x1]
  %v101 = vld [vmem:[%s1 + $0x2b0] sm:$0x1]
  %v102 = vld [vmem:[%s1 + $0x2b8] sm:$0x1]
  %v103 = vld [vmem:[%s1 + $0x2c0] sm:$0x1]
  %v104 = vld [vmem:[%s1 + $0x2c8] sm:$0x1]
  %v105 = vld [vmem:[%s1 + $0x2d0] sm:$0x1]
  %v106 = vld [vmem:[%s1 + $0x2d8] sm:$0x1]
  %v107 = vld [vmem:[%s1 + $0x2e0] sm:$0x1]
  %v108 = vld [vmem:[%s1 + $0x2e8] sm:$0x1]
  %v109 = vld [vmem:[%s1 + $0x2f0] sm:$0x1]
  %v110 = vld [vmem:[%s1 + $0x2f8] sm:$0x1]
  %v111 = vld [vmem:[%s1 + $0x300] sm:$0x1]
  %v112 = vld [vmem:[%s1 + $0x308] sm:$0x1]
  %v113 = vld [vmem:[%s1 + $0x310] sm:$0x1]
  %v114 = vld [vmem:[%s1 + $0x318] sm:$0x1]
  %v115 = vld [vmem:[%s1 + $0x320] sm:$0x1]
  %v116 = vld [vmem:[%s1 + $0x328] sm:$0x1]
  %v117 = vld [vmem:[%s1 + $0x330] sm:$0x1]
  %v118 = vld [vmem:[%s1 + $0x338] sm:$0x1]
  %v119 = vld [vmem:[%s1 + $0x340] sm:$0x1]
  %v120 = vld [vmem:[%s1 + $0x348] sm:$0x1]
  %v121 = vld [vmem:[%s1 + $0x350] sm:$0x1]
  %v122 = vld [vmem:[%s1 + $0x358] sm:$0x1]
  %v123 = vld [vmem:[%s1 + $0x360] sm:$0x1]
  %v124 = vld [vmem:[%s1 + $0x368] sm:$0x1]
  %v125 = vld [vmem:[%s1 + $0x370] sm:$0x1]
  %v126 = vld [vmem:[%s1 + $0x378] sm:$0x1]
  %v127 = vld [vmem:[%s1 + $0x380] sm:$0x1]
  %v128 = vld [vmem:[%s1 + $0x388] sm:$0x1]
  %v129 = vld [vmem:[%s1 + $0x390] sm:$0x1]
  %v130 = vld [vmem:[%s1 + $0x398] sm:$0x1]
  %v131 = vld [vmem:[%s1 + $0x3a0] sm:$0x1]
  %v132 = vld [vmem:[%s1 + $0x3a8] sm:$0x1]
  %v133 = vld [vmem:[%s1 + $0x3b0] sm:$0x1]
  %v134 = vld [vmem:[%s1 + $0x3b8] sm:$0x1]
  %v135 = vld [vmem:[%s1 + $0x3c0] sm:$0x1]
  %v136 = vld [vmem:[%s1 + $0x3c8] sm:$0x1]
  %v137 = vld [vmem:[%s1 + $0x3d0] sm:$0x1]
  %v138 = vld [vmem:[%s1 + $0x3d8] sm:$0x1]
  %v139 = vld [vmem:[%s1 + $0x3e0] sm:$0x1]
  %v140 = vld [vmem:[%s1 + $0x3e8] sm:$0x1]
  %v141 = vld [vmem:[%s1 + $0x3f0] sm:$0x1]
  %v142 = vld [vmem:[%s1 + $0x3f8] sm:$0x1]
  %v143 = vld [vmem:[%s2] sm:$0xff]
  %145 = vset.pattern.permute.xlu0 0
  %146 = vperm.xlu0 %145, %v143
  %v147 = vpop.permute.xlu0 %146
  %vm149 = vcmask 72704
  %v151 = vsel %vm149, %v14, 0
  %vm153 = vcmask 1040384
  %v155 = vsel %vm153, %v79, 0
  %v158 = vsel %vm153, %v80, 0
  %v161 = vsel %vm153, %v81, 0
  %v164 = vsel %vm153, %v82, 0
  %v167 = vsel %vm153, %v83, 0
  %v170 = vsel %vm153, %v84, 0
  %v173 = vsel %vm153, %v85, 0
  %v176 = vsel %vm153, %v86, 0
  %v179 = vsel %vm153, %v87, 0
  %v182 = vsel %vm153, %v88, 0
  %v185 = vsel %vm153, %v89, 0
  %v188 = vsel %vm153, %v90, 0
  %v191 = vsel %vm153, %v91, 0
  %v194 = vsel %vm153, %v92, 0
  %v197 = vsel %vm153, %v93, 0
  %v200 = vsel %vm153, %v94, 0
  %v203 = vsel %vm153, %v95, 0
  %v206 = vsel %vm153, %v96, 0
  %v209 = vsel %vm153, %v97, 0
  %v212 = vsel %vm153, %v98, 0
  %v215 = vsel %vm153, %v99, 0
  %v218 = vsel %vm153, %v100, 0
  %v221 = vsel %vm153, %v101, 0
  %v224 = vsel %vm153, %v102, 0
  %v227 = vsel %vm153, %v103, 0
  %v230 = vsel %vm153, %v104, 0
  %v233 = vsel %vm153, %v105, 0
  %v236 = vsel %vm153, %v106, 0
  %v239 = vsel %vm153, %v107, 0
  %v242 = vsel %vm153, %v108, 0
  %v245 = vsel %vm153, %v109, 0
  %v248 = vsel %vm153, %v110, 0
  %v251 = vsel %vm153, %v111, 0
  %v254 = vsel %vm153, %v112, 0
  %v257 = vsel %vm153, %v113, 0
  %v260 = vsel %vm153, %v114, 0
  %v263 = vsel %vm153, %v115, 0
  %v266 = vsel %vm153, %v116, 0
  %v269 = vsel %vm153, %v117, 0
  %v272 = vsel %vm153, %v118, 0
  %v275 = vsel %vm153, %v119, 0
  %v278 = vsel %vm153, %v120, 0
  %v281 = vsel %vm153, %v121, 0
  %v284 = vsel %vm153, %v122, 0
  %v287 = vsel %vm153, %v123, 0
  %v290 = vsel %vm153, %v124, 0
  %v293 = vsel %vm153, %v125, 0
  %v296 = vsel %vm153, %v126, 0
  %v299 = vsel %vm153, %v127, 0
  %v302 = vsel %vm153, %v128, 0
  %v305 = vsel %vm153, %v129, 0
  %v308 = vsel %vm153, %v130, 0
  %v311 = vsel %vm153, %v131, 0
  %v314 = vsel %vm153, %v132, 0
  %v317 = vsel %vm153, %v133, 0
  %v320 = vsel %vm153, %v134, 0
  %v323 = vsel %vm153, %v135, 0
  %v326 = vsel %vm153, %v136, 0
  %v329 = vsel %vm153, %v137, 0
  %v332 = vsel %vm153, %v138, 0
  %v335 = vsel %vm153, %v139, 0
  %v338 = vsel %vm153, %v140, 0
  %v341 = vsel %vm153, %v141, 0
  %v344 = vsel %vm153, %v142, 0
  %346 = vmatprep.subr.mxu0 0.0
  %347 = vmatpush1.msra.mxu0 0.0
  %348 = vmatprep.subr.mxu0 0.0
  %349 = vmatpush1.msra.mxu0 0.0
  %350 = vmatprep.subr.mxu0 0.0
  %351 = vmatpush1.msra.mxu0 0.0
  %352 = vmatprep.subr.mxu0 0.0
  %353 = vmatpush1.msra.mxu0 0.0
  %354 = vmatprep.subr.mxu0 0.0
  %355 = vmatpush1.msra.mxu0 0.0
  %356 = vmatprep.subr.mxu0 0.0
  %357 = vmatpush1.msra.mxu0 0.0
  %358 = vmatprep.subr.mxu0 0.0
  %359 = vmatpush1.msra.mxu0 0.0
  %360 = vmatprep.subr.mxu0 0.0
  %361 = vmatpush1.msra.mxu0 0.0
  %362 = vmatprep.subr.mxu0 0.0
  %363 = vmatpush1.msra.mxu0 0.0
  %364 = vmatprep.subr.mxu0 0.0
  %365 = vmatpush1.msra.mxu0 0.0
  %366 = vmatprep.subr.mxu0 0.0
  %367 = vmatpush1.msra.mxu0 0.0
  %368 = vmatprep.subr.mxu0 0.0
  %369 = vmatpush1.msra.mxu0 0.0
  %370 = vmatprep.subr.mxu0 0.0
  %371 = vmatpush1.msra.mxu0 0.0
  %372 = vmatprep.subr.mxu0 0.0
  %373 = vmatpush1.msra.mxu0 0.0
  %374 = vmatprep.subr.mxu0 %v158
  %375 = vmatpush1.msra.mxu0 %v155
  %376 = vmatprep.subr.mxu0 %v16
  %377 = vmatpush1.msra.mxu0 %v15
  %378 = vmatprep.subr.mxu0 0.0
  %379 = vmatpush2.msra.mxu0 0.0
  %380 = vmatprep.subr.mxu0 0.0
  %381 = vmatpush2.msra.mxu0 0.0
  %382 = vmatprep.subr.mxu0 0.0
  %383 = vmatpush2.msra.mxu0 0.0
  %384 = vmatprep.subr.mxu0 0.0
  %385 = vmatpush2.msra.mxu0 0.0
  %386 = vmatprep.subr.mxu0 0.0
  %387 = vmatpush2.msra.mxu0 0.0
  %388 = vmatprep.subr.mxu0 0.0
  %389 = vmatpush2.msra.mxu0 0.0
  %390 = vmatprep.subr.mxu0 0.0
  %391 = vmatpush2.msra.mxu0 0.0
  %392 = vmatprep.subr.mxu0 0.0
  %393 = vmatpush2.msra.mxu0 0.0
  %394 = vmatprep.subr.mxu0 0.0
  %395 = vmatpush2.msra.mxu0 0.0
  %396 = vmatprep.subr.mxu0 0.0
  %397 = vmatpush2.msra.mxu0 0.0
  %398 = vmatprep.subr.mxu0 0.0
  %399 = vmatpush2.msra.mxu0 0.0
  %400 = vmatprep.subr.mxu0 0.0
  %401 = vmatpush2.msra.mxu0 0.0
  %402 = vmatprep.subr.mxu0 0.0
  %403 = vmatpush2.msra.mxu0 0.0
  %404 = vmatprep.subr.mxu0 0.0
  %405 = vmatpush2.msra.mxu0 0.0
  %406 = vmatprep.subr.mxu0 0.0
  %407 = vmatpush2.msra.mxu0 0.0
  %408 = vmatprep.subr.mxu0 0.0
  %409 = vmatpush2.msra.mxu0 0.0
  %410 = vmatprep.mubr.f32.mxu0 0.0
  %411 = vmatmul.mubr.f32.gmra.mxu0 %v151
  %v412 = vpop.f32.mrf.mxu0
  %v413 = vadd.f32 %v147, %v412
  %v414 = vpop.f32.mrf.mxu0
  %v415 = vadd.f32 %v147, %v414
  %416 = vdwg.mxu0
  %417 = vmatprep.subr.mxu0 0.0
  %418 = vmatpush1.msra.mxu0 0.0
  %419 = vmatprep.subr.mxu0 0.0
  %420 = vmatpush1.msra.mxu0 0.0
  %421 = vmatprep.subr.mxu0 0.0
  %422 = vmatpush1.msra.mxu0 0.0
  %423 = vmatprep.subr.mxu0 0.0
  %424 = vmatpush1.msra.mxu0 0.0
  %425 = vmatprep.subr.mxu0 0.0
  %426 = vmatpush1.msra.mxu0 0.0
  %427 = vmatprep.subr.mxu0 0.0
  %428 = vmatpush1.msra.mxu0 0.0
  %429 = vmatprep.subr.mxu0 0.0
  %430 = vmatpush1.msra.mxu0 0.0
  %431 = vmatprep.subr.mxu0 0.0
  %432 = vmatpush1.msra.mxu0 0.0
  %433 = vmatprep.subr.mxu0 0.0
  %434 = vmatpush1.msra.mxu0 0.0
  %435 = vmatprep.subr.mxu0 0.0
  %436 = vmatpush1.msra.mxu0 0.0
  %437 = vmatprep.subr.mxu0 0.0
  %438 = vmatpush1.msra.mxu0 0.0
  %439 = vmatprep.subr.mxu0 0.0
  %440 = vmatpush1.msra.mxu0 0.0
  %441 = vmatprep.subr.mxu0 0.0
  %442 = vmatpush1.msra.mxu0 0.0
  %443 = vmatprep.subr.mxu0 0.0
  %444 = vmatpush1.msra.mxu0 0.0
  %445 = vmatprep.subr.mxu0 %v164
  %446 = vmatpush1.msra.mxu0 %v161
  %447 = vmatprep.subr.mxu0 %v18
  %448 = vmatpush1.msra.mxu0 %v17
  %449 = vmatprep.subr.mxu0 0.0
  %450 = vmatpush2.msra.mxu0 0.0
  %451 = vmatprep.subr.mxu0 0.0
  %452 = vmatpush2.msra.mxu0 0.0
  %453 = vmatprep.subr.mxu0 0.0
  %454 = vmatpush2.msra.mxu0 0.0
  %455 = vmatprep.subr.mxu0 0.0
  %456 = vmatpush2.msra.mxu0 0.0
  %457 = vmatprep.subr.mxu0 0.0
  %458 = vmatpush2.msra.mxu0 0.0
  %459 = vmatprep.subr.mxu0 0.0
  %460 = vmatpush2.msra.mxu0 0.0
  %461 = vmatprep.subr.mxu0 0.0
  %462 = vmatpush2.msra.mxu0 0.0
  %463 = vmatprep.subr.mxu0 0.0
  %464 = vmatpush2.msra.mxu0 0.0
  %465 = vmatprep.subr.mxu0 0.0
  %466 = vmatpush2.msra.mxu0 0.0
  %467 = vmatprep.subr.mxu0 0.0
  %468 = vmatpush2.msra.mxu0 0.0
  %469 = vmatprep.subr.mxu0 0.0
  %470 = vmatpush2.msra.mxu0 0.0
  %471 = vmatprep.subr.mxu0 0.0
  %472 = vmatpush2.msra.mxu0 0.0
  %473 = vmatprep.subr.mxu0 0.0
  %474 = vmatpush2.msra.mxu0 0.0
  %475 = vmatprep.subr.mxu0 0.0
  %476 = vmatpush2.msra.mxu0 0.0
  %477 = vmatprep.subr.mxu0 0.0
  %478 = vmatpush2.msra.mxu0 0.0
  %479 = vmatprep.subr.mxu0 0.0
  %480 = vmatpush2.msra.mxu0 0.0
  %481 = vmatprep.mubr.f32.mxu0 0.0
  %482 = vmatmul.mubr.f32.gmra.mxu0 %v151
  %v483 = vpop.f32.mrf.mxu0
  %v484 = vadd.f32 %v147, %v483
  %v485 = vpop.f32.mrf.mxu0
  %v486 = vadd.f32 %v147, %v485
  %487 = vdwg.mxu0
  %488 = vmatprep.subr.mxu0 0.0
  %489 = vmatpush1.msra.mxu0 0.0
  %490 = vmatprep.subr.mxu0 0.0
  %491 = vmatpush1.msra.mxu0 0.0
  %492 = vmatprep.subr.mxu0 0.0
  %493 = vmatpush1.msra.mxu0 0.0
  %494 = vmatprep.subr.mxu0 0.0
  %495 = vmatpush1.msra.mxu0 0.0
  %496 = vmatprep.subr.mxu0 0.0
  %497 = vmatpush1.msra.mxu0 0.0
  %498 = vmatprep.subr.mxu0 0.0
  %499 = vmatpush1.msra.mxu0 0.0
  %500 = vmatprep.subr.mxu0 0.0
  %501 = vmatpush1.msra.mxu0 0.0
  %502 = vmatprep.subr.mxu0 0.0
  %503 = vmatpush1.msra.mxu0 0.0
  %504 = vmatprep.subr.mxu0 0.0
  %505 = vmatpush1.msra.mxu0 0.0
  %506 = vmatprep.subr.mxu0 0.0
  %507 = vmatpush1.msra.mxu0 0.0
  %508 = vmatprep.subr.mxu0 0.0
  %509 = vmatpush1.msra.mxu0 0.0
  %510 = vmatprep.subr.mxu0 0.0
  %511 = vmatpush1.msra.mxu0 0.0
  %512 = vmatprep.subr.mxu0 0.0
  %513 = vmatpush1.msra.mxu0 0.0
  %514 = vmatprep.subr.mxu0 0.0
  %515 = vmatpush1.msra.mxu0 0.0
  %516 = vmatprep.subr.mxu0 %v170
  %517 = vmatpush1.msra.mxu0 %v167
  %518 = vmatprep.subr.mxu0 %v20
  %519 = vmatpush1.msra.mxu0 %v19
  %520 = vmatprep.subr.mxu0 0.0
  %521 = vmatpush2.msra.mxu0 0.0
  %522 = vmatprep.subr.mxu0 0.0
  %523 = vmatpush2.msra.mxu0 0.0
  %524 = vmatprep.subr.mxu0 0.0
  %525 = vmatpush2.msra.mxu0 0.0
  %526 = vmatprep.subr.mxu0 0.0
  %527 = vmatpush2.msra.mxu0 0.0
  %528 = vmatprep.subr.mxu0 0.0
  %529 = vmatpush2.msra.mxu0 0.0
  %530 = vmatprep.subr.mxu0 0.0
  %531 = vmatpush2.msra.mxu0 0.0
  %532 = vmatprep.subr.mxu0 0.0
  %533 = vmatpush2.msra.mxu0 0.0
  %534 = vmatprep.subr.mxu0 0.0
  %535 = vmatpush2.msra.mxu0 0.0
  %536 = vmatprep.subr.mxu0 0.0
  %537 = vmatpush2.msra.mxu0 0.0
  %538 = vmatprep.subr.mxu0 0.0
  %539 = vmatpush2.msra.mxu0 0.0
  %540 = vmatprep.subr.mxu0 0.0
  %541 = vmatpush2.msra.mxu0 0.0
  %542 = vmatprep.subr.mxu0 0.0
  %543 = vmatpush2.msra.mxu0 0.0
  %544 = vmatprep.subr.mxu0 0.0
  %545 = vmatpush2.msra.mxu0 0.0
  %546 = vmatprep.subr.mxu0 0.0
  %547 = vmatpush2.msra.mxu0 0.0
  %548 = vmatprep.subr.mxu0 0.0
  %549 = vmatpush2.msra.mxu0 0.0
  %550 = vmatprep.subr.mxu0 0.0
  %551 = vmatpush2.msra.mxu0 0.0
  %552 = vmatprep.mubr.f32.mxu0 0.0
  %553 = vmatmul.mubr.f32.gmra.mxu0 %v151
  %v554 = vpop.f32.mrf.mxu0
  %v555 = vadd.f32 %v147, %v554
  %v556 = vpop.f32.mrf.mxu0
  %v557 = vadd.f32 %v147, %v556
  %558 = vdwg.mxu0
  %559 = vmatprep.subr.mxu0 0.0
  %560 = vmatpush1.msra.mxu0 0.0
  %561 = vmatprep.subr.mxu0 0.0
  %562 = vmatpush1.msra.mxu0 0.0
  %563 = vmatprep.subr.mxu0 0.0
  %564 = vmatpush1.msra.mxu0 0.0
  %565 = vmatprep.subr.mxu0 0.0
  %566 = vmatpush1.msra.mxu0 0.0
  %567 = vmatprep.subr.mxu0 0.0
  %568 = vmatpush1.msra.mxu0 0.0
  %569 = vmatprep.subr.mxu0 0.0
  %570 = vmatpush1.msra.mxu0 0.0
  %571 = vmatprep.subr.mxu0 0.0
  %572 = vmatpush1.msra.mxu0 0.0
  %573 = vmatprep.subr.mxu0 0.0
  %574 = vmatpush1.msra.mxu0 0.0
  %575 = vmatprep.subr.mxu0 0.0
  %576 = vmatpush1.msra.mxu0 0.0
  %577 = vmatprep.subr.mxu0 0.0
  %578 = vmatpush1.msra.mxu0 0.0
  %579 = vmatprep.subr.mxu0 0.0
  %580 = vmatpush1.msra.mxu0 0.0
  %581 = vmatprep.subr.mxu0 0.0
  %582 = vmatpush1.msra.mxu0 0.0
  %583 = vmatprep.subr.mxu0 0.0
  %584 = vmatpush1.msra.mxu0 0.0
  %585 = vmatprep.subr.mxu0 0.0
  %586 = vmatpush1.msra.mxu0 0.0
  %587 = vmatprep.subr.mxu0 %v176
  %588 = vmatpush1.msra.mxu0 %v173
  %589 = vmatprep.subr.mxu0 %v22
  %590 = vmatpush1.msra.mxu0 %v21
  %591 = vmatprep.subr.mxu0 0.0
  %592 = vmatpush2.msra.mxu0 0.0
  %593 = vmatprep.subr.mxu0 0.0
  %594 = vmatpush2.msra.mxu0 0.0
  %595 = vmatprep.subr.mxu0 0.0
  %596 = vmatpush2.msra.mxu0 0.0
  %597 = vmatprep.subr.mxu0 0.0
  %598 = vmatpush2.msra.mxu0 0.0
  %599 = vmatprep.subr.mxu0 0.0
  %600 = vmatpush2.msra.mxu0 0.0
  %601 = vmatprep.subr.mxu0 0.0
  %602 = vmatpush2.msra.mxu0 0.0
  %603 = vmatprep.subr.mxu0 0.0
  %604 = vmatpush2.msra.mxu0 0.0
  %605 = vmatprep.subr.mxu0 0.0
  %606 = vmatpush2.msra.mxu0 0.0
  %607 = vmatprep.subr.mxu0 0.0
  %608 = vmatpush2.msra.mxu0 0.0
  %609 = vmatprep.subr.mxu0 0.0
  %610 = vmatpush2.msra.mxu0 0.0
  %611 = vmatprep.subr.mxu0 0.0
  %612 = vmatpush2.msra.mxu0 0.0
  %613 = vmatprep.subr.mxu0 0.0
  %614 = vmatpush2.msra.mxu0 0.0
  %615 = vmatprep.subr.mxu0 0.0
  %616 = vmatpush2.msra.mxu0 0.0
  %617 = vmatprep.subr.mxu0 0.0
  %618 = vmatpush2.msra.mxu0 0.0
  %619 = vmatprep.subr.mxu0 0.0
  %620 = vmatpush2.msra.mxu0 0.0
  %621 = vmatprep.subr.mxu0 0.0
  %622 = vmatpush2.msra.mxu0 0.0
  %623 = vmatprep.mubr.f32.mxu0 0.0
  %624 = vmatmul.mubr.f32.gmra.mxu0 %v151
  %v625 = vpop.f32.mrf.mxu0
  %v626 = vadd.f32 %v147, %v625
  %v627 = vpop.f32.mrf.mxu0
  %v628 = vadd.f32 %v147, %v627
  %629 = vdwg.mxu0
  %630 = vmatprep.subr.mxu0 0.0
  %631 = vmatpush1.msra.mxu0 0.0
  %632 = vmatprep.subr.mxu0 0.0
  %633 = vmatpush1.msra.mxu0 0.0
  %634 = vmatprep.subr.mxu0 0.0
  %635 = vmatpush1.msra.mxu0 0.0
  %636 = vmatprep.subr.mxu0 0.0
  %637 = vmatpush1.msra.mxu0 0.0
  %638 = vmatprep.subr.mxu0 0.0
  %639 = vmatpush1.msra.mxu0 0.0
  %640 = vmatprep.subr.mxu0 0.0
  %641 = vmatpush1.msra.mxu0 0.0
  %642 = vmatprep.subr.mxu0 0.0
  %643 = vmatpush1.msra.mxu0 0.0
  %644 = vmatprep.subr.mxu0 0.0
  %645 = vmatpush1.msra.mxu0 0.0
  %646 = vmatprep.subr.mxu0 0.0
  %647 = vmatpush1.msra.mxu0 0.0
  %648 = vmatprep.subr.mxu0 0.0
  %649 = vmatpush1.msra.mxu0 0.0
  %650 = vmatprep.subr.mxu0 0.0
  %651 = vmatpush1.msra.mxu0 0.0
  %652 = vmatprep.subr.mxu0 0.0
  %653 = vmatpush1.msra.mxu0 0.0
  %654 = vmatprep.subr.mxu0 0.0
  %655 = vmatpush1.msra.mxu0 0.0
  %656 = vmatprep.subr.mxu0 0.0
  %657 = vmatpush1.msra.mxu0 0.0
  %658 = vmatprep.subr.mxu0 %v182
  %659 = vmatpush1.msra.mxu0 %v179
  %660 = vmatprep.subr.mxu0 %v24
  %661 = vmatpush1.msra.mxu0 %v23
  %662 = vmatprep.subr.mxu0 0.0
  %663 = vmatpush2.msra.mxu0 0.0
  %664 = vmatprep.subr.mxu0 0.0
  %665 = vmatpush2.msra.mxu0 0.0
  %666 = vmatprep.subr.mxu0 0.0
  %667 = vmatpush2.msra.mxu0 0.0
  %668 = vmatprep.subr.mxu0 0.0
  %669 = vmatpush2.msra.mxu0 0.0
  %670 = vmatprep.subr.mxu0 0.0
  %671 = vmatpush2.msra.mxu0 0.0
  %672 = vmatprep.subr.mxu0 0.0
  %673 = vmatpush2.msra.mxu0 0.0
  %674 = vmatprep.subr.mxu0 0.0
  %675 = vmatpush2.msra.mxu0 0.0
  %676 = vmatprep.subr.mxu0 0.0
  %677 = vmatpush2.msra.mxu0 0.0
  %678 = vmatprep.subr.mxu0 0.0
  %679 = vmatpush2.msra.mxu0 0.0
  %680 = vmatprep.subr.mxu0 0.0
  %681 = vmatpush2.msra.mxu0 0.0
  %682 = vmatprep.subr.mxu0 0.0
  %683 = vmatpush2.msra.mxu0 0.0
  %684 = vmatprep.subr.mxu0 0.0
  %685 = vmatpush2.msra.mxu0 0.0
  %686 = vmatprep.subr.mxu0 0.0
  %687 = vmatpush2.msra.mxu0 0.0
  %688 = vmatprep.subr.mxu0 0.0
  %689 = vmatpush2.msra.mxu0 0.0
  %690 = vmatprep.subr.mxu0 0.0
  %691 = vmatpush2.msra.mxu0 0.0
  %692 = vmatprep.subr.mxu0 0.0
  %693 = vmatpush2.msra.mxu0 0.0
  %694 = vmatprep.mubr.f32.mxu0 0.0
  %695 = vmatmul.mubr.f32.gmra.mxu0 %v151
  %v696 = vpop.f32.mrf.mxu0
  %v697 = vadd.f32 %v147, %v696
  %v698 = vpop.f32.mrf.mxu0
  %v699 = vadd.f32 %v147, %v698
  %700 = vdwg.mxu0
  %701 = vmatprep.subr.mxu0 0.0
  %702 = vmatpush1.msra.mxu0 0.0
  %703 = vmatprep.subr.mxu0 0.0
  %704 = vmatpush1.msra.mxu0 0.0
  %705 = vmatprep.subr.mxu0 0.0
  %706 = vmatpush1.msra.mxu0 0.0
  %707 = vmatprep.subr.mxu0 0.0
  %708 = vmatpush1.msra.mxu0 0.0
  %709 = vmatprep.subr.mxu0 0.0
  %710 = vmatpush1.msra.mxu0 0.0
  %711 = vmatprep.subr.mxu0 0.0
  %712 = vmatpush1.msra.mxu0 0.0
  %713 = vmatprep.subr.mxu0 0.0
  %714 = vmatpush1.msra.mxu0 0.0
  %715 = vmatprep.subr.mxu0 0.0
  %716 = vmatpush1.msra.mxu0 0.0
  %717 = vmatprep.subr.mxu0 0.0
  %718 = vmatpush1.msra.mxu0 0.0
  %719 = vmatprep.subr.mxu0 0.0
  %720 = vmatpush1.msra.mxu0 0.0
  %721 = vmatprep.subr.mxu0 0.0
  %722 = vmatpush1.msra.mxu0 0.0
  %723 = vmatprep.subr.mxu0 0.0
  %724 = vmatpush1.msra.mxu0 0.0
  %725 = vmatprep.subr.mxu0 0.0
  %726 = vmatpush1.msra.mxu0 0.0
  %727 = vmatprep.subr.mxu0 0.0
  %728 = vmatpush1.msra.mxu0 0.0
  %729 = vmatprep.subr.mxu0 %v188
  %730 = vmatpush1.msra.mxu0 %v185
  %731 = vmatprep.subr.mxu0 %v26
  %732 = vmatpush1.msra.mxu0 %v25
  %733 = vmatprep.subr.mxu0 0.0
  %734 = vmatpush2.msra.mxu0 0.0
  %735 = vmatprep.subr.mxu0 0.0
  %736 = vmatpush2.msra.mxu0 0.0
  %737 = vmatprep.subr.mxu0 0.0
  %738 = vmatpush2.msra.mxu0 0.0
  %739 = vmatprep.subr.mxu0 0.0
  %740 = vmatpush2.msra.mxu0 0.0
  %741 = vmatprep.subr.mxu0 0.0
  %742 = vmatpush2.msra.mxu0 0.0
  %743 = vmatprep.subr.mxu0 0.0
  %744 = vmatpush2.msra.mxu0 0.0
  %745 = vmatprep.subr.mxu0 0.0
  %746 = vmatpush2.msra.mxu0 0.0
  %747 = vmatprep.subr.mxu0 0.0
  %748 = vmatpush2.msra.mxu0 0.0
  %749 = vmatprep.subr.mxu0 0.0
  %750 = vmatpush2.msra.mxu0 0.0
  %751 = vmatprep.subr.mxu0 0.0
  %752 = vmatpush2.msra.mxu0 0.0
  %753 = vmatprep.subr.mxu0 0.0
  %754 = vmatpush2.msra.mxu0 0.0
  %755 = vmatprep.subr.mxu0 0.0
  %756 = vmatpush2.msra.mxu0 0.0
  %757 = vmatprep.subr.mxu0 0.0
  %758 = vmatpush2.msra.mxu0 0.0
  %759 = vmatprep.subr.mxu0 0.0
  %760 = vmatpush2.msra.mxu0 0.0
  %761 = vmatprep.subr.mxu0 0.0
  %762 = vmatpush2.msra.mxu0 0.0
  %763 = vmatprep.subr.mxu0 0.0
  %764 = vmatpush2.msra.mxu0 0.0
  %765 = vmatprep.mubr.f32.mxu0 0.0
  %766 = vmatmul.mubr.f32.gmra.mxu0 %v151
  %v767 = vpop.f32.mrf.mxu0
  %v768 = vadd.f32 %v147, %v767
  %v769 = vpop.f32.mrf.mxu0
  %v770 = vadd.f32 %v147, %v769
  %771 = vdwg.mxu0
  %772 = vmatprep.subr.mxu0 0.0
  %773 = vmatpush1.msra.mxu0 0.0
  %774 = vmatprep.subr.mxu0 0.0
  %775 = vmatpush1.msra.mxu0 0.0
  %776 = vmatprep.subr.mxu0 0.0
  %777 = vmatpush1.msra.mxu0 0.0
  %778 = vmatprep.subr.mxu0 0.0
  %779 = vmatpush1.msra.mxu0 0.0
  %780 = vmatprep.subr.mxu0 0.0
  %781 = vmatpush1.msra.mxu0 0.0
  %782 = vmatprep.subr.mxu0 0.0
  %783 = vmatpush1.msra.mxu0 0.0
  %784 = vmatprep.subr.mxu0 0.0
  %785 = vmatpush1.msra.mxu0 0.0
  %786 = vmatprep.subr.mxu0 0.0
  %787 = vmatpush1.msra.mxu0 0.0
  %788 = vmatprep.subr.mxu0 0.0
  %789 = vmatpush1.msra.mxu0 0.0
  %790 = vmatprep.subr.mxu0 0.0
  %791 = vmatpush1.msra.mxu0 0.0
  %792 = vmatprep.subr.mxu0 0.0
  %793 = vmatpush1.msra.mxu0 0.0
  %794 = vmatprep.subr.mxu0 0.0
  %795 = vmatpush1.msra.mxu0 0.0
  %796 = vmatprep.subr.mxu0 0.0
  %797 = vmatpush1.msra.mxu0 0.0
  %798 = vmatprep.subr.mxu0 0.0
  %799 = vmatpush1.msra.mxu0 0.0
  %800 = vmatprep.subr.mxu0 %v194
  %801 = vmatpush1.msra.mxu0 %v191
  %802 = vmatprep.subr.mxu0 %v28
  %803 = vmatpush1.msra.mxu0 %v27
  %804 = vmatprep.subr.mxu0 0.0
  %805 = vmatpush2.msra.mxu0 0.0
  %806 = vmatprep.subr.mxu0 0.0
  %807 = vmatpush2.msra.mxu0 0.0
  %808 = vmatprep.subr.mxu0 0.0
  %809 = vmatpush2.msra.mxu0 0.0
  %810 = vmatprep.subr.mxu0 0.0
  %811 = vmatpush2.msra.mxu0 0.0
  %812 = vmatprep.subr.mxu0 0.0
  %813 = vmatpush2.msra.mxu0 0.0
  %814 = vmatprep.subr.mxu0 0.0
  %815 = vmatpush2.msra.mxu0 0.0
  %816 = vmatprep.subr.mxu0 0.0
  %817 = vmatpush2.msra.mxu0 0.0
  %818 = vmatprep.subr.mxu0 0.0
  %819 = vmatpush2.msra.mxu0 0.0
  %820 = vmatprep.subr.mxu0 0.0
  %821 = vmatpush2.msra.mxu0 0.0
  %822 = vmatprep.subr.mxu0 0.0
  %823 = vmatpush2.msra.mxu0 0.0
  %824 = vmatprep.subr.mxu0 0.0
  %825 = vmatpush2.msra.mxu0 0.0
  %826 = vmatprep.subr.mxu0 0.0
  %827 = vmatpush2.msra.mxu0 0.0
  %828 = vmatprep.subr.mxu0 0.0
  %829 = vmatpush2.msra.mxu0 0.0
  %830 = vmatprep.subr.mxu0 0.0
  %831 = vmatpush2.msra.mxu0 0.0
  %832 = vmatprep.subr.mxu0 0.0
  %833 = vmatpush2.msra.mxu0 0.0
  %834 = vmatprep.subr.mxu0 0.0
  %835 = vmatpush2.msra.mxu0 0.0
  %836 = vmatprep.mubr.f32.mxu0 0.0
  %837 = vmatmul.mubr.f32.gmra.mxu0 %v151
  %v838 = vpop.f32.mrf.mxu0
  %v839 = vadd.f32 %v147, %v838
  %v840 = vpop.f32.mrf.mxu0
  %v841 = vadd.f32 %v147, %v840
  %842 = vdwg.mxu0
  %843 = vmatprep.subr.mxu0 0.0
  %844 = vmatpush1.msra.mxu0 0.0
  %845 = vmatprep.subr.mxu0 0.0
  %846 = vmatpush1.msra.mxu0 0.0
  %847 = vmatprep.subr.mxu0 0.0
  %848 = vmatpush1.msra.mxu0 0.0
  %849 = vmatprep.subr.mxu0 0.0
  %850 = vmatpush1.msra.mxu0 0.0
  %851 = vmatprep.subr.mxu0 0.0
  %852 = vmatpush1.msra.mxu0 0.0
  %853 = vmatprep.subr.mxu0 0.0
  %854 = vmatpush1.msra.mxu0 0.0
  %855 = vmatprep.subr.mxu0 0.0
  %856 = vmatpush1.msra.mxu0 0.0
  %857 = vmatprep.subr.mxu0 0.0
  %858 = vmatpush1.msra.mxu0 0.0
  %859 = vmatprep.subr.mxu0 0.0
  %860 = vmatpush1.msra.mxu0 0.0
  %861 = vmatprep.subr.mxu0 0.0
  %862 = vmatpush1.msra.mxu0 0.0
  %863 = vmatprep.subr.mxu0 0.0
  %864 = vmatpush1.msra.mxu0 0.0
  %865 = vmatprep.subr.mxu0 0.0
  %866 = vmatpush1.msra.mxu0 0.0
  %867 = vmatprep.subr.mxu0 0.0
  %868 = vmatpush1.msra.mxu0 0.0
  %869 = vmatprep.subr.mxu0 0.0
  %870 = vmatpush1.msra.mxu0 0.0
  %871 = vmatprep.subr.mxu0 %v200
  %872 = vmatpush1.msra.mxu0 %v197
  %873 = vmatprep.subr.mxu0 %v30
  %874 = vmatpush1.msra.mxu0 %v29
  %875 = vmatprep.subr.mxu0 0.0
  %876 = vmatpush2.msra.mxu0 0.0
  %877 = vmatprep.subr.mxu0 0.0
  %878 = vmatpush2.msra.mxu0 0.0
  %879 = vmatprep.subr.mxu0 0.0
  %880 = vmatpush2.msra.mxu0 0.0
  %881 = vmatprep.subr.mxu0 0.0
  %882 = vmatpush2.msra.mxu0 0.0
  %883 = vmatprep.subr.mxu0 0.0
  %884 = vmatpush2.msra.mxu0 0.0
  %885 = vmatprep.subr.mxu0 0.0
  %886 = vmatpush2.msra.mxu0 0.0
  %887 = vmatprep.subr.mxu0 0.0
  %888 = vmatpush2.msra.mxu0 0.0
  %889 = vmatprep.subr.mxu0 0.0
  %890 = vmatpush2.msra.mxu0 0.0
  %891 = vmatprep.subr.mxu0 0.0
  %892 = vmatpush2.msra.mxu0 0.0
  %893 = vmatprep.subr.mxu0 0.0
  %894 = vmatpush2.msra.mxu0 0.0
  %895 = vmatprep.subr.mxu0 0.0
  %896 = vmatpush2.msra.mxu0 0.0
  %897 = vmatprep.subr.mxu0 0.0
  %898 = vmatpush2.msra.mxu0 0.0
  %899 = vmatprep.subr.mxu0 0.0
  %900 = vmatpush2.msra.mxu0 0.0
  %901 = vmatprep.subr.mxu0 0.0
  %902 = vmatpush2.msra.mxu0 0.0
  %903 = vmatprep.subr.mxu0 0.0
  %904 = vmatpush2.msra.mxu0 0.0
  %905 = vmatprep.subr.mxu0 0.0
  %906 = vmatpush2.msra.mxu0 0.0
  %907 = vmatprep.mubr.f32.mxu0 0.0
  %908 = vmatmul.mubr.f32.gmra.mxu0 %v151
  %v909 = vpop.f32.mrf.mxu0
  %v910 = vadd.f32 %v147, %v909
  %v911 = vpop.f32.mrf.mxu0
  %v912 = vadd.f32 %v147, %v911
  %913 = vdwg.mxu0
  %914 = vmatprep.subr.mxu0 0.0
  %915 = vmatpush1.msra.mxu0 0.0
  %916 = vmatprep.subr.mxu0 0.0
  %917 = vmatpush1.msra.mxu0 0.0
  %918 = vmatprep.subr.mxu0 0.0
  %919 = vmatpush1.msra.mxu0 0.0
  %920 = vmatprep.subr.mxu0 0.0
  %921 = vmatpush1.msra.mxu0 0.0
  %922 = vmatprep.subr.mxu0 0.0
  %923 = vmatpush1.msra.mxu0 0.0
  %924 = vmatprep.subr.mxu0 0.0
  %925 = vmatpush1.msra.mxu0 0.0
  %926 = vmatprep.subr.mxu0 0.0
  %927 = vmatpush1.msra.mxu0 0.0
  %928 = vmatprep.subr.mxu0 0.0
  %929 = vmatpush1.msra.mxu0 0.0
  %930 = vmatprep.subr.mxu0 0.0
  %931 = vmatpush1.msra.mxu0 0.0
  %932 = vmatprep.subr.mxu0 0.0
  %933 = vmatpush1.msra.mxu0 0.0
  %934 = vmatprep.subr.mxu0 0.0
  %935 = vmatpush1.msra.mxu0 0.0
  %936 = vmatprep.subr.mxu0 0.0
  %937 = vmatpush1.msra.mxu0 0.0
  %938 = vmatprep.subr.mxu0 0.0
  %939 = vmatpush1.msra.mxu0 0.0
  %940 = vmatprep.subr.mxu0 0.0
  %941 = vmatpush1.msra.mxu0 0.0
  %942 = vmatprep.subr.mxu0 %v206
  %943 = vmatpush1.msra.mxu0 %v203
  %944 = vmatprep.subr.mxu0 %v32
  %945 = vmatpush1.msra.mxu0 %v31
  %946 = vmatprep.subr.mxu0 0.0
  %947 = vmatpush2.msra.mxu0 0.0
  %948 = vmatprep.subr.mxu0 0.0
  %949 = vmatpush2.msra.mxu0 0.0
  %950 = vmatprep.subr.mxu0 0.0
  %951 = vmatpush2.msra.mxu0 0.0
  %952 = vmatprep.subr.mxu0 0.0
  %953 = vmatpush2.msra.mxu0 0.0
  %954 = vmatprep.subr.mxu0 0.0
  %955 = vmatpush2.msra.mxu0 0.0
  %956 = vmatprep.subr.mxu0 0.0
  %957 = vmatpush2.msra.mxu0 0.0
  %958 = vmatprep.subr.mxu0 0.0
  %959 = vmatpush2.msra.mxu0 0.0
  %960 = vmatprep.subr.mxu0 0.0
  %961 = vmatpush2.msra.mxu0 0.0
  %962 = vmatprep.subr.mxu0 0.0
  %963 = vmatpush2.msra.mxu0 0.0
  %964 = vmatprep.subr.mxu0 0.0
  %965 = vmatpush2.msra.mxu0 0.0
  %966 = vmatprep.subr.mxu0 0.0
  %967 = vmatpush2.msra.mxu0 0.0
  %968 = vmatprep.subr.mxu0 0.0
  %969 = vmatpush2.msra.mxu0 0.0
  %970 = vmatprep.subr.mxu0 0.0
  %971 = vmatpush2.msra.mxu0 0.0
  %972 = vmatprep.subr.mxu0 0.0
  %973 = vmatpush2.msra.mxu0 0.0
  %974 = vmatprep.subr.mxu0 0.0
  %975 = vmatpush2.msra.mxu0 0.0
  %976 = vmatprep.subr.mxu0 0.0
  %977 = vmatpush2.msra.mxu0 0.0
  %978 = vmatprep.mubr.f32.mxu0 0.0
  %979 = vmatmul.mubr.f32.gmra.mxu0 %v151
  %v980 = vpop.f32.mrf.mxu0
  %v981 = vadd.f32 %v147, %v980
  %v982 = vpop.f32.mrf.mxu0
  %v983 = vadd.f32 %v147, %v982
  %984 = vdwg.mxu0
  %985 = vmatprep.subr.mxu0 0.0
  %986 = vmatpush1.msra.mxu0 0.0
  %987 = vmatprep.subr.mxu0 0.0
  %988 = vmatpush1.msra.mxu0 0.0
  %989 = vmatprep.subr.mxu0 0.0
  %990 = vmatpush1.msra.mxu0 0.0
  %991 = vmatprep.subr.mxu0 0.0
  %992 = vmatpush1.msra.mxu0 0.0
  %993 = vmatprep.subr.mxu0 0.0
  %994 = vmatpush1.msra.mxu0 0.0
  %995 = vmatprep.subr.mxu0 0.0
  %996 = vmatpush1.msra.mxu0 0.0
  %997 = vmatprep.subr.mxu0 0.0
  %998 = vmatpush1.msra.mxu0 0.0
  %999 = vmatprep.subr.mxu0 0.0
  %1000 = vmatpush1.msra.mxu0 0.0
  %1001 = vmatprep.subr.mxu0 0.0
  %1002 = vmatpush1.msra.mxu0 0.0
  %1003 = vmatprep.subr.mxu0 0.0
  %1004 = vmatpush1.msra.mxu0 0.0
  %1005 = vmatprep.subr.mxu0 0.0
  %1006 = vmatpush1.msra.mxu0 0.0
  %1007 = vmatprep.subr.mxu0 0.0
  %1008 = vmatpush1.msra.mxu0 0.0
  %1009 = vmatprep.subr.mxu0 0.0
  %1010 = vmatpush1.msra.mxu0 0.0
  %1011 = vmatprep.subr.mxu0 0.0
  %1012 = vmatpush1.msra.mxu0 0.0
  %1013 = vmatprep.subr.mxu0 %v212
  %1014 = vmatpush1.msra.mxu0 %v209
  %1015 = vmatprep.subr.mxu0 %v34
  %1016 = vmatpush1.msra.mxu0 %v33
  %1017 = vmatprep.subr.mxu0 0.0
  %1018 = vmatpush2.msra.mxu0 0.0
  %1019 = vmatprep.subr.mxu0 0.0
  %1020 = vmatpush2.msra.mxu0 0.0
  %1021 = vmatprep.subr.mxu0 0.0
  %1022 = vmatpush2.msra.mxu0 0.0
  %1023 = vmatprep.subr.mxu0 0.0
  %1024 = vmatpush2.msra.mxu0 0.0
  %1025 = vmatprep.subr.mxu0 0.0
  %1026 = vmatpush2.msra.mxu0 0.0
  %1027 = vmatprep.subr.mxu0 0.0
  %1028 = vmatpush2.msra.mxu0 0.0
  %1029 = vmatprep.subr.mxu0 0.0
  %1030 = vmatpush2.msra.mxu0 0.0
  %1031 = vmatprep.subr.mxu0 0.0
  %1032 = vmatpush2.msra.mxu0 0.0
  %1033 = vmatprep.subr.mxu0 0.0
  %1034 = vmatpush2.msra.mxu0 0.0
  %1035 = vmatprep.subr.mxu0 0.0
  %1036 = vmatpush2.msra.mxu0 0.0
  %1037 = vmatprep.subr.mxu0 0.0
  %1038 = vmatpush2.msra.mxu0 0.0
  %1039 = vmatprep.subr.mxu0 0.0
  %1040 = vmatpush2.msra.mxu0 0.0
  %1041 = vmatprep.subr.mxu0 0.0
  %1042 = vmatpush2.msra.mxu0 0.0
  %1043 = vmatprep.subr.mxu0 0.0
  %1044 = vmatpush2.msra.mxu0 0.0
  %1045 = vmatprep.subr.mxu0 0.0
  %1046 = vmatpush2.msra.mxu0 0.0
  %1047 = vmatprep.subr.mxu0 0.0
  %1048 = vmatpush2.msra.mxu0 0.0
  %1049 = vmatprep.mubr.f32.mxu0 0.0
  %1050 = vmatmul.mubr.f32.gmra.mxu0 %v151
  %v1051 = vpop.f32.mrf.mxu0
  %v1052 = vadd.f32 %v147, %v1051
  %v1053 = vpop.f32.mrf.mxu0
  %v1054 = vadd.f32 %v147, %v1053
  %1055 = vdwg.mxu0
  %1056 = vmatprep.subr.mxu0 0.0
  %1057 = vmatpush1.msra.mxu0 0.0
  %1058 = vmatprep.subr.mxu0 0.0
  %1059 = vmatpush1.msra.mxu0 0.0
  %1060 = vmatprep.subr.mxu0 0.0
  %1061 = vmatpush1.msra.mxu0 0.0
  %1062 = vmatprep.subr.mxu0 0.0
  %1063 = vmatpush1.msra.mxu0 0.0
  %1064 = vmatprep.subr.mxu0 0.0
  %1065 = vmatpush1.msra.mxu0 0.0
  %1066 = vmatprep.subr.mxu0 0.0
  %1067 = vmatpush1.msra.mxu0 0.0
  %1068 = vmatprep.subr.mxu0 0.0
  %1069 = vmatpush1.msra.mxu0 0.0
  %1070 = vmatprep.subr.mxu0 0.0
  %1071 = vmatpush1.msra.mxu0 0.0
  %1072 = vmatprep.subr.mxu0 0.0
  %1073 = vmatpush1.msra.mxu0 0.0
  %1074 = vmatprep.subr.mxu0 0.0
  %1075 = vmatpush1.msra.mxu0 0.0
  %1076 = vmatprep.subr.mxu0 0.0
  %1077 = vmatpush1.msra.mxu0 0.0
  %1078 = vmatprep.subr.mxu0 0.0
  %1079 = vmatpush1.msra.mxu0 0.0
  %1080 = vmatprep.subr.mxu0 0.0
  %1081 = vmatpush1.msra.mxu0 0.0
  %1082 = vmatprep.subr.mxu0 0.0
  %1083 = vmatpush1.msra.mxu0 0.0
  %1084 = vmatprep.subr.mxu0 %v218
  %1085 = vmatpush1.msra.mxu0 %v215
  %1086 = vmatprep.subr.mxu0 %v36
  %1087 = vmatpush1.msra.mxu0 %v35
  %1088 = vmatprep.subr.mxu0 0.0
  %1089 = vmatpush2.msra.mxu0 0.0
  %1090 = vmatprep.subr.mxu0 0.0
  %1091 = vmatpush2.msra.mxu0 0.0
  %1092 = vmatprep.subr.mxu0 0.0
  %1093 = vmatpush2.msra.mxu0 0.0
  %1094 = vmatprep.subr.mxu0 0.0
  %1095 = vmatpush2.msra.mxu0 0.0
  %1096 = vmatprep.subr.mxu0 0.0
  %1097 = vmatpush2.msra.mxu0 0.0
  %1098 = vmatprep.subr.mxu0 0.0
  %1099 = vmatpush2.msra.mxu0 0.0
  %1100 = vmatprep.subr.mxu0 0.0
  %1101 = vmatpush2.msra.mxu0 0.0
  %1102 = vmatprep.subr.mxu0 0.0
  %1103 = vmatpush2.msra.mxu0 0.0
  %1104 = vmatprep.subr.mxu0 0.0
  %1105 = vmatpush2.msra.mxu0 0.0
  %1106 = vmatprep.subr.mxu0 0.0
  %1107 = vmatpush2.msra.mxu0 0.0
  %1108 = vmatprep.subr.mxu0 0.0
  %1109 = vmatpush2.msra.mxu0 0.0
  %1110 = vmatprep.subr.mxu0 0.0
  %1111 = vmatpush2.msra.mxu0 0.0
  %1112 = vmatprep.subr.mxu0 0.0
  %1113 = vmatpush2.msra.mxu0 0.0
  %1114 = vmatprep.subr.mxu0 0.0
  %1115 = vmatpush2.msra.mxu0 0.0
  %1116 = vmatprep.subr.mxu0 0.0
  %1117 = vmatpush2.msra.mxu0 0.0
  %1118 = vmatprep.subr.mxu0 0.0
  %1119 = vmatpush2.msra.mxu0 0.0
  %1120 = vmatprep.mubr.f32.mxu0 0.0
  %1121 = vmatmul.mubr.f32.gmra.mxu0 %v151
  %v1122 = vpop.f32.mrf.mxu0
  %v1123 = vadd.f32 %v147, %v1122
  %v1124 = vpop.f32.mrf.mxu0
  %v1125 = vadd.f32 %v147, %v1124
  %1126 = vdwg.mxu0
  %1127 = vmatprep.subr.mxu0 0.0
  %1128 = vmatpush1.msra.mxu0 0.0
  %1129 = vmatprep.subr.mxu0 0.0
  %1130 = vmatpush1.msra.mxu0 0.0
  %1131 = vmatprep.subr.mxu0 0.0
  %1132 = vmatpush1.msra.mxu0 0.0
  %1133 = vmatprep.subr.mxu0 0.0
  %1134 = vmatpush1.msra.mxu0 0.0
  %1135 = vmatprep.subr.mxu0 0.0
  %1136 = vmatpush1.msra.mxu0 0.0
  %1137 = vmatprep.subr.mxu0 0.0
  %1138 = vmatpush1.msra.mxu0 0.0
  %1139 = vmatprep.subr.mxu0 0.0
  %1140 = vmatpush1.msra.mxu0 0.0
  %1141 = vmatprep.subr.mxu0 0.0
  %1142 = vmatpush1.msra.mxu0 0.0
  %1143 = vmatprep.subr.mxu0 0.0
  %1144 = vmatpush1.msra.mxu0 0.0
  %1145 = vmatprep.subr.mxu0 0.0
  %1146 = vmatpush1.msra.mxu0 0.0
  %1147 = vmatprep.subr.mxu0 0.0
  %1148 = vmatpush1.msra.mxu0 0.0
  %1149 = vmatprep.subr.mxu0 0.0
  %1150 = vmatpush1.msra.mxu0 0.0
  %1151 = vmatprep.subr.mxu0 0.0
  %1152 = vmatpush1.msra.mxu0 0.0
  %1153 = vmatprep.subr.mxu0 0.0
  %1154 = vmatpush1.msra.mxu0 0.0
  %1155 = vmatprep.subr.mxu0 %v224
  %1156 = vmatpush1.msra.mxu0 %v221
  %1157 = vmatprep.subr.mxu0 %v38
  %1158 = vmatpush1.msra.mxu0 %v37
  %1159 = vmatprep.subr.mxu0 0.0
  %1160 = vmatpush2.msra.mxu0 0.0
  %1161 = vmatprep.subr.mxu0 0.0
  %1162 = vmatpush2.msra.mxu0 0.0
  %1163 = vmatprep.subr.mxu0 0.0
  %1164 = vmatpush2.msra.mxu0 0.0
  %1165 = vmatprep.subr.mxu0 0.0
  %1166 = vmatpush2.msra.mxu0 0.0
  %1167 = vmatprep.subr.mxu0 0.0
  %1168 = vmatpush2.msra.mxu0 0.0
  %1169 = vmatprep.subr.mxu0 0.0
  %1170 = vmatpush2.msra.mxu0 0.0
  %1171 = vmatprep.subr.mxu0 0.0
  %1172 = vmatpush2.msra.mxu0 0.0
  %1173 = vmatprep.subr.mxu0 0.0
  %1174 = vmatpush2.msra.mxu0 0.0
  %1175 = vmatprep.subr.mxu0 0.0
  %1176 = vmatpush2.msra.mxu0 0.0
  %1177 = vmatprep.subr.mxu0 0.0
  %1178 = vmatpush2.msra.mxu0 0.0
  %1179 = vmatprep.subr.mxu0 0.0
  %1180 = vmatpush2.msra.mxu0 0.0
  %1181 = vmatprep.subr.mxu0 0.0
  %1182 = vmatpush2.msra.mxu0 0.0
  %1183 = vmatprep.subr.mxu0 0.0
  %1184 = vmatpush2.msra.mxu0 0.0
  %1185 = vmatprep.subr.mxu0 0.0
  %1186 = vmatpush2.msra.mxu0 0.0
  %1187 = vmatprep.subr.mxu0 0.0
  %1188 = vmatpush2.msra.mxu0 0.0
  %1189 = vmatprep.subr.mxu0 0.0
  %1190 = vmatpush2.msra.mxu0 0.0
  %1191 = vmatprep.mubr.f32.mxu0 0.0
  %1192 = vmatmul.mubr.f32.gmra.mxu0 %v151
  %v1193 = vpop.f32.mrf.mxu0
  %v1194 = vadd.f32 %v147, %v1193
  %v1195 = vpop.f32.mrf.mxu0
  %v1196 = vadd.f32 %v147, %v1195
  %1197 = vdwg.mxu0
  %1198 = vmatprep.subr.mxu0 0.0
  %1199 = vmatpush1.msra.mxu0 0.0
  %1200 = vmatprep.subr.mxu0 0.0
  %1201 = vmatpush1.msra.mxu0 0.0
  %1202 = vmatprep.subr.mxu0 0.0
  %1203 = vmatpush1.msra.mxu0 0.0
  %1204 = vmatprep.subr.mxu0 0.0
  %1205 = vmatpush1.msra.mxu0 0.0
  %1206 = vmatprep.subr.mxu0 0.0
  %1207 = vmatpush1.msra.mxu0 0.0
  %1208 = vmatprep.subr.mxu0 0.0
  %1209 = vmatpush1.msra.mxu0 0.0
  %1210 = vmatprep.subr.mxu0 0.0
  %1211 = vmatpush1.msra.mxu0 0.0
  %1212 = vmatprep.subr.mxu0 0.0
  %1213 = vmatpush1.msra.mxu0 0.0
  %1214 = vmatprep.subr.mxu0 0.0
  %1215 = vmatpush1.msra.mxu0 0.0
  %1216 = vmatprep.subr.mxu0 0.0
  %1217 = vmatpush1.msra.mxu0 0.0
  %1218 = vmatprep.subr.mxu0 0.0
  %1219 = vmatpush1.msra.mxu0 0.0
  %1220 = vmatprep.subr.mxu0 0.0
  %1221 = vmatpush1.msra.mxu0 0.0
  %1222 = vmatprep.subr.mxu0 0.0
  %1223 = vmatpush1.msra.mxu0 0.0
  %1224 = vmatprep.subr.mxu0 0.0
  %1225 = vmatpush1.msra.mxu0 0.0
  %1226 = vmatprep.subr.mxu0 %v230
  %1227 = vmatpush1.msra.mxu0 %v227
  %1228 = vmatprep.subr.mxu0 %v40
  %1229 = vmatpush1.msra.mxu0 %v39
  %1230 = vmatprep.subr.mxu0 0.0
  %1231 = vmatpush2.msra.mxu0 0.0
  %1232 = vmatprep.subr.mxu0 0.0
  %1233 = vmatpush2.msra.mxu0 0.0
  %1234 = vmatprep.subr.mxu0 0.0
  %1235 = vmatpush2.msra.mxu0 0.0
  %1236 = vmatprep.subr.mxu0 0.0
  %1237 = vmatpush2.msra.mxu0 0.0
  %1238 = vmatprep.subr.mxu0 0.0
  %1239 = vmatpush2.msra.mxu0 0.0
  %1240 = vmatprep.subr.mxu0 0.0
  %1241 = vmatpush2.msra.mxu0 0.0
  %1242 = vmatprep.subr.mxu0 0.0
  %1243 = vmatpush2.msra.mxu0 0.0
  %1244 = vmatprep.subr.mxu0 0.0
  %1245 = vmatpush2.msra.mxu0 0.0
  %1246 = vmatprep.subr.mxu0 0.0
  %1247 = vmatpush2.msra.mxu0 0.0
  %1248 = vmatprep.subr.mxu0 0.0
  %1249 = vmatpush2.msra.mxu0 0.0
  %1250 = vmatprep.subr.mxu0 0.0
  %1251 = vmatpush2.msra.mxu0 0.0
  %1252 = vmatprep.subr.mxu0 0.0
  %1253 = vmatpush2.msra.mxu0 0.0
  %1254 = vmatprep.subr.mxu0 0.0
  %1255 = vmatpush2.msra.mxu0 0.0
  %1256 = vmatprep.subr.mxu0 0.0
  %1257 = vmatpush2.msra.mxu0 0.0
  %1258 = vmatprep.subr.mxu0 0.0
  %1259 = vmatpush2.msra.mxu0 0.0
  %1260 = vmatprep.subr.mxu0 0.0
  %1261 = vmatpush2.msra.mxu0 0.0
  %1262 = vmatprep.mubr.f32.mxu0 0.0
  %1263 = vmatmul.mubr.f32.gmra.mxu0 %v151
  %v1264 = vpop.f32.mrf.mxu0
  %v1265 = vadd.f32 %v147, %v1264
  %v1266 = vpop.f32.mrf.mxu0
  %v1267 = vadd.f32 %v147, %v1266
  %1268 = vdwg.mxu0
  %1269 = vmatprep.subr.mxu0 0.0
  %1270 = vmatpush1.msra.mxu0 0.0
  %1271 = vmatprep.subr.mxu0 0.0
  %1272 = vmatpush1.msra.mxu0 0.0
  %1273 = vmatprep.subr.mxu0 0.0
  %1274 = vmatpush1.msra.mxu0 0.0
  %1275 = vmatprep.subr.mxu0 0.0
  %1276 = vmatpush1.msra.mxu0 0.0
  %1277 = vmatprep.subr.mxu0 0.0
  %1278 = vmatpush1.msra.mxu0 0.0
  %1279 = vmatprep.subr.mxu0 0.0
  %1280 = vmatpush1.msra.mxu0 0.0
  %1281 = vmatprep.subr.mxu0 0.0
  %1282 = vmatpush1.msra.mxu0 0.0
  %1283 = vmatprep.subr.mxu0 0.0
  %1284 = vmatpush1.msra.mxu0 0.0
  %1285 = vmatprep.subr.mxu0 0.0
  %1286 = vmatpush1.msra.mxu0 0.0
  %1287 = vmatprep.subr.mxu0 0.0
  %1288 = vmatpush1.msra.mxu0 0.0
  %1289 = vmatprep.subr.mxu0 0.0
  %1290 = vmatpush1.msra.mxu0 0.0
  %1291 = vmatprep.subr.mxu0 0.0
  %1292 = vmatpush1.msra.mxu0 0.0
  %1293 = vmatprep.subr.mxu0 0.0
  %1294 = vmatpush1.msra.mxu0 0.0
  %1295 = vmatprep.subr.mxu0 0.0
  %1296 = vmatpush1.msra.mxu0 0.0
  %1297 = vmatprep.subr.mxu0 %v236
  %1298 = vmatpush1.msra.mxu0 %v233
  %1299 = vmatprep.subr.mxu0 %v42
  %1300 = vmatpush1.msra.mxu0 %v41
  %1301 = vmatprep.subr.mxu0 0.0
  %1302 = vmatpush2.msra.mxu0 0.0
  %1303 = vmatprep.subr.mxu0 0.0
  %1304 = vmatpush2.msra.mxu0 0.0
  %1305 = vmatprep.subr.mxu0 0.0
  %1306 = vmatpush2.msra.mxu0 0.0
  %1307 = vmatprep.subr.mxu0 0.0
  %1308 = vmatpush2.msra.mxu0 0.0
  %1309 = vmatprep.subr.mxu0 0.0
  %1310 = vmatpush2.msra.mxu0 0.0
  %1311 = vmatprep.subr.mxu0 0.0
  %1312 = vmatpush2.msra.mxu0 0.0
  %1313 = vmatprep.subr.mxu0 0.0
  %1314 = vmatpush2.msra.mxu0 0.0
  %1315 = vmatprep.subr.mxu0 0.0
  %1316 = vmatpush2.msra.mxu0 0.0
  %1317 = vmatprep.subr.mxu0 0.0
  %1318 = vmatpush2.msra.mxu0 0.0
  %1319 = vmatprep.subr.mxu0 0.0
  %1320 = vmatpush2.msra.mxu0 0.0
  %1321 = vmatprep.subr.mxu0 0.0
  %1322 = vmatpush2.msra.mxu0 0.0
  %1323 = vmatprep.subr.mxu0 0.0
  %1324 = vmatpush2.msra.mxu0 0.0
  %1325 = vmatprep.subr.mxu0 0.0
  %1326 = vmatpush2.msra.mxu0 0.0
  %1327 = vmatprep.subr.mxu0 0.0
  %1328 = vmatpush2.msra.mxu0 0.0
  %1329 = vmatprep.subr.mxu0 0.0
  %1330 = vmatpush2.msra.mxu0 0.0
  %1331 = vmatprep.subr.mxu0 0.0
  %1332 = vmatpush2.msra.mxu0 0.0
  %1333 = vmatprep.mubr.f32.mxu0 0.0
  %1334 = vmatmul.mubr.f32.gmra.mxu0 %v151
  %v1335 = vpop.f32.mrf.mxu0
  %v1336 = vadd.f32 %v147, %v1335
  %v1337 = vpop.f32.mrf.mxu0
  %v1338 = vadd.f32 %v147, %v1337
  %1339 = vdwg.mxu0
  %1340 = vmatprep.subr.mxu0 0.0
  %1341 = vmatpush1.msra.mxu0 0.0
  %1342 = vmatprep.subr.mxu0 0.0
  %1343 = vmatpush1.msra.mxu0 0.0
  %1344 = vmatprep.subr.mxu0 0.0
  %1345 = vmatpush1.msra.mxu0 0.0
  %1346 = vmatprep.subr.mxu0 0.0
  %1347 = vmatpush1.msra.mxu0 0.0
  %1348 = vmatprep.subr.mxu0 0.0
  %1349 = vmatpush1.msra.mxu0 0.0
  %1350 = vmatprep.subr.mxu0 0.0
  %1351 = vmatpush1.msra.mxu0 0.0
  %1352 = vmatprep.subr.mxu0 0.0
  %1353 = vmatpush1.msra.mxu0 0.0
  %1354 = vmatprep.subr.mxu0 0.0
  %1355 = vmatpush1.msra.mxu0 0.0
  %1356 = vmatprep.subr.mxu0 0.0
  %1357 = vmatpush1.msra.mxu0 0.0
  %1358 = vmatprep.subr.mxu0 0.0
  %1359 = vmatpush1.msra.mxu0 0.0
  %1360 = vmatprep.subr.mxu0 0.0
  %1361 = vmatpush1.msra.mxu0 0.0
  %1362 = vmatprep.subr.mxu0 0.0
  %1363 = vmatpush1.msra.mxu0 0.0
  %1364 = vmatprep.subr.mxu0 0.0
  %1365 = vmatpush1.msra.mxu0 0.0
  %1366 = vmatprep.subr.mxu0 0.0
  %1367 = vmatpush1.msra.mxu0 0.0
  %1368 = vmatprep.subr.mxu0 %v242
  %1369 = vmatpush1.msra.mxu0 %v239
  %1370 = vmatprep.subr.mxu0 %v44
  %1371 = vmatpush1.msra.mxu0 %v43
  %1372 = vmatprep.subr.mxu0 0.0
  %1373 = vmatpush2.msra.mxu0 0.0
  %1374 = vmatprep.subr.mxu0 0.0
  %1375 = vmatpush2.msra.mxu0 0.0
  %1376 = vmatprep.subr.mxu0 0.0
  %1377 = vmatpush2.msra.mxu0 0.0
  %1378 = vmatprep.subr.mxu0 0.0
  %1379 = vmatpush2.msra.mxu0 0.0
  %1380 = vmatprep.subr.mxu0 0.0
  %1381 = vmatpush2.msra.mxu0 0.0
  %1382 = vmatprep.subr.mxu0 0.0
  %1383 = vmatpush2.msra.mxu0 0.0
  %1384 = vmatprep.subr.mxu0 0.0
  %1385 = vmatpush2.msra.mxu0 0.0
  %1386 = vmatprep.subr.mxu0 0.0
  %1387 = vmatpush2.msra.mxu0 0.0
  %1388 = vmatprep.subr.mxu0 0.0
  %1389 = vmatpush2.msra.mxu0 0.0
  %1390 = vmatprep.subr.mxu0 0.0
  %1391 = vmatpush2.msra.mxu0 0.0
  %1392 = vmatprep.subr.mxu0 0.0
  %1393 = vmatpush2.msra.mxu0 0.0
  %1394 = vmatprep.subr.mxu0 0.0
  %1395 = vmatpush2.msra.mxu0 0.0
  %1396 = vmatprep.subr.mxu0 0.0
  %1397 = vmatpush2.msra.mxu0 0.0
  %1398 = vmatprep.subr.mxu0 0.0
  %1399 = vmatpush2.msra.mxu0 0.0
  %1400 = vmatprep.subr.mxu0 0.0
  %1401 = vmatpush2.msra.mxu0 0.0
  %1402 = vmatprep.subr.mxu0 0.0
  %1403 = vmatpush2.msra.mxu0 0.0
  %1404 = vmatprep.mubr.f32.mxu0 0.0
  %1405 = vmatmul.mubr.f32.gmra.mxu0 %v151
  %v1406 = vpop.f32.mrf.mxu0
  %v1407 = vadd.f32 %v147, %v1406
  %v1408 = vpop.f32.mrf.mxu0
  %v1409 = vadd.f32 %v147, %v1408
  %1410 = vdwg.mxu0
  %1411 = vmatprep.subr.mxu0 0.0
  %1412 = vmatpush1.msra.mxu0 0.0
  %1413 = vmatprep.subr.mxu0 0.0
  %1414 = vmatpush1.msra.mxu0 0.0
  %1415 = vmatprep.subr.mxu0 0.0
  %1416 = vmatpush1.msra.mxu0 0.0
  %1417 = vmatprep.subr.mxu0 0.0
  %1418 = vmatpush1.msra.mxu0 0.0
  %1419 = vmatprep.subr.mxu0 0.0
  %1420 = vmatpush1.msra.mxu0 0.0
  %1421 = vmatprep.subr.mxu0 0.0
  %1422 = vmatpush1.msra.mxu0 0.0
  %1423 = vmatprep.subr.mxu0 0.0
  %1424 = vmatpush1.msra.mxu0 0.0
  %1425 = vmatprep.subr.mxu0 0.0
  %1426 = vmatpush1.msra.mxu0 0.0
  %1427 = vmatprep.subr.mxu0 0.0
  %1428 = vmatpush1.msra.mxu0 0.0
  %1429 = vmatprep.subr.mxu0 0.0
  %1430 = vmatpush1.msra.mxu0 0.0
  %1431 = vmatprep.subr.mxu0 0.0
  %1432 = vmatpush1.msra.mxu0 0.0
  %1433 = vmatprep.subr.mxu0 0.0
  %1434 = vmatpush1.msra.mxu0 0.0
  %1435 = vmatprep.subr.mxu0 0.0
  %1436 = vmatpush1.msra.mxu0 0.0
  %1437 = vmatprep.subr.mxu0 0.0
  %1438 = vmatpush1.msra.mxu0 0.0
  %1439 = vmatprep.subr.mxu0 %v248
  %1440 = vmatpush1.msra.mxu0 %v245
  %1441 = vmatprep.subr.mxu0 %v46
  %1442 = vmatpush1.msra.mxu0 %v45
  %1443 = vmatprep.subr.mxu0 0.0
  %1444 = vmatpush2.msra.mxu0 0.0
  %1445 = vmatprep.subr.mxu0 0.0
  %1446 = vmatpush2.msra.mxu0 0.0
  %1447 = vmatprep.subr.mxu0 0.0
  %1448 = vmatpush2.msra.mxu0 0.0
  %1449 = vmatprep.subr.mxu0 0.0
  %1450 = vmatpush2.msra.mxu0 0.0
  %1451 = vmatprep.subr.mxu0 0.0
  %1452 = vmatpush2.msra.mxu0 0.0
  %1453 = vmatprep.subr.mxu0 0.0
  %1454 = vmatpush2.msra.mxu0 0.0
  %1455 = vmatprep.subr.mxu0 0.0
  %1456 = vmatpush2.msra.mxu0 0.0
  %1457 = vmatprep.subr.mxu0 0.0
  %1458 = vmatpush2.msra.mxu0 0.0
  %1459 = vmatprep.subr.mxu0 0.0
  %1460 = vmatpush2.msra.mxu0 0.0
  %1461 = vmatprep.subr.mxu0 0.0
  %1462 = vmatpush2.msra.mxu0 0.0
  %1463 = vmatprep.subr.mxu0 0.0
  %1464 = vmatpush2.msra.mxu0 0.0
  %1465 = vmatprep.subr.mxu0 0.0
  %1466 = vmatpush2.msra.mxu0 0.0
  %1467 = vmatprep.subr.mxu0 0.0
  %1468 = vmatpush2.msra.mxu0 0.0
  %1469 = vmatprep.subr.mxu0 0.0
  %1470 = vmatpush2.msra.mxu0 0.0
  %1471 = vmatprep.subr.mxu0 0.0
  %1472 = vmatpush2.msra.mxu0 0.0
  %1473 = vmatprep.subr.mxu0 0.0
  %1474 = vmatpush2.msra.mxu0 0.0
  %1475 = vmatprep.mubr.f32.mxu0 0.0
  %1476 = vmatmul.mubr.f32.gmra.mxu0 %v151
  %v1477 = vpop.f32.mrf.mxu0
  %v1478 = vadd.f32 %v147, %v1477
  %v1479 = vpop.f32.mrf.mxu0
  %v1480 = vadd.f32 %v147, %v1479
  %1481 = vdwg.mxu0
  %1482 = vmatprep.subr.mxu0 0.0
  %1483 = vmatpush1.msra.mxu0 0.0
  %1484 = vmatprep.subr.mxu0 0.0
  %1485 = vmatpush1.msra.mxu0 0.0
  %1486 = vmatprep.subr.mxu0 0.0
  %1487 = vmatpush1.msra.mxu0 0.0
  %1488 = vmatprep.subr.mxu0 0.0
  %1489 = vmatpush1.msra.mxu0 0.0
  %1490 = vmatprep.subr.mxu0 0.0
  %1491 = vmatpush1.msra.mxu0 0.0
  %1492 = vmatprep.subr.mxu0 0.0
  %1493 = vmatpush1.msra.mxu0 0.0
  %1494 = vmatprep.subr.mxu0 0.0
  %1495 = vmatpush1.msra.mxu0 0.0
  %1496 = vmatprep.subr.mxu0 0.0
  %1497 = vmatpush1.msra.mxu0 0.0
  %1498 = vmatprep.subr.mxu0 0.0
  %1499 = vmatpush1.msra.mxu0 0.0
  %1500 = vmatprep.subr.mxu0 0.0
  %1501 = vmatpush1.msra.mxu0 0.0
  %1502 = vmatprep.subr.mxu0 0.0
  %1503 = vmatpush1.msra.mxu0 0.0
  %1504 = vmatprep.subr.mxu0 0.0
  %1505 = vmatpush1.msra.mxu0 0.0
  %1506 = vmatprep.subr.mxu0 0.0
  %1507 = vmatpush1.msra.mxu0 0.0
  %1508 = vmatprep.subr.mxu0 0.0
  %1509 = vmatpush1.msra.mxu0 0.0
  %1510 = vmatprep.subr.mxu0 %v254
  %1511 = vmatpush1.msra.mxu0 %v251
  %1512 = vmatprep.subr.mxu0 %v48
  %1513 = vmatpush1.msra.mxu0 %v47
  %1514 = vmatprep.subr.mxu0 0.0
  %1515 = vmatpush2.msra.mxu0 0.0
  %1516 = vmatprep.subr.mxu0 0.0
  %1517 = vmatpush2.msra.mxu0 0.0
  %1518 = vmatprep.subr.mxu0 0.0
  %1519 = vmatpush2.msra.mxu0 0.0
  %1520 = vmatprep.subr.mxu0 0.0
  %1521 = vmatpush2.msra.mxu0 0.0
  %1522 = vmatprep.subr.mxu0 0.0
  %1523 = vmatpush2.msra.mxu0 0.0
  %1524 = vmatprep.subr.mxu0 0.0
  %1525 = vmatpush2.msra.mxu0 0.0
  %1526 = vmatprep.subr.mxu0 0.0
  %1527 = vmatpush2.msra.mxu0 0.0
  %1528 = vmatprep.subr.mxu0 0.0
  %1529 = vmatpush2.msra.mxu0 0.0
  %1530 = vmatprep.subr.mxu0 0.0
  %1531 = vmatpush2.msra.mxu0 0.0
  %1532 = vmatprep.subr.mxu0 0.0
  %1533 = vmatpush2.msra.mxu0 0.0
  %1534 = vmatprep.subr.mxu0 0.0
  %1535 = vmatpush2.msra.mxu0 0.0
  %1536 = vmatprep.subr.mxu0 0.0
  %1537 = vmatpush2.msra.mxu0 0.0
  %1538 = vmatprep.subr.mxu0 0.0
  %1539 = vmatpush2.msra.mxu0 0.0
  %1540 = vmatprep.subr.mxu0 0.0
  %1541 = vmatpush2.msra.mxu0 0.0
  %1542 = vmatprep.subr.mxu0 0.0
  %1543 = vmatpush2.msra.mxu0 0.0
  %1544 = vmatprep.subr.mxu0 0.0
  %1545 = vmatpush2.msra.mxu0 0.0
  %1546 = vmatprep.mubr.f32.mxu0 0.0
  %1547 = vmatmul.mubr.f32.gmra.mxu0 %v151
  %v1548 = vpop.f32.mrf.mxu0
  %v1549 = vadd.f32 %v147, %v1548
  %v1550 = vpop.f32.mrf.mxu0
  %v1551 = vadd.f32 %v147, %v1550
  %1552 = vdwg.mxu0
  %1553 = vmatprep.subr.mxu0 0.0
  %1554 = vmatpush1.msra.mxu0 0.0
  %1555 = vmatprep.subr.mxu0 0.0
  %1556 = vmatpush1.msra.mxu0 0.0
  %1557 = vmatprep.subr.mxu0 0.0
  %1558 = vmatpush1.msra.mxu0 0.0
  %1559 = vmatprep.subr.mxu0 0.0
  %1560 = vmatpush1.msra.mxu0 0.0
  %1561 = vmatprep.subr.mxu0 0.0
  %1562 = vmatpush1.msra.mxu0 0.0
  %1563 = vmatprep.subr.mxu0 0.0
  %1564 = vmatpush1.msra.mxu0 0.0
  %1565 = vmatprep.subr.mxu0 0.0
  %1566 = vmatpush1.msra.mxu0 0.0
  %1567 = vmatprep.subr.mxu0 0.0
  %1568 = vmatpush1.msra.mxu0 0.0
  %1569 = vmatprep.subr.mxu0 0.0
  %1570 = vmatpush1.msra.mxu0 0.0
  %1571 = vmatprep.subr.mxu0 0.0
  %1572 = vmatpush1.msra.mxu0 0.0
  %1573 = vmatprep.subr.mxu0 0.0
  %1574 = vmatpush1.msra.mxu0 0.0
  %1575 = vmatprep.subr.mxu0 0.0
  %1576 = vmatpush1.msra.mxu0 0.0
  %1577 = vmatprep.subr.mxu0 0.0
  %1578 = vmatpush1.msra.mxu0 0.0
  %1579 = vmatprep.subr.mxu0 0.0
  %1580 = vmatpush1.msra.mxu0 0.0
  %1581 = vmatprep.subr.mxu0 %v260
  %1582 = vmatpush1.msra.mxu0 %v257
  %1583 = vmatprep.subr.mxu0 %v50
  %1584 = vmatpush1.msra.mxu0 %v49
  %1585 = vmatprep.subr.mxu0 0.0
  %1586 = vmatpush2.msra.mxu0 0.0
  %1587 = vmatprep.subr.mxu0 0.0
  %1588 = vmatpush2.msra.mxu0 0.0
  %1589 = vmatprep.subr.mxu0 0.0
  %1590 = vmatpush2.msra.mxu0 0.0
  %1591 = vmatprep.subr.mxu0 0.0
  %1592 = vmatpush2.msra.mxu0 0.0
  %1593 = vmatprep.subr.mxu0 0.0
  %1594 = vmatpush2.msra.mxu0 0.0
  %1595 = vmatprep.subr.mxu0 0.0
  %1596 = vmatpush2.msra.mxu0 0.0
  %1597 = vmatprep.subr.mxu0 0.0
  %1598 = vmatpush2.msra.mxu0 0.0
  %1599 = vmatprep.subr.mxu0 0.0
  %1600 = vmatpush2.msra.mxu0 0.0
  %1601 = vmatprep.subr.mxu0 0.0
  %1602 = vmatpush2.msra.mxu0 0.0
  %1603 = vmatprep.subr.mxu0 0.0
  %1604 = vmatpush2.msra.mxu0 0.0
  %1605 = vmatprep.subr.mxu0 0.0
  %1606 = vmatpush2.msra.mxu0 0.0
  %1607 = vmatprep.subr.mxu0 0.0
  %1608 = vmatpush2.msra.mxu0 0.0
  %1609 = vmatprep.subr.mxu0 0.0
  %1610 = vmatpush2.msra.mxu0 0.0
  %1611 = vmatprep.subr.mxu0 0.0
  %1612 = vmatpush2.msra.mxu0 0.0
  %1613 = vmatprep.subr.mxu0 0.0
  %1614 = vmatpush2.msra.mxu0 0.0
  %1615 = vmatprep.subr.mxu0 0.0
  %1616 = vmatpush2.msra.mxu0 0.0
  %1617 = vmatprep.mubr.f32.mxu0 0.0
  %1618 = vmatmul.mubr.f32.gmra.mxu0 %v151
  %v1619 = vpop.f32.mrf.mxu0
  %v1620 = vadd.f32 %v147, %v1619
  %v1621 = vpop.f32.mrf.mxu0
  %v1622 = vadd.f32 %v147, %v1621
  %1623 = vdwg.mxu0
  %1624 = vmatprep.subr.mxu0 0.0
  %1625 = vmatpush1.msra.mxu0 0.0
  %1626 = vmatprep.subr.mxu0 0.0
  %1627 = vmatpush1.msra.mxu0 0.0
  %1628 = vmatprep.subr.mxu0 0.0
  %1629 = vmatpush1.msra.mxu0 0.0
  %1630 = vmatprep.subr.mxu0 0.0
  %1631 = vmatpush1.msra.mxu0 0.0
  %1632 = vmatprep.subr.mxu0 0.0
  %1633 = vmatpush1.msra.mxu0 0.0
  %1634 = vmatprep.subr.mxu0 0.0
  %1635 = vmatpush1.msra.mxu0 0.0
  %1636 = vmatprep.subr.mxu0 0.0
  %1637 = vmatpush1.msra.mxu0 0.0
  %1638 = vmatprep.subr.mxu0 0.0
  %1639 = vmatpush1.msra.mxu0 0.0
  %1640 = vmatprep.subr.mxu0 0.0
  %1641 = vmatpush1.msra.mxu0 0.0
  %1642 = vmatprep.subr.mxu0 0.0
  %1643 = vmatpush1.msra.mxu0 0.0
  %1644 = vmatprep.subr.mxu0 0.0
  %1645 = vmatpush1.msra.mxu0 0.0
  %1646 = vmatprep.subr.mxu0 0.0
  %1647 = vmatpush1.msra.mxu0 0.0
  %1648 = vmatprep.subr.mxu0 0.0
  %1649 = vmatpush1.msra.mxu0 0.0
  %1650 = vmatprep.subr.mxu0 0.0
  %1651 = vmatpush1.msra.mxu0 0.0
  %1652 = vmatprep.subr.mxu0 %v266
  %1653 = vmatpush1.msra.mxu0 %v263
  %1654 = vmatprep.subr.mxu0 %v52
  %1655 = vmatpush1.msra.mxu0 %v51
  %1656 = vmatprep.subr.mxu0 0.0
  %1657 = vmatpush2.msra.mxu0 0.0
  %1658 = vmatprep.subr.mxu0 0.0
  %1659 = vmatpush2.msra.mxu0 0.0
  %1660 = vmatprep.subr.mxu0 0.0
  %1661 = vmatpush2.msra.mxu0 0.0
  %1662 = vmatprep.subr.mxu0 0.0
  %1663 = vmatpush2.msra.mxu0 0.0
  %1664 = vmatprep.subr.mxu0 0.0
  %1665 = vmatpush2.msra.mxu0 0.0
  %1666 = vmatprep.subr.mxu0 0.0
  %1667 = vmatpush2.msra.mxu0 0.0
  %1668 = vmatprep.subr.mxu0 0.0
  %1669 = vmatpush2.msra.mxu0 0.0
  %1670 = vmatprep.subr.mxu0 0.0
  %1671 = vmatpush2.msra.mxu0 0.0
  %1672 = vmatprep.subr.mxu0 0.0
  %1673 = vmatpush2.msra.mxu0 0.0
  %1674 = vmatprep.subr.mxu0 0.0
  %1675 = vmatpush2.msra.mxu0 0.0
  %1676 = vmatprep.subr.mxu0 0.0
  %1677 = vmatpush2.msra.mxu0 0.0
  %1678 = vmatprep.subr.mxu0 0.0
  %1679 = vmatpush2.msra.mxu0 0.0
  %1680 = vmatprep.subr.mxu0 0.0
  %1681 = vmatpush2.msra.mxu0 0.0
  %1682 = vmatprep.subr.mxu0 0.0
  %1683 = vmatpush2.msra.mxu0 0.0
  %1684 = vmatprep.subr.mxu0 0.0
  %1685 = vmatpush2.msra.mxu0 0.0
  %1686 = vmatprep.subr.mxu0 0.0
  %1687 = vmatpush2.msra.mxu0 0.0
  %1688 = vmatprep.mubr.f32.mxu0 0.0
  %1689 = vmatmul.mubr.f32.gmra.mxu0 %v151
  %v1690 = vpop.f32.mrf.mxu0
  %v1691 = vadd.f32 %v147, %v1690
  %v1692 = vpop.f32.mrf.mxu0
  %v1693 = vadd.f32 %v147, %v1692
  %1694 = vdwg.mxu0
  %1695 = vmatprep.subr.mxu0 0.0
  %1696 = vmatpush1.msra.mxu0 0.0
  %1697 = vmatprep.subr.mxu0 0.0
  %1698 = vmatpush1.msra.mxu0 0.0
  %1699 = vmatprep.subr.mxu0 0.0
  %1700 = vmatpush1.msra.mxu0 0.0
  %1701 = vmatprep.subr.mxu0 0.0
  %1702 = vmatpush1.msra.mxu0 0.0
  %1703 = vmatprep.subr.mxu0 0.0
  %1704 = vmatpush1.msra.mxu0 0.0
  %1705 = vmatprep.subr.mxu0 0.0
  %1706 = vmatpush1.msra.mxu0 0.0
  %1707 = vmatprep.subr.mxu0 0.0
  %1708 = vmatpush1.msra.mxu0 0.0
  %1709 = vmatprep.subr.mxu0 0.0
  %1710 = vmatpush1.msra.mxu0 0.0
  %1711 = vmatprep.subr.mxu0 0.0
  %1712 = vmatpush1.msra.mxu0 0.0
  %1713 = vmatprep.subr.mxu0 0.0
  %1714 = vmatpush1.msra.mxu0 0.0
  %1715 = vmatprep.subr.mxu0 0.0
  %1716 = vmatpush1.msra.mxu0 0.0
  %1717 = vmatprep.subr.mxu0 0.0
  %1718 = vmatpush1.msra.mxu0 0.0
  %1719 = vmatprep.subr.mxu0 0.0
  %1720 = vmatpush1.msra.mxu0 0.0
  %1721 = vmatprep.subr.mxu0 0.0
  %1722 = vmatpush1.msra.mxu0 0.0
  %1723 = vmatprep.subr.mxu0 %v272
  %1724 = vmatpush1.msra.mxu0 %v269
  %1725 = vmatprep.subr.mxu0 %v54
  %1726 = vmatpush1.msra.mxu0 %v53
  %1727 = vmatprep.subr.mxu0 0.0
  %1728 = vmatpush2.msra.mxu0 0.0
  %1729 = vmatprep.subr.mxu0 0.0
  %1730 = vmatpush2.msra.mxu0 0.0
  %1731 = vmatprep.subr.mxu0 0.0
  %1732 = vmatpush2.msra.mxu0 0.0
  %1733 = vmatprep.subr.mxu0 0.0
  %1734 = vmatpush2.msra.mxu0 0.0
  %1735 = vmatprep.subr.mxu0 0.0
  %1736 = vmatpush2.msra.mxu0 0.0
  %1737 = vmatprep.subr.mxu0 0.0
  %1738 = vmatpush2.msra.mxu0 0.0
  %1739 = vmatprep.subr.mxu0 0.0
  %1740 = vmatpush2.msra.mxu0 0.0
  %1741 = vmatprep.subr.mxu0 0.0
  %1742 = vmatpush2.msra.mxu0 0.0
  %1743 = vmatprep.subr.mxu0 0.0
  %1744 = vmatpush2.msra.mxu0 0.0
  %1745 = vmatprep.subr.mxu0 0.0
  %1746 = vmatpush2.msra.mxu0 0.0
  %1747 = vmatprep.subr.mxu0 0.0
  %1748 = vmatpush2.msra.mxu0 0.0
  %1749 = vmatprep.subr.mxu0 0.0
  %1750 = vmatpush2.msra.mxu0 0.0
  %1751 = vmatprep.subr.mxu0 0.0
  %1752 = vmatpush2.msra.mxu0 0.0
  %1753 = vmatprep.subr.mxu0 0.0
  %1754 = vmatpush2.msra.mxu0 0.0
  %1755 = vmatprep.subr.mxu0 0.0
  %1756 = vmatpush2.msra.mxu0 0.0
  %1757 = vmatprep.subr.mxu0 0.0
  %1758 = vmatpush2.msra.mxu0 0.0
  %1759 = vmatprep.mubr.f32.mxu0 0.0
  %1760 = vmatmul.mubr.f32.gmra.mxu0 %v151
  %v1761 = vpop.f32.mrf.mxu0
  %v1762 = vadd.f32 %v147, %v1761
  %v1763 = vpop.f32.mrf.mxu0
  %v1764 = vadd.f32 %v147, %v1763
  %1765 = vdwg.mxu0
  %1766 = vmatprep.subr.mxu0 0.0
  %1767 = vmatpush1.msra.mxu0 0.0
  %1768 = vmatprep.subr.mxu0 0.0
  %1769 = vmatpush1.msra.mxu0 0.0
  %1770 = vmatprep.subr.mxu0 0.0
  %1771 = vmatpush1.msra.mxu0 0.0
  %1772 = vmatprep.subr.mxu0 0.0
  %1773 = vmatpush1.msra.mxu0 0.0
  %1774 = vmatprep.subr.mxu0 0.0
  %1775 = vmatpush1.msra.mxu0 0.0
  %1776 = vmatprep.subr.mxu0 0.0
  %1777 = vmatpush1.msra.mxu0 0.0
  %1778 = vmatprep.subr.mxu0 0.0
  %1779 = vmatpush1.msra.mxu0 0.0
  %1780 = vmatprep.subr.mxu0 0.0
  %1781 = vmatpush1.msra.mxu0 0.0
  %1782 = vmatprep.subr.mxu0 0.0
  %1783 = vmatpush1.msra.mxu0 0.0
  %1784 = vmatprep.subr.mxu0 0.0
  %1785 = vmatpush1.msra.mxu0 0.0
  %1786 = vmatprep.subr.mxu0 0.0
  %1787 = vmatpush1.msra.mxu0 0.0
  %1788 = vmatprep.subr.mxu0 0.0
  %1789 = vmatpush1.msra.mxu0 0.0
  %1790 = vmatprep.subr.mxu0 0.0
  %1791 = vmatpush1.msra.mxu0 0.0
  %1792 = vmatprep.subr.mxu0 0.0
  %1793 = vmatpush1.msra.mxu0 0.0
  %1794 = vmatprep.subr.mxu0 %v278
  %1795 = vmatpush1.msra.mxu0 %v275
  %1796 = vmatprep.subr.mxu0 %v56
  %1797 = vmatpush1.msra.mxu0 %v55
  %1798 = vmatprep.subr.mxu0 0.0
  %1799 = vmatpush2.msra.mxu0 0.0
  %1800 = vmatprep.subr.mxu0 0.0
  %1801 = vmatpush2.msra.mxu0 0.0
  %1802 = vmatprep.subr.mxu0 0.0
  %1803 = vmatpush2.msra.mxu0 0.0
  %1804 = vmatprep.subr.mxu0 0.0
  %1805 = vmatpush2.msra.mxu0 0.0
  %1806 = vmatprep.subr.mxu0 0.0
  %1807 = vmatpush2.msra.mxu0 0.0
  %1808 = vmatprep.subr.mxu0 0.0
  %1809 = vmatpush2.msra.mxu0 0.0
  %1810 = vmatprep.subr.mxu0 0.0
  %1811 = vmatpush2.msra.mxu0 0.0
  %1812 = vmatprep.subr.mxu0 0.0
  %1813 = vmatpush2.msra.mxu0 0.0
  %1814 = vmatprep.subr.mxu0 0.0
  %1815 = vmatpush2.msra.mxu0 0.0
  %1816 = vmatprep.subr.mxu0 0.0
  %1817 = vmatpush2.msra.mxu0 0.0
  %1818 = vmatprep.subr.mxu0 0.0
  %1819 = vmatpush2.msra.mxu0 0.0
  %1820 = vmatprep.subr.mxu0 0.0
  %1821 = vmatpush2.msra.mxu0 0.0
  %1822 = vmatprep.subr.mxu0 0.0
  %1823 = vmatpush2.msra.mxu0 0.0
  %1824 = vmatprep.subr.mxu0 0.0
  %1825 = vmatpush2.msra.mxu0 0.0
  %1826 = vmatprep.subr.mxu0 0.0
  %1827 = vmatpush2.msra.mxu0 0.0
  %1828 = vmatprep.subr.mxu0 0.0
  %1829 = vmatpush2.msra.mxu0 0.0
  %1830 = vmatprep.mubr.f32.mxu0 0.0
  %1831 = vmatmul.mubr.f32.gmra.mxu0 %v151
  %v1832 = vpop.f32.mrf.mxu0
  %v1833 = vadd.f32 %v147, %v1832
  %v1834 = vpop.f32.mrf.mxu0
  %v1835 = vadd.f32 %v147, %v1834
  %1836 = vdwg.mxu0
  %1837 = vmatprep.subr.mxu0 0.0
  %1838 = vmatpush1.msra.mxu0 0.0
  %1839 = vmatprep.subr.mxu0 0.0
  %1840 = vmatpush1.msra.mxu0 0.0
  %1841 = vmatprep.subr.mxu0 0.0
  %1842 = vmatpush1.msra.mxu0 0.0
  %1843 = vmatprep.subr.mxu0 0.0
  %1844 = vmatpush1.msra.mxu0 0.0
  %1845 = vmatprep.subr.mxu0 0.0
  %1846 = vmatpush1.msra.mxu0 0.0
  %1847 = vmatprep.subr.mxu0 0.0
  %1848 = vmatpush1.msra.mxu0 0.0
  %1849 = vmatprep.subr.mxu0 0.0
  %1850 = vmatpush1.msra.mxu0 0.0
  %1851 = vmatprep.subr.mxu0 0.0
  %1852 = vmatpush1.msra.mxu0 0.0
  %1853 = vmatprep.subr.mxu0 0.0
  %1854 = vmatpush1.msra.mxu0 0.0
  %1855 = vmatprep.subr.mxu0 0.0
  %1856 = vmatpush1.msra.mxu0 0.0
  %1857 = vmatprep.subr.mxu0 0.0
  %1858 = vmatpush1.msra.mxu0 0.0
  %1859 = vmatprep.subr.mxu0 0.0
  %1860 = vmatpush1.msra.mxu0 0.0
  %1861 = vmatprep.subr.mxu0 0.0
  %1862 = vmatpush1.msra.mxu0 0.0
  %1863 = vmatprep.subr.mxu0 0.0
  %1864 = vmatpush1.msra.mxu0 0.0
  %1865 = vmatprep.subr.mxu0 %v284
  %1866 = vmatpush1.msra.mxu0 %v281
  %1867 = vmatprep.subr.mxu0 %v58
  %1868 = vmatpush1.msra.mxu0 %v57
  %1869 = vmatprep.subr.mxu0 0.0
  %1870 = vmatpush2.msra.mxu0 0.0
  %1871 = vmatprep.subr.mxu0 0.0
  %1872 = vmatpush2.msra.mxu0 0.0
  %1873 = vmatprep.subr.mxu0 0.0
  %1874 = vmatpush2.msra.mxu0 0.0
  %1875 = vmatprep.subr.mxu0 0.0
  %1876 = vmatpush2.msra.mxu0 0.0
  %1877 = vmatprep.subr.mxu0 0.0
  %1878 = vmatpush2.msra.mxu0 0.0
  %1879 = vmatprep.subr.mxu0 0.0
  %1880 = vmatpush2.msra.mxu0 0.0
  %1881 = vmatprep.subr.mxu0 0.0
  %1882 = vmatpush2.msra.mxu0 0.0
  %1883 = vmatprep.subr.mxu0 0.0
  %1884 = vmatpush2.msra.mxu0 0.0
  %1885 = vmatprep.subr.mxu0 0.0
  %1886 = vmatpush2.msra.mxu0 0.0
  %1887 = vmatprep.subr.mxu0 0.0
  %1888 = vmatpush2.msra.mxu0 0.0
  %1889 = vmatprep.subr.mxu0 0.0
  %1890 = vmatpush2.msra.mxu0 0.0
  %1891 = vmatprep.subr.mxu0 0.0
  %1892 = vmatpush2.msra.mxu0 0.0
  %1893 = vmatprep.subr.mxu0 0.0
  %1894 = vmatpush2.msra.mxu0 0.0
  %1895 = vmatprep.subr.mxu0 0.0
  %1896 = vmatpush2.msra.mxu0 0.0
  %1897 = vmatprep.subr.mxu0 0.0
  %1898 = vmatpush2.msra.mxu0 0.0
  %1899 = vmatprep.subr.mxu0 0.0
  %1900 = vmatpush2.msra.mxu0 0.0
  %1901 = vmatprep.mubr.f32.mxu0 0.0
  %1902 = vmatmul.mubr.f32.gmra.mxu0 %v151
  %v1903 = vpop.f32.mrf.mxu0
  %v1904 = vadd.f32 %v147, %v1903
  %v1905 = vpop.f32.mrf.mxu0
  %v1906 = vadd.f32 %v147, %v1905
  %1907 = vdwg.mxu0
  %1908 = vmatprep.subr.mxu0 0.0
  %1909 = vmatpush1.msra.mxu0 0.0
  %1910 = vmatprep.subr.mxu0 0.0
  %1911 = vmatpush1.msra.mxu0 0.0
  %1912 = vmatprep.subr.mxu0 0.0
  %1913 = vmatpush1.msra.mxu0 0.0
  %1914 = vmatprep.subr.mxu0 0.0
  %1915 = vmatpush1.msra.mxu0 0.0
  %1916 = vmatprep.subr.mxu0 0.0
  %1917 = vmatpush1.msra.mxu0 0.0
  %1918 = vmatprep.subr.mxu0 0.0
  %1919 = vmatpush1.msra.mxu0 0.0
  %1920 = vmatprep.subr.mxu0 0.0
  %1921 = vmatpush1.msra.mxu0 0.0
  %1922 = vmatprep.subr.mxu0 0.0
  %1923 = vmatpush1.msra.mxu0 0.0
  %1924 = vmatprep.subr.mxu0 0.0
  %1925 = vmatpush1.msra.mxu0 0.0
  %1926 = vmatprep.subr.mxu0 0.0
  %1927 = vmatpush1.msra.mxu0 0.0
  %1928 = vmatprep.subr.mxu0 0.0
  %1929 = vmatpush1.msra.mxu0 0.0
  %1930 = vmatprep.subr.mxu0 0.0
  %1931 = vmatpush1.msra.mxu0 0.0
  %1932 = vmatprep.subr.mxu0 0.0
  %1933 = vmatpush1.msra.mxu0 0.0
  %1934 = vmatprep.subr.mxu0 0.0
  %1935 = vmatpush1.msra.mxu0 0.0
  %1936 = vmatprep.subr.mxu0 %v290
  %1937 = vmatpush1.msra.mxu0 %v287
  %1938 = vmatprep.subr.mxu0 %v60
  %1939 = vmatpush1.msra.mxu0 %v59
  %1940 = vmatprep.subr.mxu0 0.0
  %1941 = vmatpush2.msra.mxu0 0.0
  %1942 = vmatprep.subr.mxu0 0.0
  %1943 = vmatpush2.msra.mxu0 0.0
  %1944 = vmatprep.subr.mxu0 0.0
  %1945 = vmatpush2.msra.mxu0 0.0
  %1946 = vmatprep.subr.mxu0 0.0
  %1947 = vmatpush2.msra.mxu0 0.0
  %1948 = vmatprep.subr.mxu0 0.0
  %1949 = vmatpush2.msra.mxu0 0.0
  %1950 = vmatprep.subr.mxu0 0.0
  %1951 = vmatpush2.msra.mxu0 0.0
  %1952 = vmatprep.subr.mxu0 0.0
  %1953 = vmatpush2.msra.mxu0 0.0
  %1954 = vmatprep.subr.mxu0 0.0
  %1955 = vmatpush2.msra.mxu0 0.0
  %1956 = vmatprep.subr.mxu0 0.0
  %1957 = vmatpush2.msra.mxu0 0.0
  %1958 = vmatprep.subr.mxu0 0.0
  %1959 = vmatpush2.msra.mxu0 0.0
  %1960 = vmatprep.subr.mxu0 0.0
  %1961 = vmatpush2.msra.mxu0 0.0
  %1962 = vmatprep.subr.mxu0 0.0
  %1963 = vmatpush2.msra.mxu0 0.0
  %1964 = vmatprep.subr.mxu0 0.0
  %1965 = vmatpush2.msra.mxu0 0.0
  %1966 = vmatprep.subr.mxu0 0.0
  %1967 = vmatpush2.msra.mxu0 0.0
  %1968 = vmatprep.subr.mxu0 0.0
  %1969 = vmatpush2.msra.mxu0 0.0
  %1970 = vmatprep.subr.mxu0 0.0
  %1971 = vmatpush2.msra.mxu0 0.0
  %1972 = vmatprep.mubr.f32.mxu0 0.0
  %1973 = vmatmul.mubr.f32.gmra.mxu0 %v151
  %v1974 = vpop.f32.mrf.mxu0
  %v1975 = vadd.f32 %v147, %v1974
  %v1976 = vpop.f32.mrf.mxu0
  %v1977 = vadd.f32 %v147, %v1976
  %1978 = vdwg.mxu0
  %1979 = vmatprep.subr.mxu0 0.0
  %1980 = vmatpush1.msra.mxu0 0.0
  %1981 = vmatprep.subr.mxu0 0.0
  %1982 = vmatpush1.msra.mxu0 0.0
  %1983 = vmatprep.subr.mxu0 0.0
  %1984 = vmatpush1.msra.mxu0 0.0
  %1985 = vmatprep.subr.mxu0 0.0
  %1986 = vmatpush1.msra.mxu0 0.0
  %1987 = vmatprep.subr.mxu0 0.0
  %1988 = vmatpush1.msra.mxu0 0.0
  %1989 = vmatprep.subr.mxu0 0.0
  %1990 = vmatpush1.msra.mxu0 0.0
  %1991 = vmatprep.subr.mxu0 0.0
  %1992 = vmatpush1.msra.mxu0 0.0
  %1993 = vmatprep.subr.mxu0 0.0
  %1994 = vmatpush1.msra.mxu0 0.0
  %1995 = vmatprep.subr.mxu0 0.0
  %1996 = vmatpush1.msra.mxu0 0.0
  %1997 = vmatprep.subr.mxu0 0.0
  %1998 = vmatpush1.msra.mxu0 0.0
  %1999 = vmatprep.subr.mxu0 0.0
  %2000 = vmatpush1.msra.mxu0 0.0
  %2001 = vmatprep.subr.mxu0 0.0
  %2002 = vmatpush1.msra.mxu0 0.0
  %2003 = vmatprep.subr.mxu0 0.0
  %2004 = vmatpush1.msra.mxu0 0.0
  %2005 = vmatprep.subr.mxu0 0.0
  %2006 = vmatpush1.msra.mxu0 0.0
  %2007 = vmatprep.subr.mxu0 %v296
  %2008 = vmatpush1.msra.mxu0 %v293
  %2009 = vmatprep.subr.mxu0 %v62
  %2010 = vmatpush1.msra.mxu0 %v61
  %2011 = vmatprep.subr.mxu0 0.0
  %2012 = vmatpush2.msra.mxu0 0.0
  %2013 = vmatprep.subr.mxu0 0.0
  %2014 = vmatpush2.msra.mxu0 0.0
  %2015 = vmatprep.subr.mxu0 0.0
  %2016 = vmatpush2.msra.mxu0 0.0
  %2017 = vmatprep.subr.mxu0 0.0
  %2018 = vmatpush2.msra.mxu0 0.0
  %2019 = vmatprep.subr.mxu0 0.0
  %2020 = vmatpush2.msra.mxu0 0.0
  %2021 = vmatprep.subr.mxu0 0.0
  %2022 = vmatpush2.msra.mxu0 0.0
  %2023 = vmatprep.subr.mxu0 0.0
  %2024 = vmatpush2.msra.mxu0 0.0
  %2025 = vmatprep.subr.mxu0 0.0
  %2026 = vmatpush2.msra.mxu0 0.0
  %2027 = vmatprep.subr.mxu0 0.0
  %2028 = vmatpush2.msra.mxu0 0.0
  %2029 = vmatprep.subr.mxu0 0.0
  %2030 = vmatpush2.msra.mxu0 0.0
  %2031 = vmatprep.subr.mxu0 0.0
  %2032 = vmatpush2.msra.mxu0 0.0
  %2033 = vmatprep.subr.mxu0 0.0
  %2034 = vmatpush2.msra.mxu0 0.0
  %2035 = vmatprep.subr.mxu0 0.0
  %2036 = vmatpush2.msra.mxu0 0.0
  %2037 = vmatprep.subr.mxu0 0.0
  %2038 = vmatpush2.msra.mxu0 0.0
  %2039 = vmatprep.subr.mxu0 0.0
  %2040 = vmatpush2.msra.mxu0 0.0
  %2041 = vmatprep.subr.mxu0 0.0
  %2042 = vmatpush2.msra.mxu0 0.0
  %2043 = vmatprep.mubr.f32.mxu0 0.0
  %2044 = vmatmul.mubr.f32.gmra.mxu0 %v151
  %v2045 = vpop.f32.mrf.mxu0
  %v2046 = vadd.f32 %v147, %v2045
  %v2047 = vpop.f32.mrf.mxu0
  %v2048 = vadd.f32 %v147, %v2047
  %2049 = vdwg.mxu0
  %2050 = vmatprep.subr.mxu0 0.0
  %2051 = vmatpush1.msra.mxu0 0.0
  %2052 = vmatprep.subr.mxu0 0.0
  %2053 = vmatpush1.msra.mxu0 0.0
  %2054 = vmatprep.subr.mxu0 0.0
  %2055 = vmatpush1.msra.mxu0 0.0
  %2056 = vmatprep.subr.mxu0 0.0
  %2057 = vmatpush1.msra.mxu0 0.0
  %2058 = vmatprep.subr.mxu0 0.0
  %2059 = vmatpush1.msra.mxu0 0.0
  %2060 = vmatprep.subr.mxu0 0.0
  %2061 = vmatpush1.msra.mxu0 0.0
  %2062 = vmatprep.subr.mxu0 0.0
  %2063 = vmatpush1.msra.mxu0 0.0
  %2064 = vmatprep.subr.mxu0 0.0
  %2065 = vmatpush1.msra.mxu0 0.0
  %2066 = vmatprep.subr.mxu0 0.0
  %2067 = vmatpush1.msra.mxu0 0.0
  %2068 = vmatprep.subr.mxu0 0.0
  %2069 = vmatpush1.msra.mxu0 0.0
  %2070 = vmatprep.subr.mxu0 0.0
  %2071 = vmatpush1.msra.mxu0 0.0
  %2072 = vmatprep.subr.mxu0 0.0
  %2073 = vmatpush1.msra.mxu0 0.0
  %2074 = vmatprep.subr.mxu0 0.0
  %2075 = vmatpush1.msra.mxu0 0.0
  %2076 = vmatprep.subr.mxu0 0.0
  %2077 = vmatpush1.msra.mxu0 0.0
  %2078 = vmatprep.subr.mxu0 %v302
  %2079 = vmatpush1.msra.mxu0 %v299
  %2080 = vmatprep.subr.mxu0 %v64
  %2081 = vmatpush1.msra.mxu0 %v63
  %2082 = vmatprep.subr.mxu0 0.0
  %2083 = vmatpush2.msra.mxu0 0.0
  %2084 = vmatprep.subr.mxu0 0.0
  %2085 = vmatpush2.msra.mxu0 0.0
  %2086 = vmatprep.subr.mxu0 0.0
  %2087 = vmatpush2.msra.mxu0 0.0
  %2088 = vmatprep.subr.mxu0 0.0
  %2089 = vmatpush2.msra.mxu0 0.0
  %2090 = vmatprep.subr.mxu0 0.0
  %2091 = vmatpush2.msra.mxu0 0.0
  %2092 = vmatprep.subr.mxu0 0.0
  %2093 = vmatpush2.msra.mxu0 0.0
  %2094 = vmatprep.subr.mxu0 0.0
  %2095 = vmatpush2.msra.mxu0 0.0
  %2096 = vmatprep.subr.mxu0 0.0
  %2097 = vmatpush2.msra.mxu0 0.0
  %2098 = vmatprep.subr.mxu0 0.0
  %2099 = vmatpush2.msra.mxu0 0.0
  %2100 = vmatprep.subr.mxu0 0.0
  %2101 = vmatpush2.msra.mxu0 0.0
  %2102 = vmatprep.subr.mxu0 0.0
  %2103 = vmatpush2.msra.mxu0 0.0
  %2104 = vmatprep.subr.mxu0 0.0
  %2105 = vmatpush2.msra.mxu0 0.0
  %2106 = vmatprep.subr.mxu0 0.0
  %2107 = vmatpush2.msra.mxu0 0.0
  %2108 = vmatprep.subr.mxu0 0.0
  %2109 = vmatpush2.msra.mxu0 0.0
  %2110 = vmatprep.subr.mxu0 0.0
  %2111 = vmatpush2.msra.mxu0 0.0
  %2112 = vmatprep.subr.mxu0 0.0
  %2113 = vmatpush2.msra.mxu0 0.0
  %2114 = vmatprep.mubr.f32.mxu0 0.0
  %2115 = vmatmul.mubr.f32.gmra.mxu0 %v151
  %v2116 = vpop.f32.mrf.mxu0
  %v2117 = vadd.f32 %v147, %v2116
  %v2118 = vpop.f32.mrf.mxu0
  %v2119 = vadd.f32 %v147, %v2118
  %2120 = vdwg.mxu0
  %2121 = vmatprep.subr.mxu0 0.0
  %2122 = vmatpush1.msra.mxu0 0.0
  %2123 = vmatprep.subr.mxu0 0.0
  %2124 = vmatpush1.msra.mxu0 0.0
  %2125 = vmatprep.subr.mxu0 0.0
  %2126 = vmatpush1.msra.mxu0 0.0
  %2127 = vmatprep.subr.mxu0 0.0
  %2128 = vmatpush1.msra.mxu0 0.0
  %2129 = vmatprep.subr.mxu0 0.0
  %2130 = vmatpush1.msra.mxu0 0.0
  %2131 = vmatprep.subr.mxu0 0.0
  %2132 = vmatpush1.msra.mxu0 0.0
  %2133 = vmatprep.subr.mxu0 0.0
  %2134 = vmatpush1.msra.mxu0 0.0
  %2135 = vmatprep.subr.mxu0 0.0
  %2136 = vmatpush1.msra.mxu0 0.0
  %2137 = vmatprep.subr.mxu0 0.0
  %2138 = vmatpush1.msra.mxu0 0.0
  %2139 = vmatprep.subr.mxu0 0.0
  %2140 = vmatpush1.msra.mxu0 0.0
  %2141 = vmatprep.subr.mxu0 0.0
  %2142 = vmatpush1.msra.mxu0 0.0
  %2143 = vmatprep.subr.mxu0 0.0
  %2144 = vmatpush1.msra.mxu0 0.0
  %2145 = vmatprep.subr.mxu0 0.0
  %2146 = vmatpush1.msra.mxu0 0.0
  %2147 = vmatprep.subr.mxu0 0.0
  %2148 = vmatpush1.msra.mxu0 0.0
  %2149 = vmatprep.subr.mxu0 %v308
  %2150 = vmatpush1.msra.mxu0 %v305
  %2151 = vmatprep.subr.mxu0 %v66
  %2152 = vmatpush1.msra.mxu0 %v65
  %2153 = vmatprep.subr.mxu0 0.0
  %2154 = vmatpush2.msra.mxu0 0.0
  %2155 = vmatprep.subr.mxu0 0.0
  %2156 = vmatpush2.msra.mxu0 0.0
  %2157 = vmatprep.subr.mxu0 0.0
  %2158 = vmatpush2.msra.mxu0 0.0
  %2159 = vmatprep.subr.mxu0 0.0
  %2160 = vmatpush2.msra.mxu0 0.0
  %2161 = vmatprep.subr.mxu0 0.0
  %2162 = vmatpush2.msra.mxu0 0.0
  %2163 = vmatprep.subr.mxu0 0.0
  %2164 = vmatpush2.msra.mxu0 0.0
  %2165 = vmatprep.subr.mxu0 0.0
  %2166 = vmatpush2.msra.mxu0 0.0
  %2167 = vmatprep.subr.mxu0 0.0
  %2168 = vmatpush2.msra.mxu0 0.0
  %2169 = vmatprep.subr.mxu0 0.0
  %2170 = vmatpush2.msra.mxu0 0.0
  %2171 = vmatprep.subr.mxu0 0.0
  %2172 = vmatpush2.msra.mxu0 0.0
  %2173 = vmatprep.subr.mxu0 0.0
  %2174 = vmatpush2.msra.mxu0 0.0
  %2175 = vmatprep.subr.mxu0 0.0
  %2176 = vmatpush2.msra.mxu0 0.0
  %2177 = vmatprep.subr.mxu0 0.0
  %2178 = vmatpush2.msra.mxu0 0.0
  %2179 = vmatprep.subr.mxu0 0.0
  %2180 = vmatpush2.msra.mxu0 0.0
  %2181 = vmatprep.subr.mxu0 0.0
  %2182 = vmatpush2.msra.mxu0 0.0
  %2183 = vmatprep.subr.mxu0 0.0
  %2184 = vmatpush2.msra.mxu0 0.0
  %2185 = vmatprep.mubr.f32.mxu0 0.0
  %2186 = vmatmul.mubr.f32.gmra.mxu0 %v151
  %v2187 = vpop.f32.mrf.mxu0
  %v2188 = vadd.f32 %v147, %v2187
  %v2189 = vpop.f32.mrf.mxu0
  %v2190 = vadd.f32 %v147, %v2189
  %2191 = vdwg.mxu0
  %2192 = vmatprep.subr.mxu0 0.0
  %2193 = vmatpush1.msra.mxu0 0.0
  %2194 = vmatprep.subr.mxu0 0.0
  %2195 = vmatpush1.msra.mxu0 0.0
  %2196 = vmatprep.subr.mxu0 0.0
  %2197 = vmatpush1.msra.mxu0 0.0
  %2198 = vmatprep.subr.mxu0 0.0
  %2199 = vmatpush1.msra.mxu0 0.0
  %2200 = vmatprep.subr.mxu0 0.0
  %2201 = vmatpush1.msra.mxu0 0.0
  %2202 = vmatprep.subr.mxu0 0.0
  %2203 = vmatpush1.msra.mxu0 0.0
  %2204 = vmatprep.subr.mxu0 0.0
  %2205 = vmatpush1.msra.mxu0 0.0
  %2206 = vmatprep.subr.mxu0 0.0
  %2207 = vmatpush1.msra.mxu0 0.0
  %2208 = vmatprep.subr.mxu0 0.0
  %2209 = vmatpush1.msra.mxu0 0.0
  %2210 = vmatprep.subr.mxu0 0.0
  %2211 = vmatpush1.msra.mxu0 0.0
  %2212 = vmatprep.subr.mxu0 0.0
  %2213 = vmatpush1.msra.mxu0 0.0
  %2214 = vmatprep.subr.mxu0 0.0
  %2215 = vmatpush1.msra.mxu0 0.0
  %2216 = vmatprep.subr.mxu0 0.0
  %2217 = vmatpush1.msra.mxu0 0.0
  %2218 = vmatprep.subr.mxu0 0.0
  %2219 = vmatpush1.msra.mxu0 0.0
  %2220 = vmatprep.subr.mxu0 %v314
  %2221 = vmatpush1.msra.mxu0 %v311
  %2222 = vmatprep.subr.mxu0 %v68
  %2223 = vmatpush1.msra.mxu0 %v67
  %2224 = vmatprep.subr.mxu0 0.0
  %2225 = vmatpush2.msra.mxu0 0.0
  %2226 = vmatprep.subr.mxu0 0.0
  %2227 = vmatpush2.msra.mxu0 0.0
  %2228 = vmatprep.subr.mxu0 0.0
  %2229 = vmatpush2.msra.mxu0 0.0
  %2230 = vmatprep.subr.mxu0 0.0
  %2231 = vmatpush2.msra.mxu0 0.0
  %2232 = vmatprep.subr.mxu0 0.0
  %2233 = vmatpush2.msra.mxu0 0.0
  %2234 = vmatprep.subr.mxu0 0.0
  %2235 = vmatpush2.msra.mxu0 0.0
  %2236 = vmatprep.subr.mxu0 0.0
  %2237 = vmatpush2.msra.mxu0 0.0
  %2238 = vmatprep.subr.mxu0 0.0
  %2239 = vmatpush2.msra.mxu0 0.0
  %2240 = vmatprep.subr.mxu0 0.0
  %2241 = vmatpush2.msra.mxu0 0.0
  %2242 = vmatprep.subr.mxu0 0.0
  %2243 = vmatpush2.msra.mxu0 0.0
  %2244 = vmatprep.subr.mxu0 0.0
  %2245 = vmatpush2.msra.mxu0 0.0
  %2246 = vmatprep.subr.mxu0 0.0
  %2247 = vmatpush2.msra.mxu0 0.0
  %2248 = vmatprep.subr.mxu0 0.0
  %2249 = vmatpush2.msra.mxu0 0.0
  %2250 = vmatprep.subr.mxu0 0.0
  %2251 = vmatpush2.msra.mxu0 0.0
  %2252 = vmatprep.subr.mxu0 0.0
  %2253 = vmatpush2.msra.mxu0 0.0
  %2254 = vmatprep.subr.mxu0 0.0
  %2255 = vmatpush2.msra.mxu0 0.0
  %2256 = vmatprep.mubr.f32.mxu0 0.0
  %2257 = vmatmul.mubr.f32.gmra.mxu0 %v151
  %v2258 = vpop.f32.mrf.mxu0
  %v2259 = vadd.f32 %v147, %v2258
  %v2260 = vpop.f32.mrf.mxu0
  %v2261 = vadd.f32 %v147, %v2260
  %2262 = vdwg.mxu0
  %2263 = vmatprep.subr.mxu0 0.0
  %2264 = vmatpush1.msra.mxu0 0.0
  %2265 = vmatprep.subr.mxu0 0.0
  %2266 = vmatpush1.msra.mxu0 0.0
  %2267 = vmatprep.subr.mxu0 0.0
  %2268 = vmatpush1.msra.mxu0 0.0
  %2269 = vmatprep.subr.mxu0 0.0
  %2270 = vmatpush1.msra.mxu0 0.0
  %2271 = vmatprep.subr.mxu0 0.0
  %2272 = vmatpush1.msra.mxu0 0.0
  %2273 = vmatprep.subr.mxu0 0.0
  %2274 = vmatpush1.msra.mxu0 0.0
  %2275 = vmatprep.subr.mxu0 0.0
  %2276 = vmatpush1.msra.mxu0 0.0
  %2277 = vmatprep.subr.mxu0 0.0
  %2278 = vmatpush1.msra.mxu0 0.0
  %2279 = vmatprep.subr.mxu0 0.0
  %2280 = vmatpush1.msra.mxu0 0.0
  %2281 = vmatprep.subr.mxu0 0.0
  %2282 = vmatpush1.msra.mxu0 0.0
  %2283 = vmatprep.subr.mxu0 0.0
  %2284 = vmatpush1.msra.mxu0 0.0
  %2285 = vmatprep.subr.mxu0 0.0
  %2286 = vmatpush1.msra.mxu0 0.0
  %2287 = vmatprep.subr.mxu0 0.0
  %2288 = vmatpush1.msra.mxu0 0.0
  %2289 = vmatprep.subr.mxu0 0.0
  %2290 = vmatpush1.msra.mxu0 0.0
  %2291 = vmatprep.subr.mxu0 %v320
  %2292 = vmatpush1.msra.mxu0 %v317
  %2293 = vmatprep.subr.mxu0 %v70
  %2294 = vmatpush1.msra.mxu0 %v69
  %2295 = vmatprep.subr.mxu0 0.0
  %2296 = vmatpush2.msra.mxu0 0.0
  %2297 = vmatprep.subr.mxu0 0.0
  %2298 = vmatpush2.msra.mxu0 0.0
  %2299 = vmatprep.subr.mxu0 0.0
  %2300 = vmatpush2.msra.mxu0 0.0
  %2301 = vmatprep.subr.mxu0 0.0
  %2302 = vmatpush2.msra.mxu0 0.0
  %2303 = vmatprep.subr.mxu0 0.0
  %2304 = vmatpush2.msra.mxu0 0.0
  %2305 = vmatprep.subr.mxu0 0.0
  %2306 = vmatpush2.msra.mxu0 0.0
  %2307 = vmatprep.subr.mxu0 0.0
  %2308 = vmatpush2.msra.mxu0 0.0
  %2309 = vmatprep.subr.mxu0 0.0
  %2310 = vmatpush2.msra.mxu0 0.0
  %2311 = vmatprep.subr.mxu0 0.0
  %2312 = vmatpush2.msra.mxu0 0.0
  %2313 = vmatprep.subr.mxu0 0.0
  %2314 = vmatpush2.msra.mxu0 0.0
  %2315 = vmatprep.subr.mxu0 0.0
  %2316 = vmatpush2.msra.mxu0 0.0
  %2317 = vmatprep.subr.mxu0 0.0
  %2318 = vmatpush2.msra.mxu0 0.0
  %2319 = vmatprep.subr.mxu0 0.0
  %2320 = vmatpush2.msra.mxu0 0.0
  %2321 = vmatprep.subr.mxu0 0.0
  %2322 = vmatpush2.msra.mxu0 0.0
  %2323 = vmatprep.subr.mxu0 0.0
  %2324 = vmatpush2.msra.mxu0 0.0
  %2325 = vmatprep.subr.mxu0 0.0
  %2326 = vmatpush2.msra.mxu0 0.0
  %2327 = vmatprep.mubr.f32.mxu0 0.0
  %2328 = vmatmul.mubr.f32.gmra.mxu0 %v151
  %v2329 = vpop.f32.mrf.mxu0
  %v2330 = vadd.f32 %v147, %v2329
  %v2331 = vpop.f32.mrf.mxu0
  %v2332 = vadd.f32 %v147, %v2331
  %2333 = vdwg.mxu0
  %2334 = vmatprep.subr.mxu0 0.0
  %2335 = vmatpush1.msra.mxu0 0.0
  %2336 = vmatprep.subr.mxu0 0.0
  %2337 = vmatpush1.msra.mxu0 0.0
  %2338 = vmatprep.subr.mxu0 0.0
  %2339 = vmatpush1.msra.mxu0 0.0
  %2340 = vmatprep.subr.mxu0 0.0
  %2341 = vmatpush1.msra.mxu0 0.0
  %2342 = vmatprep.subr.mxu0 0.0
  %2343 = vmatpush1.msra.mxu0 0.0
  %2344 = vmatprep.subr.mxu0 0.0
  %2345 = vmatpush1.msra.mxu0 0.0
  %2346 = vmatprep.subr.mxu0 0.0
  %2347 = vmatpush1.msra.mxu0 0.0
  %2348 = vmatprep.subr.mxu0 0.0
  %2349 = vmatpush1.msra.mxu0 0.0
  %2350 = vmatprep.subr.mxu0 0.0
  %2351 = vmatpush1.msra.mxu0 0.0
  %2352 = vmatprep.subr.mxu0 0.0
  %2353 = vmatpush1.msra.mxu0 0.0
  %2354 = vmatprep.subr.mxu0 0.0
  %2355 = vmatpush1.msra.mxu0 0.0
  %2356 = vmatprep.subr.mxu0 0.0
  %2357 = vmatpush1.msra.mxu0 0.0
  %2358 = vmatprep.subr.mxu0 0.0
  %2359 = vmatpush1.msra.mxu0 0.0
  %2360 = vmatprep.subr.mxu0 0.0
  %2361 = vmatpush1.msra.mxu0 0.0
  %2362 = vmatprep.subr.mxu0 %v326
  %2363 = vmatpush1.msra.mxu0 %v323
  %2364 = vmatprep.subr.mxu0 %v72
  %2365 = vmatpush1.msra.mxu0 %v71
  %2366 = vmatprep.subr.mxu0 0.0
  %2367 = vmatpush2.msra.mxu0 0.0
  %2368 = vmatprep.subr.mxu0 0.0
  %2369 = vmatpush2.msra.mxu0 0.0
  %2370 = vmatprep.subr.mxu0 0.0
  %2371 = vmatpush2.msra.mxu0 0.0
  %2372 = vmatprep.subr.mxu0 0.0
  %2373 = vmatpush2.msra.mxu0 0.0
  %2374 = vmatprep.subr.mxu0 0.0
  %2375 = vmatpush2.msra.mxu0 0.0
  %2376 = vmatprep.subr.mxu0 0.0
  %2377 = vmatpush2.msra.mxu0 0.0
  %2378 = vmatprep.subr.mxu0 0.0
  %2379 = vmatpush2.msra.mxu0 0.0
  %2380 = vmatprep.subr.mxu0 0.0
  %2381 = vmatpush2.msra.mxu0 0.0
  %2382 = vmatprep.subr.mxu0 0.0
  %2383 = vmatpush2.msra.mxu0 0.0
  %2384 = vmatprep.subr.mxu0 0.0
  %2385 = vmatpush2.msra.mxu0 0.0
  %2386 = vmatprep.subr.mxu0 0.0
  %2387 = vmatpush2.msra.mxu0 0.0
  %2388 = vmatprep.subr.mxu0 0.0
  %2389 = vmatpush2.msra.mxu0 0.0
  %2390 = vmatprep.subr.mxu0 0.0
  %2391 = vmatpush2.msra.mxu0 0.0
  %2392 = vmatprep.subr.mxu0 0.0
  %2393 = vmatpush2.msra.mxu0 0.0
  %2394 = vmatprep.subr.mxu0 0.0
  %2395 = vmatpush2.msra.mxu0 0.0
  %2396 = vmatprep.subr.mxu0 0.0
  %2397 = vmatpush2.msra.mxu0 0.0
  %2398 = vmatprep.mubr.f32.mxu0 0.0
  %2399 = vmatmul.mubr.f32.gmra.mxu0 %v151
  %v2400 = vpop.f32.mrf.mxu0
  %v2401 = vadd.f32 %v147, %v2400
  %v2402 = vpop.f32.mrf.mxu0
  %v2403 = vadd.f32 %v147, %v2402
  %2404 = vdwg.mxu0
  %2405 = vmatprep.subr.mxu0 0.0
  %2406 = vmatpush1.msra.mxu0 0.0
  %2407 = vmatprep.subr.mxu0 0.0
  %2408 = vmatpush1.msra.mxu0 0.0
  %2409 = vmatprep.subr.mxu0 0.0
  %2410 = vmatpush1.msra.mxu0 0.0
  %2411 = vmatprep.subr.mxu0 0.0
  %2412 = vmatpush1.msra.mxu0 0.0
  %2413 = vmatprep.subr.mxu0 0.0
  %2414 = vmatpush1.msra.mxu0 0.0
  %2415 = vmatprep.subr.mxu0 0.0
  %2416 = vmatpush1.msra.mxu0 0.0
  %2417 = vmatprep.subr.mxu0 0.0
  %2418 = vmatpush1.msra.mxu0 0.0
  %2419 = vmatprep.subr.mxu0 0.0
  %2420 = vmatpush1.msra.mxu0 0.0
  %2421 = vmatprep.subr.mxu0 0.0
  %2422 = vmatpush1.msra.mxu0 0.0
  %2423 = vmatprep.subr.mxu0 0.0
  %2424 = vmatpush1.msra.mxu0 0.0
  %2425 = vmatprep.subr.mxu0 0.0
  %2426 = vmatpush1.msra.mxu0 0.0
  %2427 = vmatprep.subr.mxu0 0.0
  %2428 = vmatpush1.msra.mxu0 0.0
  %2429 = vmatprep.subr.mxu0 0.0
  %2430 = vmatpush1.msra.mxu0 0.0
  %2431 = vmatprep.subr.mxu0 0.0
  %2432 = vmatpush1.msra.mxu0 0.0
  %2433 = vmatprep.subr.mxu0 %v332
  %2434 = vmatpush1.msra.mxu0 %v329
  %2435 = vmatprep.subr.mxu0 %v74
  %2436 = vmatpush1.msra.mxu0 %v73
  %2437 = vmatprep.subr.mxu0 0.0
  %2438 = vmatpush2.msra.mxu0 0.0
  %2439 = vmatprep.subr.mxu0 0.0
  %2440 = vmatpush2.msra.mxu0 0.0
  %2441 = vmatprep.subr.mxu0 0.0
  %2442 = vmatpush2.msra.mxu0 0.0
  %2443 = vmatprep.subr.mxu0 0.0
  %2444 = vmatpush2.msra.mxu0 0.0
  %2445 = vmatprep.subr.mxu0 0.0
  %2446 = vmatpush2.msra.mxu0 0.0
  %2447 = vmatprep.subr.mxu0 0.0
  %2448 = vmatpush2.msra.mxu0 0.0
  %2449 = vmatprep.subr.mxu0 0.0
  %2450 = vmatpush2.msra.mxu0 0.0
  %2451 = vmatprep.subr.mxu0 0.0
  %2452 = vmatpush2.msra.mxu0 0.0
  %2453 = vmatprep.subr.mxu0 0.0
  %2454 = vmatpush2.msra.mxu0 0.0
  %2455 = vmatprep.subr.mxu0 0.0
  %2456 = vmatpush2.msra.mxu0 0.0
  %2457 = vmatprep.subr.mxu0 0.0
  %2458 = vmatpush2.msra.mxu0 0.0
  %2459 = vmatprep.subr.mxu0 0.0
  %2460 = vmatpush2.msra.mxu0 0.0
  %2461 = vmatprep.subr.mxu0 0.0
  %2462 = vmatpush2.msra.mxu0 0.0
  %2463 = vmatprep.subr.mxu0 0.0
  %2464 = vmatpush2.msra.mxu0 0.0
  %2465 = vmatprep.subr.mxu0 0.0
  %2466 = vmatpush2.msra.mxu0 0.0
  %2467 = vmatprep.subr.mxu0 0.0
  %2468 = vmatpush2.msra.mxu0 0.0
  %2469 = vmatprep.mubr.f32.mxu0 0.0
  %2470 = vmatmul.mubr.f32.gmra.mxu0 %v151
  %v2471 = vpop.f32.mrf.mxu0
  %v2472 = vadd.f32 %v147, %v2471
  %v2473 = vpop.f32.mrf.mxu0
  %v2474 = vadd.f32 %v147, %v2473
  %2475 = vdwg.mxu0
  %2476 = vmatprep.subr.mxu0 0.0
  %2477 = vmatpush1.msra.mxu0 0.0
  %2478 = vmatprep.subr.mxu0 0.0
  %2479 = vmatpush1.msra.mxu0 0.0
  %2480 = vmatprep.subr.mxu0 0.0
  %2481 = vmatpush1.msra.mxu0 0.0
  %2482 = vmatprep.subr.mxu0 0.0
  %2483 = vmatpush1.msra.mxu0 0.0
  %2484 = vmatprep.subr.mxu0 0.0
  %2485 = vmatpush1.msra.mxu0 0.0
  %2486 = vmatprep.subr.mxu0 0.0
  %2487 = vmatpush1.msra.mxu0 0.0
  %2488 = vmatprep.subr.mxu0 0.0
  %2489 = vmatpush1.msra.mxu0 0.0
  %2490 = vmatprep.subr.mxu0 0.0
  %2491 = vmatpush1.msra.mxu0 0.0
  %2492 = vmatprep.subr.mxu0 0.0
  %2493 = vmatpush1.msra.mxu0 0.0
  %2494 = vmatprep.subr.mxu0 0.0
  %2495 = vmatpush1.msra.mxu0 0.0
  %2496 = vmatprep.subr.mxu0 0.0
  %2497 = vmatpush1.msra.mxu0 0.0
  %2498 = vmatprep.subr.mxu0 0.0
  %2499 = vmatpush1.msra.mxu0 0.0
  %2500 = vmatprep.subr.mxu0 0.0
  %2501 = vmatpush1.msra.mxu0 0.0
  %2502 = vmatprep.subr.mxu0 0.0
  %2503 = vmatpush1.msra.mxu0 0.0
  %2504 = vmatprep.subr.mxu0 %v338
  %2505 = vmatpush1.msra.mxu0 %v335
  %2506 = vmatprep.subr.mxu0 %v76
  %2507 = vmatpush1.msra.mxu0 %v75
  %2508 = vmatprep.subr.mxu0 0.0
  %2509 = vmatpush2.msra.mxu0 0.0
  %2510 = vmatprep.subr.mxu0 0.0
  %2511 = vmatpush2.msra.mxu0 0.0
  %2512 = vmatprep.subr.mxu0 0.0
  %2513 = vmatpush2.msra.mxu0 0.0
  %2514 = vmatprep.subr.mxu0 0.0
  %2515 = vmatpush2.msra.mxu0 0.0
  %2516 = vmatprep.subr.mxu0 0.0
  %2517 = vmatpush2.msra.mxu0 0.0
  %2518 = vmatprep.subr.mxu0 0.0
  %2519 = vmatpush2.msra.mxu0 0.0
  %2520 = vmatprep.subr.mxu0 0.0
  %2521 = vmatpush2.msra.mxu0 0.0
  %2522 = vmatprep.subr.mxu0 0.0
  %2523 = vmatpush2.msra.mxu0 0.0
  %2524 = vmatprep.subr.mxu0 0.0
  %2525 = vmatpush2.msra.mxu0 0.0
  %2526 = vmatprep.subr.mxu0 0.0
  %2527 = vmatpush2.msra.mxu0 0.0
  %2528 = vmatprep.subr.mxu0 0.0
  %2529 = vmatpush2.msra.mxu0 0.0
  %2530 = vmatprep.subr.mxu0 0.0
  %2531 = vmatpush2.msra.mxu0 0.0
  %2532 = vmatprep.subr.mxu0 0.0
  %2533 = vmatpush2.msra.mxu0 0.0
  %2534 = vmatprep.subr.mxu0 0.0
  %2535 = vmatpush2.msra.mxu0 0.0
  %2536 = vmatprep.subr.mxu0 0.0
  %2537 = vmatpush2.msra.mxu0 0.0
  %2538 = vmatprep.subr.mxu0 0.0
  %2539 = vmatpush2.msra.mxu0 0.0
  %2540 = vmatprep.mubr.f32.mxu0 0.0
  %2541 = vmatmul.mubr.f32.gmra.mxu0 %v151
  %v2542 = vpop.f32.mrf.mxu0
  %v2543 = vadd.f32 %v147, %v2542
  %v2544 = vpop.f32.mrf.mxu0
  %v2545 = vadd.f32 %v147, %v2544
  %2546 = vdwg.mxu0
  %2547 = vmatprep.subr.mxu0 0.0
  %2548 = vmatpush1.msra.mxu0 0.0
  %2549 = vmatprep.subr.mxu0 0.0
  %2550 = vmatpush1.msra.mxu0 0.0
  %2551 = vmatprep.subr.mxu0 0.0
  %2552 = vmatpush1.msra.mxu0 0.0
  %2553 = vmatprep.subr.mxu0 0.0
  %2554 = vmatpush1.msra.mxu0 0.0
  %2555 = vmatprep.subr.mxu0 0.0
  %2556 = vmatpush1.msra.mxu0 0.0
  %2557 = vmatprep.subr.mxu0 0.0
  %2558 = vmatpush1.msra.mxu0 0.0
  %2559 = vmatprep.subr.mxu0 0.0
  %2560 = vmatpush1.msra.mxu0 0.0
  %2561 = vmatprep.subr.mxu0 0.0
  %2562 = vmatpush1.msra.mxu0 0.0
  %2563 = vmatprep.subr.mxu0 0.0
  %2564 = vmatpush1.msra.mxu0 0.0
  %2565 = vmatprep.subr.mxu0 0.0
  %2566 = vmatpush1.msra.mxu0 0.0
  %2567 = vmatprep.subr.mxu0 0.0
  %2568 = vmatpush1.msra.mxu0 0.0
  %2569 = vmatprep.subr.mxu0 0.0
  %2570 = vmatpush1.msra.mxu0 0.0
  %2571 = vmatprep.subr.mxu0 0.0
  %2572 = vmatpush1.msra.mxu0 0.0
  %2573 = vmatprep.subr.mxu0 0.0
  %2574 = vmatpush1.msra.mxu0 0.0
  %2575 = vmatprep.subr.mxu0 %v344
  %2576 = vmatpush1.msra.mxu0 %v341
  %2577 = vmatprep.subr.mxu0 %v78
  %2578 = vmatpush1.msra.mxu0 %v77
  %2579 = vmatprep.subr.mxu0 0.0
  %2580 = vmatpush2.msra.mxu0 0.0
  %2581 = vmatprep.subr.mxu0 0.0
  %2582 = vmatpush2.msra.mxu0 0.0
  %2583 = vmatprep.subr.mxu0 0.0
  %2584 = vmatpush2.msra.mxu0 0.0
  %2585 = vmatprep.subr.mxu0 0.0
  %2586 = vmatpush2.msra.mxu0 0.0
  %2587 = vmatprep.subr.mxu0 0.0
  %2588 = vmatpush2.msra.mxu0 0.0
  %2589 = vmatprep.subr.mxu0 0.0
  %2590 = vmatpush2.msra.mxu0 0.0
  %2591 = vmatprep.subr.mxu0 0.0
  %2592 = vmatpush2.msra.mxu0 0.0
  %2593 = vmatprep.subr.mxu0 0.0
  %2594 = vmatpush2.msra.mxu0 0.0
  %2595 = vmatprep.subr.mxu0 0.0
  %2596 = vmatpush2.msra.mxu0 0.0
  %2597 = vmatprep.subr.mxu0 0.0
  %2598 = vmatpush2.msra.mxu0 0.0
  %2599 = vmatprep.subr.mxu0 0.0
  %2600 = vmatpush2.msra.mxu0 0.0
  %2601 = vmatprep.subr.mxu0 0.0
  %2602 = vmatpush2.msra.mxu0 0.0
  %2603 = vmatprep.subr.mxu0 0.0
  %2604 = vmatpush2.msra.mxu0 0.0
  %2605 = vmatprep.subr.mxu0 0.0
  %2606 = vmatpush2.msra.mxu0 0.0
  %2607 = vmatprep.subr.mxu0 0.0
  %2608 = vmatpush2.msra.mxu0 0.0
  %2609 = vmatprep.subr.mxu0 0.0
  %2610 = vmatpush2.msra.mxu0 0.0
  %2611 = vmatprep.mubr.f32.mxu0 0.0
  %2612 = vmatmul.mubr.f32.gmra.mxu0 %v151
  %v2613 = vpop.f32.mrf.mxu0
  %v2614 = vadd.f32 %v147, %v2613
  %v2615 = vpop.f32.mrf.mxu0
  %v2616 = vadd.f32 %v147, %v2615
  %2617 = vdwg.mxu0
  %v2618 = vmax.f32 %v413, 0.0
  %v2619 = vmax.f32 %v415, 0.0
  %v2620 = vmax.f32 %v484, 0.0
  %v2621 = vmax.f32 %v486, 0.0
  %v2622 = vmax.f32 %v555, 0.0
  %v2623 = vmax.f32 %v557, 0.0
  %v2624 = vmax.f32 %v626, 0.0
  %v2625 = vmax.f32 %v628, 0.0
  %v2626 = vmax.f32 %v697, 0.0
  %v2627 = vmax.f32 %v699, 0.0
  %v2628 = vmax.f32 %v768, 0.0
  %v2629 = vmax.f32 %v770, 0.0
  %v2630 = vmax.f32 %v839, 0.0
  %v2631 = vmax.f32 %v841, 0.0
  %v2632 = vmax.f32 %v910, 0.0
  %v2633 = vmax.f32 %v912, 0.0
  %v2634 = vmax.f32 %v981, 0.0
  %v2635 = vmax.f32 %v983, 0.0
  %v2636 = vmax.f32 %v1052, 0.0
  %v2637 = vmax.f32 %v1054, 0.0
  %v2638 = vmax.f32 %v1123, 0.0
  %v2639 = vmax.f32 %v1125, 0.0
  %v2640 = vmax.f32 %v1194, 0.0
  %v2641 = vmax.f32 %v1196, 0.0
  %v2642 = vmax.f32 %v1265, 0.0
  %v2643 = vmax.f32 %v1267, 0.0
  %v2644 = vmax.f32 %v1336, 0.0
  %v2645 = vmax.f32 %v1338, 0.0
  %v2646 = vmax.f32 %v1407, 0.0
  %v2647 = vmax.f32 %v1409, 0.0
  %v2648 = vmax.f32 %v1478, 0.0
  %v2649 = vmax.f32 %v1480, 0.0
  %v2650 = vmax.f32 %v1549, 0.0
  %v2651 = vmax.f32 %v1551, 0.0
  %v2652 = vmax.f32 %v1620, 0.0
  %v2653 = vmax.f32 %v1622, 0.0
  %v2654 = vmax.f32 %v1691, 0.0
  %v2655 = vmax.f32 %v1693, 0.0
  %v2656 = vmax.f32 %v1762, 0.0
  %v2657 = vmax.f32 %v1764, 0.0
  %v2658 = vmax.f32 %v1833, 0.0
  %v2659 = vmax.f32 %v1835, 0.0
  %v2660 = vmax.f32 %v1904, 0.0
  %v2661 = vmax.f32 %v1906, 0.0
  %v2662 = vmax.f32 %v1975, 0.0
  %v2663 = vmax.f32 %v1977, 0.0
  %v2664 = vmax.f32 %v2046, 0.0
  %v2665 = vmax.f32 %v2048, 0.0
  %v2666 = vmax.f32 %v2117, 0.0
  %v2667 = vmax.f32 %v2119, 0.0
  %v2668 = vmax.f32 %v2188, 0.0
  %v2669 = vmax.f32 %v2190, 0.0
  %v2670 = vmax.f32 %v2259, 0.0
  %v2671 = vmax.f32 %v2261, 0.0
  %v2672 = vmax.f32 %v2330, 0.0
  %v2673 = vmax.f32 %v2332, 0.0
  %v2674 = vmax.f32 %v2401, 0.0
  %v2675 = vmax.f32 %v2403, 0.0
  %v2676 = vmax.f32 %v2472, 0.0
  %v2677 = vmax.f32 %v2474, 0.0
  %v2678 = vmax.f32 %v2543, 0.0
  %v2679 = vmax.f32 %v2545, 0.0
  %v2680 = vmax.f32 %v2614, 0.0
  %v2681 = vmax.f32 %v2616, 0.0
  %2682 = vst [vmem:[%s3] sm:$0xff] %v2618
  %2683 = vst [vmem:[%s3 + $0x8] sm:$0xff] %v2619
  %2684 = vst [vmem:[%s3 + $0x10] sm:$0xff] %v2620
  %2685 = vst [vmem:[%s3 + $0x18] sm:$0xff] %v2621
  %2686 = vst [vmem:[%s3 + $0x20] sm:$0xff] %v2622
  %2687 = vst [vmem:[%s3 + $0x28] sm:$0xff] %v2623
  %2688 = vst [vmem:[%s3 + $0x30] sm:$0xff] %v2624
  %2689 = vst [vmem:[%s3 + $0x38] sm:$0xff] %v2625
  %2690 = vst [vmem:[%s3 + $0x40] sm:$0xff] %v2626
  %2691 = vst [vmem:[%s3 + $0x48] sm:$0xff] %v2627
  %2692 = vst [vmem:[%s3 + $0x50] sm:$0xff] %v2628
  %2693 = vst [vmem:[%s3 + $0x58] sm:$0xff] %v2629
  %2694 = vst [vmem:[%s3 + $0x60] sm:$0xff] %v2630
  %2695 = vst [vmem:[%s3 + $0x68] sm:$0xff] %v2631
  %2696 = vst [vmem:[%s3 + $0x70] sm:$0xff] %v2632
  %2697 = vst [vmem:[%s3 + $0x78] sm:$0xff] %v2633
  %2698 = vst [vmem:[%s3 + $0x80] sm:$0xff] %v2634
  %2699 = vst [vmem:[%s3 + $0x88] sm:$0xff] %v2635
  %2700 = vst [vmem:[%s3 + $0x90] sm:$0xff] %v2636
  %2701 = vst [vmem:[%s3 + $0x98] sm:$0xff] %v2637
  %2702 = vst [vmem:[%s3 + $0xa0] sm:$0xff] %v2638
  %2703 = vst [vmem:[%s3 + $0xa8] sm:$0xff] %v2639
  %2704 = vst [vmem:[%s3 + $0xb0] sm:$0xff] %v2640
  %2705 = vst [vmem:[%s3 + $0xb8] sm:$0xff] %v2641
  %2706 = vst [vmem:[%s3 + $0xc0] sm:$0xff] %v2642
  %2707 = vst [vmem:[%s3 + $0xc8] sm:$0xff] %v2643
  %2708 = vst [vmem:[%s3 + $0xd0] sm:$0xff] %v2644
  %2709 = vst [vmem:[%s3 + $0xd8] sm:$0xff] %v2645
  %2710 = vst [vmem:[%s3 + $0xe0] sm:$0xff] %v2646
  %2711 = vst [vmem:[%s3 + $0xe8] sm:$0xff] %v2647
  %2712 = vst [vmem:[%s3 + $0xf0] sm:$0xff] %v2648
  %2713 = vst [vmem:[%s3 + $0xf8] sm:$0xff] %v2649
  %2714 = vst [vmem:[%s3 + $0x100] sm:$0xff] %v2650
  %2715 = vst [vmem:[%s3 + $0x108] sm:$0xff] %v2651
  %2716 = vst [vmem:[%s3 + $0x110] sm:$0xff] %v2652
  %2717 = vst [vmem:[%s3 + $0x118] sm:$0xff] %v2653
  %2718 = vst [vmem:[%s3 + $0x120] sm:$0xff] %v2654
  %2719 = vst [vmem:[%s3 + $0x128] sm:$0xff] %v2655
  %2720 = vst [vmem:[%s3 + $0x130] sm:$0xff] %v2656
  %2721 = vst [vmem:[%s3 + $0x138] sm:$0xff] %v2657
  %2722 = vst [vmem:[%s3 + $0x140] sm:$0xff] %v2658
  %2723 = vst [vmem:[%s3 + $0x148] sm:$0xff] %v2659
  %2724 = vst [vmem:[%s3 + $0x150] sm:$0xff] %v2660
  %2725 = vst [vmem:[%s3 + $0x158] sm:$0xff] %v2661
  %2726 = vst [vmem:[%s3 + $0x160] sm:$0xff] %v2662
  %2727 = vst [vmem:[%s3 + $0x168] sm:$0xff] %v2663
  %2728 = vst [vmem:[%s3 + $0x170] sm:$0xff] %v2664
  %2729 = vst [vmem:[%s3 + $0x178] sm:$0xff] %v2665
  %2730 = vst [vmem:[%s3 + $0x180] sm:$0xff] %v2666
  %2731 = vst [vmem:[%s3 + $0x188] sm:$0xff] %v2667
  %2732 = vst [vmem:[%s3 + $0x190] sm:$0xff] %v2668
  %2733 = vst [vmem:[%s3 + $0x198] sm:$0xff] %v2669
  %2734 = vst [vmem:[%s3 + $0x1a0] sm:$0xff] %v2670
  %2735 = vst [vmem:[%s3 + $0x1a8] sm:$0xff] %v2671
  %2736 = vst [vmem:[%s3 + $0x1b0] sm:$0xff] %v2672
  %2737 = vst [vmem:[%s3 + $0x1b8] sm:$0xff] %v2673
  %2738 = vst [vmem:[%s3 + $0x1c0] sm:$0xff] %v2674
  %2739 = vst [vmem:[%s3 + $0x1c8] sm:$0xff] %v2675
  %2740 = vst [vmem:[%s3 + $0x1d0] sm:$0xff] %v2676
  %2741 = vst [vmem:[%s3 + $0x1d8] sm:$0xff] %v2677
  %2742 = vst [vmem:[%s3 + $0x1e0] sm:$0xff] %v2678
  %2743 = vst [vmem:[%s3 + $0x1e8] sm:$0xff] %v2679
  %2744 = vst [vmem:[%s3 + $0x1f0] sm:$0xff] %v2680
  %2745 = vst [vmem:[%s3 + $0x1f8] sm:$0xff] %v2681
  // Predicated region
  $region14: #{encoder_forward.5} parent=0 // pred_check
    _
  $region15: #{encoder_forward.5} parent=0 // pred_check_branch
    %2747 = sbr.rel (0) target = $region17
  $region16: #{encoder_forward.5} parent=0 // pred_region
    _
  $region17: #{encoder_forward.5} parent=0 // pred_fallthru
    _
  // Predicated region
  $region18: #{encoder_forward.5} parent=0 // pred_check
    _
  $region19: #{encoder_forward.5} parent=0 // pred_check_branch
    %2749 = sbr.rel (0) target = $region21
  $region20: #{encoder_forward.5} parent=0 // pred_region
    _
  $region21: #{encoder_forward.5} parent=0 // pred_fallthru
    _

// kernel: encoder_forward.6
$region0: #{encoder_forward.6}
  #allocation0 [shape = 'u32[]', space=smem, size = 0x4, offset = 0x4, fixed_abs, tag = 'smem constant byte address 0x4 - core index']
  #allocation1 [shape = 'u32[144,128]{1,0:T(1,128)}', space=vmem, size = 0x12000, scoped, tag = 'internal scratch']
  %s0 = inlined_call_operand.vmem [shape: f32[16,72], index: 0, kind: input, shape index: {}]
  %s1 = inlined_call_operand.vmem [shape: f32[72,2048], index: 1, kind: input, shape index: {}]
  %s2 = inlined_call_operand.vmem [shape: f32[16,1], index: 2, kind: input, shape index: {}]
  %s3 = inlined_call_operand.vmem [shape: f32[16,2048], index: 3, kind: output, shape index: {}]
  %s4 = sld [smem:[#allocation0]]
  $region22: #{encoder_forward.6} parent=0
    _
  %s6 = ssub.s32 1, %s4
  %s7 = scalar_select 0, %s6, %s4
  // Predicated region
  $region2: #{encoder_forward.6} parent=0 // pred_check
    _
  $region3: #{encoder_forward.6} parent=0 // pred_check_branch
    %9 = sbr.rel (0) target = $region5
  $region4: #{encoder_forward.6} parent=0 // pred_region
    _
  $region5: #{encoder_forward.6} parent=0 // pred_fallthru
    _
  // Predicated region
  $region6: #{encoder_forward.6} parent=0 // pred_check
    _
  $region7: #{encoder_forward.6} parent=0 // pred_check_branch
    %11 = sbr.rel (0) target = $region9
  $region8: #{encoder_forward.6} parent=0 // pred_region
    _
  $region9: #{encoder_forward.6} parent=0 // pred_fallthru
    _
  // Predicated region
  $region10: #{encoder_forward.6} parent=0 // pred_check
    _
  $region11: #{encoder_forward.6} parent=0 // pred_check_branch
    %13 = sbr.rel (0) target = $region13
  $region12: #{encoder_forward.6} parent=0 // pred_region
    _
  $region13: #{encoder_forward.6} parent=0 // pred_fallthru
    _
  %v14 = vld [vmem:[%s0] sm:$0xff]
  %v15 = vld [vmem:[%s0 + $0x8] sm:$0xff]
  %v16 = vld [vmem:[%s1] sm:$0xff]
  %v17 = vld [vmem:[%s1 + $0x8] sm:$0xff]
  %v18 = vld [vmem:[%s1 + $0x10] sm:$0xff]
  %v19 = vld [vmem:[%s1 + $0x18] sm:$0xff]
  %v20 = vld [vmem:[%s1 + $0x20] sm:$0xff]
  %v21 = vld [vmem:[%s1 + $0x28] sm:$0xff]
  %v22 = vld [vmem:[%s1 + $0x30] sm:$0xff]
  %v23 = vld [vmem:[%s1 + $0x38] sm:$0xff]
  %v24 = vld [vmem:[%s1 + $0x40] sm:$0xff]
  %v25 = vld [vmem:[%s1 + $0x48] sm:$0xff]
  %v26 = vld [vmem:[%s1 + $0x50] sm:$0xff]
  %v27 = vld [vmem:[%s1 + $0x58] sm:$0xff]
  %v28 = vld [vmem:[%s1 + $0x60] sm:$0xff]
  %v29 = vld [vmem:[%s1 + $0x68] sm:$0xff]
  %v30 = vld [vmem:[%s1 + $0x70] sm:$0xff]
  %v31 = vld [vmem:[%s1 + $0x78] sm:$0xff]
  %v32 = vld [vmem:[%s1 + $0x80] sm:$0xff]
  %v33 = vld [vmem:[%s1 + $0x88] sm:$0xff]
  %v34 = vld [vmem:[%s1 + $0x90] sm:$0xff]
  %v35 = vld [vmem:[%s1 + $0x98] sm:$0xff]
  %v36 = vld [vmem:[%s1 + $0xa0] sm:$0xff]
  %v37 = vld [vmem:[%s1 + $0xa8] sm:$0xff]
  %v38 = vld [vmem:[%s1 + $0xb0] sm:$0xff]
  %v39 = vld [vmem:[%s1 + $0xb8] sm:$0xff]
  %v40 = vld [vmem:[%s1 + $0xc0] sm:$0xff]
  %v41 = vld [vmem:[%s1 + $0xc8] sm:$0xff]
  %v42 = vld [vmem:[%s1 + $0xd0] sm:$0xff]
  %v43 = vld [vmem:[%s1 + $0xd8] sm:$0xff]
  %v44 = vld [vmem:[%s1 + $0xe0] sm:$0xff]
  %v45 = vld [vmem:[%s1 + $0xe8] sm:$0xff]
  %v46 = vld [vmem:[%s1 + $0xf0] sm:$0xff]
  %v47 = vld [vmem:[%s1 + $0xf8] sm:$0xff]
  %v48 = vld [vmem:[%s1 + $0x100] sm:$0xff]
  %v49 = vld [vmem:[%s1 + $0x108] sm:$0xff]
  %v50 = vld [vmem:[%s1 + $0x110] sm:$0xff]
  %v51 = vld [vmem:[%s1 + $0x118] sm:$0xff]
  %v52 = vld [vmem:[%s1 + $0x120] sm:$0xff]
  %v53 = vld [vmem:[%s1 + $0x128] sm:$0xff]
  %v54 = vld [vmem:[%s1 + $0x130] sm:$0xff]
  %v55 = vld [vmem:[%s1 + $0x138] sm:$0xff]
  %v56 = vld [vmem:[%s1 + $0x140] sm:$0xff]
  %v57 = vld [vmem:[%s1 + $0x148] sm:$0xff]
  %v58 = vld [vmem:[%s1 + $0x150] sm:$0xff]
  %v59 = vld [vmem:[%s1 + $0x158] sm:$0xff]
  %v60 = vld [vmem:[%s1 + $0x160] sm:$0xff]
  %v61 = vld [vmem:[%s1 + $0x168] sm:$0xff]
  %v62 = vld [vmem:[%s1 + $0x170] sm:$0xff]
  %v63 = vld [vmem:[%s1 + $0x178] sm:$0xff]
  %v64 = vld [vmem:[%s1 + $0x180] sm:$0xff]
  %v65 = vld [vmem:[%s1 + $0x188] sm:$0xff]
  %v66 = vld [vmem:[%s1 + $0x190] sm:$0xff]
  %v67 = vld [vmem:[%s1 + $0x198] sm:$0xff]
  %v68 = vld [vmem:[%s1 + $0x1a0] sm:$0xff]
  %v69 = vld [vmem:[%s1 + $0x1a8] sm:$0xff]
  %v70 = vld [vmem:[%s1 + $0x1b0] sm:$0xff]
  %v71 = vld [vmem:[%s1 + $0x1b8] sm:$0xff]
  %v72 = vld [vmem:[%s1 + $0x1c0] sm:$0xff]
  %v73 = vld [vmem:[%s1 + $0x1c8] sm:$0xff]
  %v74 = vld [vmem:[%s1 + $0x1d0] sm:$0xff]
  %v75 = vld [vmem:[%s1 + $0x1d8] sm:$0xff]
  %v76 = vld [vmem:[%s1 + $0x1e0] sm:$0xff]
  %v77 = vld [vmem:[%s1 + $0x1e8] sm:$0xff]
  %v78 = vld [vmem:[%s1 + $0x1f0] sm:$0xff]
  %v79 = vld [vmem:[%s1 + $0x1f8] sm:$0xff]
  %v80 = vld [vmem:[%s1 + $0x200] sm:$0xff]
  %v81 = vld [vmem:[%s1 + $0x208] sm:$0xff]
  %v82 = vld [vmem:[%s1 + $0x210] sm:$0xff]
  %v83 = vld [vmem:[%s1 + $0x218] sm:$0xff]
  %v84 = vld [vmem:[%s1 + $0x220] sm:$0xff]
  %v85 = vld [vmem:[%s1 + $0x228] sm:$0xff]
  %v86 = vld [vmem:[%s1 + $0x230] sm:$0xff]
  %v87 = vld [vmem:[%s1 + $0x238] sm:$0xff]
  %v88 = vld [vmem:[%s1 + $0x240] sm:$0xff]
  %v89 = vld [vmem:[%s1 + $0x248] sm:$0xff]
  %v90 = vld [vmem:[%s1 + $0x250] sm:$0xff]
  %v91 = vld [vmem:[%s1 + $0x258] sm:$0xff]
  %v92 = vld [vmem:[%s1 + $0x260] sm:$0xff]
  %v93 = vld [vmem:[%s1 + $0x268] sm:$0xff]
  %v94 = vld [vmem:[%s1 + $0x270] sm:$0xff]
  %v95 = vld [vmem:[%s1 + $0x278] sm:$0xff]
  %v96 = vld [vmem:[%s1 + $0x280] sm:$0xff]
  %v97 = vld [vmem:[%s1 + $0x288] sm:$0xff]
  %v98 = vld [vmem:[%s1 + $0x290] sm:$0xff]
  %v99 = vld [vmem:[%s1 + $0x298] sm:$0xff]
  %v100 = vld [vmem:[%s1 + $0x2a0] sm:$0xff]
  %v101 = vld [vmem:[%s1 + $0x2a8] sm:$0xff]
  %v102 = vld [vmem:[%s1 + $0x2b0] sm:$0xff]
  %v103 = vld [vmem:[%s1 + $0x2b8] sm:$0xff]
  %v104 = vld [vmem:[%s1 + $0x2c0] sm:$0xff]
  %v105 = vld [vmem:[%s1 + $0x2c8] sm:$0xff]
  %v106 = vld [vmem:[%s1 + $0x2d0] sm:$0xff]
  %v107 = vld [vmem:[%s1 + $0x2d8] sm:$0xff]
  %v108 = vld [vmem:[%s1 + $0x2e0] sm:$0xff]
  %v109 = vld [vmem:[%s1 + $0x2e8] sm:$0xff]
  %v110 = vld [vmem:[%s1 + $0x2f0] sm:$0xff]
  %v111 = vld [vmem:[%s1 + $0x2f8] sm:$0xff]
  %v112 = vld [vmem:[%s1 + $0x300] sm:$0xff]
  %v113 = vld [vmem:[%s1 + $0x308] sm:$0xff]
  %v114 = vld [vmem:[%s1 + $0x310] sm:$0xff]
  %v115 = vld [vmem:[%s1 + $0x318] sm:$0xff]
  %v116 = vld [vmem:[%s1 + $0x320] sm:$0xff]
  %v117 = vld [vmem:[%s1 + $0x328] sm:$0xff]
  %v118 = vld [vmem:[%s1 + $0x330] sm:$0xff]
  %v119 = vld [vmem:[%s1 + $0x338] sm:$0xff]
  %v120 = vld [vmem:[%s1 + $0x340] sm:$0xff]
  %v121 = vld [vmem:[%s1 + $0x348] sm:$0xff]
  %v122 = vld [vmem:[%s1 + $0x350] sm:$0xff]
  %v123 = vld [vmem:[%s1 + $0x358] sm:$0xff]
  %v124 = vld [vmem:[%s1 + $0x360] sm:$0xff]
  %v125 = vld [vmem:[%s1 + $0x368] sm:$0xff]
  %v126 = vld [vmem:[%s1 + $0x370] sm:$0xff]
  %v127 = vld [vmem:[%s1 + $0x378] sm:$0xff]
  %v128 = vld [vmem:[%s1 + $0x380] sm:$0xff]
  %v129 = vld [vmem:[%s1 + $0x388] sm:$0xff]
  %v130 = vld [vmem:[%s1 + $0x390] sm:$0xff]
  %v131 = vld [vmem:[%s1 + $0x398] sm:$0xff]
  %v132 = vld [vmem:[%s1 + $0x3a0] sm:$0xff]
  %v133 = vld [vmem:[%s1 + $0x3a8] sm:$0xff]
  %v134 = vld [vmem:[%s1 + $0x3b0] sm:$0xff]
  %v135 = vld [vmem:[%s1 + $0x3b8] sm:$0xff]
  %v136 = vld [vmem:[%s1 + $0x3c0] sm:$0xff]
  %v137 = vld [vmem:[%s1 + $0x3c8] sm:$0xff]
  %v138 = vld [vmem:[%s1 + $0x3d0] sm:$0xff]
  %v139 = vld [vmem:[%s1 + $0x3d8] sm:$0xff]
  %v140 = vld [vmem:[%s1 + $0x3e0] sm:$0xff]
  %v141 = vld [vmem:[%s1 + $0x3e8] sm:$0xff]
  %v142 = vld [vmem:[%s1 + $0x3f0] sm:$0xff]
  %v143 = vld [vmem:[%s1 + $0x3f8] sm:$0xff]
  %v144 = vld [vmem:[%s1 + $0x400] sm:$0xff]
  %v145 = vld [vmem:[%s1 + $0x408] sm:$0xff]
  %v146 = vld [vmem:[%s1 + $0x410] sm:$0xff]
  %v147 = vld [vmem:[%s1 + $0x418] sm:$0xff]
  %v148 = vld [vmem:[%s1 + $0x420] sm:$0xff]
  %v149 = vld [vmem:[%s1 + $0x428] sm:$0xff]
  %v150 = vld [vmem:[%s1 + $0x430] sm:$0xff]
  %v151 = vld [vmem:[%s1 + $0x438] sm:$0xff]
  %v152 = vld [vmem:[%s1 + $0x440] sm:$0xff]
  %v153 = vld [vmem:[%s1 + $0x448] sm:$0xff]
  %v154 = vld [vmem:[%s1 + $0x450] sm:$0xff]
  %v155 = vld [vmem:[%s1 + $0x458] sm:$0xff]
  %v156 = vld [vmem:[%s1 + $0x460] sm:$0xff]
  %v157 = vld [vmem:[%s1 + $0x468] sm:$0xff]
  %v158 = vld [vmem:[%s1 + $0x470] sm:$0xff]
  %v159 = vld [vmem:[%s1 + $0x478] sm:$0xff]
  %v160 = vld [vmem:[%s2] sm:$0xff]
  %v161 = vld [vmem:[%s2 + $0x8] sm:$0xff]
  %163 = vset.pattern.permute.xlu0 0
  %164 = vperm.xlu0 %163, %v160
  %v165 = vpop.permute.xlu0 %164
  %168 = vset.pattern.permute.xlu0 0
  %169 = vperm.xlu0 %168, %v161
  %v170 = vpop.permute.xlu0 %169
  %vm172 = vcmask 588800
  %v174 = vsel %vm172, %v14, 0
  %v177 = vsel %vm172, %v15, 0
  %179 = vmatprep.subr.mxu0 0.0
  %180 = vmatpush1.msra.mxu0 0.0
  %181 = vmatprep.subr.mxu0 0.0
  %182 = vmatpush1.msra.mxu0 0.0
  %183 = vmatprep.subr.mxu0 0.0
  %184 = vmatpush1.msra.mxu0 0.0
  %185 = vmatprep.subr.mxu0 0.0
  %186 = vmatpush1.msra.mxu0 0.0
  %187 = vmatprep.subr.mxu0 0.0
  %188 = vmatpush1.msra.mxu0 0.0
  %189 = vmatprep.subr.mxu0 0.0
  %190 = vmatpush1.msra.mxu0 0.0
  %191 = vmatprep.subr.mxu0 0.0
  %192 = vmatpush1.msra.mxu0 0.0
  %193 = vmatprep.subr.mxu0 %v145
  %194 = vmatpush1.msra.mxu0 %v144
  %195 = vmatprep.subr.mxu0 %v129
  %196 = vmatpush1.msra.mxu0 %v128
  %197 = vmatprep.subr.mxu0 %v113
  %198 = vmatpush1.msra.mxu0 %v112
  %199 = vmatprep.subr.mxu0 %v97
  %200 = vmatpush1.msra.mxu0 %v96
  %201 = vmatprep.subr.mxu0 %v81
  %202 = vmatpush1.msra.mxu0 %v80
  %203 = vmatprep.subr.mxu0 %v65
  %204 = vmatpush1.msra.mxu0 %v64
  %205 = vmatprep.subr.mxu0 %v49
  %206 = vmatpush1.msra.mxu0 %v48
  %207 = vmatprep.subr.mxu0 %v33
  %208 = vmatpush1.msra.mxu0 %v32
  %209 = vmatprep.subr.mxu0 %v17
  %210 = vmatpush1.msra.mxu0 %v16
  %211 = vmatprep.subr.mxu0 0.0
  %212 = vmatpush2.msra.mxu0 0.0
  %213 = vmatprep.subr.mxu0 0.0
  %214 = vmatpush2.msra.mxu0 0.0
  %215 = vmatprep.subr.mxu0 0.0
  %216 = vmatpush2.msra.mxu0 0.0
  %217 = vmatprep.subr.mxu0 0.0
  %218 = vmatpush2.msra.mxu0 0.0
  %219 = vmatprep.subr.mxu0 0.0
  %220 = vmatpush2.msra.mxu0 0.0
  %221 = vmatprep.subr.mxu0 0.0
  %222 = vmatpush2.msra.mxu0 0.0
  %223 = vmatprep.subr.mxu0 0.0
  %224 = vmatpush2.msra.mxu0 0.0
  %225 = vmatprep.subr.mxu0 0.0
  %226 = vmatpush2.msra.mxu0 0.0
  %227 = vmatprep.subr.mxu0 0.0
  %228 = vmatpush2.msra.mxu0 0.0
  %229 = vmatprep.subr.mxu0 0.0
  %230 = vmatpush2.msra.mxu0 0.0
  %231 = vmatprep.subr.mxu0 0.0
  %232 = vmatpush2.msra.mxu0 0.0
  %233 = vmatprep.subr.mxu0 0.0
  %234 = vmatpush2.msra.mxu0 0.0
  %235 = vmatprep.subr.mxu0 0.0
  %236 = vmatpush2.msra.mxu0 0.0
  %237 = vmatprep.subr.mxu0 0.0
  %238 = vmatpush2.msra.mxu0 0.0
  %239 = vmatprep.subr.mxu0 0.0
  %240 = vmatpush2.msra.mxu0 0.0
  %241 = vmatprep.subr.mxu0 0.0
  %242 = vmatpush2.msra.mxu0 0.0
  %243 = vmatprep.mubr.f32.mxu0 0.0
  %244 = vmatmul.mubr.f32.gmra.mxu0 %v174
  %v245 = vpop.f32.mrf.mxu0
  %v246 = vadd.f32 %v165, %v245
  %v247 = vpop.f32.mrf.mxu0
  %v248 = vadd.f32 %v165, %v247
  %249 = vmatprep.mubr.f32.mxu0 0.0
  %250 = vmatmul.mubr.f32.gmra.mxu0 %v177
  %v251 = vpop.f32.mrf.mxu0
  %v252 = vadd.f32 %v170, %v251
  %v253 = vpop.f32.mrf.mxu0
  %v254 = vadd.f32 %v170, %v253
  %255 = vdwg.mxu0
  %256 = vmatprep.subr.mxu0 0.0
  %257 = vmatpush1.msra.mxu0 0.0
  %258 = vmatprep.subr.mxu0 0.0
  %259 = vmatpush1.msra.mxu0 0.0
  %260 = vmatprep.subr.mxu0 0.0
  %261 = vmatpush1.msra.mxu0 0.0
  %262 = vmatprep.subr.mxu0 0.0
  %263 = vmatpush1.msra.mxu0 0.0
  %264 = vmatprep.subr.mxu0 0.0
  %265 = vmatpush1.msra.mxu0 0.0
  %266 = vmatprep.subr.mxu0 0.0
  %267 = vmatpush1.msra.mxu0 0.0
  %268 = vmatprep.subr.mxu0 0.0
  %269 = vmatpush1.msra.mxu0 0.0
  %270 = vmatprep.subr.mxu0 %v147
  %271 = vmatpush1.msra.mxu0 %v146
  %272 = vmatprep.subr.mxu0 %v131
  %273 = vmatpush1.msra.mxu0 %v130
  %274 = vmatprep.subr.mxu0 %v115
  %275 = vmatpush1.msra.mxu0 %v114
  %276 = vmatprep.subr.mxu0 %v99
  %277 = vmatpush1.msra.mxu0 %v98
  %278 = vmatprep.subr.mxu0 %v83
  %279 = vmatpush1.msra.mxu0 %v82
  %280 = vmatprep.subr.mxu0 %v67
  %281 = vmatpush1.msra.mxu0 %v66
  %282 = vmatprep.subr.mxu0 %v51
  %283 = vmatpush1.msra.mxu0 %v50
  %284 = vmatprep.subr.mxu0 %v35
  %285 = vmatpush1.msra.mxu0 %v34
  %286 = vmatprep.subr.mxu0 %v19
  %287 = vmatpush1.msra.mxu0 %v18
  %288 = vmatprep.subr.mxu0 0.0
  %289 = vmatpush2.msra.mxu0 0.0
  %290 = vmatprep.subr.mxu0 0.0
  %291 = vmatpush2.msra.mxu0 0.0
  %292 = vmatprep.subr.mxu0 0.0
  %293 = vmatpush2.msra.mxu0 0.0
  %294 = vmatprep.subr.mxu0 0.0
  %295 = vmatpush2.msra.mxu0 0.0
  %296 = vmatprep.subr.mxu0 0.0
  %297 = vmatpush2.msra.mxu0 0.0
  %298 = vmatprep.subr.mxu0 0.0
  %299 = vmatpush2.msra.mxu0 0.0
  %300 = vmatprep.subr.mxu0 0.0
  %301 = vmatpush2.msra.mxu0 0.0
  %302 = vmatprep.subr.mxu0 0.0
  %303 = vmatpush2.msra.mxu0 0.0
  %304 = vmatprep.subr.mxu0 0.0
  %305 = vmatpush2.msra.mxu0 0.0
  %306 = vmatprep.subr.mxu0 0.0
  %307 = vmatpush2.msra.mxu0 0.0
  %308 = vmatprep.subr.mxu0 0.0
  %309 = vmatpush2.msra.mxu0 0.0
  %310 = vmatprep.subr.mxu0 0.0
  %311 = vmatpush2.msra.mxu0 0.0
  %312 = vmatprep.subr.mxu0 0.0
  %313 = vmatpush2.msra.mxu0 0.0
  %314 = vmatprep.subr.mxu0 0.0
  %315 = vmatpush2.msra.mxu0 0.0
  %316 = vmatprep.subr.mxu0 0.0
  %317 = vmatpush2.msra.mxu0 0.0
  %318 = vmatprep.subr.mxu0 0.0
  %319 = vmatpush2.msra.mxu0 0.0
  %320 = vmatprep.mubr.f32.mxu0 0.0
  %321 = vmatmul.mubr.f32.gmra.mxu0 %v174
  %v322 = vpop.f32.mrf.mxu0
  %v323 = vadd.f32 %v165, %v322
  %v324 = vpop.f32.mrf.mxu0
  %v325 = vadd.f32 %v165, %v324
  %326 = vmatprep.mubr.f32.mxu0 0.0
  %327 = vmatmul.mubr.f32.gmra.mxu0 %v177
  %v328 = vpop.f32.mrf.mxu0
  %v329 = vadd.f32 %v170, %v328
  %v330 = vpop.f32.mrf.mxu0
  %v331 = vadd.f32 %v170, %v330
  %332 = vdwg.mxu0
  %333 = vmatprep.subr.mxu0 0.0
  %334 = vmatpush1.msra.mxu0 0.0
  %335 = vmatprep.subr.mxu0 0.0
  %336 = vmatpush1.msra.mxu0 0.0
  %337 = vmatprep.subr.mxu0 0.0
  %338 = vmatpush1.msra.mxu0 0.0
  %339 = vmatprep.subr.mxu0 0.0
  %340 = vmatpush1.msra.mxu0 0.0
  %341 = vmatprep.subr.mxu0 0.0
  %342 = vmatpush1.msra.mxu0 0.0
  %343 = vmatprep.subr.mxu0 0.0
  %344 = vmatpush1.msra.mxu0 0.0
  %345 = vmatprep.subr.mxu0 0.0
  %346 = vmatpush1.msra.mxu0 0.0
  %347 = vmatprep.subr.mxu0 %v149
  %348 = vmatpush1.msra.mxu0 %v148
  %349 = vmatprep.subr.mxu0 %v133
  %350 = vmatpush1.msra.mxu0 %v132
  %351 = vmatprep.subr.mxu0 %v117
  %352 = vmatpush1.msra.mxu0 %v116
  %353 = vmatprep.subr.mxu0 %v101
  %354 = vmatpush1.msra.mxu0 %v100
  %355 = vmatprep.subr.mxu0 %v85
  %356 = vmatpush1.msra.mxu0 %v84
  %357 = vmatprep.subr.mxu0 %v69
  %358 = vmatpush1.msra.mxu0 %v68
  %359 = vmatprep.subr.mxu0 %v53
  %360 = vmatpush1.msra.mxu0 %v52
  %361 = vmatprep.subr.mxu0 %v37
  %362 = vmatpush1.msra.mxu0 %v36
  %363 = vmatprep.subr.mxu0 %v21
  %364 = vmatpush1.msra.mxu0 %v20
  %365 = vmatprep.subr.mxu0 0.0
  %366 = vmatpush2.msra.mxu0 0.0
  %367 = vmatprep.subr.mxu0 0.0
  %368 = vmatpush2.msra.mxu0 0.0
  %369 = vmatprep.subr.mxu0 0.0
  %370 = vmatpush2.msra.mxu0 0.0
  %371 = vmatprep.subr.mxu0 0.0
  %372 = vmatpush2.msra.mxu0 0.0
  %373 = vmatprep.subr.mxu0 0.0
  %374 = vmatpush2.msra.mxu0 0.0
  %375 = vmatprep.subr.mxu0 0.0
  %376 = vmatpush2.msra.mxu0 0.0
  %377 = vmatprep.subr.mxu0 0.0
  %378 = vmatpush2.msra.mxu0 0.0
  %379 = vmatprep.subr.mxu0 0.0
  %380 = vmatpush2.msra.mxu0 0.0
  %381 = vmatprep.subr.mxu0 0.0
  %382 = vmatpush2.msra.mxu0 0.0
  %383 = vmatprep.subr.mxu0 0.0
  %384 = vmatpush2.msra.mxu0 0.0
  %385 = vmatprep.subr.mxu0 0.0
  %386 = vmatpush2.msra.mxu0 0.0
  %387 = vmatprep.subr.mxu0 0.0
  %388 = vmatpush2.msra.mxu0 0.0
  %389 = vmatprep.subr.mxu0 0.0
  %390 = vmatpush2.msra.mxu0 0.0
  %391 = vmatprep.subr.mxu0 0.0
  %392 = vmatpush2.msra.mxu0 0.0
  %393 = vmatprep.subr.mxu0 0.0
  %394 = vmatpush2.msra.mxu0 0.0
  %395 = vmatprep.subr.mxu0 0.0
  %396 = vmatpush2.msra.mxu0 0.0
  %397 = vmatprep.mubr.f32.mxu0 0.0
  %398 = vmatmul.mubr.f32.gmra.mxu0 %v174
  %v399 = vpop.f32.mrf.mxu0
  %v400 = vadd.f32 %v165, %v399
  %v401 = vpop.f32.mrf.mxu0
  %v402 = vadd.f32 %v165, %v401
  %403 = vmatprep.mubr.f32.mxu0 0.0
  %404 = vmatmul.mubr.f32.gmra.mxu0 %v177
  %v405 = vpop.f32.mrf.mxu0
  %v406 = vadd.f32 %v170, %v405
  %v407 = vpop.f32.mrf.mxu0
  %v408 = vadd.f32 %v170, %v407
  %409 = vdwg.mxu0
  %410 = vmatprep.subr.mxu0 0.0
  %411 = vmatpush1.msra.mxu0 0.0
  %412 = vmatprep.subr.mxu0 0.0
  %413 = vmatpush1.msra.mxu0 0.0
  %414 = vmatprep.subr.mxu0 0.0
  %415 = vmatpush1.msra.mxu0 0.0
  %416 = vmatprep.subr.mxu0 0.0
  %417 = vmatpush1.msra.mxu0 0.0
  %418 = vmatprep.subr.mxu0 0.0
  %419 = vmatpush1.msra.mxu0 0.0
  %420 = vmatprep.subr.mxu0 0.0
  %421 = vmatpush1.msra.mxu0 0.0
  %422 = vmatprep.subr.mxu0 0.0
  %423 = vmatpush1.msra.mxu0 0.0
  %424 = vmatprep.subr.mxu0 %v151
  %425 = vmatpush1.msra.mxu0 %v150
  %426 = vmatprep.subr.mxu0 %v135
  %427 = vmatpush1.msra.mxu0 %v134
  %428 = vmatprep.subr.mxu0 %v119
  %429 = vmatpush1.msra.mxu0 %v118
  %430 = vmatprep.subr.mxu0 %v103
  %431 = vmatpush1.msra.mxu0 %v102
  %432 = vmatprep.subr.mxu0 %v87
  %433 = vmatpush1.msra.mxu0 %v86
  %434 = vmatprep.subr.mxu0 %v71
  %435 = vmatpush1.msra.mxu0 %v70
  %436 = vmatprep.subr.mxu0 %v55
  %437 = vmatpush1.msra.mxu0 %v54
  %438 = vmatprep.subr.mxu0 %v39
  %439 = vmatpush1.msra.mxu0 %v38
  %440 = vmatprep.subr.mxu0 %v23
  %441 = vmatpush1.msra.mxu0 %v22
  %442 = vmatprep.subr.mxu0 0.0
  %443 = vmatpush2.msra.mxu0 0.0
  %444 = vmatprep.subr.mxu0 0.0
  %445 = vmatpush2.msra.mxu0 0.0
  %446 = vmatprep.subr.mxu0 0.0
  %447 = vmatpush2.msra.mxu0 0.0
  %448 = vmatprep.subr.mxu0 0.0
  %449 = vmatpush2.msra.mxu0 0.0
  %450 = vmatprep.subr.mxu0 0.0
  %451 = vmatpush2.msra.mxu0 0.0
  %452 = vmatprep.subr.mxu0 0.0
  %453 = vmatpush2.msra.mxu0 0.0
  %454 = vmatprep.subr.mxu0 0.0
  %455 = vmatpush2.msra.mxu0 0.0
  %456 = vmatprep.subr.mxu0 0.0
  %457 = vmatpush2.msra.mxu0 0.0
  %458 = vmatprep.subr.mxu0 0.0
  %459 = vmatpush2.msra.mxu0 0.0
  %460 = vmatprep.subr.mxu0 0.0
  %461 = vmatpush2.msra.mxu0 0.0
  %462 = vmatprep.subr.mxu0 0.0
  %463 = vmatpush2.msra.mxu0 0.0
  %464 = vmatprep.subr.mxu0 0.0
  %465 = vmatpush2.msra.mxu0 0.0
  %466 = vmatprep.subr.mxu0 0.0
  %467 = vmatpush2.msra.mxu0 0.0
  %468 = vmatprep.subr.mxu0 0.0
  %469 = vmatpush2.msra.mxu0 0.0
  %470 = vmatprep.subr.mxu0 0.0
  %471 = vmatpush2.msra.mxu0 0.0
  %472 = vmatprep.subr.mxu0 0.0
  %473 = vmatpush2.msra.mxu0 0.0
  %474 = vmatprep.mubr.f32.mxu0 0.0
  %475 = vmatmul.mubr.f32.gmra.mxu0 %v174
  %v476 = vpop.f32.mrf.mxu0
  %v477 = vadd.f32 %v165, %v476
  %v478 = vpop.f32.mrf.mxu0
  %v479 = vadd.f32 %v165, %v478
  %480 = vmatprep.mubr.f32.mxu0 0.0
  %481 = vmatmul.mubr.f32.gmra.mxu0 %v177
  %v482 = vpop.f32.mrf.mxu0
  %v483 = vadd.f32 %v170, %v482
  %v484 = vpop.f32.mrf.mxu0
  %v485 = vadd.f32 %v170, %v484
  %486 = vdwg.mxu0
  %487 = vmatprep.subr.mxu0 0.0
  %488 = vmatpush1.msra.mxu0 0.0
  %489 = vmatprep.subr.mxu0 0.0
  %490 = vmatpush1.msra.mxu0 0.0
  %491 = vmatprep.subr.mxu0 0.0
  %492 = vmatpush1.msra.mxu0 0.0
  %493 = vmatprep.subr.mxu0 0.0
  %494 = vmatpush1.msra.mxu0 0.0
  %495 = vmatprep.subr.mxu0 0.0
  %496 = vmatpush1.msra.mxu0 0.0
  %497 = vmatprep.subr.mxu0 0.0
  %498 = vmatpush1.msra.mxu0 0.0
  %499 = vmatprep.subr.mxu0 0.0
  %500 = vmatpush1.msra.mxu0 0.0
  %501 = vmatprep.subr.mxu0 %v153
  %502 = vmatpush1.msra.mxu0 %v152
  %503 = vmatprep.subr.mxu0 %v137
  %504 = vmatpush1.msra.mxu0 %v136
  %505 = vmatprep.subr.mxu0 %v121
  %506 = vmatpush1.msra.mxu0 %v120
  %507 = vmatprep.subr.mxu0 %v105
  %508 = vmatpush1.msra.mxu0 %v104
  %509 = vmatprep.subr.mxu0 %v89
  %510 = vmatpush1.msra.mxu0 %v88
  %511 = vmatprep.subr.mxu0 %v73
  %512 = vmatpush1.msra.mxu0 %v72
  %513 = vmatprep.subr.mxu0 %v57
  %514 = vmatpush1.msra.mxu0 %v56
  %515 = vmatprep.subr.mxu0 %v41
  %516 = vmatpush1.msra.mxu0 %v40
  %517 = vmatprep.subr.mxu0 %v25
  %518 = vmatpush1.msra.mxu0 %v24
  %519 = vmatprep.subr.mxu0 0.0
  %520 = vmatpush2.msra.mxu0 0.0
  %521 = vmatprep.subr.mxu0 0.0
  %522 = vmatpush2.msra.mxu0 0.0
  %523 = vmatprep.subr.mxu0 0.0
  %524 = vmatpush2.msra.mxu0 0.0
  %525 = vmatprep.subr.mxu0 0.0
  %526 = vmatpush2.msra.mxu0 0.0
  %527 = vmatprep.subr.mxu0 0.0
  %528 = vmatpush2.msra.mxu0 0.0
  %529 = vmatprep.subr.mxu0 0.0
  %530 = vmatpush2.msra.mxu0 0.0
  %531 = vmatprep.subr.mxu0 0.0
  %532 = vmatpush2.msra.mxu0 0.0
  %533 = vmatprep.subr.mxu0 0.0
  %534 = vmatpush2.msra.mxu0 0.0
  %535 = vmatprep.subr.mxu0 0.0
  %536 = vmatpush2.msra.mxu0 0.0
  %537 = vmatprep.subr.mxu0 0.0
  %538 = vmatpush2.msra.mxu0 0.0
  %539 = vmatprep.subr.mxu0 0.0
  %540 = vmatpush2.msra.mxu0 0.0
  %541 = vmatprep.subr.mxu0 0.0
  %542 = vmatpush2.msra.mxu0 0.0
  %543 = vmatprep.subr.mxu0 0.0
  %544 = vmatpush2.msra.mxu0 0.0
  %545 = vmatprep.subr.mxu0 0.0
  %546 = vmatpush2.msra.mxu0 0.0
  %547 = vmatprep.subr.mxu0 0.0
  %548 = vmatpush2.msra.mxu0 0.0
  %549 = vmatprep.subr.mxu0 0.0
  %550 = vmatpush2.msra.mxu0 0.0
  %551 = vmatprep.mubr.f32.mxu0 0.0
  %552 = vmatmul.mubr.f32.gmra.mxu0 %v174
  %v553 = vpop.f32.mrf.mxu0
  %v554 = vadd.f32 %v165, %v553
  %v555 = vpop.f32.mrf.mxu0
  %v556 = vadd.f32 %v165, %v555
  %557 = vmatprep.mubr.f32.mxu0 0.0
  %558 = vmatmul.mubr.f32.gmra.mxu0 %v177
  %v559 = vpop.f32.mrf.mxu0
  %v560 = vadd.f32 %v170, %v559
  %v561 = vpop.f32.mrf.mxu0
  %v562 = vadd.f32 %v170, %v561
  %563 = vdwg.mxu0
  %564 = vmatprep.subr.mxu0 0.0
  %565 = vmatpush1.msra.mxu0 0.0
  %566 = vmatprep.subr.mxu0 0.0
  %567 = vmatpush1.msra.mxu0 0.0
  %568 = vmatprep.subr.mxu0 0.0
  %569 = vmatpush1.msra.mxu0 0.0
  %570 = vmatprep.subr.mxu0 0.0
  %571 = vmatpush1.msra.mxu0 0.0
  %572 = vmatprep.subr.mxu0 0.0
  %573 = vmatpush1.msra.mxu0 0.0
  %574 = vmatprep.subr.mxu0 0.0
  %575 = vmatpush1.msra.mxu0 0.0
  %576 = vmatprep.subr.mxu0 0.0
  %577 = vmatpush1.msra.mxu0 0.0
  %578 = vmatprep.subr.mxu0 %v155
  %579 = vmatpush1.msra.mxu0 %v154
  %580 = vmatprep.subr.mxu0 %v139
  %581 = vmatpush1.msra.mxu0 %v138
  %582 = vmatprep.subr.mxu0 %v123
  %583 = vmatpush1.msra.mxu0 %v122
  %584 = vmatprep.subr.mxu0 %v107
  %585 = vmatpush1.msra.mxu0 %v106
  %586 = vmatprep.subr.mxu0 %v91
  %587 = vmatpush1.msra.mxu0 %v90
  %588 = vmatprep.subr.mxu0 %v75
  %589 = vmatpush1.msra.mxu0 %v74
  %590 = vmatprep.subr.mxu0 %v59
  %591 = vmatpush1.msra.mxu0 %v58
  %592 = vmatprep.subr.mxu0 %v43
  %593 = vmatpush1.msra.mxu0 %v42
  %594 = vmatprep.subr.mxu0 %v27
  %595 = vmatpush1.msra.mxu0 %v26
  %596 = vmatprep.subr.mxu0 0.0
  %597 = vmatpush2.msra.mxu0 0.0
  %598 = vmatprep.subr.mxu0 0.0
  %599 = vmatpush2.msra.mxu0 0.0
  %600 = vmatprep.subr.mxu0 0.0
  %601 = vmatpush2.msra.mxu0 0.0
  %602 = vmatprep.subr.mxu0 0.0
  %603 = vmatpush2.msra.mxu0 0.0
  %604 = vmatprep.subr.mxu0 0.0
  %605 = vmatpush2.msra.mxu0 0.0
  %606 = vmatprep.subr.mxu0 0.0
  %607 = vmatpush2.msra.mxu0 0.0
  %608 = vmatprep.subr.mxu0 0.0
  %609 = vmatpush2.msra.mxu0 0.0
  %610 = vmatprep.subr.mxu0 0.0
  %611 = vmatpush2.msra.mxu0 0.0
  %612 = vmatprep.subr.mxu0 0.0
  %613 = vmatpush2.msra.mxu0 0.0
  %614 = vmatprep.subr.mxu0 0.0
  %615 = vmatpush2.msra.mxu0 0.0
  %616 = vmatprep.subr.mxu0 0.0
  %617 = vmatpush2.msra.mxu0 0.0
  %618 = vmatprep.subr.mxu0 0.0
  %619 = vmatpush2.msra.mxu0 0.0
  %620 = vmatprep.subr.mxu0 0.0
  %621 = vmatpush2.msra.mxu0 0.0
  %622 = vmatprep.subr.mxu0 0.0
  %623 = vmatpush2.msra.mxu0 0.0
  %624 = vmatprep.subr.mxu0 0.0
  %625 = vmatpush2.msra.mxu0 0.0
  %626 = vmatprep.subr.mxu0 0.0
  %627 = vmatpush2.msra.mxu0 0.0
  %628 = vmatprep.mubr.f32.mxu0 0.0
  %629 = vmatmul.mubr.f32.gmra.mxu0 %v174
  %v630 = vpop.f32.mrf.mxu0
  %v631 = vadd.f32 %v165, %v630
  %v632 = vpop.f32.mrf.mxu0
  %v633 = vadd.f32 %v165, %v632
  %634 = vmatprep.mubr.f32.mxu0 0.0
  %635 = vmatmul.mubr.f32.gmra.mxu0 %v177
  %v636 = vpop.f32.mrf.mxu0
  %v637 = vadd.f32 %v170, %v636
  %v638 = vpop.f32.mrf.mxu0
  %v639 = vadd.f32 %v170, %v638
  %640 = vdwg.mxu0
  %641 = vmatprep.subr.mxu0 0.0
  %642 = vmatpush1.msra.mxu0 0.0
  %643 = vmatprep.subr.mxu0 0.0
  %644 = vmatpush1.msra.mxu0 0.0
  %645 = vmatprep.subr.mxu0 0.0
  %646 = vmatpush1.msra.mxu0 0.0
  %647 = vmatprep.subr.mxu0 0.0
  %648 = vmatpush1.msra.mxu0 0.0
  %649 = vmatprep.subr.mxu0 0.0
  %650 = vmatpush1.msra.mxu0 0.0
  %651 = vmatprep.subr.mxu0 0.0
  %652 = vmatpush1.msra.mxu0 0.0
  %653 = vmatprep.subr.mxu0 0.0
  %654 = vmatpush1.msra.mxu0 0.0
  %655 = vmatprep.subr.mxu0 %v157
  %656 = vmatpush1.msra.mxu0 %v156
  %657 = vmatprep.subr.mxu0 %v141
  %658 = vmatpush1.msra.mxu0 %v140
  %659 = vmatprep.subr.mxu0 %v125
  %660 = vmatpush1.msra.mxu0 %v124
  %661 = vmatprep.subr.mxu0 %v109
  %662 = vmatpush1.msra.mxu0 %v108
  %663 = vmatprep.subr.mxu0 %v93
  %664 = vmatpush1.msra.mxu0 %v92
  %665 = vmatprep.subr.mxu0 %v77
  %666 = vmatpush1.msra.mxu0 %v76
  %667 = vmatprep.subr.mxu0 %v61
  %668 = vmatpush1.msra.mxu0 %v60
  %669 = vmatprep.subr.mxu0 %v45
  %670 = vmatpush1.msra.mxu0 %v44
  %671 = vmatprep.subr.mxu0 %v29
  %672 = vmatpush1.msra.mxu0 %v28
  %673 = vmatprep.subr.mxu0 0.0
  %674 = vmatpush2.msra.mxu0 0.0
  %675 = vmatprep.subr.mxu0 0.0
  %676 = vmatpush2.msra.mxu0 0.0
  %677 = vmatprep.subr.mxu0 0.0
  %678 = vmatpush2.msra.mxu0 0.0
  %679 = vmatprep.subr.mxu0 0.0
  %680 = vmatpush2.msra.mxu0 0.0
  %681 = vmatprep.subr.mxu0 0.0
  %682 = vmatpush2.msra.mxu0 0.0
  %683 = vmatprep.subr.mxu0 0.0
  %684 = vmatpush2.msra.mxu0 0.0
  %685 = vmatprep.subr.mxu0 0.0
  %686 = vmatpush2.msra.mxu0 0.0
  %687 = vmatprep.subr.mxu0 0.0
  %688 = vmatpush2.msra.mxu0 0.0
  %689 = vmatprep.subr.mxu0 0.0
  %690 = vmatpush2.msra.mxu0 0.0
  %691 = vmatprep.subr.mxu0 0.0
  %692 = vmatpush2.msra.mxu0 0.0
  %693 = vmatprep.subr.mxu0 0.0
  %694 = vmatpush2.msra.mxu0 0.0
  %695 = vmatprep.subr.mxu0 0.0
  %696 = vmatpush2.msra.mxu0 0.0
  %697 = vmatprep.subr.mxu0 0.0
  %698 = vmatpush2.msra.mxu0 0.0
  %699 = vmatprep.subr.mxu0 0.0
  %700 = vmatpush2.msra.mxu0 0.0
  %701 = vmatprep.subr.mxu0 0.0
  %702 = vmatpush2.msra.mxu0 0.0
  %703 = vmatprep.subr.mxu0 0.0
  %704 = vmatpush2.msra.mxu0 0.0
  %705 = vmatprep.mubr.f32.mxu0 0.0
  %706 = vmatmul.mubr.f32.gmra.mxu0 %v174
  %v707 = vpop.f32.mrf.mxu0
  %v708 = vadd.f32 %v165, %v707
  %v709 = vpop.f32.mrf.mxu0
  %v710 = vadd.f32 %v165, %v709
  %711 = vmatprep.mubr.f32.mxu0 0.0
  %712 = vmatmul.mubr.f32.gmra.mxu0 %v177
  %v713 = vpop.f32.mrf.mxu0
  %v714 = vadd.f32 %v170, %v713
  %v715 = vpop.f32.mrf.mxu0
  %v716 = vadd.f32 %v170, %v715
  %717 = vdwg.mxu0
  %718 = vmatprep.subr.mxu0 0.0
  %719 = vmatpush1.msra.mxu0 0.0
  %720 = vmatprep.subr.mxu0 0.0
  %721 = vmatpush1.msra.mxu0 0.0
  %722 = vmatprep.subr.mxu0 0.0
  %723 = vmatpush1.msra.mxu0 0.0
  %724 = vmatprep.subr.mxu0 0.0
  %725 = vmatpush1.msra.mxu0 0.0
  %726 = vmatprep.subr.mxu0 0.0
  %727 = vmatpush1.msra.mxu0 0.0
  %728 = vmatprep.subr.mxu0 0.0
  %729 = vmatpush1.msra.mxu0 0.0
  %730 = vmatprep.subr.mxu0 0.0
  %731 = vmatpush1.msra.mxu0 0.0
  %732 = vmatprep.subr.mxu0 %v159
  %733 = vmatpush1.msra.mxu0 %v158
  %734 = vmatprep.subr.mxu0 %v143
  %735 = vmatpush1.msra.mxu0 %v142
  %736 = vmatprep.subr.mxu0 %v127
  %737 = vmatpush1.msra.mxu0 %v126
  %738 = vmatprep.subr.mxu0 %v111
  %739 = vmatpush1.msra.mxu0 %v110
  %740 = vmatprep.subr.mxu0 %v95
  %741 = vmatpush1.msra.mxu0 %v94
  %742 = vmatprep.subr.mxu0 %v79
  %743 = vmatpush1.msra.mxu0 %v78
  %744 = vmatprep.subr.mxu0 %v63
  %745 = vmatpush1.msra.mxu0 %v62
  %746 = vmatprep.subr.mxu0 %v47
  %747 = vmatpush1.msra.mxu0 %v46
  %748 = vmatprep.subr.mxu0 %v31
  %749 = vmatpush1.msra.mxu0 %v30
  %750 = vmatprep.subr.mxu0 0.0
  %751 = vmatpush2.msra.mxu0 0.0
  %752 = vmatprep.subr.mxu0 0.0
  %753 = vmatpush2.msra.mxu0 0.0
  %754 = vmatprep.subr.mxu0 0.0
  %755 = vmatpush2.msra.mxu0 0.0
  %756 = vmatprep.subr.mxu0 0.0
  %757 = vmatpush2.msra.mxu0 0.0
  %758 = vmatprep.subr.mxu0 0.0
  %759 = vmatpush2.msra.mxu0 0.0
  %760 = vmatprep.subr.mxu0 0.0
  %761 = vmatpush2.msra.mxu0 0.0
  %762 = vmatprep.subr.mxu0 0.0
  %763 = vmatpush2.msra.mxu0 0.0
  %764 = vmatprep.subr.mxu0 0.0
  %765 = vmatpush2.msra.mxu0 0.0
  %766 = vmatprep.subr.mxu0 0.0
  %767 = vmatpush2.msra.mxu0 0.0
  %768 = vmatprep.subr.mxu0 0.0
  %769 = vmatpush2.msra.mxu0 0.0
  %770 = vmatprep.subr.mxu0 0.0
  %771 = vmatpush2.msra.mxu0 0.0
  %772 = vmatprep.subr.mxu0 0.0
  %773 = vmatpush2.msra.mxu0 0.0
  %774 = vmatprep.subr.mxu0 0.0
  %775 = vmatpush2.msra.mxu0 0.0
  %776 = vmatprep.subr.mxu0 0.0
  %777 = vmatpush2.msra.mxu0 0.0
  %778 = vmatprep.subr.mxu0 0.0
  %779 = vmatpush2.msra.mxu0 0.0
  %780 = vmatprep.subr.mxu0 0.0
  %781 = vmatpush2.msra.mxu0 0.0
  %782 = vmatprep.mubr.f32.mxu0 0.0
  %783 = vmatmul.mubr.f32.gmra.mxu0 %v174
  %v784 = vpop.f32.mrf.mxu0
  %v785 = vadd.f32 %v165, %v784
  %v786 = vpop.f32.mrf.mxu0
  %v787 = vadd.f32 %v165, %v786
  %788 = vmatprep.mubr.f32.mxu0 0.0
  %789 = vmatmul.mubr.f32.gmra.mxu0 %v177
  %v790 = vpop.f32.mrf.mxu0
  %v791 = vadd.f32 %v170, %v790
  %v792 = vpop.f32.mrf.mxu0
  %v793 = vadd.f32 %v170, %v792
  %794 = vdwg.mxu0
  %v795 = vmax.f32 %v246, 0.0
  %v796 = vmax.f32 %v248, 0.0
  %v797 = vmax.f32 %v323, 0.0
  %v798 = vmax.f32 %v325, 0.0
  %v799 = vmax.f32 %v400, 0.0
  %v800 = vmax.f32 %v402, 0.0
  %v801 = vmax.f32 %v477, 0.0
  %v802 = vmax.f32 %v479, 0.0
  %v803 = vmax.f32 %v554, 0.0
  %v804 = vmax.f32 %v556, 0.0
  %v805 = vmax.f32 %v631, 0.0
  %v806 = vmax.f32 %v633, 0.0
  %v807 = vmax.f32 %v708, 0.0
  %v808 = vmax.f32 %v710, 0.0
  %v809 = vmax.f32 %v785, 0.0
  %v810 = vmax.f32 %v787, 0.0
  %v811 = vmax.f32 %v252, 0.0
  %v812 = vmax.f32 %v254, 0.0
  %v813 = vmax.f32 %v329, 0.0
  %v814 = vmax.f32 %v331, 0.0
  %v815 = vmax.f32 %v406, 0.0
  %v816 = vmax.f32 %v408, 0.0
  %v817 = vmax.f32 %v483, 0.0
  %v818 = vmax.f32 %v485, 0.0
  %v819 = vmax.f32 %v560, 0.0
  %v820 = vmax.f32 %v562, 0.0
  %v821 = vmax.f32 %v637, 0.0
  %v822 = vmax.f32 %v639, 0.0
  %v823 = vmax.f32 %v714, 0.0
  %v824 = vmax.f32 %v716, 0.0
  %v825 = vmax.f32 %v791, 0.0
  %v826 = vmax.f32 %v793, 0.0
  %827 = vst [vmem:[%s3] sm:$0xff] %v795
  %828 = vst [vmem:[%s3 + $0x8] sm:$0xff] %v796
  %829 = vst [vmem:[%s3 + $0x10] sm:$0xff] %v797
  %830 = vst [vmem:[%s3 + $0x18] sm:$0xff] %v798
  %831 = vst [vmem:[%s3 + $0x20] sm:$0xff] %v799
  %832 = vst [vmem:[%s3 + $0x28] sm:$0xff] %v800
  %833 = vst [vmem:[%s3 + $0x30] sm:$0xff] %v801
  %834 = vst [vmem:[%s3 + $0x38] sm:$0xff] %v802
  %835 = vst [vmem:[%s3 + $0x40] sm:$0xff] %v803
  %836 = vst [vmem:[%s3 + $0x48] sm:$0xff] %v804
  %837 = vst [vmem:[%s3 + $0x50] sm:$0xff] %v805
  %838 = vst [vmem:[%s3 + $0x58] sm:$0xff] %v806
  %839 = vst [vmem:[%s3 + $0x60] sm:$0xff] %v807
  %840 = vst [vmem:[%s3 + $0x68] sm:$0xff] %v808
  %841 = vst [vmem:[%s3 + $0x70] sm:$0xff] %v809
  %842 = vst [vmem:[%s3 + $0x78] sm:$0xff] %v810
  %843 = vst [vmem:[%s3 + $0x80] sm:$0xff] %v811
  %844 = vst [vmem:[%s3 + $0x88] sm:$0xff] %v812
  %845 = vst [vmem:[%s3 + $0x90] sm:$0xff] %v813
  %846 = vst [vmem:[%s3 + $0x98] sm:$0xff] %v814
  %847 = vst [vmem:[%s3 + $0xa0] sm:$0xff] %v815
  %848 = vst [vmem:[%s3 + $0xa8] sm:$0xff] %v816
  %849 = vst [vmem:[%s3 + $0xb0] sm:$0xff] %v817
  %850 = vst [vmem:[%s3 + $0xb8] sm:$0xff] %v818
  %851 = vst [vmem:[%s3 + $0xc0] sm:$0xff] %v819
  %852 = vst [vmem:[%s3 + $0xc8] sm:$0xff] %v820
  %853 = vst [vmem:[%s3 + $0xd0] sm:$0xff] %v821
  %854 = vst [vmem:[%s3 + $0xd8] sm:$0xff] %v822
  %855 = vst [vmem:[%s3 + $0xe0] sm:$0xff] %v823
  %856 = vst [vmem:[%s3 + $0xe8] sm:$0xff] %v824
  %857 = vst [vmem:[%s3 + $0xf0] sm:$0xff] %v825
  %858 = vst [vmem:[%s3 + $0xf8] sm:$0xff] %v826
  // Predicated region
  $region14: #{encoder_forward.6} parent=0 // pred_check
    _
  $region15: #{encoder_forward.6} parent=0 // pred_check_branch
    %860 = sbr.rel (0) target = $region17
  $region16: #{encoder_forward.6} parent=0 // pred_region
    _
  $region17: #{encoder_forward.6} parent=0 // pred_fallthru
    _
  // Predicated region
  $region18: #{encoder_forward.6} parent=0 // pred_check
    _
  $region19: #{encoder_forward.6} parent=0 // pred_check_branch
    %862 = sbr.rel (0) target = $region21
  $region20: #{encoder_forward.6} parent=0 // pred_region
    _
  $region21: #{encoder_forward.6} parent=0 // pred_fallthru
    _

// kernel: encoder_forward.7
$region0: #{encoder_forward.7}
  #allocation0 [shape = 'u32[]', space=smem, size = 0x4, offset = 0x4, fixed_abs, tag = 'smem constant byte address 0x4 - core index']
  #allocation1 [shape = 'u32[144,128]{1,0:T(1,128)}', space=vmem, size = 0x12000, scoped, tag = 'internal scratch']
  %s0 = inlined_call_operand.vmem [shape: f32[32,144], index: 0, kind: input, shape index: {}]
  %s1 = inlined_call_operand.vmem [shape: f32[144,512], index: 1, kind: input, shape index: {}]
  %s2 = inlined_call_operand.vmem [shape: f32[32,1], index: 2, kind: input, shape index: {}]
  %s3 = inlined_call_operand.vmem [shape: f32[32,512], index: 3, kind: output, shape index: {}]
  %s4 = sld [smem:[#allocation0]]
  $region22: #{encoder_forward.7} parent=0
    _
  %s6 = ssub.s32 1, %s4
  %s7 = scalar_select 0, %s6, %s4
  // Predicated region
  $region2: #{encoder_forward.7} parent=0 // pred_check
    _
  $region3: #{encoder_forward.7} parent=0 // pred_check_branch
    %9 = sbr.rel (0) target = $region5
  $region4: #{encoder_forward.7} parent=0 // pred_region
    _
  $region5: #{encoder_forward.7} parent=0 // pred_fallthru
    _
  // Predicated region
  $region6: #{encoder_forward.7} parent=0 // pred_check
    _
  $region7: #{encoder_forward.7} parent=0 // pred_check_branch
    %11 = sbr.rel (0) target = $region9
  $region8: #{encoder_forward.7} parent=0 // pred_region
    _
  $region9: #{encoder_forward.7} parent=0 // pred_fallthru
    _
  // Predicated region
  $region10: #{encoder_forward.7} parent=0 // pred_check
    _
  $region11: #{encoder_forward.7} parent=0 // pred_check_branch
    %13 = sbr.rel (0) target = $region13
  $region12: #{encoder_forward.7} parent=0 // pred_region
    _
  $region13: #{encoder_forward.7} parent=0 // pred_fallthru
    _
  %v14 = vld [vmem:[%s0] sm:$0xff]
  %v15 = vld [vmem:[%s0 + $0x8] sm:$0xff]
  %v16 = vld [vmem:[%s0 + $0x10] sm:$0xff]
  %v17 = vld [vmem:[%s0 + $0x18] sm:$0xff]
  %v18 = vld [vmem:[%s0 + $0x20] sm:$0xff]
  %v19 = vld [vmem:[%s0 + $0x28] sm:$0xff]
  %v20 = vld [vmem:[%s0 + $0x30] sm:$0xff]
  %v21 = vld [vmem:[%s0 + $0x38] sm:$0xff]
  %v22 = vld [vmem:[%s1] sm:$0xff]
  %v23 = vld [vmem:[%s1 + $0x8] sm:$0xff]
  %v24 = vld [vmem:[%s1 + $0x10] sm:$0xff]
  %v25 = vld [vmem:[%s1 + $0x18] sm:$0xff]
  %v26 = vld [vmem:[%s1 + $0x20] sm:$0xff]
  %v27 = vld [vmem:[%s1 + $0x28] sm:$0xff]
  %v28 = vld [vmem:[%s1 + $0x30] sm:$0xff]
  %v29 = vld [vmem:[%s1 + $0x38] sm:$0xff]
  %v30 = vld [vmem:[%s1 + $0x40] sm:$0xff]
  %v31 = vld [vmem:[%s1 + $0x48] sm:$0xff]
  %v32 = vld [vmem:[%s1 + $0x50] sm:$0xff]
  %v33 = vld [vmem:[%s1 + $0x58] sm:$0xff]
  %v34 = vld [vmem:[%s1 + $0x60] sm:$0xff]
  %v35 = vld [vmem:[%s1 + $0x68] sm:$0xff]
  %v36 = vld [vmem:[%s1 + $0x70] sm:$0xff]
  %v37 = vld [vmem:[%s1 + $0x78] sm:$0xff]
  %v38 = vld [vmem:[%s1 + $0x80] sm:$0xff]
  %v39 = vld [vmem:[%s1 + $0x88] sm:$0xff]
  %v40 = vld [vmem:[%s1 + $0x90] sm:$0xff]
  %v41 = vld [vmem:[%s1 + $0x98] sm:$0xff]
  %v42 = vld [vmem:[%s1 + $0xa0] sm:$0xff]
  %v43 = vld [vmem:[%s1 + $0xa8] sm:$0xff]
  %v44 = vld [vmem:[%s1 + $0xb0] sm:$0xff]
  %v45 = vld [vmem:[%s1 + $0xb8] sm:$0xff]
  %v46 = vld [vmem:[%s1 + $0xc0] sm:$0xff]
  %v47 = vld [vmem:[%s1 + $0xc8] sm:$0xff]
  %v48 = vld [vmem:[%s1 + $0xd0] sm:$0xff]
  %v49 = vld [vmem:[%s1 + $0xd8] sm:$0xff]
  %v50 = vld [vmem:[%s1 + $0xe0] sm:$0xff]
  %v51 = vld [vmem:[%s1 + $0xe8] sm:$0xff]
  %v52 = vld [vmem:[%s1 + $0xf0] sm:$0xff]
  %v53 = vld [vmem:[%s1 + $0xf8] sm:$0xff]
  %v54 = vld [vmem:[%s1 + $0x100] sm:$0xff]
  %v55 = vld [vmem:[%s1 + $0x108] sm:$0xff]
  %v56 = vld [vmem:[%s1 + $0x110] sm:$0xff]
  %v57 = vld [vmem:[%s1 + $0x118] sm:$0xff]
  %v58 = vld [vmem:[%s1 + $0x120] sm:$0xff]
  %v59 = vld [vmem:[%s1 + $0x128] sm:$0xff]
  %v60 = vld [vmem:[%s1 + $0x130] sm:$0xff]
  %v61 = vld [vmem:[%s1 + $0x138] sm:$0xff]
  %v62 = vld [vmem:[%s1 + $0x140] sm:$0xff]
  %v63 = vld [vmem:[%s1 + $0x148] sm:$0xff]
  %v64 = vld [vmem:[%s1 + $0x150] sm:$0xff]
  %v65 = vld [vmem:[%s1 + $0x158] sm:$0xff]
  %v66 = vld [vmem:[%s1 + $0x160] sm:$0xff]
  %v67 = vld [vmem:[%s1 + $0x168] sm:$0xff]
  %v68 = vld [vmem:[%s1 + $0x170] sm:$0xff]
  %v69 = vld [vmem:[%s1 + $0x178] sm:$0xff]
  %v70 = vld [vmem:[%s1 + $0x180] sm:$0xff]
  %v71 = vld [vmem:[%s1 + $0x188] sm:$0xff]
  %v72 = vld [vmem:[%s1 + $0x190] sm:$0xff]
  %v73 = vld [vmem:[%s1 + $0x198] sm:$0xff]
  %v74 = vld [vmem:[%s1 + $0x1a0] sm:$0xff]
  %v75 = vld [vmem:[%s1 + $0x1a8] sm:$0xff]
  %v76 = vld [vmem:[%s1 + $0x1b0] sm:$0xff]
  %v77 = vld [vmem:[%s1 + $0x1b8] sm:$0xff]
  %v78 = vld [vmem:[%s1 + $0x1c0] sm:$0xff]
  %v79 = vld [vmem:[%s1 + $0x1c8] sm:$0xff]
  %v80 = vld [vmem:[%s1 + $0x1d0] sm:$0xff]
  %v81 = vld [vmem:[%s1 + $0x1d8] sm:$0xff]
  %v82 = vld [vmem:[%s1 + $0x1e0] sm:$0xff]
  %v83 = vld [vmem:[%s1 + $0x1e8] sm:$0xff]
  %v84 = vld [vmem:[%s1 + $0x1f0] sm:$0xff]
  %v85 = vld [vmem:[%s1 + $0x1f8] sm:$0xff]
  %v86 = vld [vmem:[%s1 + $0x200] sm:$0xff]
  %v87 = vld [vmem:[%s1 + $0x208] sm:$0xff]
  %v88 = vld [vmem:[%s1 + $0x210] sm:$0xff]
  %v89 = vld [vmem:[%s1 + $0x218] sm:$0xff]
  %v90 = vld [vmem:[%s1 + $0x220] sm:$0xff]
  %v91 = vld [vmem:[%s1 + $0x228] sm:$0xff]
  %v92 = vld [vmem:[%s1 + $0x230] sm:$0xff]
  %v93 = vld [vmem:[%s1 + $0x238] sm:$0xff]
  %v94 = vld [vmem:[%s2] sm:$0xff]
  %v95 = vld [vmem:[%s2 + $0x8] sm:$0xff]
  %v96 = vld [vmem:[%s2 + $0x10] sm:$0xff]
  %v97 = vld [vmem:[%s2 + $0x18] sm:$0xff]
  %99 = vset.pattern.permute.xlu0 0
  %100 = vperm.xlu0 %99, %v94
  %v101 = vpop.permute.xlu0 %100
  %104 = vset.pattern.permute.xlu0 0
  %105 = vperm.xlu0 %104, %v95
  %v106 = vpop.permute.xlu0 %105
  %109 = vset.pattern.permute.xlu0 0
  %110 = vperm.xlu0 %109, %v96
  %v111 = vpop.permute.xlu0 %110
  %114 = vset.pattern.permute.xlu0 0
  %115 = vperm.xlu0 %114, %v97
  %v116 = vpop.permute.xlu0 %115
  %vm118 = vcmask 130048
  %v120 = vsel %vm118, %v15, 0
  %v123 = vsel %vm118, %v17, 0
  %v126 = vsel %vm118, %v19, 0
  %v129 = vsel %vm118, %v21, 0
  %131 = vmatprep.subr.mxu0 %v83
  %132 = vmatpush1.msra.mxu0 %v82
  %133 = vmatprep.subr.mxu0 %v79
  %134 = vmatpush1.msra.mxu0 %v78
  %135 = vmatprep.subr.mxu0 %v75
  %136 = vmatpush1.msra.mxu0 %v74
  %137 = vmatprep.subr.mxu0 %v71
  %138 = vmatpush1.msra.mxu0 %v70
  %139 = vmatprep.subr.mxu0 %v67
  %140 = vmatpush1.msra.mxu0 %v66
  %141 = vmatprep.subr.mxu0 %v63
  %142 = vmatpush1.msra.mxu0 %v62
  %143 = vmatprep.subr.mxu0 %v59
  %144 = vmatpush1.msra.mxu0 %v58
  %145 = vmatprep.subr.mxu0 %v55
  %146 = vmatpush1.msra.mxu0 %v54
  %147 = vmatprep.subr.mxu0 %v51
  %148 = vmatpush1.msra.mxu0 %v50
  %149 = vmatprep.subr.mxu0 %v47
  %150 = vmatpush1.msra.mxu0 %v46
  %151 = vmatprep.subr.mxu0 %v43
  %152 = vmatpush1.msra.mxu0 %v42
  %153 = vmatprep.subr.mxu0 %v39
  %154 = vmatpush1.msra.mxu0 %v38
  %155 = vmatprep.subr.mxu0 %v35
  %156 = vmatpush1.msra.mxu0 %v34
  %157 = vmatprep.subr.mxu0 %v31
  %158 = vmatpush1.msra.mxu0 %v30
  %159 = vmatprep.subr.mxu0 %v27
  %160 = vmatpush1.msra.mxu0 %v26
  %161 = vmatprep.subr.mxu0 %v23
  %162 = vmatpush1.msra.mxu0 %v22
  %163 = vmatprep.subr.mxu0 0.0
  %164 = vmatpush2.msra.mxu0 0.0
  %165 = vmatprep.subr.mxu0 0.0
  %166 = vmatpush2.msra.mxu0 0.0
  %167 = vmatprep.subr.mxu0 0.0
  %168 = vmatpush2.msra.mxu0 0.0
  %169 = vmatprep.subr.mxu0 0.0
  %170 = vmatpush2.msra.mxu0 0.0
  %171 = vmatprep.subr.mxu0 0.0
  %172 = vmatpush2.msra.mxu0 0.0
  %173 = vmatprep.subr.mxu0 0.0
  %174 = vmatpush2.msra.mxu0 0.0
  %175 = vmatprep.subr.mxu0 0.0
  %176 = vmatpush2.msra.mxu0 0.0
  %177 = vmatprep.subr.mxu0 0.0
  %178 = vmatpush2.msra.mxu0 0.0
  %179 = vmatprep.subr.mxu0 0.0
  %180 = vmatpush2.msra.mxu0 0.0
  %181 = vmatprep.subr.mxu0 0.0
  %182 = vmatpush2.msra.mxu0 0.0
  %183 = vmatprep.subr.mxu0 0.0
  %184 = vmatpush2.msra.mxu0 0.0
  %185 = vmatprep.subr.mxu0 0.0
  %186 = vmatpush2.msra.mxu0 0.0
  %187 = vmatprep.subr.mxu0 0.0
  %188 = vmatpush2.msra.mxu0 0.0
  %189 = vmatprep.subr.mxu0 0.0
  %190 = vmatpush2.msra.mxu0 0.0
  %191 = vmatprep.subr.mxu0 %v91
  %192 = vmatpush2.msra.mxu0 %v90
  %193 = vmatprep.subr.mxu0 %v87
  %194 = vmatpush2.msra.mxu0 %v86
  %195 = vmatprep.mubr.f32.mxu0 %v120
  %196 = vmatmul.mubr.f32.gmra.mxu0 %v14
  %v197 = vpop.f32.mrf.mxu0
  %v198 = vadd.f32 %v101, %v197
  %v199 = vpop.f32.mrf.mxu0
  %v200 = vadd.f32 %v101, %v199
  %201 = vmatprep.mubr.f32.mxu0 %v123
  %202 = vmatmul.mubr.f32.gmra.mxu0 %v16
  %v203 = vpop.f32.mrf.mxu0
  %v204 = vadd.f32 %v106, %v203
  %v205 = vpop.f32.mrf.mxu0
  %v206 = vadd.f32 %v106, %v205
  %207 = vmatprep.mubr.f32.mxu0 %v126
  %208 = vmatmul.mubr.f32.gmra.mxu0 %v18
  %v209 = vpop.f32.mrf.mxu0
  %v210 = vadd.f32 %v111, %v209
  %v211 = vpop.f32.mrf.mxu0
  %v212 = vadd.f32 %v111, %v211
  %213 = vmatprep.mubr.f32.mxu0 %v129
  %214 = vmatmul.mubr.f32.gmra.mxu0 %v20
  %v215 = vpop.f32.mrf.mxu0
  %v216 = vadd.f32 %v116, %v215
  %v217 = vpop.f32.mrf.mxu0
  %v218 = vadd.f32 %v116, %v217
  %219 = vdwg.mxu0
  %220 = vmatprep.subr.mxu0 %v85
  %221 = vmatpush1.msra.mxu0 %v84
  %222 = vmatprep.subr.mxu0 %v81
  %223 = vmatpush1.msra.mxu0 %v80
  %224 = vmatprep.subr.mxu0 %v77
  %225 = vmatpush1.msra.mxu0 %v76
  %226 = vmatprep.subr.mxu0 %v73
  %227 = vmatpush1.msra.mxu0 %v72
  %228 = vmatprep.subr.mxu0 %v69
  %229 = vmatpush1.msra.mxu0 %v68
  %230 = vmatprep.subr.mxu0 %v65
  %231 = vmatpush1.msra.mxu0 %v64
  %232 = vmatprep.subr.mxu0 %v61
  %233 = vmatpush1.msra.mxu0 %v60
  %234 = vmatprep.subr.mxu0 %v57
  %235 = vmatpush1.msra.mxu0 %v56
  %236 = vmatprep.subr.mxu0 %v53
  %237 = vmatpush1.msra.mxu0 %v52
  %238 = vmatprep.subr.mxu0 %v49
  %239 = vmatpush1.msra.mxu0 %v48
  %240 = vmatprep.subr.mxu0 %v45
  %241 = vmatpush1.msra.mxu0 %v44
  %242 = vmatprep.subr.mxu0 %v41
  %243 = vmatpush1.msra.mxu0 %v40
  %244 = vmatprep.subr.mxu0 %v37
  %245 = vmatpush1.msra.mxu0 %v36
  %246 = vmatprep.subr.mxu0 %v33
  %247 = vmatpush1.msra.mxu0 %v32
  %248 = vmatprep.subr.mxu0 %v29
  %249 = vmatpush1.msra.mxu0 %v28
  %250 = vmatprep.subr.mxu0 %v25
  %251 = vmatpush1.msra.mxu0 %v24
  %252 = vmatprep.subr.mxu0 0.0
  %253 = vmatpush2.msra.mxu0 0.0
  %254 = vmatprep.subr.mxu0 0.0
  %255 = vmatpush2.msra.mxu0 0.0
  %256 = vmatprep.subr.mxu0 0.0
  %257 = vmatpush2.msra.mxu0 0.0
  %258 = vmatprep.subr.mxu0 0.0
  %259 = vmatpush2.msra.mxu0 0.0
  %260 = vmatprep.subr.mxu0 0.0
  %261 = vmatpush2.msra.mxu0 0.0
  %262 = vmatprep.subr.mxu0 0.0
  %263 = vmatpush2.msra.mxu0 0.0
  %264 = vmatprep.subr.mxu0 0.0
  %265 = vmatpush2.msra.mxu0 0.0
  %266 = vmatprep.subr.mxu0 0.0
  %267 = vmatpush2.msra.mxu0 0.0
  %268 = vmatprep.subr.mxu0 0.0
  %269 = vmatpush2.msra.mxu0 0.0
  %270 = vmatprep.subr.mxu0 0.0
  %271 = vmatpush2.msra.mxu0 0.0
  %272 = vmatprep.subr.mxu0 0.0
  %273 = vmatpush2.msra.mxu0 0.0
  %274 = vmatprep.subr.mxu0 0.0
  %275 = vmatpush2.msra.mxu0 0.0
  %276 = vmatprep.subr.mxu0 0.0
  %277 = vmatpush2.msra.mxu0 0.0
  %278 = vmatprep.subr.mxu0 0.0
  %279 = vmatpush2.msra.mxu0 0.0
  %280 = vmatprep.subr.mxu0 %v93
  %281 = vmatpush2.msra.mxu0 %v92
  %282 = vmatprep.subr.mxu0 %v89
  %283 = vmatpush2.msra.mxu0 %v88
  %284 = vmatprep.mubr.f32.mxu0 %v120
  %285 = vmatmul.mubr.f32.gmra.mxu0 %v14
  %v286 = vpop.f32.mrf.mxu0
  %v287 = vadd.f32 %v101, %v286
  %v288 = vpop.f32.mrf.mxu0
  %v289 = vadd.f32 %v101, %v288
  %290 = vmatprep.mubr.f32.mxu0 %v123
  %291 = vmatmul.mubr.f32.gmra.mxu0 %v16
  %v292 = vpop.f32.mrf.mxu0
  %v293 = vadd.f32 %v106, %v292
  %v294 = vpop.f32.mrf.mxu0
  %v295 = vadd.f32 %v106, %v294
  %296 = vmatprep.mubr.f32.mxu0 %v126
  %297 = vmatmul.mubr.f32.gmra.mxu0 %v18
  %v298 = vpop.f32.mrf.mxu0
  %v299 = vadd.f32 %v111, %v298
  %v300 = vpop.f32.mrf.mxu0
  %v301 = vadd.f32 %v111, %v300
  %302 = vmatprep.mubr.f32.mxu0 %v129
  %303 = vmatmul.mubr.f32.gmra.mxu0 %v20
  %v304 = vpop.f32.mrf.mxu0
  %v305 = vadd.f32 %v116, %v304
  %v306 = vpop.f32.mrf.mxu0
  %v307 = vadd.f32 %v116, %v306
  %308 = vdwg.mxu0
  %v309 = vmax.f32 %v198, 0.0
  %v310 = vmax.f32 %v200, 0.0
  %v311 = vmax.f32 %v287, 0.0
  %v312 = vmax.f32 %v289, 0.0
  %v313 = vmax.f32 %v204, 0.0
  %v314 = vmax.f32 %v206, 0.0
  %v315 = vmax.f32 %v293, 0.0
  %v316 = vmax.f32 %v295, 0.0
  %v317 = vmax.f32 %v210, 0.0
  %v318 = vmax.f32 %v212, 0.0
  %v319 = vmax.f32 %v299, 0.0
  %v320 = vmax.f32 %v301, 0.0
  %v321 = vmax.f32 %v216, 0.0
  %v322 = vmax.f32 %v218, 0.0
  %v323 = vmax.f32 %v305, 0.0
  %v324 = vmax.f32 %v307, 0.0
  %325 = vst [vmem:[%s3] sm:$0xff] %v309
  %326 = vst [vmem:[%s3 + $0x8] sm:$0xff] %v310
  %327 = vst [vmem:[%s3 + $0x10] sm:$0xff] %v311
  %328 = vst [vmem:[%s3 + $0x18] sm:$0xff] %v312
  %329 = vst [vmem:[%s3 + $0x20] sm:$0xff] %v313
  %330 = vst [vmem:[%s3 + $0x28] sm:$0xff] %v314
  %331 = vst [vmem:[%s3 + $0x30] sm:$0xff] %v315
  %332 = vst [vmem:[%s3 + $0x38] sm:$0xff] %v316
  %333 = vst [vmem:[%s3 + $0x40] sm:$0xff] %v317
  %334 = vst [vmem:[%s3 + $0x48] sm:$0xff] %v318
  %335 = vst [vmem:[%s3 + $0x50] sm:$0xff] %v319
  %336 = vst [vmem:[%s3 + $0x58] sm:$0xff] %v320
  %337 = vst [vmem:[%s3 + $0x60] sm:$0xff] %v321
  %338 = vst [vmem:[%s3 + $0x68] sm:$0xff] %v322
  %339 = vst [vmem:[%s3 + $0x70] sm:$0xff] %v323
  %340 = vst [vmem:[%s3 + $0x78] sm:$0xff] %v324
  // Predicated region
  $region14: #{encoder_forward.7} parent=0 // pred_check
    _
  $region15: #{encoder_forward.7} parent=0 // pred_check_branch
    %342 = sbr.rel (0) target = $region17
  $region16: #{encoder_forward.7} parent=0 // pred_region
    _
  $region17: #{encoder_forward.7} parent=0 // pred_fallthru
    _
  // Predicated region
  $region18: #{encoder_forward.7} parent=0 // pred_check
    _
  $region19: #{encoder_forward.7} parent=0 // pred_check_branch
    %344 = sbr.rel (0) target = $region21
  $region20: #{encoder_forward.7} parent=0 // pred_region
    _
  $region21: #{encoder_forward.7} parent=0 // pred_fallthru
    _

// kernel: encoder_forward.8
$region0: #{encoder_forward.8}
  #allocation0 [shape = 'u32[]', space=smem, size = 0x4, offset = 0x4, fixed_abs, tag = 'smem constant byte address 0x4 - core index']
  #allocation1 [shape = 'u32[144,128]{1,0:T(1,128)}', space=vmem, size = 0x12000, scoped, tag = 'internal scratch']
  %s0 = inlined_call_operand.vmem [shape: f32[64,288], index: 0, kind: input, shape index: {}]
  %s1 = inlined_call_operand.vmem [shape: f32[288,128], index: 1, kind: input, shape index: {}]
  %s2 = inlined_call_operand.vmem [shape: f32[64,1], index: 2, kind: input, shape index: {}]
  %s3 = inlined_call_operand.vmem [shape: f32[64,128], index: 3, kind: output, shape index: {}]
  %s4 = sld [smem:[#allocation0]]
  $region22: #{encoder_forward.8} parent=0
    _
  %s6 = ssub.s32 1, %s4
  %s7 = scalar_select 0, %s6, %s4
  // Predicated region
  $region2: #{encoder_forward.8} parent=0 // pred_check
    _
  $region3: #{encoder_forward.8} parent=0 // pred_check_branch
    %9 = sbr.rel (0) target = $region5
  $region4: #{encoder_forward.8} parent=0 // pred_region
    _
  $region5: #{encoder_forward.8} parent=0 // pred_fallthru
    _
  // Predicated region
  $region6: #{encoder_forward.8} parent=0 // pred_check
    _
  $region7: #{encoder_forward.8} parent=0 // pred_check_branch
    %11 = sbr.rel (0) target = $region9
  $region8: #{encoder_forward.8} parent=0 // pred_region
    _
  $region9: #{encoder_forward.8} parent=0 // pred_fallthru
    _
  // Predicated region
  $region10: #{encoder_forward.8} parent=0 // pred_check
    _
  $region11: #{encoder_forward.8} parent=0 // pred_check_branch
    %13 = sbr.rel (0) target = $region13
  $region12: #{encoder_forward.8} parent=0 // pred_region
    _
  $region13: #{encoder_forward.8} parent=0 // pred_fallthru
    _
  %v14 = vld [vmem:[%s0] sm:$0xff]
  %v15 = vld [vmem:[%s0 + $0x8] sm:$0xff]
  %v16 = vld [vmem:[%s0 + $0x10] sm:$0xff]
  %v17 = vld [vmem:[%s0 + $0x18] sm:$0xff]
  %v18 = vld [vmem:[%s0 + $0x20] sm:$0xff]
  %v19 = vld [vmem:[%s0 + $0x28] sm:$0xff]
  %v20 = vld [vmem:[%s0 + $0x30] sm:$0xff]
  %v21 = vld [vmem:[%s0 + $0x38] sm:$0xff]
  %v22 = vld [vmem:[%s0 + $0x40] sm:$0xff]
  %v23 = vld [vmem:[%s0 + $0x48] sm:$0xff]
  %v24 = vld [vmem:[%s0 + $0x50] sm:$0xff]
  %v25 = vld [vmem:[%s0 + $0x58] sm:$0xff]
  %v26 = vld [vmem:[%s0 + $0x60] sm:$0xff]
  %v27 = vld [vmem:[%s0 + $0x68] sm:$0xff]
  %v28 = vld [vmem:[%s0 + $0x70] sm:$0xff]
  %v29 = vld [vmem:[%s0 + $0x78] sm:$0xff]
  %v30 = vld [vmem:[%s0 + $0x80] sm:$0xff]
  %v31 = vld [vmem:[%s0 + $0x88] sm:$0xff]
  %v32 = vld [vmem:[%s0 + $0x90] sm:$0xff]
  %v33 = vld [vmem:[%s0 + $0x98] sm:$0xff]
  %v34 = vld [vmem:[%s0 + $0xa0] sm:$0xff]
  %v35 = vld [vmem:[%s0 + $0xa8] sm:$0xff]
  %v36 = vld [vmem:[%s0 + $0xb0] sm:$0xff]
  %v37 = vld [vmem:[%s0 + $0xb8] sm:$0xff]
  %v38 = vld [vmem:[%s1] sm:$0xff]
  %v39 = vld [vmem:[%s1 + $0x8] sm:$0xff]
  %v40 = vld [vmem:[%s1 + $0x10] sm:$0xff]
  %v41 = vld [vmem:[%s1 + $0x18] sm:$0xff]
  %v42 = vld [vmem:[%s1 + $0x20] sm:$0xff]
  %v43 = vld [vmem:[%s1 + $0x28] sm:$0xff]
  %v44 = vld [vmem:[%s1 + $0x30] sm:$0xff]
  %v45 = vld [vmem:[%s1 + $0x38] sm:$0xff]
  %v46 = vld [vmem:[%s1 + $0x40] sm:$0xff]
  %v47 = vld [vmem:[%s1 + $0x48] sm:$0xff]
  %v48 = vld [vmem:[%s1 + $0x50] sm:$0xff]
  %v49 = vld [vmem:[%s1 + $0x58] sm:$0xff]
  %v50 = vld [vmem:[%s1 + $0x60] sm:$0xff]
  %v51 = vld [vmem:[%s1 + $0x68] sm:$0xff]
  %v52 = vld [vmem:[%s1 + $0x70] sm:$0xff]
  %v53 = vld [vmem:[%s1 + $0x78] sm:$0xff]
  %v54 = vld [vmem:[%s1 + $0x80] sm:$0xff]
  %v55 = vld [vmem:[%s1 + $0x88] sm:$0xff]
  %v56 = vld [vmem:[%s1 + $0x90] sm:$0xff]
  %v57 = vld [vmem:[%s1 + $0x98] sm:$0xff]
  %v58 = vld [vmem:[%s1 + $0xa0] sm:$0xff]
  %v59 = vld [vmem:[%s1 + $0xa8] sm:$0xff]
  %v60 = vld [vmem:[%s1 + $0xb0] sm:$0xff]
  %v61 = vld [vmem:[%s1 + $0xb8] sm:$0xff]
  %v62 = vld [vmem:[%s1 + $0xc0] sm:$0xff]
  %v63 = vld [vmem:[%s1 + $0xc8] sm:$0xff]
  %v64 = vld [vmem:[%s1 + $0xd0] sm:$0xff]
  %v65 = vld [vmem:[%s1 + $0xd8] sm:$0xff]
  %v66 = vld [vmem:[%s1 + $0xe0] sm:$0xff]
  %v67 = vld [vmem:[%s1 + $0xe8] sm:$0xff]
  %v68 = vld [vmem:[%s1 + $0xf0] sm:$0xff]
  %v69 = vld [vmem:[%s1 + $0xf8] sm:$0xff]
  %v70 = vld [vmem:[%s1 + $0x100] sm:$0xff]
  %v71 = vld [vmem:[%s1 + $0x108] sm:$0xff]
  %v72 = vld [vmem:[%s1 + $0x110] sm:$0xff]
  %v73 = vld [vmem:[%s1 + $0x118] sm:$0xff]
  %v74 = vld [vmem:[%s2] sm:$0xff]
  %v75 = vld [vmem:[%s2 + $0x8] sm:$0xff]
  %v76 = vld [vmem:[%s2 + $0x10] sm:$0xff]
  %v77 = vld [vmem:[%s2 + $0x18] sm:$0xff]
  %v78 = vld [vmem:[%s2 + $0x20] sm:$0xff]
  %v79 = vld [vmem:[%s2 + $0x28] sm:$0xff]
  %v80 = vld [vmem:[%s2 + $0x30] sm:$0xff]
  %v81 = vld [vmem:[%s2 + $0x38] sm:$0xff]
  %83 = vset.pattern.permute.xlu0 0
  %84 = vperm.xlu0 %83, %v74
  %v85 = vpop.permute.xlu0 %84
  %88 = vset.pattern.permute.xlu0 0
  %89 = vperm.xlu0 %88, %v75
  %v90 = vpop.permute.xlu0 %89
  %93 = vset.pattern.permute.xlu0 0
  %94 = vperm.xlu0 %93, %v76
  %v95 = vpop.permute.xlu0 %94
  %98 = vset.pattern.permute.xlu0 0
  %99 = vperm.xlu0 %98, %v77
  %v100 = vpop.permute.xlu0 %99
  %103 = vset.pattern.permute.xlu0 0
  %104 = vperm.xlu0 %103, %v78
  %v105 = vpop.permute.xlu0 %104
  %108 = vset.pattern.permute.xlu0 0
  %109 = vperm.xlu0 %108, %v79
  %v110 = vpop.permute.xlu0 %109
  %113 = vset.pattern.permute.xlu0 0
  %114 = vperm.xlu0 %113, %v80
  %v115 = vpop.permute.xlu0 %114
  %118 = vset.pattern.permute.xlu0 0
  %119 = vperm.xlu0 %118, %v81
  %v120 = vpop.permute.xlu0 %119
  %vm122 = vcmask 261120
  %v124 = vsel %vm122, %v16, 0
  %v127 = vsel %vm122, %v19, 0
  %v130 = vsel %vm122, %v22, 0
  %v133 = vsel %vm122, %v25, 0
  %v136 = vsel %vm122, %v28, 0
  %v139 = vsel %vm122, %v31, 0
  %v142 = vsel %vm122, %v34, 0
  %v145 = vsel %vm122, %v37, 0
  %147 = vmatprep.subr.mxu0 0.0
  %148 = vmatpush1.msra.mxu0 %v53
  %149 = vmatprep.subr.mxu0 0.0
  %150 = vmatpush1.msra.mxu0 %v52
  %151 = vmatprep.subr.mxu0 0.0
  %152 = vmatpush1.msra.mxu0 %v51
  %153 = vmatprep.subr.mxu0 0.0
  %154 = vmatpush1.msra.mxu0 %v50
  %155 = vmatprep.subr.mxu0 0.0
  %156 = vmatpush1.msra.mxu0 %v49
  %157 = vmatprep.subr.mxu0 0.0
  %158 = vmatpush1.msra.mxu0 %v48
  %159 = vmatprep.subr.mxu0 0.0
  %160 = vmatpush1.msra.mxu0 %v47
  %161 = vmatprep.subr.mxu0 0.0
  %162 = vmatpush1.msra.mxu0 %v46
  %163 = vmatprep.subr.mxu0 0.0
  %164 = vmatpush1.msra.mxu0 %v45
  %165 = vmatprep.subr.mxu0 0.0
  %166 = vmatpush1.msra.mxu0 %v44
  %167 = vmatprep.subr.mxu0 0.0
  %168 = vmatpush1.msra.mxu0 %v43
  %169 = vmatprep.subr.mxu0 0.0
  %170 = vmatpush1.msra.mxu0 %v42
  %171 = vmatprep.subr.mxu0 0.0
  %172 = vmatpush1.msra.mxu0 %v41
  %173 = vmatprep.subr.mxu0 0.0
  %174 = vmatpush1.msra.mxu0 %v40
  %175 = vmatprep.subr.mxu0 0.0
  %176 = vmatpush1.msra.mxu0 %v39
  %177 = vmatprep.subr.mxu0 0.0
  %178 = vmatpush1.msra.mxu0 %v38
  %179 = vmatprep.subr.mxu0 0.0
  %180 = vmatpush2.msra.mxu0 %v69
  %181 = vmatprep.subr.mxu0 0.0
  %182 = vmatpush2.msra.mxu0 %v68
  %183 = vmatprep.subr.mxu0 0.0
  %184 = vmatpush2.msra.mxu0 %v67
  %185 = vmatprep.subr.mxu0 0.0
  %186 = vmatpush2.msra.mxu0 %v66
  %187 = vmatprep.subr.mxu0 0.0
  %188 = vmatpush2.msra.mxu0 %v65
  %189 = vmatprep.subr.mxu0 0.0
  %190 = vmatpush2.msra.mxu0 %v64
  %191 = vmatprep.subr.mxu0 0.0
  %192 = vmatpush2.msra.mxu0 %v63
  %193 = vmatprep.subr.mxu0 0.0
  %194 = vmatpush2.msra.mxu0 %v62
  %195 = vmatprep.subr.mxu0 0.0
  %196 = vmatpush2.msra.mxu0 %v61
  %197 = vmatprep.subr.mxu0 0.0
  %198 = vmatpush2.msra.mxu0 %v60
  %199 = vmatprep.subr.mxu0 0.0
  %200 = vmatpush2.msra.mxu0 %v59
  %201 = vmatprep.subr.mxu0 0.0
  %202 = vmatpush2.msra.mxu0 %v58
  %203 = vmatprep.subr.mxu0 0.0
  %204 = vmatpush2.msra.mxu0 %v57
  %205 = vmatprep.subr.mxu0 0.0
  %206 = vmatpush2.msra.mxu0 %v56
  %207 = vmatprep.subr.mxu0 0.0
  %208 = vmatpush2.msra.mxu0 %v55
  %209 = vmatprep.subr.mxu0 0.0
  %210 = vmatpush2.msra.mxu0 %v54
  %211 = vmatprep.mubr.f32.mxu0 %v15
  %212 = vmatmul.mubr.f32.gmra.mxu0 %v14
  %v213 = vpop.f32.mrf.mxu0
  %v214 = vadd.f32 %v85, %v213
  %v215 = vpop.f32.mrf.mxu0
  %216 = vmatprep.mubr.f32.mxu0 %v18
  %217 = vmatmul.mubr.f32.gmra.mxu0 %v17
  %v218 = vpop.f32.mrf.mxu0
  %v219 = vadd.f32 %v90, %v218
  %v220 = vpop.f32.mrf.mxu0
  %221 = vmatprep.mubr.f32.mxu0 %v21
  %222 = vmatmul.mubr.f32.gmra.mxu0 %v20
  %v223 = vpop.f32.mrf.mxu0
  %v224 = vadd.f32 %v95, %v223
  %v225 = vpop.f32.mrf.mxu0
  %226 = vmatprep.mubr.f32.mxu0 %v24
  %227 = vmatmul.mubr.f32.gmra.mxu0 %v23
  %v228 = vpop.f32.mrf.mxu0
  %v229 = vadd.f32 %v100, %v228
  %v230 = vpop.f32.mrf.mxu0
  %231 = vmatprep.mubr.f32.mxu0 %v27
  %232 = vmatmul.mubr.f32.gmra.mxu0 %v26
  %v233 = vpop.f32.mrf.mxu0
  %v234 = vadd.f32 %v105, %v233
  %v235 = vpop.f32.mrf.mxu0
  %236 = vmatprep.mubr.f32.mxu0 %v30
  %237 = vmatmul.mubr.f32.gmra.mxu0 %v29
  %v238 = vpop.f32.mrf.mxu0
  %v239 = vadd.f32 %v110, %v238
  %v240 = vpop.f32.mrf.mxu0
  %241 = vmatprep.mubr.f32.mxu0 %v33
  %242 = vmatmul.mubr.f32.gmra.mxu0 %v32
  %v243 = vpop.f32.mrf.mxu0
  %v244 = vadd.f32 %v115, %v243
  %v245 = vpop.f32.mrf.mxu0
  %246 = vmatprep.mubr.f32.mxu0 %v36
  %247 = vmatmul.mubr.f32.gmra.mxu0 %v35
  %v248 = vpop.f32.mrf.mxu0
  %v249 = vadd.f32 %v120, %v248
  %v250 = vpop.f32.mrf.mxu0
  %251 = vdwg.mxu0
  %252 = vmatprep.subr.mxu0 0.0
  %253 = vmatpush1.msra.mxu0 0.0
  %254 = vmatprep.subr.mxu0 0.0
  %255 = vmatpush1.msra.mxu0 0.0
  %256 = vmatprep.subr.mxu0 0.0
  %257 = vmatpush1.msra.mxu0 0.0
  %258 = vmatprep.subr.mxu0 0.0
  %259 = vmatpush1.msra.mxu0 0.0
  %260 = vmatprep.subr.mxu0 0.0
  %261 = vmatpush1.msra.mxu0 0.0
  %262 = vmatprep.subr.mxu0 0.0
  %263 = vmatpush1.msra.mxu0 0.0
  %264 = vmatprep.subr.mxu0 0.0
  %265 = vmatpush1.msra.mxu0 0.0
  %266 = vmatprep.subr.mxu0 0.0
  %267 = vmatpush1.msra.mxu0 0.0
  %268 = vmatprep.subr.mxu0 0.0
  %269 = vmatpush1.msra.mxu0 0.0
  %270 = vmatprep.subr.mxu0 0.0
  %271 = vmatpush1.msra.mxu0 0.0
  %272 = vmatprep.subr.mxu0 0.0
  %273 = vmatpush1.msra.mxu0 0.0
  %274 = vmatprep.subr.mxu0 0.0
  %275 = vmatpush1.msra.mxu0 0.0
  %276 = vmatprep.subr.mxu0 0.0
  %277 = vmatpush1.msra.mxu0 %v73
  %278 = vmatprep.subr.mxu0 0.0
  %279 = vmatpush1.msra.mxu0 %v72
  %280 = vmatprep.subr.mxu0 0.0
  %281 = vmatpush1.msra.mxu0 %v71
  %282 = vmatprep.subr.mxu0 0.0
  %283 = vmatpush1.msra.mxu0 %v70
  %284 = vmatprep.subr.mxu0 0.0
  %285 = vmatpush2.msra.mxu0 0.0
  %286 = vmatprep.subr.mxu0 0.0
  %287 = vmatpush2.msra.mxu0 0.0
  %288 = vmatprep.subr.mxu0 0.0
  %289 = vmatpush2.msra.mxu0 0.0
  %290 = vmatprep.subr.mxu0 0.0
  %291 = vmatpush2.msra.mxu0 0.0
  %292 = vmatprep.subr.mxu0 0.0
  %293 = vmatpush2.msra.mxu0 0.0
  %294 = vmatprep.subr.mxu0 0.0
  %295 = vmatpush2.msra.mxu0 0.0
  %296 = vmatprep.subr.mxu0 0.0
  %297 = vmatpush2.msra.mxu0 0.0
  %298 = vmatprep.subr.mxu0 0.0
  %299 = vmatpush2.msra.mxu0 0.0
  %300 = vmatprep.subr.mxu0 0.0
  %301 = vmatpush2.msra.mxu0 0.0
  %302 = vmatprep.subr.mxu0 0.0
  %303 = vmatpush2.msra.mxu0 0.0
  %304 = vmatprep.subr.mxu0 0.0
  %305 = vmatpush2.msra.mxu0 0.0
  %306 = vmatprep.subr.mxu0 0.0
  %307 = vmatpush2.msra.mxu0 0.0
  %308 = vmatprep.subr.mxu0 0.0
  %309 = vmatpush2.msra.mxu0 0.0
  %310 = vmatprep.subr.mxu0 0.0
  %311 = vmatpush2.msra.mxu0 0.0
  %312 = vmatprep.subr.mxu0 0.0
  %313 = vmatpush2.msra.mxu0 0.0
  %314 = vmatprep.subr.mxu0 0.0
  %315 = vmatpush2.msra.mxu0 0.0
  %316 = vmatprep.mubr.f32.mxu0 0.0
  %317 = vmatmul.mubr.f32.gmra.mxu0 %v124
  %v318 = vpop.f32.mrf.mxu0
  %v319 = vadd.f32 %v214, %v318
  %v320 = vpop.f32.mrf.mxu0
  %321 = vmatprep.mubr.f32.mxu0 0.0
  %322 = vmatmul.mubr.f32.gmra.mxu0 %v127
  %v323 = vpop.f32.mrf.mxu0
  %v324 = vadd.f32 %v219, %v323
  %v325 = vpop.f32.mrf.mxu0
  %326 = vmatprep.mubr.f32.mxu0 0.0
  %327 = vmatmul.mubr.f32.gmra.mxu0 %v130
  %v328 = vpop.f32.mrf.mxu0
  %v329 = vadd.f32 %v224, %v328
  %v330 = vpop.f32.mrf.mxu0
  %331 = vmatprep.mubr.f32.mxu0 0.0
  %332 = vmatmul.mubr.f32.gmra.mxu0 %v133
  %v333 = vpop.f32.mrf.mxu0
  %v334 = vadd.f32 %v229, %v333
  %v335 = vpop.f32.mrf.mxu0
  %336 = vmatprep.mubr.f32.mxu0 0.0
  %337 = vmatmul.mubr.f32.gmra.mxu0 %v136
  %v338 = vpop.f32.mrf.mxu0
  %v339 = vadd.f32 %v234, %v338
  %v340 = vpop.f32.mrf.mxu0
  %341 = vmatprep.mubr.f32.mxu0 0.0
  %342 = vmatmul.mubr.f32.gmra.mxu0 %v139
  %v343 = vpop.f32.mrf.mxu0
  %v344 = vadd.f32 %v239, %v343
  %v345 = vpop.f32.mrf.mxu0
  %346 = vmatprep.mubr.f32.mxu0 0.0
  %347 = vmatmul.mubr.f32.gmra.mxu0 %v142
  %v348 = vpop.f32.mrf.mxu0
  %v349 = vadd.f32 %v244, %v348
  %v350 = vpop.f32.mrf.mxu0
  %351 = vmatprep.mubr.f32.mxu0 0.0
  %352 = vmatmul.mubr.f32.gmra.mxu0 %v145
  %v353 = vpop.f32.mrf.mxu0
  %v354 = vadd.f32 %v249, %v353
  %v355 = vpop.f32.mrf.mxu0
  %356 = vdwg.mxu0
  %v357 = vmax.f32 %v319, 0.0
  %v358 = vmax.f32 %v324, 0.0
  %v359 = vmax.f32 %v329, 0.0
  %v360 = vmax.f32 %v334, 0.0
  %v361 = vmax.f32 %v339, 0.0
  %v362 = vmax.f32 %v344, 0.0
  %v363 = vmax.f32 %v349, 0.0
  %v364 = vmax.f32 %v354, 0.0
  %365 = vst [vmem:[%s3] sm:$0xff] %v357
  %366 = vst [vmem:[%s3 + $0x8] sm:$0xff] %v358
  %367 = vst [vmem:[%s3 + $0x10] sm:$0xff] %v359
  %368 = vst [vmem:[%s3 + $0x18] sm:$0xff] %v360
  %369 = vst [vmem:[%s3 + $0x20] sm:$0xff] %v361
  %370 = vst [vmem:[%s3 + $0x28] sm:$0xff] %v362
  %371 = vst [vmem:[%s3 + $0x30] sm:$0xff] %v363
  %372 = vst [vmem:[%s3 + $0x38] sm:$0xff] %v364
  // Predicated region
  $region14: #{encoder_forward.8} parent=0 // pred_check
    _
  $region15: #{encoder_forward.8} parent=0 // pred_check_branch
    %374 = sbr.rel (0) target = $region17
  $region16: #{encoder_forward.8} parent=0 // pred_region
    _
  $region17: #{encoder_forward.8} parent=0 // pred_fallthru
    _
  // Predicated region
  $region18: #{encoder_forward.8} parent=0 // pred_check
    _
  $region19: #{encoder_forward.8} parent=0 // pred_check_branch
    %376 = sbr.rel (0) target = $region21
  $region20: #{encoder_forward.8} parent=0 // pred_region
    _
  $region21: #{encoder_forward.8} parent=0 // pred_fallthru
    _

// kernel: encoder_forward.9
$region0: #{encoder_forward.9}
  #allocation0 [shape = 'u32[]', space=smem, size = 0x4, offset = 0x4, fixed_abs, tag = 'smem constant byte address 0x4 - core index']
  #allocation1 [shape = 'u32[144,128]{1,0:T(1,128)}', space=vmem, size = 0x12000, scoped, tag = 'internal scratch']
  %s0 = inlined_call_operand.vmem [shape: f32[2,4096], index: 0, kind: input, shape index: {}]
  %s1 = inlined_call_operand.vmem [shape: bf16[4,4096,512], index: 1, kind: input, shape index: {}]
  %s2 = inlined_call_operand.vmem [shape: f32[1,2048], index: 2, kind: input, shape index: {}]
  %s3 = inlined_call_operand.vmem [shape: f32[2048,2], index: 3, kind: input, shape index: {}]
  %s4 = inlined_call_operand.vmem [shape: f32[4,2,2], index: 4, kind: output, shape index: {}]
  %s5 = sld [smem:[#allocation0]]
  $region49: #{encoder_forward.9} parent=0
    _
  %s7 = ssub.s32 1, %s5
  %s8 = scalar_select 0, %s7, %s5
  loop: start=0, step=1, limit=6
  $region2: #{encoder_forward.9} parent=0 // loop_pre_header
    _
  $region3: #{encoder_forward.9} parent=0 // loop_header
    %s10 = sphi 0, %s14
    %p11 = scmp.ge.s32.totalorder %s10, 6
    %s18 = sphi 0, %s18
    %s20 = sphi 0, %s18
    %s21 = sphi 0, %s20
    %s35 = sphi 0, %s21
    %s41 = sphi 0, %s43
    %s44 = sphi 0, %s41
    %s45 = sphi 0, %s44
    %s61 = sphi 0, %s45
    %s67 = sphi 0, %s69
    %s70 = sphi 0, %s67
    %s71 = sphi 0, %s70
    %s87 = sphi 0, %s71
    %s91 = sphi 0, %s91
    %s93 = sphi 0, %s91
    %s94 = sphi 0, %s93
    %s108 = sphi 0, %s94
    %s114 = sphi 0, %s116
    %s117 = sphi 0, %s114
    %s118 = sphi 0, %s117
    %s134 = sphi 0, %s118
  $region4: #{encoder_forward.9} parent=0 // loop_header_branch
    %13 = sbr.rel (%p11) target = $region8
  $region5: #{encoder_forward.9} parent=0 // loop_body
    %s15 = ssub.s32 %s10, 1
    %s16 = ssub.s32 %s10, 2
    %s17 = sadd.s32 %s10, 1
    %s19 = sadd.s32 %s18, 1
    %p22 = scmp.eq.s32.totalorder %s10, 3
    %p23 = scmp.ne.s32.totalorder %s18, %s20
    %p24 = scmp.eq.s32.totalorder %s10, 0
    %p25 = por %p23, %p24
    %p26 = scmp.ne.s32.totalorder %s18, %s20
    %p27 = scmp.eq.s32.totalorder %s15, 3
    %p28 = por %p26, %p27
    %p29 = scmp.ne.s32.totalorder %s20, %s21
    %p30 = scmp.eq.s32.totalorder %s15, 0
    %p31 = por %p29, %p30
    %p32 = scmp.ne.s32.totalorder %s20, %s21
    %p33 = scmp.eq.s32.totalorder %s16, 3
    %p34 = por %p32, %p33
    %p36 = scmp.ne.s32.totalorder %s21, %s35
    %p37 = scmp.eq.s32.totalorder %s16, 0
    %p38 = por %p36, %p37
    %s39 = ssub.s32 %s10, %s17
    %p40 = scmp.eq.s32.totalorder %s39, 0
    %s42 = sadd.s32 %s41, 1
    %s43 = scalar_select %p40, %s41, %s42
    %p46 = pneg %p40
    %p47 = scmp.eq.s32.totalorder %s10, 3
    %p48 = por %p46, %p47
    %p49 = scmp.ne.s32.totalorder %s41, %s44
    %p50 = scmp.eq.s32.totalorder %s10, 0
    %p51 = por %p49, %p50
    %p52 = scmp.ne.s32.totalorder %s41, %s44
    %p53 = scmp.eq.s32.totalorder %s15, 3
    %p54 = por %p52, %p53
    %p55 = scmp.ne.s32.totalorder %s44, %s45
    %p56 = scmp.eq.s32.totalorder %s15, 0
    %p57 = por %p55, %p56
    %p58 = scmp.ne.s32.totalorder %s44, %s45
    %p59 = scmp.eq.s32.totalorder %s16, 3
    %p60 = por %p58, %p59
    %p62 = scmp.ne.s32.totalorder %s45, %s61
    %p63 = scmp.eq.s32.totalorder %s16, 0
    %p64 = por %p62, %p63
    %s65 = ssub.s32 %s10, %s17
    %p66 = scmp.eq.s32.totalorder %s65, 0
    %s68 = sadd.s32 %s67, 1
    %s69 = scalar_select %p66, %s67, %s68
    %p72 = pneg %p66
    %p73 = scmp.eq.s32.totalorder %s10, 3
    %p74 = por %p72, %p73
    %p75 = scmp.ne.s32.totalorder %s67, %s70
    %p76 = scmp.eq.s32.totalorder %s10, 0
    %p77 = por %p75, %p76
    %p78 = scmp.ne.s32.totalorder %s67, %s70
    %p79 = scmp.eq.s32.totalorder %s15, 3
    %p80 = por %p78, %p79
    %p81 = scmp.ne.s32.totalorder %s70, %s71
    %p82 = scmp.eq.s32.totalorder %s15, 0
    %p83 = por %p81, %p82
    %p84 = scmp.ne.s32.totalorder %s70, %s71
    %p85 = scmp.eq.s32.totalorder %s16, 3
    %p86 = por %p84, %p85
    %p88 = scmp.ne.s32.totalorder %s71, %s87
    %p89 = scmp.eq.s32.totalorder %s16, 0
    %p90 = por %p88, %p89
    %s92 = sadd.s32 %s91, 1
    %p95 = scmp.eq.s32.totalorder %s10, 3
    %p96 = scmp.ne.s32.totalorder %s91, %s93
    %p97 = scmp.eq.s32.totalorder %s10, 0
    %p98 = por %p96, %p97
    %p99 = scmp.ne.s32.totalorder %s91, %s93
    %p100 = scmp.eq.s32.totalorder %s15, 3
    %p101 = por %p99, %p100
    %p102 = scmp.ne.s32.totalorder %s93, %s94
    %p103 = scmp.eq.s32.totalorder %s15, 0
    %p104 = por %p102, %p103
    %p105 = scmp.ne.s32.totalorder %s93, %s94
    %p106 = scmp.eq.s32.totalorder %s16, 3
    %p107 = por %p105, %p106
    %p109 = scmp.ne.s32.totalorder %s94, %s108
    %p110 = scmp.eq.s32.totalorder %s16, 0
    %p111 = por %p109, %p110
    %s112 = ssub.s32 %s10, %s17
    %p113 = scmp.eq.s32.totalorder %s112, 0
    %s115 = sadd.s32 %s114, 1
    %s116 = scalar_select %p113, %s114, %s115
    %p119 = pneg %p113
    %p120 = scmp.eq.s32.totalorder %s10, 3
    %p121 = por %p119, %p120
    %p122 = scmp.ne.s32.totalorder %s114, %s117
    %p123 = scmp.eq.s32.totalorder %s10, 0
    %p124 = por %p122, %p123
    %p125 = scmp.ne.s32.totalorder %s114, %s117
    %p126 = scmp.eq.s32.totalorder %s15, 3
    %p127 = por %p125, %p126
    %p128 = scmp.ne.s32.totalorder %s117, %s118
    %p129 = scmp.eq.s32.totalorder %s15, 0
    %p130 = por %p128, %p129
    %p131 = scmp.ne.s32.totalorder %s117, %s118
    %p132 = scmp.eq.s32.totalorder %s16, 3
    %p133 = por %p131, %p132
    %p135 = scmp.ne.s32.totalorder %s118, %s134
    %p136 = scmp.eq.s32.totalorder %s16, 0
    %p137 = por %p135, %p136
    %p138 = scmp.le.s32.totalorder 1, %s10
    %p139 = scmp.lt.s32.totalorder %s10, 5
    %p140 = pnand %p138, %p139
    %p141 = pneg %p140
    // Predicated region
    $region9: #{encoder_forward.9} parent=5 // pred_check
      _
    $region10: #{encoder_forward.9} parent=5 // pred_check_branch
      %143 = sbr.rel (%p140) target = $region12
    $region11: #{encoder_forward.9} parent=5 // pred_region
      %s144 = ssub.s32 %s10, 1
      // Predicated region
      $region13: #{encoder_forward.9} parent=11 // pred_check
        %p145 = pneg %p31
      $region14: #{encoder_forward.9} parent=11 // pred_check_branch
        %147 = sbr.rel (%p145) target = $region16
      $region15: #{encoder_forward.9} parent=11 // pred_region
        _
      $region16: #{encoder_forward.9} parent=11 // pred_fallthru
        _
      // Predicated region
      $region17: #{encoder_forward.9} parent=11 // pred_check
        %p148 = pneg %p104
      $region18: #{encoder_forward.9} parent=11 // pred_check_branch
        %150 = sbr.rel (%p148) target = $region20
      $region19: #{encoder_forward.9} parent=11 // pred_region
        _
      $region20: #{encoder_forward.9} parent=11 // pred_fallthru
        _
    $region12: #{encoder_forward.9} parent=5 // pred_fallthru
      _
    %p151 = scmp.lt.s32.totalorder %s10, 4
    // Predicated region
    $region21: #{encoder_forward.9} parent=5 // pred_check
      %p152 = pneg %p151
    $region22: #{encoder_forward.9} parent=5 // pred_check_branch
      %154 = sbr.rel (%p152) target = $region24
    $region23: #{encoder_forward.9} parent=5 // pred_region
      // Predicated region
      $region25: #{encoder_forward.9} parent=23 // pred_check
        %p155 = pneg %p51
      $region26: #{encoder_forward.9} parent=23 // pred_check_branch
        %157 = sbr.rel (%p155) target = $region28
      $region27: #{encoder_forward.9} parent=23 // pred_region
        %p158 = scmp.lt.s32.totalorder %s10, 3
        %s159 = scalar_select %p158, %s10, 3
        %s160 = smul.addr %s159, 2048
        %s161 = smul.addr %s160, 4
        %s162 = scalar_lea.vmem %s1, %s161
      $region28: #{encoder_forward.9} parent=23 // pred_fallthru
        _
      // Predicated region
      $region29: #{encoder_forward.9} parent=23 // pred_check
        %p163 = pneg %p77
      $region30: #{encoder_forward.9} parent=23 // pred_check_branch
        %165 = sbr.rel (%p163) target = $region32
      $region31: #{encoder_forward.9} parent=23 // pred_region
        %s166 = smul.u32 4, %s10
        %p167 = scmp.lt.s32.totalorder %s166, 15
        %s168 = scalar_select %p167, %s166, 15
        %s169 = scalar_lea.vmem %s2, %s168
        %s170 = smul.u32 4, %s10
      $region32: #{encoder_forward.9} parent=23 // pred_fallthru
        _
    $region24: #{encoder_forward.9} parent=5 // pred_fallthru
      _
    %p171 = scmp.le.s32.totalorder 1, %s10
    %p172 = scmp.lt.s32.totalorder %s10, 5
    %p173 = pnand %p171, %p172
    %p174 = pneg %p173
    // Predicated region
    $region33: #{encoder_forward.9} parent=5 // pred_check
      _
    $region34: #{encoder_forward.9} parent=5 // pred_check_branch
      %176 = sbr.rel (%p173) target = $region36
    $region35: #{encoder_forward.9} parent=5 // pred_region
      %s177 = ssub.s32 %s10, 1
      %p178 = pneg %p31
      %p179 = pneg %p28
      %p180 = scmp.lt.s32.totalorder %s15, 3
      %s181 = scalar_select %p180, %s15, 3
      %s182 = smul.addr %s181, 2048
      %s183 = smul.addr %s182, 4
      %s184 = scalar_lea.vmem %s1, %s183
      %p185 = pneg %p57
      %p186 = pneg %p54
      %s187 = smul.u32 4, %s15
      %p188 = scmp.lt.s32.totalorder %s187, 15
      %s189 = scalar_select %p188, %s187, 15
      %s190 = scalar_lea.vmem %s2, %s189
      %p191 = pneg %p83
      %p192 = pneg %p80
      %p193 = pneg %p104
      %p194 = pneg %p101
      %p195 = pneg %p130
      %p196 = pneg %p127
      %p197 = scmp.lt.s32.totalorder %s15, 3
      %s198 = scalar_select %p197, %s15, 3
      %s199 = smul.addr %s198, 2
      %s200 = scalar_lea.vmem %s4, %s199
      %p201 = scmp.lt.s32.totalorder %s15, 3
      %s202 = scalar_select %p201, %s15, 3
      %s203 = smul.addr %s202, 2048
      %s204 = smul.addr %s203, 4
      %s205 = scalar_lea.vmem %s1, %s204
      %s206 = smul.u32 4, %s15
      %p207 = scmp.lt.s32.totalorder %s206, 15
      %s208 = scalar_select %p207, %s206, 15
      %s209 = scalar_lea.vmem %s2, %s208
      %s210 = smul.u32 4, %s15
      %p211 = scmp.lt.s32.totalorder %s15, 3
      %s212 = scalar_select %p211, %s15, 3
      %s213 = smul.addr %s212, 2
      %s214 = scalar_lea.vmem %s4, %s213
      %v215 = vld [vmem:[%s0] sm:$0xff]
      %v216 = vld [vmem:[%s0 + $0x8] sm:$0xff]
      %v217 = vld [vmem:[%s0 + $0x10] sm:$0xff]
      %v218 = vld [vmem:[%s0 + $0x18] sm:$0xff]
      %v219 = vld [vmem:[%s0 + $0x20] sm:$0xff]
      %v220 = vld [vmem:[%s0 + $0x28] sm:$0xff]
      %v221 = vld [vmem:[%s0 + $0x30] sm:$0xff]
      %v222 = vld [vmem:[%s0 + $0x38] sm:$0xff]
      %v231 = vcombine.high %v215, %v215
      %v233 = vunpack.c.l.s4 1983009808
      %v234 = vunpack.c.0.s8 %v233
      %v235 = vlaneseq
      %v236 = vshrl.u32 %v235, 7
      %v237 = vsub.s32 %v234, %v236
      %v238 = vrot.slane %v215, %v237
      %v240 = vunpack.c.l.s4 1983009808
      %v241 = vunpack.c.0.s8 %v240
      %v242 = vlaneseq
      %v243 = vshrl.u32 %v242, 7
      %v244 = vsub.s32 %v241, %v243
      %v245 = vrot.slane %v231, %v244
      %v246 = vcombine.high %v238, %v238
      %v247 = vcombine.high %v245, %v245
      %v248 = vcombine.high %v216, %v216
      %v250 = vunpack.c.l.s4 1983009808
      %v251 = vunpack.c.0.s8 %v250
      %v252 = vlaneseq
      %v253 = vshrl.u32 %v252, 7
      %v254 = vsub.s32 %v251, %v253
      %v255 = vrot.slane %v216, %v254
      %v257 = vunpack.c.l.s4 1983009808
      %v258 = vunpack.c.0.s8 %v257
      %v259 = vlaneseq
      %v260 = vshrl.u32 %v259, 7
      %v261 = vsub.s32 %v258, %v260
      %v262 = vrot.slane %v248, %v261
      %v263 = vcombine.high %v255, %v255
      %v264 = vcombine.high %v262, %v262
      %v265 = vcombine.high %v217, %v217
      %v267 = vunpack.c.l.s4 1983009808
      %v268 = vunpack.c.0.s8 %v267
      %v269 = vlaneseq
      %v270 = vshrl.u32 %v269, 7
      %v271 = vsub.s32 %v268, %v270
      %v272 = vrot.slane %v217, %v271
      %v274 = vunpack.c.l.s4 1983009808
      %v275 = vunpack.c.0.s8 %v274
      %v276 = vlaneseq
      %v277 = vshrl.u32 %v276, 7
      %v278 = vsub.s32 %v275, %v277
      %v279 = vrot.slane %v265, %v278
      %v280 = vcombine.high %v272, %v272
      %v281 = vcombine.high %v279, %v279
      %v282 = vcombine.high %v218, %v218
      %v284 = vunpack.c.l.s4 1983009808
      %v285 = vunpack.c.0.s8 %v284
      %v286 = vlaneseq
      %v287 = vshrl.u32 %v286, 7
      %v288 = vsub.s32 %v285, %v287
      %v289 = vrot.slane %v218, %v288
      %v291 = vunpack.c.l.s4 1983009808
      %v292 = vunpack.c.0.s8 %v291
      %v293 = vlaneseq
      %v294 = vshrl.u32 %v293, 7
      %v295 = vsub.s32 %v292, %v294
      %v296 = vrot.slane %v282, %v295
      %v297 = vcombine.high %v289, %v289
      %v298 = vcombine.high %v296, %v296
      %v299 = vcombine.high %v219, %v219
      %v301 = vunpack.c.l.s4 1983009808
      %v302 = vunpack.c.0.s8 %v301
      %v303 = vlaneseq
      %v304 = vshrl.u32 %v303, 7
      %v305 = vsub.s32 %v302, %v304
      %v306 = vrot.slane %v219, %v305
      %v308 = vunpack.c.l.s4 1983009808
      %v309 = vunpack.c.0.s8 %v308
      %v310 = vlaneseq
      %v311 = vshrl.u32 %v310, 7
      %v312 = vsub.s32 %v309, %v311
      %v313 = vrot.slane %v299, %v312
      %v314 = vcombine.high %v306, %v306
      %v315 = vcombine.high %v313, %v313
      %v316 = vcombine.high %v220, %v220
      %v318 = vunpack.c.l.s4 1983009808
      %v319 = vunpack.c.0.s8 %v318
      %v320 = vlaneseq
      %v321 = vshrl.u32 %v320, 7
      %v322 = vsub.s32 %v319, %v321
      %v323 = vrot.slane %v220, %v322
      %v325 = vunpack.c.l.s4 1983009808
      %v326 = vunpack.c.0.s8 %v325
      %v327 = vlaneseq
      %v328 = vshrl.u32 %v327, 7
      %v329 = vsub.s32 %v326, %v328
      %v330 = vrot.slane %v316, %v329
      %v331 = vcombine.high %v323, %v323
      %v332 = vcombine.high %v330, %v330
      %v333 = vcombine.high %v221, %v221
      %v335 = vunpack.c.l.s4 1983009808
      %v336 = vunpack.c.0.s8 %v335
      %v337 = vlaneseq
      %v338 = vshrl.u32 %v337, 7
      %v339 = vsub.s32 %v336, %v338
      %v340 = vrot.slane %v221, %v339
      %v342 = vunpack.c.l.s4 1983009808
      %v343 = vunpack.c.0.s8 %v342
      %v344 = vlaneseq
      %v345 = vshrl.u32 %v344, 7
      %v346 = vsub.s32 %v343, %v345
      %v347 = vrot.slane %v333, %v346
      %v348 = vcombine.high %v340, %v340
      %v349 = vcombine.high %v347, %v347
      %v350 = vcombine.high %v222, %v222
      %v352 = vunpack.c.l.s4 1983009808
      %v353 = vunpack.c.0.s8 %v352
      %v354 = vlaneseq
      %v355 = vshrl.u32 %v354, 7
      %v356 = vsub.s32 %v353, %v355
      %v357 = vrot.slane %v222, %v356
      %v359 = vunpack.c.l.s4 1983009808
      %v360 = vunpack.c.0.s8 %v359
      %v361 = vlaneseq
      %v362 = vshrl.u32 %v361, 7
      %v363 = vsub.s32 %v360, %v362
      %v364 = vrot.slane %v350, %v363
      %v365 = vcombine.high %v357, %v357
      %v366 = vcombine.high %v364, %v364
      %v399 = vpack.c.bf16 %v238, %v238
      %v400 = vpack.c.bf16 %v246, %v246
      %v401 = vpack.c.bf16 %v245, %v245
      %v402 = vpack.c.bf16 %v247, %v247
      %v403 = vpack.c.bf16 %v255, %v255
      %v404 = vpack.c.bf16 %v263, %v263
      %v405 = vpack.c.bf16 %v262, %v262
      %v406 = vpack.c.bf16 %v264, %v264
      %v407 = vpack.c.bf16 %v272, %v272
      %v408 = vpack.c.bf16 %v280, %v280
      %v409 = vpack.c.bf16 %v279, %v279
      %v410 = vpack.c.bf16 %v281, %v281
      %v411 = vpack.c.bf16 %v289, %v289
      %v412 = vpack.c.bf16 %v297, %v297
      %v413 = vpack.c.bf16 %v296, %v296
      %v414 = vpack.c.bf16 %v298, %v298
      %v415 = vpack.c.bf16 %v306, %v306
      %v416 = vpack.c.bf16 %v314, %v314
      %v417 = vpack.c.bf16 %v313, %v313
      %v418 = vpack.c.bf16 %v315, %v315
      %v419 = vpack.c.bf16 %v323, %v323
      %v420 = vpack.c.bf16 %v331, %v331
      %v421 = vpack.c.bf16 %v330, %v330
      %v422 = vpack.c.bf16 %v332, %v332
      %v423 = vpack.c.bf16 %v340, %v340
      %v424 = vpack.c.bf16 %v348, %v348
      %v425 = vpack.c.bf16 %v347, %v347
      %v426 = vpack.c.bf16 %v349, %v349
      %v427 = vpack.c.bf16 %v357, %v357
      %v428 = vpack.c.bf16 %v365, %v365
      %v429 = vpack.c.bf16 %v364, %v364
      %v430 = vpack.c.bf16 %v366, %v366
      %v431 = vld [vmem:[%s205] sm:$0xff]
      %v432 = vld [vmem:[%s205 + $0x8] sm:$0xff]
      %v433 = vld [vmem:[%s205 + $0x10] sm:$0xff]
      %v434 = vld [vmem:[%s205 + $0x18] sm:$0xff]
      %v435 = vld [vmem:[%s205 + $0x20] sm:$0xff]
      %v436 = vld [vmem:[%s205 + $0x28] sm:$0xff]
      %v437 = vld [vmem:[%s205 + $0x30] sm:$0xff]
      %v438 = vld [vmem:[%s205 + $0x38] sm:$0xff]
      %v439 = vld [vmem:[%s205 + $0x40] sm:$0xff]
      %v440 = vld [vmem:[%s205 + $0x48] sm:$0xff]
      %v441 = vld [vmem:[%s205 + $0x50] sm:$0xff]
      %v442 = vld [vmem:[%s205 + $0x58] sm:$0xff]
      %v443 = vld [vmem:[%s205 + $0x60] sm:$0xff]
      %v444 = vld [vmem:[%s205 + $0x68] sm:$0xff]
      %v445 = vld [vmem:[%s205 + $0x70] sm:$0xff]
      %v446 = vld [vmem:[%s205 + $0x78] sm:$0xff]
      %v447 = vld [vmem:[%s205 + $0x80] sm:$0xff]
      %v448 = vld [vmem:[%s205 + $0x88] sm:$0xff]
      %v449 = vld [vmem:[%s205 + $0x90] sm:$0xff]
      %v450 = vld [vmem:[%s205 + $0x98] sm:$0xff]
      %v451 = vld [vmem:[%s205 + $0xa0] sm:$0xff]
      %v452 = vld [vmem:[%s205 + $0xa8] sm:$0xff]
      %v453 = vld [vmem:[%s205 + $0xb0] sm:$0xff]
      %v454 = vld [vmem:[%s205 + $0xb8] sm:$0xff]
      %v455 = vld [vmem:[%s205 + $0xc0] sm:$0xff]
      %v456 = vld [vmem:[%s205 + $0xc8] sm:$0xff]
      %v457 = vld [vmem:[%s205 + $0xd0] sm:$0xff]
      %v458 = vld [vmem:[%s205 + $0xd8] sm:$0xff]
      %v459 = vld [vmem:[%s205 + $0xe0] sm:$0xff]
      %v460 = vld [vmem:[%s205 + $0xe8] sm:$0xff]
      %v461 = vld [vmem:[%s205 + $0xf0] sm:$0xff]
      %v462 = vld [vmem:[%s205 + $0xf8] sm:$0xff]
      %v463 = vld [vmem:[%s205 + $0x100] sm:$0xff]
      %v464 = vld [vmem:[%s205 + $0x108] sm:$0xff]
      %v465 = vld [vmem:[%s205 + $0x110] sm:$0xff]
      %v466 = vld [vmem:[%s205 + $0x118] sm:$0xff]
      %v467 = vld [vmem:[%s205 + $0x120] sm:$0xff]
      %v468 = vld [vmem:[%s205 + $0x128] sm:$0xff]
      %v469 = vld [vmem:[%s205 + $0x130] sm:$0xff]
      %v470 = vld [vmem:[%s205 + $0x138] sm:$0xff]
      %v471 = vld [vmem:[%s205 + $0x140] sm:$0xff]
      %v472 = vld [vmem:[%s205 + $0x148] sm:$0xff]
      %v473 = vld [vmem:[%s205 + $0x150] sm:$0xff]
      %v474 = vld [vmem:[%s205 + $0x158] sm:$0xff]
      %v475 = vld [vmem:[%s205 + $0x160] sm:$0xff]
      %v476 = vld [vmem:[%s205 + $0x168] sm:$0xff]
      %v477 = vld [vmem:[%s205 + $0x170] sm:$0xff]
      %v478 = vld [vmem:[%s205 + $0x178] sm:$0xff]
      %v479 = vld [vmem:[%s205 + $0x180] sm:$0xff]
      %v480 = vld [vmem:[%s205 + $0x188] sm:$0xff]
      %v481 = vld [vmem:[%s205 + $0x190] sm:$0xff]
      %v482 = vld [vmem:[%s205 + $0x198] sm:$0xff]
      %v483 = vld [vmem:[%s205 + $0x1a0] sm:$0xff]
      %v484 = vld [vmem:[%s205 + $0x1a8] sm:$0xff]
      %v485 = vld [vmem:[%s205 + $0x1b0] sm:$0xff]
      %v486 = vld [vmem:[%s205 + $0x1b8] sm:$0xff]
      %v487 = vld [vmem:[%s205 + $0x1c0] sm:$0xff]
      %v488 = vld [vmem:[%s205 + $0x1c8] sm:$0xff]
      %v489 = vld [vmem:[%s205 + $0x1d0] sm:$0xff]
      %v490 = vld [vmem:[%s205 + $0x1d8] sm:$0xff]
      %v491 = vld [vmem:[%s205 + $0x1e0] sm:$0xff]
      %v492 = vld [vmem:[%s205 + $0x1e8] sm:$0xff]
      %v493 = vld [vmem:[%s205 + $0x1f0] sm:$0xff]
      %v494 = vld [vmem:[%s205 + $0x1f8] sm:$0xff]
      %v495 = vld [vmem:[%s205 + $0x200] sm:$0xff]
      %v496 = vld [vmem:[%s205 + $0x208] sm:$0xff]
      %v497 = vld [vmem:[%s205 + $0x210] sm:$0xff]
      %v498 = vld [vmem:[%s205 + $0x218] sm:$0xff]
      %v499 = vld [vmem:[%s205 + $0x220] sm:$0xff]
      %v500 = vld [vmem:[%s205 + $0x228] sm:$0xff]
      %v501 = vld [vmem:[%s205 + $0x230] sm:$0xff]
      %v502 = vld [vmem:[%s205 + $0x238] sm:$0xff]
      %v503 = vld [vmem:[%s205 + $0x240] sm:$0xff]
      %v504 = vld [vmem:[%s205 + $0x248] sm:$0xff]
      %v505 = vld [vmem:[%s205 + $0x250] sm:$0xff]
      %v506 = vld [vmem:[%s205 + $0x258] sm:$0xff]
      %v507 = vld [vmem:[%s205 + $0x260] sm:$0xff]
      %v508 = vld [vmem:[%s205 + $0x268] sm:$0xff]
      %v509 = vld [vmem:[%s205 + $0x270] sm:$0xff]
      %v510 = vld [vmem:[%s205 + $0x278] sm:$0xff]
      %v511 = vld [vmem:[%s205 + $0x280] sm:$0xff]
      %v512 = vld [vmem:[%s205 + $0x288] sm:$0xff]
      %v513 = vld [vmem:[%s205 + $0x290] sm:$0xff]
      %v514 = vld [vmem:[%s205 + $0x298] sm:$0xff]
      %v515 = vld [vmem:[%s205 + $0x2a0] sm:$0xff]
      %v516 = vld [vmem:[%s205 + $0x2a8] sm:$0xff]
      %v517 = vld [vmem:[%s205 + $0x2b0] sm:$0xff]
      %v518 = vld [vmem:[%s205 + $0x2b8] sm:$0xff]
      %v519 = vld [vmem:[%s205 + $0x2c0] sm:$0xff]
      %v520 = vld [vmem:[%s205 + $0x2c8] sm:$0xff]
      %v521 = vld [vmem:[%s205 + $0x2d0] sm:$0xff]
      %v522 = vld [vmem:[%s205 + $0x2d8] sm:$0xff]
      %v523 = vld [vmem:[%s205 + $0x2e0] sm:$0xff]
      %v524 = vld [vmem:[%s205 + $0x2e8] sm:$0xff]
      %v525 = vld [vmem:[%s205 + $0x2f0] sm:$0xff]
      %v526 = vld [vmem:[%s205 + $0x2f8] sm:$0xff]
      %v527 = vld [vmem:[%s205 + $0x300] sm:$0xff]
      %v528 = vld [vmem:[%s205 + $0x308] sm:$0xff]
      %v529 = vld [vmem:[%s205 + $0x310] sm:$0xff]
      %v530 = vld [vmem:[%s205 + $0x318] sm:$0xff]
      %v531 = vld [vmem:[%s205 + $0x320] sm:$0xff]
      %v532 = vld [vmem:[%s205 + $0x328] sm:$0xff]
      %v533 = vld [vmem:[%s205 + $0x330] sm:$0xff]
      %v534 = vld [vmem:[%s205 + $0x338] sm:$0xff]
      %v535 = vld [vmem:[%s205 + $0x340] sm:$0xff]
      %v536 = vld [vmem:[%s205 + $0x348] sm:$0xff]
      %v537 = vld [vmem:[%s205 + $0x350] sm:$0xff]
      %v538 = vld [vmem:[%s205 + $0x358] sm:$0xff]
      %v539 = vld [vmem:[%s205 + $0x360] sm:$0xff]
      %v540 = vld [vmem:[%s205 + $0x368] sm:$0xff]
      %v541 = vld [vmem:[%s205 + $0x370] sm:$0xff]
      %v542 = vld [vmem:[%s205 + $0x378] sm:$0xff]
      %v543 = vld [vmem:[%s205 + $0x380] sm:$0xff]
      %v544 = vld [vmem:[%s205 + $0x388] sm:$0xff]
      %v545 = vld [vmem:[%s205 + $0x390] sm:$0xff]
      %v546 = vld [vmem:[%s205 + $0x398] sm:$0xff]
      %v547 = vld [vmem:[%s205 + $0x3a0] sm:$0xff]
      %v548 = vld [vmem:[%s205 + $0x3a8] sm:$0xff]
      %v549 = vld [vmem:[%s205 + $0x3b0] sm:$0xff]
      %v550 = vld [vmem:[%s205 + $0x3b8] sm:$0xff]
      %v551 = vld [vmem:[%s205 + $0x3c0] sm:$0xff]
      %v552 = vld [vmem:[%s205 + $0x3c8] sm:$0xff]
      %v553 = vld [vmem:[%s205 + $0x3d0] sm:$0xff]
      %v554 = vld [vmem:[%s205 + $0x3d8] sm:$0xff]
      %v555 = vld [vmem:[%s205 + $0x3e0] sm:$0xff]
      %v556 = vld [vmem:[%s205 + $0x3e8] sm:$0xff]
      %v557 = vld [vmem:[%s205 + $0x3f0] sm:$0xff]
      %v558 = vld [vmem:[%s205 + $0x3f8] sm:$0xff]
      %v559 = vld [vmem:[%s205 + $0x400] sm:$0xff]
      %v560 = vld [vmem:[%s205 + $0x408] sm:$0xff]
      %v561 = vld [vmem:[%s205 + $0x410] sm:$0xff]
      %v562 = vld [vmem:[%s205 + $0x418] sm:$0xff]
      %v563 = vld [vmem:[%s205 + $0x420] sm:$0xff]
      %v564 = vld [vmem:[%s205 + $0x428] sm:$0xff]
      %v565 = vld [vmem:[%s205 + $0x430] sm:$0xff]
      %v566 = vld [vmem:[%s205 + $0x438] sm:$0xff]
      %v567 = vld [vmem:[%s205 + $0x440] sm:$0xff]
      %v568 = vld [vmem:[%s205 + $0x448] sm:$0xff]
      %v569 = vld [vmem:[%s205 + $0x450] sm:$0xff]
      %v570 = vld [vmem:[%s205 + $0x458] sm:$0xff]
      %v571 = vld [vmem:[%s205 + $0x460] sm:$0xff]
      %v572 = vld [vmem:[%s205 + $0x468] sm:$0xff]
      %v573 = vld [vmem:[%s205 + $0x470] sm:$0xff]
      %v574 = vld [vmem:[%s205 + $0x478] sm:$0xff]
      %v575 = vld [vmem:[%s205 + $0x480] sm:$0xff]
      %v576 = vld [vmem:[%s205 + $0x488] sm:$0xff]
      %v577 = vld [vmem:[%s205 + $0x490] sm:$0xff]
      %v578 = vld [vmem:[%s205 + $0x498] sm:$0xff]
      %v579 = vld [vmem:[%s205 + $0x4a0] sm:$0xff]
      %v580 = vld [vmem:[%s205 + $0x4a8] sm:$0xff]
      %v581 = vld [vmem:[%s205 + $0x4b0] sm:$0xff]
      %v582 = vld [vmem:[%s205 + $0x4b8] sm:$0xff]
      %v583 = vld [vmem:[%s205 + $0x4c0] sm:$0xff]
      %v584 = vld [vmem:[%s205 + $0x4c8] sm:$0xff]
      %v585 = vld [vmem:[%s205 + $0x4d0] sm:$0xff]
      %v586 = vld [vmem:[%s205 + $0x4d8] sm:$0xff]
      %v587 = vld [vmem:[%s205 + $0x4e0] sm:$0xff]
      %v588 = vld [vmem:[%s205 + $0x4e8] sm:$0xff]
      %v589 = vld [vmem:[%s205 + $0x4f0] sm:$0xff]
      %v590 = vld [vmem:[%s205 + $0x4f8] sm:$0xff]
      %v591 = vld [vmem:[%s205 + $0x500] sm:$0xff]
      %v592 = vld [vmem:[%s205 + $0x508] sm:$0xff]
      %v593 = vld [vmem:[%s205 + $0x510] sm:$0xff]
      %v594 = vld [vmem:[%s205 + $0x518] sm:$0xff]
      %v595 = vld [vmem:[%s205 + $0x520] sm:$0xff]
      %v596 = vld [vmem:[%s205 + $0x528] sm:$0xff]
      %v597 = vld [vmem:[%s205 + $0x530] sm:$0xff]
      %v598 = vld [vmem:[%s205 + $0x538] sm:$0xff]
      %v599 = vld [vmem:[%s205 + $0x540] sm:$0xff]
      %v600 = vld [vmem:[%s205 + $0x548] sm:$0xff]
      %v601 = vld [vmem:[%s205 + $0x550] sm:$0xff]
      %v602 = vld [vmem:[%s205 + $0x558] sm:$0xff]
      %v603 = vld [vmem:[%s205 + $0x560] sm:$0xff]
      %v604 = vld [vmem:[%s205 + $0x568] sm:$0xff]
      %v605 = vld [vmem:[%s205 + $0x570] sm:$0xff]
      %v606 = vld [vmem:[%s205 + $0x578] sm:$0xff]
      %v607 = vld [vmem:[%s205 + $0x580] sm:$0xff]
      %v608 = vld [vmem:[%s205 + $0x588] sm:$0xff]
      %v609 = vld [vmem:[%s205 + $0x590] sm:$0xff]
      %v610 = vld [vmem:[%s205 + $0x598] sm:$0xff]
      %v611 = vld [vmem:[%s205 + $0x5a0] sm:$0xff]
      %v612 = vld [vmem:[%s205 + $0x5a8] sm:$0xff]
      %v613 = vld [vmem:[%s205 + $0x5b0] sm:$0xff]
      %v614 = vld [vmem:[%s205 + $0x5b8] sm:$0xff]
      %v615 = vld [vmem:[%s205 + $0x5c0] sm:$0xff]
      %v616 = vld [vmem:[%s205 + $0x5c8] sm:$0xff]
      %v617 = vld [vmem:[%s205 + $0x5d0] sm:$0xff]
      %v618 = vld [vmem:[%s205 + $0x5d8] sm:$0xff]
      %v619 = vld [vmem:[%s205 + $0x5e0] sm:$0xff]
      %v620 = vld [vmem:[%s205 + $0x5e8] sm:$0xff]
      %v621 = vld [vmem:[%s205 + $0x5f0] sm:$0xff]
      %v622 = vld [vmem:[%s205 + $0x5f8] sm:$0xff]
      %v623 = vld [vmem:[%s205 + $0x600] sm:$0xff]
      %v624 = vld [vmem:[%s205 + $0x608] sm:$0xff]
      %v625 = vld [vmem:[%s205 + $0x610] sm:$0xff]
      %v626 = vld [vmem:[%s205 + $0x618] sm:$0xff]
      %v627 = vld [vmem:[%s205 + $0x620] sm:$0xff]
      %v628 = vld [vmem:[%s205 + $0x628] sm:$0xff]
      %v629 = vld [vmem:[%s205 + $0x630] sm:$0xff]
      %v630 = vld [vmem:[%s205 + $0x638] sm:$0xff]
      %v631 = vld [vmem:[%s205 + $0x640] sm:$0xff]
      %v632 = vld [vmem:[%s205 + $0x648] sm:$0xff]
      %v633 = vld [vmem:[%s205 + $0x650] sm:$0xff]
      %v634 = vld [vmem:[%s205 + $0x658] sm:$0xff]
      %v635 = vld [vmem:[%s205 + $0x660] sm:$0xff]
      %v636 = vld [vmem:[%s205 + $0x668] sm:$0xff]
      %v637 = vld [vmem:[%s205 + $0x670] sm:$0xff]
      %v638 = vld [vmem:[%s205 + $0x678] sm:$0xff]
      %v639 = vld [vmem:[%s205 + $0x680] sm:$0xff]
      %v640 = vld [vmem:[%s205 + $0x688] sm:$0xff]
      %v641 = vld [vmem:[%s205 + $0x690] sm:$0xff]
      %v642 = vld [vmem:[%s205 + $0x698] sm:$0xff]
      %v643 = vld [vmem:[%s205 + $0x6a0] sm:$0xff]
      %v644 = vld [vmem:[%s205 + $0x6a8] sm:$0xff]
      %v645 = vld [vmem:[%s205 + $0x6b0] sm:$0xff]
      %v646 = vld [vmem:[%s205 + $0x6b8] sm:$0xff]
      %v647 = vld [vmem:[%s205 + $0x6c0] sm:$0xff]
      %v648 = vld [vmem:[%s205 + $0x6c8] sm:$0xff]
      %v649 = vld [vmem:[%s205 + $0x6d0] sm:$0xff]
      %v650 = vld [vmem:[%s205 + $0x6d8] sm:$0xff]
      %v651 = vld [vmem:[%s205 + $0x6e0] sm:$0xff]
      %v652 = vld [vmem:[%s205 + $0x6e8] sm:$0xff]
      %v653 = vld [vmem:[%s205 + $0x6f0] sm:$0xff]
      %v654 = vld [vmem:[%s205 + $0x6f8] sm:$0xff]
      %v655 = vld [vmem:[%s205 + $0x700] sm:$0xff]
      %v656 = vld [vmem:[%s205 + $0x708] sm:$0xff]
      %v657 = vld [vmem:[%s205 + $0x710] sm:$0xff]
      %v658 = vld [vmem:[%s205 + $0x718] sm:$0xff]
      %v659 = vld [vmem:[%s205 + $0x720] sm:$0xff]
      %v660 = vld [vmem:[%s205 + $0x728] sm:$0xff]
      %v661 = vld [vmem:[%s205 + $0x730] sm:$0xff]
      %v662 = vld [vmem:[%s205 + $0x738] sm:$0xff]
      %v663 = vld [vmem:[%s205 + $0x740] sm:$0xff]
      %v664 = vld [vmem:[%s205 + $0x748] sm:$0xff]
      %v665 = vld [vmem:[%s205 + $0x750] sm:$0xff]
      %v666 = vld [vmem:[%s205 + $0x758] sm:$0xff]
      %v667 = vld [vmem:[%s205 + $0x760] sm:$0xff]
      %v668 = vld [vmem:[%s205 + $0x768] sm:$0xff]
      %v669 = vld [vmem:[%s205 + $0x770] sm:$0xff]
      %v670 = vld [vmem:[%s205 + $0x778] sm:$0xff]
      %v671 = vld [vmem:[%s205 + $0x780] sm:$0xff]
      %v672 = vld [vmem:[%s205 + $0x788] sm:$0xff]
      %v673 = vld [vmem:[%s205 + $0x790] sm:$0xff]
      %v674 = vld [vmem:[%s205 + $0x798] sm:$0xff]
      %v675 = vld [vmem:[%s205 + $0x7a0] sm:$0xff]
      %v676 = vld [vmem:[%s205 + $0x7a8] sm:$0xff]
      %v677 = vld [vmem:[%s205 + $0x7b0] sm:$0xff]
      %v678 = vld [vmem:[%s205 + $0x7b8] sm:$0xff]
      %v679 = vld [vmem:[%s205 + $0x7c0] sm:$0xff]
      %v680 = vld [vmem:[%s205 + $0x7c8] sm:$0xff]
      %v681 = vld [vmem:[%s205 + $0x7d0] sm:$0xff]
      %v682 = vld [vmem:[%s205 + $0x7d8] sm:$0xff]
      %v683 = vld [vmem:[%s205 + $0x7e0] sm:$0xff]
      %v684 = vld [vmem:[%s205 + $0x7e8] sm:$0xff]
      %v685 = vld [vmem:[%s205 + $0x7f0] sm:$0xff]
      %v686 = vld [vmem:[%s205 + $0x7f8] sm:$0xff]
      %v687 = vld [vmem:[%s205 + $0x800] sm:$0xff]
      %v688 = vld [vmem:[%s205 + $0x808] sm:$0xff]
      %v689 = vld [vmem:[%s205 + $0x810] sm:$0xff]
      %v690 = vld [vmem:[%s205 + $0x818] sm:$0xff]
      %v691 = vld [vmem:[%s205 + $0x820] sm:$0xff]
      %v692 = vld [vmem:[%s205 + $0x828] sm:$0xff]
      %v693 = vld [vmem:[%s205 + $0x830] sm:$0xff]
      %v694 = vld [vmem:[%s205 + $0x838] sm:$0xff]
      %v695 = vld [vmem:[%s205 + $0x840] sm:$0xff]
      %v696 = vld [vmem:[%s205 + $0x848] sm:$0xff]
      %v697 = vld [vmem:[%s205 + $0x850] sm:$0xff]
      %v698 = vld [vmem:[%s205 + $0x858] sm:$0xff]
      %v699 = vld [vmem:[%s205 + $0x860] sm:$0xff]
      %v700 = vld [vmem:[%s205 + $0x868] sm:$0xff]
      %v701 = vld [vmem:[%s205 + $0x870] sm:$0xff]
      %v702 = vld [vmem:[%s205 + $0x878] sm:$0xff]
      %v703 = vld [vmem:[%s205 + $0x880] sm:$0xff]
      %v704 = vld [vmem:[%s205 + $0x888] sm:$0xff]
      %v705 = vld [vmem:[%s205 + $0x890] sm:$0xff]
      %v706 = vld [vmem:[%s205 + $0x898] sm:$0xff]
      %v707 = vld [vmem:[%s205 + $0x8a0] sm:$0xff]
      %v708 = vld [vmem:[%s205 + $0x8a8] sm:$0xff]
      %v709 = vld [vmem:[%s205 + $0x8b0] sm:$0xff]
      %v710 = vld [vmem:[%s205 + $0x8b8] sm:$0xff]
      %v711 = vld [vmem:[%s205 + $0x8c0] sm:$0xff]
      %v712 = vld [vmem:[%s205 + $0x8c8] sm:$0xff]
      %v713 = vld [vmem:[%s205 + $0x8d0] sm:$0xff]
      %v714 = vld [vmem:[%s205 + $0x8d8] sm:$0xff]
      %v715 = vld [vmem:[%s205 + $0x8e0] sm:$0xff]
      %v716 = vld [vmem:[%s205 + $0x8e8] sm:$0xff]
      %v717 = vld [vmem:[%s205 + $0x8f0] sm:$0xff]
      %v718 = vld [vmem:[%s205 + $0x8f8] sm:$0xff]
      %v719 = vld [vmem:[%s205 + $0x900] sm:$0xff]
      %v720 = vld [vmem:[%s205 + $0x908] sm:$0xff]
      %v721 = vld [vmem:[%s205 + $0x910] sm:$0xff]
      %v722 = vld [vmem:[%s205 + $0x918] sm:$0xff]
      %v723 = vld [vmem:[%s205 + $0x920] sm:$0xff]
      %v724 = vld [vmem:[%s205 + $0x928] sm:$0xff]
      %v725 = vld [vmem:[%s205 + $0x930] sm:$0xff]
      %v726 = vld [vmem:[%s205 + $0x938] sm:$0xff]
      %v727 = vld [vmem:[%s205 + $0x940] sm:$0xff]
      %v728 = vld [vmem:[%s205 + $0x948] sm:$0xff]
      %v729 = vld [vmem:[%s205 + $0x950] sm:$0xff]
      %v730 = vld [vmem:[%s205 + $0x958] sm:$0xff]
      %v731 = vld [vmem:[%s205 + $0x960] sm:$0xff]
      %v732 = vld [vmem:[%s205 + $0x968] sm:$0xff]
      %v733 = vld [vmem:[%s205 + $0x970] sm:$0xff]
      %v734 = vld [vmem:[%s205 + $0x978] sm:$0xff]
      %v735 = vld [vmem:[%s205 + $0x980] sm:$0xff]
      %v736 = vld [vmem:[%s205 + $0x988] sm:$0xff]
      %v737 = vld [vmem:[%s205 + $0x990] sm:$0xff]
      %v738 = vld [vmem:[%s205 + $0x998] sm:$0xff]
      %v739 = vld [vmem:[%s205 + $0x9a0] sm:$0xff]
      %v740 = vld [vmem:[%s205 + $0x9a8] sm:$0xff]
      %v741 = vld [vmem:[%s205 + $0x9b0] sm:$0xff]
      %v742 = vld [vmem:[%s205 + $0x9b8] sm:$0xff]
      %v743 = vld [vmem:[%s205 + $0x9c0] sm:$0xff]
      %v744 = vld [vmem:[%s205 + $0x9c8] sm:$0xff]
      %v745 = vld [vmem:[%s205 + $0x9d0] sm:$0xff]
      %v746 = vld [vmem:[%s205 + $0x9d8] sm:$0xff]
      %v747 = vld [vmem:[%s205 + $0x9e0] sm:$0xff]
      %v748 = vld [vmem:[%s205 + $0x9e8] sm:$0xff]
      %v749 = vld [vmem:[%s205 + $0x9f0] sm:$0xff]
      %v750 = vld [vmem:[%s205 + $0x9f8] sm:$0xff]
      %v751 = vld [vmem:[%s205 + $0xa00] sm:$0xff]
      %v752 = vld [vmem:[%s205 + $0xa08] sm:$0xff]
      %v753 = vld [vmem:[%s205 + $0xa10] sm:$0xff]
      %v754 = vld [vmem:[%s205 + $0xa18] sm:$0xff]
      %v755 = vld [vmem:[%s205 + $0xa20] sm:$0xff]
      %v756 = vld [vmem:[%s205 + $0xa28] sm:$0xff]
      %v757 = vld [vmem:[%s205 + $0xa30] sm:$0xff]
      %v758 = vld [vmem:[%s205 + $0xa38] sm:$0xff]
      %v759 = vld [vmem:[%s205 + $0xa40] sm:$0xff]
      %v760 = vld [vmem:[%s205 + $0xa48] sm:$0xff]
      %v761 = vld [vmem:[%s205 + $0xa50] sm:$0xff]
      %v762 = vld [vmem:[%s205 + $0xa58] sm:$0xff]
      %v763 = vld [vmem:[%s205 + $0xa60] sm:$0xff]
      %v764 = vld [vmem:[%s205 + $0xa68] sm:$0xff]
      %v765 = vld [vmem:[%s205 + $0xa70] sm:$0xff]
      %v766 = vld [vmem:[%s205 + $0xa78] sm:$0xff]
      %v767 = vld [vmem:[%s205 + $0xa80] sm:$0xff]
      %v768 = vld [vmem:[%s205 + $0xa88] sm:$0xff]
      %v769 = vld [vmem:[%s205 + $0xa90] sm:$0xff]
      %v770 = vld [vmem:[%s205 + $0xa98] sm:$0xff]
      %v771 = vld [vmem:[%s205 + $0xaa0] sm:$0xff]
      %v772 = vld [vmem:[%s205 + $0xaa8] sm:$0xff]
      %v773 = vld [vmem:[%s205 + $0xab0] sm:$0xff]
      %v774 = vld [vmem:[%s205 + $0xab8] sm:$0xff]
      %v775 = vld [vmem:[%s205 + $0xac0] sm:$0xff]
      %v776 = vld [vmem:[%s205 + $0xac8] sm:$0xff]
      %v777 = vld [vmem:[%s205 + $0xad0] sm:$0xff]
      %v778 = vld [vmem:[%s205 + $0xad8] sm:$0xff]
      %v779 = vld [vmem:[%s205 + $0xae0] sm:$0xff]
      %v780 = vld [vmem:[%s205 + $0xae8] sm:$0xff]
      %v781 = vld [vmem:[%s205 + $0xaf0] sm:$0xff]
      %v782 = vld [vmem:[%s205 + $0xaf8] sm:$0xff]
      %v783 = vld [vmem:[%s205 + $0xb00] sm:$0xff]
      %v784 = vld [vmem:[%s205 + $0xb08] sm:$0xff]
      %v785 = vld [vmem:[%s205 + $0xb10] sm:$0xff]
      %v786 = vld [vmem:[%s205 + $0xb18] sm:$0xff]
      %v787 = vld [vmem:[%s205 + $0xb20] sm:$0xff]
      %v788 = vld [vmem:[%s205 + $0xb28] sm:$0xff]
      %v789 = vld [vmem:[%s205 + $0xb30] sm:$0xff]
      %v790 = vld [vmem:[%s205 + $0xb38] sm:$0xff]
      %v791 = vld [vmem:[%s205 + $0xb40] sm:$0xff]
      %v792 = vld [vmem:[%s205 + $0xb48] sm:$0xff]
      %v793 = vld [vmem:[%s205 + $0xb50] sm:$0xff]
      %v794 = vld [vmem:[%s205 + $0xb58] sm:$0xff]
      %v795 = vld [vmem:[%s205 + $0xb60] sm:$0xff]
      %v796 = vld [vmem:[%s205 + $0xb68] sm:$0xff]
      %v797 = vld [vmem:[%s205 + $0xb70] sm:$0xff]
      %v798 = vld [vmem:[%s205 + $0xb78] sm:$0xff]
      %v799 = vld [vmem:[%s205 + $0xb80] sm:$0xff]
      %v800 = vld [vmem:[%s205 + $0xb88] sm:$0xff]
      %v801 = vld [vmem:[%s205 + $0xb90] sm:$0xff]
      %v802 = vld [vmem:[%s205 + $0xb98] sm:$0xff]
      %v803 = vld [vmem:[%s205 + $0xba0] sm:$0xff]
      %v804 = vld [vmem:[%s205 + $0xba8] sm:$0xff]
      %v805 = vld [vmem:[%s205 + $0xbb0] sm:$0xff]
      %v806 = vld [vmem:[%s205 + $0xbb8] sm:$0xff]
      %v807 = vld [vmem:[%s205 + $0xbc0] sm:$0xff]
      %v808 = vld [vmem:[%s205 + $0xbc8] sm:$0xff]
      %v809 = vld [vmem:[%s205 + $0xbd0] sm:$0xff]
      %v810 = vld [vmem:[%s205 + $0xbd8] sm:$0xff]
      %v811 = vld [vmem:[%s205 + $0xbe0] sm:$0xff]
      %v812 = vld [vmem:[%s205 + $0xbe8] sm:$0xff]
      %v813 = vld [vmem:[%s205 + $0xbf0] sm:$0xff]
      %v814 = vld [vmem:[%s205 + $0xbf8] sm:$0xff]
      %v815 = vld [vmem:[%s205 + $0xc00] sm:$0xff]
      %v816 = vld [vmem:[%s205 + $0xc08] sm:$0xff]
      %v817 = vld [vmem:[%s205 + $0xc10] sm:$0xff]
      %v818 = vld [vmem:[%s205 + $0xc18] sm:$0xff]
      %v819 = vld [vmem:[%s205 + $0xc20] sm:$0xff]
      %v820 = vld [vmem:[%s205 + $0xc28] sm:$0xff]
      %v821 = vld [vmem:[%s205 + $0xc30] sm:$0xff]
      %v822 = vld [vmem:[%s205 + $0xc38] sm:$0xff]
      %v823 = vld [vmem:[%s205 + $0xc40] sm:$0xff]
      %v824 = vld [vmem:[%s205 + $0xc48] sm:$0xff]
      %v825 = vld [vmem:[%s205 + $0xc50] sm:$0xff]
      %v826 = vld [vmem:[%s205 + $0xc58] sm:$0xff]
      %v827 = vld [vmem:[%s205 + $0xc60] sm:$0xff]
      %v828 = vld [vmem:[%s205 + $0xc68] sm:$0xff]
      %v829 = vld [vmem:[%s205 + $0xc70] sm:$0xff]
      %v830 = vld [vmem:[%s205 + $0xc78] sm:$0xff]
      %v831 = vld [vmem:[%s205 + $0xc80] sm:$0xff]
      %v832 = vld [vmem:[%s205 + $0xc88] sm:$0xff]
      %v833 = vld [vmem:[%s205 + $0xc90] sm:$0xff]
      %v834 = vld [vmem:[%s205 + $0xc98] sm:$0xff]
      %v835 = vld [vmem:[%s205 + $0xca0] sm:$0xff]
      %v836 = vld [vmem:[%s205 + $0xca8] sm:$0xff]
      %v837 = vld [vmem:[%s205 + $0xcb0] sm:$0xff]
      %v838 = vld [vmem:[%s205 + $0xcb8] sm:$0xff]
      %v839 = vld [vmem:[%s205 + $0xcc0] sm:$0xff]
      %v840 = vld [vmem:[%s205 + $0xcc8] sm:$0xff]
      %v841 = vld [vmem:[%s205 + $0xcd0] sm:$0xff]
      %v842 = vld [vmem:[%s205 + $0xcd8] sm:$0xff]
      %v843 = vld [vmem:[%s205 + $0xce0] sm:$0xff]
      %v844 = vld [vmem:[%s205 + $0xce8] sm:$0xff]
      %v845 = vld [vmem:[%s205 + $0xcf0] sm:$0xff]
      %v846 = vld [vmem:[%s205 + $0xcf8] sm:$0xff]
      %v847 = vld [vmem:[%s205 + $0xd00] sm:$0xff]
      %v848 = vld [vmem:[%s205 + $0xd08] sm:$0xff]
      %v849 = vld [vmem:[%s205 + $0xd10] sm:$0xff]
      %v850 = vld [vmem:[%s205 + $0xd18] sm:$0xff]
      %v851 = vld [vmem:[%s205 + $0xd20] sm:$0xff]
      %v852 = vld [vmem:[%s205 + $0xd28] sm:$0xff]
      %v853 = vld [vmem:[%s205 + $0xd30] sm:$0xff]
      %v854 = vld [vmem:[%s205 + $0xd38] sm:$0xff]
      %v855 = vld [vmem:[%s205 + $0xd40] sm:$0xff]
      %v856 = vld [vmem:[%s205 + $0xd48] sm:$0xff]
      %v857 = vld [vmem:[%s205 + $0xd50] sm:$0xff]
      %v858 = vld [vmem:[%s205 + $0xd58] sm:$0xff]
      %v859 = vld [vmem:[%s205 + $0xd60] sm:$0xff]
      %v860 = vld [vmem:[%s205 + $0xd68] sm:$0xff]
      %v861 = vld [vmem:[%s205 + $0xd70] sm:$0xff]
      %v862 = vld [vmem:[%s205 + $0xd78] sm:$0xff]
      %v863 = vld [vmem:[%s205 + $0xd80] sm:$0xff]
      %v864 = vld [vmem:[%s205 + $0xd88] sm:$0xff]
      %v865 = vld [vmem:[%s205 + $0xd90] sm:$0xff]
      %v866 = vld [vmem:[%s205 + $0xd98] sm:$0xff]
      %v867 = vld [vmem:[%s205 + $0xda0] sm:$0xff]
      %v868 = vld [vmem:[%s205 + $0xda8] sm:$0xff]
      %v869 = vld [vmem:[%s205 + $0xdb0] sm:$0xff]
      %v870 = vld [vmem:[%s205 + $0xdb8] sm:$0xff]
      %v871 = vld [vmem:[%s205 + $0xdc0] sm:$0xff]
      %v872 = vld [vmem:[%s205 + $0xdc8] sm:$0xff]
      %v873 = vld [vmem:[%s205 + $0xdd0] sm:$0xff]
      %v874 = vld [vmem:[%s205 + $0xdd8] sm:$0xff]
      %v875 = vld [vmem:[%s205 + $0xde0] sm:$0xff]
      %v876 = vld [vmem:[%s205 + $0xde8] sm:$0xff]
      %v877 = vld [vmem:[%s205 + $0xdf0] sm:$0xff]
      %v878 = vld [vmem:[%s205 + $0xdf8] sm:$0xff]
      %v879 = vld [vmem:[%s205 + $0xe00] sm:$0xff]
      %v880 = vld [vmem:[%s205 + $0xe08] sm:$0xff]
      %v881 = vld [vmem:[%s205 + $0xe10] sm:$0xff]
      %v882 = vld [vmem:[%s205 + $0xe18] sm:$0xff]
      %v883 = vld [vmem:[%s205 + $0xe20] sm:$0xff]
      %v884 = vld [vmem:[%s205 + $0xe28] sm:$0xff]
      %v885 = vld [vmem:[%s205 + $0xe30] sm:$0xff]
      %v886 = vld [vmem:[%s205 + $0xe38] sm:$0xff]
      %v887 = vld [vmem:[%s205 + $0xe40] sm:$0xff]
      %v888 = vld [vmem:[%s205 + $0xe48] sm:$0xff]
      %v889 = vld [vmem:[%s205 + $0xe50] sm:$0xff]
      %v890 = vld [vmem:[%s205 + $0xe58] sm:$0xff]
      %v891 = vld [vmem:[%s205 + $0xe60] sm:$0xff]
      %v892 = vld [vmem:[%s205 + $0xe68] sm:$0xff]
      %v893 = vld [vmem:[%s205 + $0xe70] sm:$0xff]
      %v894 = vld [vmem:[%s205 + $0xe78] sm:$0xff]
      %v895 = vld [vmem:[%s205 + $0xe80] sm:$0xff]
      %v896 = vld [vmem:[%s205 + $0xe88] sm:$0xff]
      %v897 = vld [vmem:[%s205 + $0xe90] sm:$0xff]
      %v898 = vld [vmem:[%s205 + $0xe98] sm:$0xff]
      %v899 = vld [vmem:[%s205 + $0xea0] sm:$0xff]
      %v900 = vld [vmem:[%s205 + $0xea8] sm:$0xff]
      %v901 = vld [vmem:[%s205 + $0xeb0] sm:$0xff]
      %v902 = vld [vmem:[%s205 + $0xeb8] sm:$0xff]
      %v903 = vld [vmem:[%s205 + $0xec0] sm:$0xff]
      %v904 = vld [vmem:[%s205 + $0xec8] sm:$0xff]
      %v905 = vld [vmem:[%s205 + $0xed0] sm:$0xff]
      %v906 = vld [vmem:[%s205 + $0xed8] sm:$0xff]
      %v907 = vld [vmem:[%s205 + $0xee0] sm:$0xff]
      %v908 = vld [vmem:[%s205 + $0xee8] sm:$0xff]
      %v909 = vld [vmem:[%s205 + $0xef0] sm:$0xff]
      %v910 = vld [vmem:[%s205 + $0xef8] sm:$0xff]
      %v911 = vld [vmem:[%s205 + $0xf00] sm:$0xff]
      %v912 = vld [vmem:[%s205 + $0xf08] sm:$0xff]
      %v913 = vld [vmem:[%s205 + $0xf10] sm:$0xff]
      %v914 = vld [vmem:[%s205 + $0xf18] sm:$0xff]
      %v915 = vld [vmem:[%s205 + $0xf20] sm:$0xff]
      %v916 = vld [vmem:[%s205 + $0xf28] sm:$0xff]
      %v917 = vld [vmem:[%s205 + $0xf30] sm:$0xff]
      %v918 = vld [vmem:[%s205 + $0xf38] sm:$0xff]
      %v919 = vld [vmem:[%s205 + $0xf40] sm:$0xff]
      %v920 = vld [vmem:[%s205 + $0xf48] sm:$0xff]
      %v921 = vld [vmem:[%s205 + $0xf50] sm:$0xff]
      %v922 = vld [vmem:[%s205 + $0xf58] sm:$0xff]
      %v923 = vld [vmem:[%s205 + $0xf60] sm:$0xff]
      %v924 = vld [vmem:[%s205 + $0xf68] sm:$0xff]
      %v925 = vld [vmem:[%s205 + $0xf70] sm:$0xff]
      %v926 = vld [vmem:[%s205 + $0xf78] sm:$0xff]
      %v927 = vld [vmem:[%s205 + $0xf80] sm:$0xff]
      %v928 = vld [vmem:[%s205 + $0xf88] sm:$0xff]
      %v929 = vld [vmem:[%s205 + $0xf90] sm:$0xff]
      %v930 = vld [vmem:[%s205 + $0xf98] sm:$0xff]
      %v931 = vld [vmem:[%s205 + $0xfa0] sm:$0xff]
      %v932 = vld [vmem:[%s205 + $0xfa8] sm:$0xff]
      %v933 = vld [vmem:[%s205 + $0xfb0] sm:$0xff]
      %v934 = vld [vmem:[%s205 + $0xfb8] sm:$0xff]
      %v935 = vld [vmem:[%s205 + $0xfc0] sm:$0xff]
      %v936 = vld [vmem:[%s205 + $0xfc8] sm:$0xff]
      %v937 = vld [vmem:[%s205 + $0xfd0] sm:$0xff]
      %v938 = vld [vmem:[%s205 + $0xfd8] sm:$0xff]
      %v939 = vld [vmem:[%s205 + $0xfe0] sm:$0xff]
      %v940 = vld [vmem:[%s205 + $0xfe8] sm:$0xff]
      %v941 = vld [vmem:[%s205 + $0xff0] sm:$0xff]
      %v942 = vld [vmem:[%s205 + $0xff8] sm:$0xff]
      %v943 = vld [vmem:[%s205 + $0x1000] sm:$0xff]
      %v944 = vld [vmem:[%s205 + $0x1008] sm:$0xff]
      %v945 = vld [vmem:[%s205 + $0x1010] sm:$0xff]
      %v946 = vld [vmem:[%s205 + $0x1018] sm:$0xff]
      %v947 = vld [vmem:[%s205 + $0x1020] sm:$0xff]
      %v948 = vld [vmem:[%s205 + $0x1028] sm:$0xff]
      %v949 = vld [vmem:[%s205 + $0x1030] sm:$0xff]
      %v950 = vld [vmem:[%s205 + $0x1038] sm:$0xff]
      %v951 = vld [vmem:[%s205 + $0x1040] sm:$0xff]
      %v952 = vld [vmem:[%s205 + $0x1048] sm:$0xff]
      %v953 = vld [vmem:[%s205 + $0x1050] sm:$0xff]
      %v954 = vld [vmem:[%s205 + $0x1058] sm:$0xff]
      %v955 = vld [vmem:[%s205 + $0x1060] sm:$0xff]
      %v956 = vld [vmem:[%s205 + $0x1068] sm:$0xff]
      %v957 = vld [vmem:[%s205 + $0x1070] sm:$0xff]
      %v958 = vld [vmem:[%s205 + $0x1078] sm:$0xff]
      %v959 = vld [vmem:[%s205 + $0x1080] sm:$0xff]
      %v960 = vld [vmem:[%s205 + $0x1088] sm:$0xff]
      %v961 = vld [vmem:[%s205 + $0x1090] sm:$0xff]
      %v962 = vld [vmem:[%s205 + $0x1098] sm:$0xff]
      %v963 = vld [vmem:[%s205 + $0x10a0] sm:$0xff]
      %v964 = vld [vmem:[%s205 + $0x10a8] sm:$0xff]
      %v965 = vld [vmem:[%s205 + $0x10b0] sm:$0xff]
      %v966 = vld [vmem:[%s205 + $0x10b8] sm:$0xff]
      %v967 = vld [vmem:[%s205 + $0x10c0] sm:$0xff]
      %v968 = vld [vmem:[%s205 + $0x10c8] sm:$0xff]
      %v969 = vld [vmem:[%s205 + $0x10d0] sm:$0xff]
      %v970 = vld [vmem:[%s205 + $0x10d8] sm:$0xff]
      %v971 = vld [vmem:[%s205 + $0x10e0] sm:$0xff]
      %v972 = vld [vmem:[%s205 + $0x10e8] sm:$0xff]
      %v973 = vld [vmem:[%s205 + $0x10f0] sm:$0xff]
      %v974 = vld [vmem:[%s205 + $0x10f8] sm:$0xff]
      %v975 = vld [vmem:[%s205 + $0x1100] sm:$0xff]
      %v976 = vld [vmem:[%s205 + $0x1108] sm:$0xff]
      %v977 = vld [vmem:[%s205 + $0x1110] sm:$0xff]
      %v978 = vld [vmem:[%s205 + $0x1118] sm:$0xff]
      %v979 = vld [vmem:[%s205 + $0x1120] sm:$0xff]
      %v980 = vld [vmem:[%s205 + $0x1128] sm:$0xff]
      %v981 = vld [vmem:[%s205 + $0x1130] sm:$0xff]
      %v982 = vld [vmem:[%s205 + $0x1138] sm:$0xff]
      %v983 = vld [vmem:[%s205 + $0x1140] sm:$0xff]
      %v984 = vld [vmem:[%s205 + $0x1148] sm:$0xff]
      %v985 = vld [vmem:[%s205 + $0x1150] sm:$0xff]
      %v986 = vld [vmem:[%s205 + $0x1158] sm:$0xff]
      %v987 = vld [vmem:[%s205 + $0x1160] sm:$0xff]
      %v988 = vld [vmem:[%s205 + $0x1168] sm:$0xff]
      %v989 = vld [vmem:[%s205 + $0x1170] sm:$0xff]
      %v990 = vld [vmem:[%s205 + $0x1178] sm:$0xff]
      %v991 = vld [vmem:[%s205 + $0x1180] sm:$0xff]
      %v992 = vld [vmem:[%s205 + $0x1188] sm:$0xff]
      %v993 = vld [vmem:[%s205 + $0x1190] sm:$0xff]
      %v994 = vld [vmem:[%s205 + $0x1198] sm:$0xff]
      %v995 = vld [vmem:[%s205 + $0x11a0] sm:$0xff]
      %v996 = vld [vmem:[%s205 + $0x11a8] sm:$0xff]
      %v997 = vld [vmem:[%s205 + $0x11b0] sm:$0xff]
      %v998 = vld [vmem:[%s205 + $0x11b8] sm:$0xff]
      %v999 = vld [vmem:[%s205 + $0x11c0] sm:$0xff]
      %v1000 = vld [vmem:[%s205 + $0x11c8] sm:$0xff]
      %v1001 = vld [vmem:[%s205 + $0x11d0] sm:$0xff]
      %v1002 = vld [vmem:[%s205 + $0x11d8] sm:$0xff]
      %v1003 = vld [vmem:[%s205 + $0x11e0] sm:$0xff]
      %v1004 = vld [vmem:[%s205 + $0x11e8] sm:$0xff]
      %v1005 = vld [vmem:[%s205 + $0x11f0] sm:$0xff]
      %v1006 = vld [vmem:[%s205 + $0x11f8] sm:$0xff]
      %v1007 = vld [vmem:[%s205 + $0x1200] sm:$0xff]
      %v1008 = vld [vmem:[%s205 + $0x1208] sm:$0xff]
      %v1009 = vld [vmem:[%s205 + $0x1210] sm:$0xff]
      %v1010 = vld [vmem:[%s205 + $0x1218] sm:$0xff]
      %v1011 = vld [vmem:[%s205 + $0x1220] sm:$0xff]
      %v1012 = vld [vmem:[%s205 + $0x1228] sm:$0xff]
      %v1013 = vld [vmem:[%s205 + $0x1230] sm:$0xff]
      %v1014 = vld [vmem:[%s205 + $0x1238] sm:$0xff]
      %v1015 = vld [vmem:[%s205 + $0x1240] sm:$0xff]
      %v1016 = vld [vmem:[%s205 + $0x1248] sm:$0xff]
      %v1017 = vld [vmem:[%s205 + $0x1250] sm:$0xff]
      %v1018 = vld [vmem:[%s205 + $0x1258] sm:$0xff]
      %v1019 = vld [vmem:[%s205 + $0x1260] sm:$0xff]
      %v1020 = vld [vmem:[%s205 + $0x1268] sm:$0xff]
      %v1021 = vld [vmem:[%s205 + $0x1270] sm:$0xff]
      %v1022 = vld [vmem:[%s205 + $0x1278] sm:$0xff]
      %v1023 = vld [vmem:[%s205 + $0x1280] sm:$0xff]
      %v1024 = vld [vmem:[%s205 + $0x1288] sm:$0xff]
      %v1025 = vld [vmem:[%s205 + $0x1290] sm:$0xff]
      %v1026 = vld [vmem:[%s205 + $0x1298] sm:$0xff]
      %v1027 = vld [vmem:[%s205 + $0x12a0] sm:$0xff]
      %v1028 = vld [vmem:[%s205 + $0x12a8] sm:$0xff]
      %v1029 = vld [vmem:[%s205 + $0x12b0] sm:$0xff]
      %v1030 = vld [vmem:[%s205 + $0x12b8] sm:$0xff]
      %v1031 = vld [vmem:[%s205 + $0x12c0] sm:$0xff]
      %v1032 = vld [vmem:[%s205 + $0x12c8] sm:$0xff]
      %v1033 = vld [vmem:[%s205 + $0x12d0] sm:$0xff]
      %v1034 = vld [vmem:[%s205 + $0x12d8] sm:$0xff]
      %v1035 = vld [vmem:[%s205 + $0x12e0] sm:$0xff]
      %v1036 = vld [vmem:[%s205 + $0x12e8] sm:$0xff]
      %v1037 = vld [vmem:[%s205 + $0x12f0] sm:$0xff]
      %v1038 = vld [vmem:[%s205 + $0x12f8] sm:$0xff]
      %v1039 = vld [vmem:[%s205 + $0x1300] sm:$0xff]
      %v1040 = vld [vmem:[%s205 + $0x1308] sm:$0xff]
      %v1041 = vld [vmem:[%s205 + $0x1310] sm:$0xff]
      %v1042 = vld [vmem:[%s205 + $0x1318] sm:$0xff]
      %v1043 = vld [vmem:[%s205 + $0x1320] sm:$0xff]
      %v1044 = vld [vmem:[%s205 + $0x1328] sm:$0xff]
      %v1045 = vld [vmem:[%s205 + $0x1330] sm:$0xff]
      %v1046 = vld [vmem:[%s205 + $0x1338] sm:$0xff]
      %v1047 = vld [vmem:[%s205 + $0x1340] sm:$0xff]
      %v1048 = vld [vmem:[%s205 + $0x1348] sm:$0xff]
      %v1049 = vld [vmem:[%s205 + $0x1350] sm:$0xff]
      %v1050 = vld [vmem:[%s205 + $0x1358] sm:$0xff]
      %v1051 = vld [vmem:[%s205 + $0x1360] sm:$0xff]
      %v1052 = vld [vmem:[%s205 + $0x1368] sm:$0xff]
      %v1053 = vld [vmem:[%s205 + $0x1370] sm:$0xff]
      %v1054 = vld [vmem:[%s205 + $0x1378] sm:$0xff]
      %v1055 = vld [vmem:[%s205 + $0x1380] sm:$0xff]
      %v1056 = vld [vmem:[%s205 + $0x1388] sm:$0xff]
      %v1057 = vld [vmem:[%s205 + $0x1390] sm:$0xff]
      %v1058 = vld [vmem:[%s205 + $0x1398] sm:$0xff]
      %v1059 = vld [vmem:[%s205 + $0x13a0] sm:$0xff]
      %v1060 = vld [vmem:[%s205 + $0x13a8] sm:$0xff]
      %v1061 = vld [vmem:[%s205 + $0x13b0] sm:$0xff]
      %v1062 = vld [vmem:[%s205 + $0x13b8] sm:$0xff]
      %v1063 = vld [vmem:[%s205 + $0x13c0] sm:$0xff]
      %v1064 = vld [vmem:[%s205 + $0x13c8] sm:$0xff]
      %v1065 = vld [vmem:[%s205 + $0x13d0] sm:$0xff]
      %v1066 = vld [vmem:[%s205 + $0x13d8] sm:$0xff]
      %v1067 = vld [vmem:[%s205 + $0x13e0] sm:$0xff]
      %v1068 = vld [vmem:[%s205 + $0x13e8] sm:$0xff]
      %v1069 = vld [vmem:[%s205 + $0x13f0] sm:$0xff]
      %v1070 = vld [vmem:[%s205 + $0x13f8] sm:$0xff]
      %v1071 = vld [vmem:[%s205 + $0x1400] sm:$0xff]
      %v1072 = vld [vmem:[%s205 + $0x1408] sm:$0xff]
      %v1073 = vld [vmem:[%s205 + $0x1410] sm:$0xff]
      %v1074 = vld [vmem:[%s205 + $0x1418] sm:$0xff]
      %v1075 = vld [vmem:[%s205 + $0x1420] sm:$0xff]
      %v1076 = vld [vmem:[%s205 + $0x1428] sm:$0xff]
      %v1077 = vld [vmem:[%s205 + $0x1430] sm:$0xff]
      %v1078 = vld [vmem:[%s205 + $0x1438] sm:$0xff]
      %v1079 = vld [vmem:[%s205 + $0x1440] sm:$0xff]
      %v1080 = vld [vmem:[%s205 + $0x1448] sm:$0xff]
      %v1081 = vld [vmem:[%s205 + $0x1450] sm:$0xff]
      %v1082 = vld [vmem:[%s205 + $0x1458] sm:$0xff]
      %v1083 = vld [vmem:[%s205 + $0x1460] sm:$0xff]
      %v1084 = vld [vmem:[%s205 + $0x1468] sm:$0xff]
      %v1085 = vld [vmem:[%s205 + $0x1470] sm:$0xff]
      %v1086 = vld [vmem:[%s205 + $0x1478] sm:$0xff]
      %v1087 = vld [vmem:[%s205 + $0x1480] sm:$0xff]
      %v1088 = vld [vmem:[%s205 + $0x1488] sm:$0xff]
      %v1089 = vld [vmem:[%s205 + $0x1490] sm:$0xff]
      %v1090 = vld [vmem:[%s205 + $0x1498] sm:$0xff]
      %v1091 = vld [vmem:[%s205 + $0x14a0] sm:$0xff]
      %v1092 = vld [vmem:[%s205 + $0x14a8] sm:$0xff]
      %v1093 = vld [vmem:[%s205 + $0x14b0] sm:$0xff]
      %v1094 = vld [vmem:[%s205 + $0x14b8] sm:$0xff]
      %v1095 = vld [vmem:[%s205 + $0x14c0] sm:$0xff]
      %v1096 = vld [vmem:[%s205 + $0x14c8] sm:$0xff]
      %v1097 = vld [vmem:[%s205 + $0x14d0] sm:$0xff]
      %v1098 = vld [vmem:[%s205 + $0x14d8] sm:$0xff]
      %v1099 = vld [vmem:[%s205 + $0x14e0] sm:$0xff]
      %v1100 = vld [vmem:[%s205 + $0x14e8] sm:$0xff]
      %v1101 = vld [vmem:[%s205 + $0x14f0] sm:$0xff]
      %v1102 = vld [vmem:[%s205 + $0x14f8] sm:$0xff]
      %v1103 = vld [vmem:[%s205 + $0x1500] sm:$0xff]
      %v1104 = vld [vmem:[%s205 + $0x1508] sm:$0xff]
      %v1105 = vld [vmem:[%s205 + $0x1510] sm:$0xff]
      %v1106 = vld [vmem:[%s205 + $0x1518] sm:$0xff]
      %v1107 = vld [vmem:[%s205 + $0x1520] sm:$0xff]
      %v1108 = vld [vmem:[%s205 + $0x1528] sm:$0xff]
      %v1109 = vld [vmem:[%s205 + $0x1530] sm:$0xff]
      %v1110 = vld [vmem:[%s205 + $0x1538] sm:$0xff]
      %v1111 = vld [vmem:[%s205 + $0x1540] sm:$0xff]
      %v1112 = vld [vmem:[%s205 + $0x1548] sm:$0xff]
      %v1113 = vld [vmem:[%s205 + $0x1550] sm:$0xff]
      %v1114 = vld [vmem:[%s205 + $0x1558] sm:$0xff]
      %v1115 = vld [vmem:[%s205 + $0x1560] sm:$0xff]
      %v1116 = vld [vmem:[%s205 + $0x1568] sm:$0xff]
      %v1117 = vld [vmem:[%s205 + $0x1570] sm:$0xff]
      %v1118 = vld [vmem:[%s205 + $0x1578] sm:$0xff]
      %v1119 = vld [vmem:[%s205 + $0x1580] sm:$0xff]
      %v1120 = vld [vmem:[%s205 + $0x1588] sm:$0xff]
      %v1121 = vld [vmem:[%s205 + $0x1590] sm:$0xff]
      %v1122 = vld [vmem:[%s205 + $0x1598] sm:$0xff]
      %v1123 = vld [vmem:[%s205 + $0x15a0] sm:$0xff]
      %v1124 = vld [vmem:[%s205 + $0x15a8] sm:$0xff]
      %v1125 = vld [vmem:[%s205 + $0x15b0] sm:$0xff]
      %v1126 = vld [vmem:[%s205 + $0x15b8] sm:$0xff]
      %v1127 = vld [vmem:[%s205 + $0x15c0] sm:$0xff]
      %v1128 = vld [vmem:[%s205 + $0x15c8] sm:$0xff]
      %v1129 = vld [vmem:[%s205 + $0x15d0] sm:$0xff]
      %v1130 = vld [vmem:[%s205 + $0x15d8] sm:$0xff]
      %v1131 = vld [vmem:[%s205 + $0x15e0] sm:$0xff]
      %v1132 = vld [vmem:[%s205 + $0x15e8] sm:$0xff]
      %v1133 = vld [vmem:[%s205 + $0x15f0] sm:$0xff]
      %v1134 = vld [vmem:[%s205 + $0x15f8] sm:$0xff]
      %v1135 = vld [vmem:[%s205 + $0x1600] sm:$0xff]
      %v1136 = vld [vmem:[%s205 + $0x1608] sm:$0xff]
      %v1137 = vld [vmem:[%s205 + $0x1610] sm:$0xff]
      %v1138 = vld [vmem:[%s205 + $0x1618] sm:$0xff]
      %v1139 = vld [vmem:[%s205 + $0x1620] sm:$0xff]
      %v1140 = vld [vmem:[%s205 + $0x1628] sm:$0xff]
      %v1141 = vld [vmem:[%s205 + $0x1630] sm:$0xff]
      %v1142 = vld [vmem:[%s205 + $0x1638] sm:$0xff]
      %v1143 = vld [vmem:[%s205 + $0x1640] sm:$0xff]
      %v1144 = vld [vmem:[%s205 + $0x1648] sm:$0xff]
      %v1145 = vld [vmem:[%s205 + $0x1650] sm:$0xff]
      %v1146 = vld [vmem:[%s205 + $0x1658] sm:$0xff]
      %v1147 = vld [vmem:[%s205 + $0x1660] sm:$0xff]
      %v1148 = vld [vmem:[%s205 + $0x1668] sm:$0xff]
      %v1149 = vld [vmem:[%s205 + $0x1670] sm:$0xff]
      %v1150 = vld [vmem:[%s205 + $0x1678] sm:$0xff]
      %v1151 = vld [vmem:[%s205 + $0x1680] sm:$0xff]
      %v1152 = vld [vmem:[%s205 + $0x1688] sm:$0xff]
      %v1153 = vld [vmem:[%s205 + $0x1690] sm:$0xff]
      %v1154 = vld [vmem:[%s205 + $0x1698] sm:$0xff]
      %v1155 = vld [vmem:[%s205 + $0x16a0] sm:$0xff]
      %v1156 = vld [vmem:[%s205 + $0x16a8] sm:$0xff]
      %v1157 = vld [vmem:[%s205 + $0x16b0] sm:$0xff]
      %v1158 = vld [vmem:[%s205 + $0x16b8] sm:$0xff]
      %v1159 = vld [vmem:[%s205 + $0x16c0] sm:$0xff]
      %v1160 = vld [vmem:[%s205 + $0x16c8] sm:$0xff]
      %v1161 = vld [vmem:[%s205 + $0x16d0] sm:$0xff]
      %v1162 = vld [vmem:[%s205 + $0x16d8] sm:$0xff]
      %v1163 = vld [vmem:[%s205 + $0x16e0] sm:$0xff]
      %v1164 = vld [vmem:[%s205 + $0x16e8] sm:$0xff]
      %v1165 = vld [vmem:[%s205 + $0x16f0] sm:$0xff]
      %v1166 = vld [vmem:[%s205 + $0x16f8] sm:$0xff]
      %v1167 = vld [vmem:[%s205 + $0x1700] sm:$0xff]
      %v1168 = vld [vmem:[%s205 + $0x1708] sm:$0xff]
      %v1169 = vld [vmem:[%s205 + $0x1710] sm:$0xff]
      %v1170 = vld [vmem:[%s205 + $0x1718] sm:$0xff]
      %v1171 = vld [vmem:[%s205 + $0x1720] sm:$0xff]
      %v1172 = vld [vmem:[%s205 + $0x1728] sm:$0xff]
      %v1173 = vld [vmem:[%s205 + $0x1730] sm:$0xff]
      %v1174 = vld [vmem:[%s205 + $0x1738] sm:$0xff]
      %v1175 = vld [vmem:[%s205 + $0x1740] sm:$0xff]
      %v1176 = vld [vmem:[%s205 + $0x1748] sm:$0xff]
      %v1177 = vld [vmem:[%s205 + $0x1750] sm:$0xff]
      %v1178 = vld [vmem:[%s205 + $0x1758] sm:$0xff]
      %v1179 = vld [vmem:[%s205 + $0x1760] sm:$0xff]
      %v1180 = vld [vmem:[%s205 + $0x1768] sm:$0xff]
      %v1181 = vld [vmem:[%s205 + $0x1770] sm:$0xff]
      %v1182 = vld [vmem:[%s205 + $0x1778] sm:$0xff]
      %v1183 = vld [vmem:[%s205 + $0x1780] sm:$0xff]
      %v1184 = vld [vmem:[%s205 + $0x1788] sm:$0xff]
      %v1185 = vld [vmem:[%s205 + $0x1790] sm:$0xff]
      %v1186 = vld [vmem:[%s205 + $0x1798] sm:$0xff]
      %v1187 = vld [vmem:[%s205 + $0x17a0] sm:$0xff]
      %v1188 = vld [vmem:[%s205 + $0x17a8] sm:$0xff]
      %v1189 = vld [vmem:[%s205 + $0x17b0] sm:$0xff]
      %v1190 = vld [vmem:[%s205 + $0x17b8] sm:$0xff]
      %v1191 = vld [vmem:[%s205 + $0x17c0] sm:$0xff]
      %v1192 = vld [vmem:[%s205 + $0x17c8] sm:$0xff]
      %v1193 = vld [vmem:[%s205 + $0x17d0] sm:$0xff]
      %v1194 = vld [vmem:[%s205 + $0x17d8] sm:$0xff]
      %v1195 = vld [vmem:[%s205 + $0x17e0] sm:$0xff]
      %v1196 = vld [vmem:[%s205 + $0x17e8] sm:$0xff]
      %v1197 = vld [vmem:[%s205 + $0x17f0] sm:$0xff]
      %v1198 = vld [vmem:[%s205 + $0x17f8] sm:$0xff]
      %v1199 = vld [vmem:[%s205 + $0x1800] sm:$0xff]
      %v1200 = vld [vmem:[%s205 + $0x1808] sm:$0xff]
      %v1201 = vld [vmem:[%s205 + $0x1810] sm:$0xff]
      %v1202 = vld [vmem:[%s205 + $0x1818] sm:$0xff]
      %v1203 = vld [vmem:[%s205 + $0x1820] sm:$0xff]
      %v1204 = vld [vmem:[%s205 + $0x1828] sm:$0xff]
      %v1205 = vld [vmem:[%s205 + $0x1830] sm:$0xff]
      %v1206 = vld [vmem:[%s205 + $0x1838] sm:$0xff]
      %v1207 = vld [vmem:[%s205 + $0x1840] sm:$0xff]
      %v1208 = vld [vmem:[%s205 + $0x1848] sm:$0xff]
      %v1209 = vld [vmem:[%s205 + $0x1850] sm:$0xff]
      %v1210 = vld [vmem:[%s205 + $0x1858] sm:$0xff]
      %v1211 = vld [vmem:[%s205 + $0x1860] sm:$0xff]
      %v1212 = vld [vmem:[%s205 + $0x1868] sm:$0xff]
      %v1213 = vld [vmem:[%s205 + $0x1870] sm:$0xff]
      %v1214 = vld [vmem:[%s205 + $0x1878] sm:$0xff]
      %v1215 = vld [vmem:[%s205 + $0x1880] sm:$0xff]
      %v1216 = vld [vmem:[%s205 + $0x1888] sm:$0xff]
      %v1217 = vld [vmem:[%s205 + $0x1890] sm:$0xff]
      %v1218 = vld [vmem:[%s205 + $0x1898] sm:$0xff]
      %v1219 = vld [vmem:[%s205 + $0x18a0] sm:$0xff]
      %v1220 = vld [vmem:[%s205 + $0x18a8] sm:$0xff]
      %v1221 = vld [vmem:[%s205 + $0x18b0] sm:$0xff]
      %v1222 = vld [vmem:[%s205 + $0x18b8] sm:$0xff]
      %v1223 = vld [vmem:[%s205 + $0x18c0] sm:$0xff]
      %v1224 = vld [vmem:[%s205 + $0x18c8] sm:$0xff]
      %v1225 = vld [vmem:[%s205 + $0x18d0] sm:$0xff]
      %v1226 = vld [vmem:[%s205 + $0x18d8] sm:$0xff]
      %v1227 = vld [vmem:[%s205 + $0x18e0] sm:$0xff]
      %v1228 = vld [vmem:[%s205 + $0x18e8] sm:$0xff]
      %v1229 = vld [vmem:[%s205 + $0x18f0] sm:$0xff]
      %v1230 = vld [vmem:[%s205 + $0x18f8] sm:$0xff]
      %v1231 = vld [vmem:[%s205 + $0x1900] sm:$0xff]
      %v1232 = vld [vmem:[%s205 + $0x1908] sm:$0xff]
      %v1233 = vld [vmem:[%s205 + $0x1910] sm:$0xff]
      %v1234 = vld [vmem:[%s205 + $0x1918] sm:$0xff]
      %v1235 = vld [vmem:[%s205 + $0x1920] sm:$0xff]
      %v1236 = vld [vmem:[%s205 + $0x1928] sm:$0xff]
      %v1237 = vld [vmem:[%s205 + $0x1930] sm:$0xff]
      %v1238 = vld [vmem:[%s205 + $0x1938] sm:$0xff]
      %v1239 = vld [vmem:[%s205 + $0x1940] sm:$0xff]
      %v1240 = vld [vmem:[%s205 + $0x1948] sm:$0xff]
      %v1241 = vld [vmem:[%s205 + $0x1950] sm:$0xff]
      %v1242 = vld [vmem:[%s205 + $0x1958] sm:$0xff]
      %v1243 = vld [vmem:[%s205 + $0x1960] sm:$0xff]
      %v1244 = vld [vmem:[%s205 + $0x1968] sm:$0xff]
      %v1245 = vld [vmem:[%s205 + $0x1970] sm:$0xff]
      %v1246 = vld [vmem:[%s205 + $0x1978] sm:$0xff]
      %v1247 = vld [vmem:[%s205 + $0x1980] sm:$0xff]
      %v1248 = vld [vmem:[%s205 + $0x1988] sm:$0xff]
      %v1249 = vld [vmem:[%s205 + $0x1990] sm:$0xff]
      %v1250 = vld [vmem:[%s205 + $0x1998] sm:$0xff]
      %v1251 = vld [vmem:[%s205 + $0x19a0] sm:$0xff]
      %v1252 = vld [vmem:[%s205 + $0x19a8] sm:$0xff]
      %v1253 = vld [vmem:[%s205 + $0x19b0] sm:$0xff]
      %v1254 = vld [vmem:[%s205 + $0x19b8] sm:$0xff]
      %v1255 = vld [vmem:[%s205 + $0x19c0] sm:$0xff]
      %v1256 = vld [vmem:[%s205 + $0x19c8] sm:$0xff]
      %v1257 = vld [vmem:[%s205 + $0x19d0] sm:$0xff]
      %v1258 = vld [vmem:[%s205 + $0x19d8] sm:$0xff]
      %v1259 = vld [vmem:[%s205 + $0x19e0] sm:$0xff]
      %v1260 = vld [vmem:[%s205 + $0x19e8] sm:$0xff]
      %v1261 = vld [vmem:[%s205 + $0x19f0] sm:$0xff]
      %v1262 = vld [vmem:[%s205 + $0x19f8] sm:$0xff]
      %v1263 = vld [vmem:[%s205 + $0x1a00] sm:$0xff]
      %v1264 = vld [vmem:[%s205 + $0x1a08] sm:$0xff]
      %v1265 = vld [vmem:[%s205 + $0x1a10] sm:$0xff]
      %v1266 = vld [vmem:[%s205 + $0x1a18] sm:$0xff]
      %v1267 = vld [vmem:[%s205 + $0x1a20] sm:$0xff]
      %v1268 = vld [vmem:[%s205 + $0x1a28] sm:$0xff]
      %v1269 = vld [vmem:[%s205 + $0x1a30] sm:$0xff]
      %v1270 = vld [vmem:[%s205 + $0x1a38] sm:$0xff]
      %v1271 = vld [vmem:[%s205 + $0x1a40] sm:$0xff]
      %v1272 = vld [vmem:[%s205 + $0x1a48] sm:$0xff]
      %v1273 = vld [vmem:[%s205 + $0x1a50] sm:$0xff]
      %v1274 = vld [vmem:[%s205 + $0x1a58] sm:$0xff]
      %v1275 = vld [vmem:[%s205 + $0x1a60] sm:$0xff]
      %v1276 = vld [vmem:[%s205 + $0x1a68] sm:$0xff]
      %v1277 = vld [vmem:[%s205 + $0x1a70] sm:$0xff]
      %v1278 = vld [vmem:[%s205 + $0x1a78] sm:$0xff]
      %v1279 = vld [vmem:[%s205 + $0x1a80] sm:$0xff]
      %v1280 = vld [vmem:[%s205 + $0x1a88] sm:$0xff]
      %v1281 = vld [vmem:[%s205 + $0x1a90] sm:$0xff]
      %v1282 = vld [vmem:[%s205 + $0x1a98] sm:$0xff]
      %v1283 = vld [vmem:[%s205 + $0x1aa0] sm:$0xff]
      %v1284 = vld [vmem:[%s205 + $0x1aa8] sm:$0xff]
      %v1285 = vld [vmem:[%s205 + $0x1ab0] sm:$0xff]
      %v1286 = vld [vmem:[%s205 + $0x1ab8] sm:$0xff]
      %v1287 = vld [vmem:[%s205 + $0x1ac0] sm:$0xff]
      %v1288 = vld [vmem:[%s205 + $0x1ac8] sm:$0xff]
      %v1289 = vld [vmem:[%s205 + $0x1ad0] sm:$0xff]
      %v1290 = vld [vmem:[%s205 + $0x1ad8] sm:$0xff]
      %v1291 = vld [vmem:[%s205 + $0x1ae0] sm:$0xff]
      %v1292 = vld [vmem:[%s205 + $0x1ae8] sm:$0xff]
      %v1293 = vld [vmem:[%s205 + $0x1af0] sm:$0xff]
      %v1294 = vld [vmem:[%s205 + $0x1af8] sm:$0xff]
      %v1295 = vld [vmem:[%s205 + $0x1b00] sm:$0xff]
      %v1296 = vld [vmem:[%s205 + $0x1b08] sm:$0xff]
      %v1297 = vld [vmem:[%s205 + $0x1b10] sm:$0xff]
      %v1298 = vld [vmem:[%s205 + $0x1b18] sm:$0xff]
      %v1299 = vld [vmem:[%s205 + $0x1b20] sm:$0xff]
      %v1300 = vld [vmem:[%s205 + $0x1b28] sm:$0xff]
      %v1301 = vld [vmem:[%s205 + $0x1b30] sm:$0xff]
      %v1302 = vld [vmem:[%s205 + $0x1b38] sm:$0xff]
      %v1303 = vld [vmem:[%s205 + $0x1b40] sm:$0xff]
      %v1304 = vld [vmem:[%s205 + $0x1b48] sm:$0xff]
      %v1305 = vld [vmem:[%s205 + $0x1b50] sm:$0xff]
      %v1306 = vld [vmem:[%s205 + $0x1b58] sm:$0xff]
      %v1307 = vld [vmem:[%s205 + $0x1b60] sm:$0xff]
      %v1308 = vld [vmem:[%s205 + $0x1b68] sm:$0xff]
      %v1309 = vld [vmem:[%s205 + $0x1b70] sm:$0xff]
      %v1310 = vld [vmem:[%s205 + $0x1b78] sm:$0xff]
      %v1311 = vld [vmem:[%s205 + $0x1b80] sm:$0xff]
      %v1312 = vld [vmem:[%s205 + $0x1b88] sm:$0xff]
      %v1313 = vld [vmem:[%s205 + $0x1b90] sm:$0xff]
      %v1314 = vld [vmem:[%s205 + $0x1b98] sm:$0xff]
      %v1315 = vld [vmem:[%s205 + $0x1ba0] sm:$0xff]
      %v1316 = vld [vmem:[%s205 + $0x1ba8] sm:$0xff]
      %v1317 = vld [vmem:[%s205 + $0x1bb0] sm:$0xff]
      %v1318 = vld [vmem:[%s205 + $0x1bb8] sm:$0xff]
      %v1319 = vld [vmem:[%s205 + $0x1bc0] sm:$0xff]
      %v1320 = vld [vmem:[%s205 + $0x1bc8] sm:$0xff]
      %v1321 = vld [vmem:[%s205 + $0x1bd0] sm:$0xff]
      %v1322 = vld [vmem:[%s205 + $0x1bd8] sm:$0xff]
      %v1323 = vld [vmem:[%s205 + $0x1be0] sm:$0xff]
      %v1324 = vld [vmem:[%s205 + $0x1be8] sm:$0xff]
      %v1325 = vld [vmem:[%s205 + $0x1bf0] sm:$0xff]
      %v1326 = vld [vmem:[%s205 + $0x1bf8] sm:$0xff]
      %v1327 = vld [vmem:[%s205 + $0x1c00] sm:$0xff]
      %v1328 = vld [vmem:[%s205 + $0x1c08] sm:$0xff]
      %v1329 = vld [vmem:[%s205 + $0x1c10] sm:$0xff]
      %v1330 = vld [vmem:[%s205 + $0x1c18] sm:$0xff]
      %v1331 = vld [vmem:[%s205 + $0x1c20] sm:$0xff]
      %v1332 = vld [vmem:[%s205 + $0x1c28] sm:$0xff]
      %v1333 = vld [vmem:[%s205 + $0x1c30] sm:$0xff]
      %v1334 = vld [vmem:[%s205 + $0x1c38] sm:$0xff]
      %v1335 = vld [vmem:[%s205 + $0x1c40] sm:$0xff]
      %v1336 = vld [vmem:[%s205 + $0x1c48] sm:$0xff]
      %v1337 = vld [vmem:[%s205 + $0x1c50] sm:$0xff]
      %v1338 = vld [vmem:[%s205 + $0x1c58] sm:$0xff]
      %v1339 = vld [vmem:[%s205 + $0x1c60] sm:$0xff]
      %v1340 = vld [vmem:[%s205 + $0x1c68] sm:$0xff]
      %v1341 = vld [vmem:[%s205 + $0x1c70] sm:$0xff]
      %v1342 = vld [vmem:[%s205 + $0x1c78] sm:$0xff]
      %v1343 = vld [vmem:[%s205 + $0x1c80] sm:$0xff]
      %v1344 = vld [vmem:[%s205 + $0x1c88] sm:$0xff]
      %v1345 = vld [vmem:[%s205 + $0x1c90] sm:$0xff]
      %v1346 = vld [vmem:[%s205 + $0x1c98] sm:$0xff]
      %v1347 = vld [vmem:[%s205 + $0x1ca0] sm:$0xff]
      %v1348 = vld [vmem:[%s205 + $0x1ca8] sm:$0xff]
      %v1349 = vld [vmem:[%s205 + $0x1cb0] sm:$0xff]
      %v1350 = vld [vmem:[%s205 + $0x1cb8] sm:$0xff]
      %v1351 = vld [vmem:[%s205 + $0x1cc0] sm:$0xff]
      %v1352 = vld [vmem:[%s205 + $0x1cc8] sm:$0xff]
      %v1353 = vld [vmem:[%s205 + $0x1cd0] sm:$0xff]
      %v1354 = vld [vmem:[%s205 + $0x1cd8] sm:$0xff]
      %v1355 = vld [vmem:[%s205 + $0x1ce0] sm:$0xff]
      %v1356 = vld [vmem:[%s205 + $0x1ce8] sm:$0xff]
      %v1357 = vld [vmem:[%s205 + $0x1cf0] sm:$0xff]
      %v1358 = vld [vmem:[%s205 + $0x1cf8] sm:$0xff]
      %v1359 = vld [vmem:[%s205 + $0x1d00] sm:$0xff]
      %v1360 = vld [vmem:[%s205 + $0x1d08] sm:$0xff]
      %v1361 = vld [vmem:[%s205 + $0x1d10] sm:$0xff]
      %v1362 = vld [vmem:[%s205 + $0x1d18] sm:$0xff]
      %v1363 = vld [vmem:[%s205 + $0x1d20] sm:$0xff]
      %v1364 = vld [vmem:[%s205 + $0x1d28] sm:$0xff]
      %v1365 = vld [vmem:[%s205 + $0x1d30] sm:$0xff]
      %v1366 = vld [vmem:[%s205 + $0x1d38] sm:$0xff]
      %v1367 = vld [vmem:[%s205 + $0x1d40] sm:$0xff]
      %v1368 = vld [vmem:[%s205 + $0x1d48] sm:$0xff]
      %v1369 = vld [vmem:[%s205 + $0x1d50] sm:$0xff]
      %v1370 = vld [vmem:[%s205 + $0x1d58] sm:$0xff]
      %v1371 = vld [vmem:[%s205 + $0x1d60] sm:$0xff]
      %v1372 = vld [vmem:[%s205 + $0x1d68] sm:$0xff]
      %v1373 = vld [vmem:[%s205 + $0x1d70] sm:$0xff]
      %v1374 = vld [vmem:[%s205 + $0x1d78] sm:$0xff]
      %v1375 = vld [vmem:[%s205 + $0x1d80] sm:$0xff]
      %v1376 = vld [vmem:[%s205 + $0x1d88] sm:$0xff]
      %v1377 = vld [vmem:[%s205 + $0x1d90] sm:$0xff]
      %v1378 = vld [vmem:[%s205 + $0x1d98] sm:$0xff]
      %v1379 = vld [vmem:[%s205 + $0x1da0] sm:$0xff]
      %v1380 = vld [vmem:[%s205 + $0x1da8] sm:$0xff]
      %v1381 = vld [vmem:[%s205 + $0x1db0] sm:$0xff]
      %v1382 = vld [vmem:[%s205 + $0x1db8] sm:$0xff]
      %v1383 = vld [vmem:[%s205 + $0x1dc0] sm:$0xff]
      %v1384 = vld [vmem:[%s205 + $0x1dc8] sm:$0xff]
      %v1385 = vld [vmem:[%s205 + $0x1dd0] sm:$0xff]
      %v1386 = vld [vmem:[%s205 + $0x1dd8] sm:$0xff]
      %v1387 = vld [vmem:[%s205 + $0x1de0] sm:$0xff]
      %v1388 = vld [vmem:[%s205 + $0x1de8] sm:$0xff]
      %v1389 = vld [vmem:[%s205 + $0x1df0] sm:$0xff]
      %v1390 = vld [vmem:[%s205 + $0x1df8] sm:$0xff]
      %v1391 = vld [vmem:[%s205 + $0x1e00] sm:$0xff]
      %v1392 = vld [vmem:[%s205 + $0x1e08] sm:$0xff]
      %v1393 = vld [vmem:[%s205 + $0x1e10] sm:$0xff]
      %v1394 = vld [vmem:[%s205 + $0x1e18] sm:$0xff]
      %v1395 = vld [vmem:[%s205 + $0x1e20] sm:$0xff]
      %v1396 = vld [vmem:[%s205 + $0x1e28] sm:$0xff]
      %v1397 = vld [vmem:[%s205 + $0x1e30] sm:$0xff]
      %v1398 = vld [vmem:[%s205 + $0x1e38] sm:$0xff]
      %v1399 = vld [vmem:[%s205 + $0x1e40] sm:$0xff]
      %v1400 = vld [vmem:[%s205 + $0x1e48] sm:$0xff]
      %v1401 = vld [vmem:[%s205 + $0x1e50] sm:$0xff]
      %v1402 = vld [vmem:[%s205 + $0x1e58] sm:$0xff]
      %v1403 = vld [vmem:[%s205 + $0x1e60] sm:$0xff]
      %v1404 = vld [vmem:[%s205 + $0x1e68] sm:$0xff]
      %v1405 = vld [vmem:[%s205 + $0x1e70] sm:$0xff]
      %v1406 = vld [vmem:[%s205 + $0x1e78] sm:$0xff]
      %v1407 = vld [vmem:[%s205 + $0x1e80] sm:$0xff]
      %v1408 = vld [vmem:[%s205 + $0x1e88] sm:$0xff]
      %v1409 = vld [vmem:[%s205 + $0x1e90] sm:$0xff]
      %v1410 = vld [vmem:[%s205 + $0x1e98] sm:$0xff]
      %v1411 = vld [vmem:[%s205 + $0x1ea0] sm:$0xff]
      %v1412 = vld [vmem:[%s205 + $0x1ea8] sm:$0xff]
      %v1413 = vld [vmem:[%s205 + $0x1eb0] sm:$0xff]
      %v1414 = vld [vmem:[%s205 + $0x1eb8] sm:$0xff]
      %v1415 = vld [vmem:[%s205 + $0x1ec0] sm:$0xff]
      %v1416 = vld [vmem:[%s205 + $0x1ec8] sm:$0xff]
      %v1417 = vld [vmem:[%s205 + $0x1ed0] sm:$0xff]
      %v1418 = vld [vmem:[%s205 + $0x1ed8] sm:$0xff]
      %v1419 = vld [vmem:[%s205 + $0x1ee0] sm:$0xff]
      %v1420 = vld [vmem:[%s205 + $0x1ee8] sm:$0xff]
      %v1421 = vld [vmem:[%s205 + $0x1ef0] sm:$0xff]
      %v1422 = vld [vmem:[%s205 + $0x1ef8] sm:$0xff]
      %v1423 = vld [vmem:[%s205 + $0x1f00] sm:$0xff]
      %v1424 = vld [vmem:[%s205 + $0x1f08] sm:$0xff]
      %v1425 = vld [vmem:[%s205 + $0x1f10] sm:$0xff]
      %v1426 = vld [vmem:[%s205 + $0x1f18] sm:$0xff]
      %v1427 = vld [vmem:[%s205 + $0x1f20] sm:$0xff]
      %v1428 = vld [vmem:[%s205 + $0x1f28] sm:$0xff]
      %v1429 = vld [vmem:[%s205 + $0x1f30] sm:$0xff]
      %v1430 = vld [vmem:[%s205 + $0x1f38] sm:$0xff]
      %v1431 = vld [vmem:[%s205 + $0x1f40] sm:$0xff]
      %v1432 = vld [vmem:[%s205 + $0x1f48] sm:$0xff]
      %v1433 = vld [vmem:[%s205 + $0x1f50] sm:$0xff]
      %v1434 = vld [vmem:[%s205 + $0x1f58] sm:$0xff]
      %v1435 = vld [vmem:[%s205 + $0x1f60] sm:$0xff]
      %v1436 = vld [vmem:[%s205 + $0x1f68] sm:$0xff]
      %v1437 = vld [vmem:[%s205 + $0x1f70] sm:$0xff]
      %v1438 = vld [vmem:[%s205 + $0x1f78] sm:$0xff]
      %v1439 = vld [vmem:[%s205 + $0x1f80] sm:$0xff]
      %v1440 = vld [vmem:[%s205 + $0x1f88] sm:$0xff]
      %v1441 = vld [vmem:[%s205 + $0x1f90] sm:$0xff]
      %v1442 = vld [vmem:[%s205 + $0x1f98] sm:$0xff]
      %v1443 = vld [vmem:[%s205 + $0x1fa0] sm:$0xff]
      %v1444 = vld [vmem:[%s205 + $0x1fa8] sm:$0xff]
      %v1445 = vld [vmem:[%s205 + $0x1fb0] sm:$0xff]
      %v1446 = vld [vmem:[%s205 + $0x1fb8] sm:$0xff]
      %v1447 = vld [vmem:[%s205 + $0x1fc0] sm:$0xff]
      %v1448 = vld [vmem:[%s205 + $0x1fc8] sm:$0xff]
      %v1449 = vld [vmem:[%s205 + $0x1fd0] sm:$0xff]
      %v1450 = vld [vmem:[%s205 + $0x1fd8] sm:$0xff]
      %v1451 = vld [vmem:[%s205 + $0x1fe0] sm:$0xff]
      %v1452 = vld [vmem:[%s205 + $0x1fe8] sm:$0xff]
      %v1453 = vld [vmem:[%s205 + $0x1ff0] sm:$0xff]
      %v1454 = vld [vmem:[%s205 + $0x1ff8] sm:$0xff]
      %v1455 = vld [vmem:[%s209] sm:$0xf]
      %v1457 = vlaneseq
      %v1458 = vshrl.u32 %v1457, 7
      %v1459 = vsub.s32 0, %v1458
      %v1460 = vrot.slane %v1455, %v1459
      %v1461 = vlaneseq
      %v1462 = vshrl.u32 %v1461, 7
      %v1463 = vsub.s32 1, %v1462
      %v1464 = vrot.slane %v1455, %v1463
      %v1465 = vlaneseq
      %v1466 = vshrl.u32 %v1465, 7
      %v1467 = vsub.s32 2, %v1466
      %v1468 = vrot.slane %v1455, %v1467
      %v1469 = vlaneseq
      %v1470 = vshrl.u32 %v1469, 7
      %v1471 = vsub.s32 3, %v1470
      %v1472 = vrot.slane %v1455, %v1471
      %v2501 = vunpack.c.l.b16 %v431
      %v2502 = vunpack.c.h.b16 %v431
      %v2503 = vunpack.c.l.b16 %v432
      %v2504 = vunpack.c.h.b16 %v432
      %v2505 = vunpack.c.l.b16 %v433
      %v2506 = vunpack.c.h.b16 %v433
      %v2507 = vunpack.c.l.b16 %v434
      %v2508 = vunpack.c.h.b16 %v434
      %v2509 = vunpack.c.l.b16 %v435
      %v2510 = vunpack.c.h.b16 %v435
      %v2511 = vunpack.c.l.b16 %v436
      %v2512 = vunpack.c.h.b16 %v436
      %v2513 = vunpack.c.l.b16 %v437
      %v2514 = vunpack.c.h.b16 %v437
      %v2515 = vunpack.c.l.b16 %v438
      %v2516 = vunpack.c.h.b16 %v438
      %v2517 = vunpack.c.l.b16 %v439
      %v2518 = vunpack.c.h.b16 %v439
      %v2519 = vunpack.c.l.b16 %v440
      %v2520 = vunpack.c.h.b16 %v440
      %v2521 = vunpack.c.l.b16 %v441
      %v2522 = vunpack.c.h.b16 %v441
      %v2523 = vunpack.c.l.b16 %v442
      %v2524 = vunpack.c.h.b16 %v442
      %v2525 = vunpack.c.l.b16 %v443
      %v2526 = vunpack.c.h.b16 %v443
      %v2527 = vunpack.c.l.b16 %v444
      %v2528 = vunpack.c.h.b16 %v444
      %v2529 = vunpack.c.l.b16 %v445
      %v2530 = vunpack.c.h.b16 %v445
      %v2531 = vunpack.c.l.b16 %v446
      %v2532 = vunpack.c.h.b16 %v446
      %v2533 = vunpack.c.l.b16 %v447
      %v2534 = vunpack.c.h.b16 %v447
      %v2535 = vunpack.c.l.b16 %v448
      %v2536 = vunpack.c.h.b16 %v448
      %v2537 = vunpack.c.l.b16 %v449
      %v2538 = vunpack.c.h.b16 %v449
      %v2539 = vunpack.c.l.b16 %v450
      %v2540 = vunpack.c.h.b16 %v450
      %v2541 = vunpack.c.l.b16 %v451
      %v2542 = vunpack.c.h.b16 %v451
      %v2543 = vunpack.c.l.b16 %v452
      %v2544 = vunpack.c.h.b16 %v452
      %v2545 = vunpack.c.l.b16 %v453
      %v2546 = vunpack.c.h.b16 %v453
      %v2547 = vunpack.c.l.b16 %v454
      %v2548 = vunpack.c.h.b16 %v454
      %v2549 = vunpack.c.l.b16 %v455
      %v2550 = vunpack.c.h.b16 %v455
      %v2551 = vunpack.c.l.b16 %v456
      %v2552 = vunpack.c.h.b16 %v456
      %v2553 = vunpack.c.l.b16 %v457
      %v2554 = vunpack.c.h.b16 %v457
      %v2555 = vunpack.c.l.b16 %v458
      %v2556 = vunpack.c.h.b16 %v458
      %v2557 = vunpack.c.l.b16 %v459
      %v2558 = vunpack.c.h.b16 %v459
      %v2559 = vunpack.c.l.b16 %v460
      %v2560 = vunpack.c.h.b16 %v460
      %v2561 = vunpack.c.l.b16 %v461
      %v2562 = vunpack.c.h.b16 %v461
      %v2563 = vunpack.c.l.b16 %v462
      %v2564 = vunpack.c.h.b16 %v462
      %v2565 = vunpack.c.l.b16 %v463
      %v2566 = vunpack.c.h.b16 %v463
      %v2567 = vunpack.c.l.b16 %v464
      %v2568 = vunpack.c.h.b16 %v464
      %v2569 = vunpack.c.l.b16 %v465
      %v2570 = vunpack.c.h.b16 %v465
      %v2571 = vunpack.c.l.b16 %v466
      %v2572 = vunpack.c.h.b16 %v466
      %v2573 = vunpack.c.l.b16 %v467
      %v2574 = vunpack.c.h.b16 %v467
      %v2575 = vunpack.c.l.b16 %v468
      %v2576 = vunpack.c.h.b16 %v468
      %v2577 = vunpack.c.l.b16 %v469
      %v2578 = vunpack.c.h.b16 %v469
      %v2579 = vunpack.c.l.b16 %v470
      %v2580 = vunpack.c.h.b16 %v470
      %v2581 = vunpack.c.l.b16 %v471
      %v2582 = vunpack.c.h.b16 %v471
      %v2583 = vunpack.c.l.b16 %v472
      %v2584 = vunpack.c.h.b16 %v472
      %v2585 = vunpack.c.l.b16 %v473
      %v2586 = vunpack.c.h.b16 %v473
      %v2587 = vunpack.c.l.b16 %v474
      %v2588 = vunpack.c.h.b16 %v474
      %v2589 = vunpack.c.l.b16 %v475
      %v2590 = vunpack.c.h.b16 %v475
      %v2591 = vunpack.c.l.b16 %v476
      %v2592 = vunpack.c.h.b16 %v476
      %v2593 = vunpack.c.l.b16 %v477
      %v2594 = vunpack.c.h.b16 %v477
      %v2595 = vunpack.c.l.b16 %v478
      %v2596 = vunpack.c.h.b16 %v478
      %v2597 = vunpack.c.l.b16 %v479
      %v2598 = vunpack.c.h.b16 %v479
      %v2599 = vunpack.c.l.b16 %v480
      %v2600 = vunpack.c.h.b16 %v480
      %v2601 = vunpack.c.l.b16 %v481
      %v2602 = vunpack.c.h.b16 %v481
      %v2603 = vunpack.c.l.b16 %v482
      %v2604 = vunpack.c.h.b16 %v482
      %v2605 = vunpack.c.l.b16 %v483
      %v2606 = vunpack.c.h.b16 %v483
      %v2607 = vunpack.c.l.b16 %v484
      %v2608 = vunpack.c.h.b16 %v484
      %v2609 = vunpack.c.l.b16 %v485
      %v2610 = vunpack.c.h.b16 %v485
      %v2611 = vunpack.c.l.b16 %v486
      %v2612 = vunpack.c.h.b16 %v486
      %v2613 = vunpack.c.l.b16 %v487
      %v2614 = vunpack.c.h.b16 %v487
      %v2615 = vunpack.c.l.b16 %v488
      %v2616 = vunpack.c.h.b16 %v488
      %v2617 = vunpack.c.l.b16 %v489
      %v2618 = vunpack.c.h.b16 %v489
      %v2619 = vunpack.c.l.b16 %v490
      %v2620 = vunpack.c.h.b16 %v490
      %v2621 = vunpack.c.l.b16 %v491
      %v2622 = vunpack.c.h.b16 %v491
      %v2623 = vunpack.c.l.b16 %v492
      %v2624 = vunpack.c.h.b16 %v492
      %v2625 = vunpack.c.l.b16 %v493
      %v2626 = vunpack.c.h.b16 %v493
      %v2627 = vunpack.c.l.b16 %v494
      %v2628 = vunpack.c.h.b16 %v494
      %v2629 = vunpack.c.l.b16 %v495
      %v2630 = vunpack.c.h.b16 %v495
      %v2631 = vunpack.c.l.b16 %v496
      %v2632 = vunpack.c.h.b16 %v496
      %v2633 = vunpack.c.l.b16 %v497
      %v2634 = vunpack.c.h.b16 %v497
      %v2635 = vunpack.c.l.b16 %v498
      %v2636 = vunpack.c.h.b16 %v498
      %v2637 = vunpack.c.l.b16 %v499
      %v2638 = vunpack.c.h.b16 %v499
      %v2639 = vunpack.c.l.b16 %v500
      %v2640 = vunpack.c.h.b16 %v500
      %v2641 = vunpack.c.l.b16 %v501
      %v2642 = vunpack.c.h.b16 %v501
      %v2643 = vunpack.c.l.b16 %v502
      %v2644 = vunpack.c.h.b16 %v502
      %v2645 = vunpack.c.l.b16 %v503
      %v2646 = vunpack.c.h.b16 %v503
      %v2647 = vunpack.c.l.b16 %v504
      %v2648 = vunpack.c.h.b16 %v504
      %v2649 = vunpack.c.l.b16 %v505
      %v2650 = vunpack.c.h.b16 %v505
      %v2651 = vunpack.c.l.b16 %v506
      %v2652 = vunpack.c.h.b16 %v506
      %v2653 = vunpack.c.l.b16 %v507
      %v2654 = vunpack.c.h.b16 %v507
      %v2655 = vunpack.c.l.b16 %v508
      %v2656 = vunpack.c.h.b16 %v508
      %v2657 = vunpack.c.l.b16 %v509
      %v2658 = vunpack.c.h.b16 %v509
      %v2659 = vunpack.c.l.b16 %v510
      %v2660 = vunpack.c.h.b16 %v510
      %v2661 = vunpack.c.l.b16 %v511
      %v2662 = vunpack.c.h.b16 %v511
      %v2663 = vunpack.c.l.b16 %v512
      %v2664 = vunpack.c.h.b16 %v512
      %v2665 = vunpack.c.l.b16 %v513
      %v2666 = vunpack.c.h.b16 %v513
      %v2667 = vunpack.c.l.b16 %v514
      %v2668 = vunpack.c.h.b16 %v514
      %v2669 = vunpack.c.l.b16 %v515
      %v2670 = vunpack.c.h.b16 %v515
      %v2671 = vunpack.c.l.b16 %v516
      %v2672 = vunpack.c.h.b16 %v516
      %v2673 = vunpack.c.l.b16 %v517
      %v2674 = vunpack.c.h.b16 %v517
      %v2675 = vunpack.c.l.b16 %v518
      %v2676 = vunpack.c.h.b16 %v518
      %v2677 = vunpack.c.l.b16 %v519
      %v2678 = vunpack.c.h.b16 %v519
      %v2679 = vunpack.c.l.b16 %v520
      %v2680 = vunpack.c.h.b16 %v520
      %v2681 = vunpack.c.l.b16 %v521
      %v2682 = vunpack.c.h.b16 %v521
      %v2683 = vunpack.c.l.b16 %v522
      %v2684 = vunpack.c.h.b16 %v522
      %v2685 = vunpack.c.l.b16 %v523
      %v2686 = vunpack.c.h.b16 %v523
      %v2687 = vunpack.c.l.b16 %v524
      %v2688 = vunpack.c.h.b16 %v524
      %v2689 = vunpack.c.l.b16 %v525
      %v2690 = vunpack.c.h.b16 %v525
      %v2691 = vunpack.c.l.b16 %v526
      %v2692 = vunpack.c.h.b16 %v526
      %v2693 = vunpack.c.l.b16 %v527
      %v2694 = vunpack.c.h.b16 %v527
      %v2695 = vunpack.c.l.b16 %v528
      %v2696 = vunpack.c.h.b16 %v528
      %v2697 = vunpack.c.l.b16 %v529
      %v2698 = vunpack.c.h.b16 %v529
      %v2699 = vunpack.c.l.b16 %v530
      %v2700 = vunpack.c.h.b16 %v530
      %v2701 = vunpack.c.l.b16 %v531
      %v2702 = vunpack.c.h.b16 %v531
      %v2703 = vunpack.c.l.b16 %v532
      %v2704 = vunpack.c.h.b16 %v532
      %v2705 = vunpack.c.l.b16 %v533
      %v2706 = vunpack.c.h.b16 %v533
      %v2707 = vunpack.c.l.b16 %v534
      %v2708 = vunpack.c.h.b16 %v534
      %v2709 = vunpack.c.l.b16 %v535
      %v2710 = vunpack.c.h.b16 %v535
      %v2711 = vunpack.c.l.b16 %v536
      %v2712 = vunpack.c.h.b16 %v536
      %v2713 = vunpack.c.l.b16 %v537
      %v2714 = vunpack.c.h.b16 %v537
      %v2715 = vunpack.c.l.b16 %v538
      %v2716 = vunpack.c.h.b16 %v538
      %v2717 = vunpack.c.l.b16 %v539
      %v2718 = vunpack.c.h.b16 %v539
      %v2719 = vunpack.c.l.b16 %v540
      %v2720 = vunpack.c.h.b16 %v540
      %v2721 = vunpack.c.l.b16 %v541
      %v2722 = vunpack.c.h.b16 %v541
      %v2723 = vunpack.c.l.b16 %v542
      %v2724 = vunpack.c.h.b16 %v542
      %v2725 = vunpack.c.l.b16 %v543
      %v2726 = vunpack.c.h.b16 %v543
      %v2727 = vunpack.c.l.b16 %v544
      %v2728 = vunpack.c.h.b16 %v544
      %v2729 = vunpack.c.l.b16 %v545
      %v2730 = vunpack.c.h.b16 %v545
      %v2731 = vunpack.c.l.b16 %v546
      %v2732 = vunpack.c.h.b16 %v546
      %v2733 = vunpack.c.l.b16 %v547
      %v2734 = vunpack.c.h.b16 %v547
      %v2735 = vunpack.c.l.b16 %v548
      %v2736 = vunpack.c.h.b16 %v548
      %v2737 = vunpack.c.l.b16 %v549
      %v2738 = vunpack.c.h.b16 %v549
      %v2739 = vunpack.c.l.b16 %v550
      %v2740 = vunpack.c.h.b16 %v550
      %v2741 = vunpack.c.l.b16 %v551
      %v2742 = vunpack.c.h.b16 %v551
      %v2743 = vunpack.c.l.b16 %v552
      %v2744 = vunpack.c.h.b16 %v552
      %v2745 = vunpack.c.l.b16 %v553
      %v2746 = vunpack.c.h.b16 %v553
      %v2747 = vunpack.c.l.b16 %v554
      %v2748 = vunpack.c.h.b16 %v554
      %v2749 = vunpack.c.l.b16 %v555
      %v2750 = vunpack.c.h.b16 %v555
      %v2751 = vunpack.c.l.b16 %v556
      %v2752 = vunpack.c.h.b16 %v556
      %v2753 = vunpack.c.l.b16 %v557
      %v2754 = vunpack.c.h.b16 %v557
      %v2755 = vunpack.c.l.b16 %v558
      %v2756 = vunpack.c.h.b16 %v558
      %v2757 = vunpack.c.l.b16 %v559
      %v2758 = vunpack.c.h.b16 %v559
      %v2759 = vunpack.c.l.b16 %v560
      %v2760 = vunpack.c.h.b16 %v560
      %v2761 = vunpack.c.l.b16 %v561
      %v2762 = vunpack.c.h.b16 %v561
      %v2763 = vunpack.c.l.b16 %v562
      %v2764 = vunpack.c.h.b16 %v562
      %v2765 = vunpack.c.l.b16 %v563
      %v2766 = vunpack.c.h.b16 %v563
      %v2767 = vunpack.c.l.b16 %v564
      %v2768 = vunpack.c.h.b16 %v564
      %v2769 = vunpack.c.l.b16 %v565
      %v2770 = vunpack.c.h.b16 %v565
      %v2771 = vunpack.c.l.b16 %v566
      %v2772 = vunpack.c.h.b16 %v566
      %v2773 = vunpack.c.l.b16 %v567
      %v2774 = vunpack.c.h.b16 %v567
      %v2775 = vunpack.c.l.b16 %v568
      %v2776 = vunpack.c.h.b16 %v568
      %v2777 = vunpack.c.l.b16 %v569
      %v2778 = vunpack.c.h.b16 %v569
      %v2779 = vunpack.c.l.b16 %v570
      %v2780 = vunpack.c.h.b16 %v570
      %v2781 = vunpack.c.l.b16 %v571
      %v2782 = vunpack.c.h.b16 %v571
      %v2783 = vunpack.c.l.b16 %v572
      %v2784 = vunpack.c.h.b16 %v572
      %v2785 = vunpack.c.l.b16 %v573
      %v2786 = vunpack.c.h.b16 %v573
      %v2787 = vunpack.c.l.b16 %v574
      %v2788 = vunpack.c.h.b16 %v574
      %v2789 = vunpack.c.l.b16 %v575
      %v2790 = vunpack.c.h.b16 %v575
      %v2791 = vunpack.c.l.b16 %v576
      %v2792 = vunpack.c.h.b16 %v576
      %v2793 = vunpack.c.l.b16 %v577
      %v2794 = vunpack.c.h.b16 %v577
      %v2795 = vunpack.c.l.b16 %v578
      %v2796 = vunpack.c.h.b16 %v578
      %v2797 = vunpack.c.l.b16 %v579
      %v2798 = vunpack.c.h.b16 %v579
      %v2799 = vunpack.c.l.b16 %v580
      %v2800 = vunpack.c.h.b16 %v580
      %v2801 = vunpack.c.l.b16 %v581
      %v2802 = vunpack.c.h.b16 %v581
      %v2803 = vunpack.c.l.b16 %v582
      %v2804 = vunpack.c.h.b16 %v582
      %v2805 = vunpack.c.l.b16 %v583
      %v2806 = vunpack.c.h.b16 %v583
      %v2807 = vunpack.c.l.b16 %v584
      %v2808 = vunpack.c.h.b16 %v584
      %v2809 = vunpack.c.l.b16 %v585
      %v2810 = vunpack.c.h.b16 %v585
      %v2811 = vunpack.c.l.b16 %v586
      %v2812 = vunpack.c.h.b16 %v586
      %v2813 = vunpack.c.l.b16 %v587
      %v2814 = vunpack.c.h.b16 %v587
      %v2815 = vunpack.c.l.b16 %v588
      %v2816 = vunpack.c.h.b16 %v588
      %v2817 = vunpack.c.l.b16 %v589
      %v2818 = vunpack.c.h.b16 %v589
      %v2819 = vunpack.c.l.b16 %v590
      %v2820 = vunpack.c.h.b16 %v590
      %v2821 = vunpack.c.l.b16 %v591
      %v2822 = vunpack.c.h.b16 %v591
      %v2823 = vunpack.c.l.b16 %v592
      %v2824 = vunpack.c.h.b16 %v592
      %v2825 = vunpack.c.l.b16 %v593
      %v2826 = vunpack.c.h.b16 %v593
      %v2827 = vunpack.c.l.b16 %v594
      %v2828 = vunpack.c.h.b16 %v594
      %v2829 = vunpack.c.l.b16 %v595
      %v2830 = vunpack.c.h.b16 %v595
      %v2831 = vunpack.c.l.b16 %v596
      %v2832 = vunpack.c.h.b16 %v596
      %v2833 = vunpack.c.l.b16 %v597
      %v2834 = vunpack.c.h.b16 %v597
      %v2835 = vunpack.c.l.b16 %v598
      %v2836 = vunpack.c.h.b16 %v598
      %v2837 = vunpack.c.l.b16 %v599
      %v2838 = vunpack.c.h.b16 %v599
      %v2839 = vunpack.c.l.b16 %v600
      %v2840 = vunpack.c.h.b16 %v600
      %v2841 = vunpack.c.l.b16 %v601
      %v2842 = vunpack.c.h.b16 %v601
      %v2843 = vunpack.c.l.b16 %v602
      %v2844 = vunpack.c.h.b16 %v602
      %v2845 = vunpack.c.l.b16 %v603
      %v2846 = vunpack.c.h.b16 %v603
      %v2847 = vunpack.c.l.b16 %v604
      %v2848 = vunpack.c.h.b16 %v604
      %v2849 = vunpack.c.l.b16 %v605
      %v2850 = vunpack.c.h.b16 %v605
      %v2851 = vunpack.c.l.b16 %v606
      %v2852 = vunpack.c.h.b16 %v606
      %v2853 = vunpack.c.l.b16 %v607
      %v2854 = vunpack.c.h.b16 %v607
      %v2855 = vunpack.c.l.b16 %v608
      %v2856 = vunpack.c.h.b16 %v608
      %v2857 = vunpack.c.l.b16 %v609
      %v2858 = vunpack.c.h.b16 %v609
      %v2859 = vunpack.c.l.b16 %v610
      %v2860 = vunpack.c.h.b16 %v610
      %v2861 = vunpack.c.l.b16 %v611
      %v2862 = vunpack.c.h.b16 %v611
      %v2863 = vunpack.c.l.b16 %v612
      %v2864 = vunpack.c.h.b16 %v612
      %v2865 = vunpack.c.l.b16 %v613
      %v2866 = vunpack.c.h.b16 %v613
      %v2867 = vunpack.c.l.b16 %v614
      %v2868 = vunpack.c.h.b16 %v614
      %v2869 = vunpack.c.l.b16 %v615
      %v2870 = vunpack.c.h.b16 %v615
      %v2871 = vunpack.c.l.b16 %v616
      %v2872 = vunpack.c.h.b16 %v616
      %v2873 = vunpack.c.l.b16 %v617
      %v2874 = vunpack.c.h.b16 %v617
      %v2875 = vunpack.c.l.b16 %v618
      %v2876 = vunpack.c.h.b16 %v618
      %v2877 = vunpack.c.l.b16 %v619
      %v2878 = vunpack.c.h.b16 %v619
      %v2879 = vunpack.c.l.b16 %v620
      %v2880 = vunpack.c.h.b16 %v620
      %v2881 = vunpack.c.l.b16 %v621
      %v2882 = vunpack.c.h.b16 %v621
      %v2883 = vunpack.c.l.b16 %v622
      %v2884 = vunpack.c.h.b16 %v622
      %v2885 = vunpack.c.l.b16 %v623
      %v2886 = vunpack.c.h.b16 %v623
      %v2887 = vunpack.c.l.b16 %v624
      %v2888 = vunpack.c.h.b16 %v624
      %v2889 = vunpack.c.l.b16 %v625
      %v2890 = vunpack.c.h.b16 %v625
      %v2891 = vunpack.c.l.b16 %v626
      %v2892 = vunpack.c.h.b16 %v626
      %v2893 = vunpack.c.l.b16 %v627
      %v2894 = vunpack.c.h.b16 %v627
      %v2895 = vunpack.c.l.b16 %v628
      %v2896 = vunpack.c.h.b16 %v628
      %v2897 = vunpack.c.l.b16 %v629
      %v2898 = vunpack.c.h.b16 %v629
      %v2899 = vunpack.c.l.b16 %v630
      %v2900 = vunpack.c.h.b16 %v630
      %v2901 = vunpack.c.l.b16 %v631
      %v2902 = vunpack.c.h.b16 %v631
      %v2903 = vunpack.c.l.b16 %v632
      %v2904 = vunpack.c.h.b16 %v632
      %v2905 = vunpack.c.l.b16 %v633
      %v2906 = vunpack.c.h.b16 %v633
      %v2907 = vunpack.c.l.b16 %v634
      %v2908 = vunpack.c.h.b16 %v634
      %v2909 = vunpack.c.l.b16 %v635
      %v2910 = vunpack.c.h.b16 %v635
      %v2911 = vunpack.c.l.b16 %v636
      %v2912 = vunpack.c.h.b16 %v636
      %v2913 = vunpack.c.l.b16 %v637
      %v2914 = vunpack.c.h.b16 %v637
      %v2915 = vunpack.c.l.b16 %v638
      %v2916 = vunpack.c.h.b16 %v638
      %v2917 = vunpack.c.l.b16 %v639
      %v2918 = vunpack.c.h.b16 %v639
      %v2919 = vunpack.c.l.b16 %v640
      %v2920 = vunpack.c.h.b16 %v640
      %v2921 = vunpack.c.l.b16 %v641
      %v2922 = vunpack.c.h.b16 %v641
      %v2923 = vunpack.c.l.b16 %v642
      %v2924 = vunpack.c.h.b16 %v642
      %v2925 = vunpack.c.l.b16 %v643
      %v2926 = vunpack.c.h.b16 %v643
      %v2927 = vunpack.c.l.b16 %v644
      %v2928 = vunpack.c.h.b16 %v644
      %v2929 = vunpack.c.l.b16 %v645
      %v2930 = vunpack.c.h.b16 %v645
      %v2931 = vunpack.c.l.b16 %v646
      %v2932 = vunpack.c.h.b16 %v646
      %v2933 = vunpack.c.l.b16 %v647
      %v2934 = vunpack.c.h.b16 %v647
      %v2935 = vunpack.c.l.b16 %v648
      %v2936 = vunpack.c.h.b16 %v648
      %v2937 = vunpack.c.l.b16 %v649
      %v2938 = vunpack.c.h.b16 %v649
      %v2939 = vunpack.c.l.b16 %v650
      %v2940 = vunpack.c.h.b16 %v650
      %v2941 = vunpack.c.l.b16 %v651
      %v2942 = vunpack.c.h.b16 %v651
      %v2943 = vunpack.c.l.b16 %v652
      %v2944 = vunpack.c.h.b16 %v652
      %v2945 = vunpack.c.l.b16 %v653
      %v2946 = vunpack.c.h.b16 %v653
      %v2947 = vunpack.c.l.b16 %v654
      %v2948 = vunpack.c.h.b16 %v654
      %v2949 = vunpack.c.l.b16 %v655
      %v2950 = vunpack.c.h.b16 %v655
      %v2951 = vunpack.c.l.b16 %v656
      %v2952 = vunpack.c.h.b16 %v656
      %v2953 = vunpack.c.l.b16 %v657
      %v2954 = vunpack.c.h.b16 %v657
      %v2955 = vunpack.c.l.b16 %v658
      %v2956 = vunpack.c.h.b16 %v658
      %v2957 = vunpack.c.l.b16 %v659
      %v2958 = vunpack.c.h.b16 %v659
      %v2959 = vunpack.c.l.b16 %v660
      %v2960 = vunpack.c.h.b16 %v660
      %v2961 = vunpack.c.l.b16 %v661
      %v2962 = vunpack.c.h.b16 %v661
      %v2963 = vunpack.c.l.b16 %v662
      %v2964 = vunpack.c.h.b16 %v662
      %v2965 = vunpack.c.l.b16 %v663
      %v2966 = vunpack.c.h.b16 %v663
      %v2967 = vunpack.c.l.b16 %v664
      %v2968 = vunpack.c.h.b16 %v664
      %v2969 = vunpack.c.l.b16 %v665
      %v2970 = vunpack.c.h.b16 %v665
      %v2971 = vunpack.c.l.b16 %v666
      %v2972 = vunpack.c.h.b16 %v666
      %v2973 = vunpack.c.l.b16 %v667
      %v2974 = vunpack.c.h.b16 %v667
      %v2975 = vunpack.c.l.b16 %v668
      %v2976 = vunpack.c.h.b16 %v668
      %v2977 = vunpack.c.l.b16 %v669
      %v2978 = vunpack.c.h.b16 %v669
      %v2979 = vunpack.c.l.b16 %v670
      %v2980 = vunpack.c.h.b16 %v670
      %v2981 = vunpack.c.l.b16 %v671
      %v2982 = vunpack.c.h.b16 %v671
      %v2983 = vunpack.c.l.b16 %v672
      %v2984 = vunpack.c.h.b16 %v672
      %v2985 = vunpack.c.l.b16 %v673
      %v2986 = vunpack.c.h.b16 %v673
      %v2987 = vunpack.c.l.b16 %v674
      %v2988 = vunpack.c.h.b16 %v674
      %v2989 = vunpack.c.l.b16 %v675
      %v2990 = vunpack.c.h.b16 %v675
      %v2991 = vunpack.c.l.b16 %v676
      %v2992 = vunpack.c.h.b16 %v676
      %v2993 = vunpack.c.l.b16 %v677
      %v2994 = vunpack.c.h.b16 %v677
      %v2995 = vunpack.c.l.b16 %v678
      %v2996 = vunpack.c.h.b16 %v678
      %v2997 = vunpack.c.l.b16 %v679
      %v2998 = vunpack.c.h.b16 %v679
      %v2999 = vunpack.c.l.b16 %v680
      %v3000 = vunpack.c.h.b16 %v680
      %v3001 = vunpack.c.l.b16 %v681
      %v3002 = vunpack.c.h.b16 %v681
      %v3003 = vunpack.c.l.b16 %v682
      %v3004 = vunpack.c.h.b16 %v682
      %v3005 = vunpack.c.l.b16 %v683
      %v3006 = vunpack.c.h.b16 %v683
      %v3007 = vunpack.c.l.b16 %v684
      %v3008 = vunpack.c.h.b16 %v684
      %v3009 = vunpack.c.l.b16 %v685
      %v3010 = vunpack.c.h.b16 %v685
      %v3011 = vunpack.c.l.b16 %v686
      %v3012 = vunpack.c.h.b16 %v686
      %v3013 = vunpack.c.l.b16 %v687
      %v3014 = vunpack.c.h.b16 %v687
      %v3015 = vunpack.c.l.b16 %v688
      %v3016 = vunpack.c.h.b16 %v688
      %v3017 = vunpack.c.l.b16 %v689
      %v3018 = vunpack.c.h.b16 %v689
      %v3019 = vunpack.c.l.b16 %v690
      %v3020 = vunpack.c.h.b16 %v690
      %v3021 = vunpack.c.l.b16 %v691
      %v3022 = vunpack.c.h.b16 %v691
      %v3023 = vunpack.c.l.b16 %v692
      %v3024 = vunpack.c.h.b16 %v692
      %v3025 = vunpack.c.l.b16 %v693
      %v3026 = vunpack.c.h.b16 %v693
      %v3027 = vunpack.c.l.b16 %v694
      %v3028 = vunpack.c.h.b16 %v694
      %v3029 = vunpack.c.l.b16 %v695
      %v3030 = vunpack.c.h.b16 %v695
      %v3031 = vunpack.c.l.b16 %v696
      %v3032 = vunpack.c.h.b16 %v696
      %v3033 = vunpack.c.l.b16 %v697
      %v3034 = vunpack.c.h.b16 %v697
      %v3035 = vunpack.c.l.b16 %v698
      %v3036 = vunpack.c.h.b16 %v698
      %v3037 = vunpack.c.l.b16 %v699
      %v3038 = vunpack.c.h.b16 %v699
      %v3039 = vunpack.c.l.b16 %v700
      %v3040 = vunpack.c.h.b16 %v700
      %v3041 = vunpack.c.l.b16 %v701
      %v3042 = vunpack.c.h.b16 %v701
      %v3043 = vunpack.c.l.b16 %v702
      %v3044 = vunpack.c.h.b16 %v702
      %v3045 = vunpack.c.l.b16 %v703
      %v3046 = vunpack.c.h.b16 %v703
      %v3047 = vunpack.c.l.b16 %v704
      %v3048 = vunpack.c.h.b16 %v704
      %v3049 = vunpack.c.l.b16 %v705
      %v3050 = vunpack.c.h.b16 %v705
      %v3051 = vunpack.c.l.b16 %v706
      %v3052 = vunpack.c.h.b16 %v706
      %v3053 = vunpack.c.l.b16 %v707
      %v3054 = vunpack.c.h.b16 %v707
      %v3055 = vunpack.c.l.b16 %v708
      %v3056 = vunpack.c.h.b16 %v708
      %v3057 = vunpack.c.l.b16 %v709
      %v3058 = vunpack.c.h.b16 %v709
      %v3059 = vunpack.c.l.b16 %v710
      %v3060 = vunpack.c.h.b16 %v710
      %v3061 = vunpack.c.l.b16 %v711
      %v3062 = vunpack.c.h.b16 %v711
      %v3063 = vunpack.c.l.b16 %v712
      %v3064 = vunpack.c.h.b16 %v712
      %v3065 = vunpack.c.l.b16 %v713
      %v3066 = vunpack.c.h.b16 %v713
      %v3067 = vunpack.c.l.b16 %v714
      %v3068 = vunpack.c.h.b16 %v714
      %v3069 = vunpack.c.l.b16 %v715
      %v3070 = vunpack.c.h.b16 %v715
      %v3071 = vunpack.c.l.b16 %v716
      %v3072 = vunpack.c.h.b16 %v716
      %v3073 = vunpack.c.l.b16 %v717
      %v3074 = vunpack.c.h.b16 %v717
      %v3075 = vunpack.c.l.b16 %v718
      %v3076 = vunpack.c.h.b16 %v718
      %v3077 = vunpack.c.l.b16 %v719
      %v3078 = vunpack.c.h.b16 %v719
      %v3079 = vunpack.c.l.b16 %v720
      %v3080 = vunpack.c.h.b16 %v720
      %v3081 = vunpack.c.l.b16 %v721
      %v3082 = vunpack.c.h.b16 %v721
      %v3083 = vunpack.c.l.b16 %v722
      %v3084 = vunpack.c.h.b16 %v722
      %v3085 = vunpack.c.l.b16 %v723
      %v3086 = vunpack.c.h.b16 %v723
      %v3087 = vunpack.c.l.b16 %v724
      %v3088 = vunpack.c.h.b16 %v724
      %v3089 = vunpack.c.l.b16 %v725
      %v3090 = vunpack.c.h.b16 %v725
      %v3091 = vunpack.c.l.b16 %v726
      %v3092 = vunpack.c.h.b16 %v726
      %v3093 = vunpack.c.l.b16 %v727
      %v3094 = vunpack.c.h.b16 %v727
      %v3095 = vunpack.c.l.b16 %v728
      %v3096 = vunpack.c.h.b16 %v728
      %v3097 = vunpack.c.l.b16 %v729
      %v3098 = vunpack.c.h.b16 %v729
      %v3099 = vunpack.c.l.b16 %v730
      %v3100 = vunpack.c.h.b16 %v730
      %v3101 = vunpack.c.l.b16 %v731
      %v3102 = vunpack.c.h.b16 %v731
      %v3103 = vunpack.c.l.b16 %v732
      %v3104 = vunpack.c.h.b16 %v732
      %v3105 = vunpack.c.l.b16 %v733
      %v3106 = vunpack.c.h.b16 %v733
      %v3107 = vunpack.c.l.b16 %v734
      %v3108 = vunpack.c.h.b16 %v734
      %v3109 = vunpack.c.l.b16 %v735
      %v3110 = vunpack.c.h.b16 %v735
      %v3111 = vunpack.c.l.b16 %v736
      %v3112 = vunpack.c.h.b16 %v736
      %v3113 = vunpack.c.l.b16 %v737
      %v3114 = vunpack.c.h.b16 %v737
      %v3115 = vunpack.c.l.b16 %v738
      %v3116 = vunpack.c.h.b16 %v738
      %v3117 = vunpack.c.l.b16 %v739
      %v3118 = vunpack.c.h.b16 %v739
      %v3119 = vunpack.c.l.b16 %v740
      %v3120 = vunpack.c.h.b16 %v740
      %v3121 = vunpack.c.l.b16 %v741
      %v3122 = vunpack.c.h.b16 %v741
      %v3123 = vunpack.c.l.b16 %v742
      %v3124 = vunpack.c.h.b16 %v742
      %v3125 = vunpack.c.l.b16 %v743
      %v3126 = vunpack.c.h.b16 %v743
      %v3127 = vunpack.c.l.b16 %v744
      %v3128 = vunpack.c.h.b16 %v744
      %v3129 = vunpack.c.l.b16 %v745
      %v3130 = vunpack.c.h.b16 %v745
      %v3131 = vunpack.c.l.b16 %v746
      %v3132 = vunpack.c.h.b16 %v746
      %v3133 = vunpack.c.l.b16 %v747
      %v3134 = vunpack.c.h.b16 %v747
      %v3135 = vunpack.c.l.b16 %v748
      %v3136 = vunpack.c.h.b16 %v748
      %v3137 = vunpack.c.l.b16 %v749
      %v3138 = vunpack.c.h.b16 %v749
      %v3139 = vunpack.c.l.b16 %v750
      %v3140 = vunpack.c.h.b16 %v750
      %v3141 = vunpack.c.l.b16 %v751
      %v3142 = vunpack.c.h.b16 %v751
      %v3143 = vunpack.c.l.b16 %v752
      %v3144 = vunpack.c.h.b16 %v752
      %v3145 = vunpack.c.l.b16 %v753
      %v3146 = vunpack.c.h.b16 %v753
      %v3147 = vunpack.c.l.b16 %v754
      %v3148 = vunpack.c.h.b16 %v754
      %v3149 = vunpack.c.l.b16 %v755
      %v3150 = vunpack.c.h.b16 %v755
      %v3151 = vunpack.c.l.b16 %v756
      %v3152 = vunpack.c.h.b16 %v756
      %v3153 = vunpack.c.l.b16 %v757
      %v3154 = vunpack.c.h.b16 %v757
      %v3155 = vunpack.c.l.b16 %v758
      %v3156 = vunpack.c.h.b16 %v758
      %v3157 = vunpack.c.l.b16 %v759
      %v3158 = vunpack.c.h.b16 %v759
      %v3159 = vunpack.c.l.b16 %v760
      %v3160 = vunpack.c.h.b16 %v760
      %v3161 = vunpack.c.l.b16 %v761
      %v3162 = vunpack.c.h.b16 %v761
      %v3163 = vunpack.c.l.b16 %v762
      %v3164 = vunpack.c.h.b16 %v762
      %v3165 = vunpack.c.l.b16 %v763
      %v3166 = vunpack.c.h.b16 %v763
      %v3167 = vunpack.c.l.b16 %v764
      %v3168 = vunpack.c.h.b16 %v764
      %v3169 = vunpack.c.l.b16 %v765
      %v3170 = vunpack.c.h.b16 %v765
      %v3171 = vunpack.c.l.b16 %v766
      %v3172 = vunpack.c.h.b16 %v766
      %v3173 = vunpack.c.l.b16 %v767
      %v3174 = vunpack.c.h.b16 %v767
      %v3175 = vunpack.c.l.b16 %v768
      %v3176 = vunpack.c.h.b16 %v768
      %v3177 = vunpack.c.l.b16 %v769
      %v3178 = vunpack.c.h.b16 %v769
      %v3179 = vunpack.c.l.b16 %v770
      %v3180 = vunpack.c.h.b16 %v770
      %v3181 = vunpack.c.l.b16 %v771
      %v3182 = vunpack.c.h.b16 %v771
      %v3183 = vunpack.c.l.b16 %v772
      %v3184 = vunpack.c.h.b16 %v772
      %v3185 = vunpack.c.l.b16 %v773
      %v3186 = vunpack.c.h.b16 %v773
      %v3187 = vunpack.c.l.b16 %v774
      %v3188 = vunpack.c.h.b16 %v774
      %v3189 = vunpack.c.l.b16 %v775
      %v3190 = vunpack.c.h.b16 %v775
      %v3191 = vunpack.c.l.b16 %v776
      %v3192 = vunpack.c.h.b16 %v776
      %v3193 = vunpack.c.l.b16 %v777
      %v3194 = vunpack.c.h.b16 %v777
      %v3195 = vunpack.c.l.b16 %v778
      %v3196 = vunpack.c.h.b16 %v778
      %v3197 = vunpack.c.l.b16 %v779
      %v3198 = vunpack.c.h.b16 %v779
      %v3199 = vunpack.c.l.b16 %v780
      %v3200 = vunpack.c.h.b16 %v780
      %v3201 = vunpack.c.l.b16 %v781
      %v3202 = vunpack.c.h.b16 %v781
      %v3203 = vunpack.c.l.b16 %v782
      %v3204 = vunpack.c.h.b16 %v782
      %v3205 = vunpack.c.l.b16 %v783
      %v3206 = vunpack.c.h.b16 %v783
      %v3207 = vunpack.c.l.b16 %v784
      %v3208 = vunpack.c.h.b16 %v784
      %v3209 = vunpack.c.l.b16 %v785
      %v3210 = vunpack.c.h.b16 %v785
      %v3211 = vunpack.c.l.b16 %v786
      %v3212 = vunpack.c.h.b16 %v786
      %v3213 = vunpack.c.l.b16 %v787
      %v3214 = vunpack.c.h.b16 %v787
      %v3215 = vunpack.c.l.b16 %v788
      %v3216 = vunpack.c.h.b16 %v788
      %v3217 = vunpack.c.l.b16 %v789
      %v3218 = vunpack.c.h.b16 %v789
      %v3219 = vunpack.c.l.b16 %v790
      %v3220 = vunpack.c.h.b16 %v790
      %v3221 = vunpack.c.l.b16 %v791
      %v3222 = vunpack.c.h.b16 %v791
      %v3223 = vunpack.c.l.b16 %v792
      %v3224 = vunpack.c.h.b16 %v792
      %v3225 = vunpack.c.l.b16 %v793
      %v3226 = vunpack.c.h.b16 %v793
      %v3227 = vunpack.c.l.b16 %v794
      %v3228 = vunpack.c.h.b16 %v794
      %v3229 = vunpack.c.l.b16 %v795
      %v3230 = vunpack.c.h.b16 %v795
      %v3231 = vunpack.c.l.b16 %v796
      %v3232 = vunpack.c.h.b16 %v796
      %v3233 = vunpack.c.l.b16 %v797
      %v3234 = vunpack.c.h.b16 %v797
      %v3235 = vunpack.c.l.b16 %v798
      %v3236 = vunpack.c.h.b16 %v798
      %v3237 = vunpack.c.l.b16 %v799
      %v3238 = vunpack.c.h.b16 %v799
      %v3239 = vunpack.c.l.b16 %v800
      %v3240 = vunpack.c.h.b16 %v800
      %v3241 = vunpack.c.l.b16 %v801
      %v3242 = vunpack.c.h.b16 %v801
      %v3243 = vunpack.c.l.b16 %v802
      %v3244 = vunpack.c.h.b16 %v802
      %v3245 = vunpack.c.l.b16 %v803
      %v3246 = vunpack.c.h.b16 %v803
      %v3247 = vunpack.c.l.b16 %v804
      %v3248 = vunpack.c.h.b16 %v804
      %v3249 = vunpack.c.l.b16 %v805
      %v3250 = vunpack.c.h.b16 %v805
      %v3251 = vunpack.c.l.b16 %v806
      %v3252 = vunpack.c.h.b16 %v806
      %v3253 = vunpack.c.l.b16 %v807
      %v3254 = vunpack.c.h.b16 %v807
      %v3255 = vunpack.c.l.b16 %v808
      %v3256 = vunpack.c.h.b16 %v808
      %v3257 = vunpack.c.l.b16 %v809
      %v3258 = vunpack.c.h.b16 %v809
      %v3259 = vunpack.c.l.b16 %v810
      %v3260 = vunpack.c.h.b16 %v810
      %v3261 = vunpack.c.l.b16 %v811
      %v3262 = vunpack.c.h.b16 %v811
      %v3263 = vunpack.c.l.b16 %v812
      %v3264 = vunpack.c.h.b16 %v812
      %v3265 = vunpack.c.l.b16 %v813
      %v3266 = vunpack.c.h.b16 %v813
      %v3267 = vunpack.c.l.b16 %v814
      %v3268 = vunpack.c.h.b16 %v814
      %v3269 = vunpack.c.l.b16 %v815
      %v3270 = vunpack.c.h.b16 %v815
      %v3271 = vunpack.c.l.b16 %v816
      %v3272 = vunpack.c.h.b16 %v816
      %v3273 = vunpack.c.l.b16 %v817
      %v3274 = vunpack.c.h.b16 %v817
      %v3275 = vunpack.c.l.b16 %v818
      %v3276 = vunpack.c.h.b16 %v818
      %v3277 = vunpack.c.l.b16 %v819
      %v3278 = vunpack.c.h.b16 %v819
      %v3279 = vunpack.c.l.b16 %v820
      %v3280 = vunpack.c.h.b16 %v820
      %v3281 = vunpack.c.l.b16 %v821
      %v3282 = vunpack.c.h.b16 %v821
      %v3283 = vunpack.c.l.b16 %v822
      %v3284 = vunpack.c.h.b16 %v822
      %v3285 = vunpack.c.l.b16 %v823
      %v3286 = vunpack.c.h.b16 %v823
      %v3287 = vunpack.c.l.b16 %v824
      %v3288 = vunpack.c.h.b16 %v824
      %v3289 = vunpack.c.l.b16 %v825
      %v3290 = vunpack.c.h.b16 %v825
      %v3291 = vunpack.c.l.b16 %v826
      %v3292 = vunpack.c.h.b16 %v826
      %v3293 = vunpack.c.l.b16 %v827
      %v3294 = vunpack.c.h.b16 %v827
      %v3295 = vunpack.c.l.b16 %v828
      %v3296 = vunpack.c.h.b16 %v828
      %v3297 = vunpack.c.l.b16 %v829
      %v3298 = vunpack.c.h.b16 %v829
      %v3299 = vunpack.c.l.b16 %v830
      %v3300 = vunpack.c.h.b16 %v830
      %v3301 = vunpack.c.l.b16 %v831
      %v3302 = vunpack.c.h.b16 %v831
      %v3303 = vunpack.c.l.b16 %v832
      %v3304 = vunpack.c.h.b16 %v832
      %v3305 = vunpack.c.l.b16 %v833
      %v3306 = vunpack.c.h.b16 %v833
      %v3307 = vunpack.c.l.b16 %v834
      %v3308 = vunpack.c.h.b16 %v834
      %v3309 = vunpack.c.l.b16 %v835
      %v3310 = vunpack.c.h.b16 %v835
      %v3311 = vunpack.c.l.b16 %v836
      %v3312 = vunpack.c.h.b16 %v836
      %v3313 = vunpack.c.l.b16 %v837
      %v3314 = vunpack.c.h.b16 %v837
      %v3315 = vunpack.c.l.b16 %v838
      %v3316 = vunpack.c.h.b16 %v838
      %v3317 = vunpack.c.l.b16 %v839
      %v3318 = vunpack.c.h.b16 %v839
      %v3319 = vunpack.c.l.b16 %v840
      %v3320 = vunpack.c.h.b16 %v840
      %v3321 = vunpack.c.l.b16 %v841
      %v3322 = vunpack.c.h.b16 %v841
      %v3323 = vunpack.c.l.b16 %v842
      %v3324 = vunpack.c.h.b16 %v842
      %v3325 = vunpack.c.l.b16 %v843
      %v3326 = vunpack.c.h.b16 %v843
      %v3327 = vunpack.c.l.b16 %v844
      %v3328 = vunpack.c.h.b16 %v844
      %v3329 = vunpack.c.l.b16 %v845
      %v3330 = vunpack.c.h.b16 %v845
      %v3331 = vunpack.c.l.b16 %v846
      %v3332 = vunpack.c.h.b16 %v846
      %v3333 = vunpack.c.l.b16 %v847
      %v3334 = vunpack.c.h.b16 %v847
      %v3335 = vunpack.c.l.b16 %v848
      %v3336 = vunpack.c.h.b16 %v848
      %v3337 = vunpack.c.l.b16 %v849
      %v3338 = vunpack.c.h.b16 %v849
      %v3339 = vunpack.c.l.b16 %v850
      %v3340 = vunpack.c.h.b16 %v850
      %v3341 = vunpack.c.l.b16 %v851
      %v3342 = vunpack.c.h.b16 %v851
      %v3343 = vunpack.c.l.b16 %v852
      %v3344 = vunpack.c.h.b16 %v852
      %v3345 = vunpack.c.l.b16 %v853
      %v3346 = vunpack.c.h.b16 %v853
      %v3347 = vunpack.c.l.b16 %v854
      %v3348 = vunpack.c.h.b16 %v854
      %v3349 = vunpack.c.l.b16 %v855
      %v3350 = vunpack.c.h.b16 %v855
      %v3351 = vunpack.c.l.b16 %v856
      %v3352 = vunpack.c.h.b16 %v856
      %v3353 = vunpack.c.l.b16 %v857
      %v3354 = vunpack.c.h.b16 %v857
      %v3355 = vunpack.c.l.b16 %v858
      %v3356 = vunpack.c.h.b16 %v858
      %v3357 = vunpack.c.l.b16 %v859
      %v3358 = vunpack.c.h.b16 %v859
      %v3359 = vunpack.c.l.b16 %v860
      %v3360 = vunpack.c.h.b16 %v860
      %v3361 = vunpack.c.l.b16 %v861
      %v3362 = vunpack.c.h.b16 %v861
      %v3363 = vunpack.c.l.b16 %v862
      %v3364 = vunpack.c.h.b16 %v862
      %v3365 = vunpack.c.l.b16 %v863
      %v3366 = vunpack.c.h.b16 %v863
      %v3367 = vunpack.c.l.b16 %v864
      %v3368 = vunpack.c.h.b16 %v864
      %v3369 = vunpack.c.l.b16 %v865
      %v3370 = vunpack.c.h.b16 %v865
      %v3371 = vunpack.c.l.b16 %v866
      %v3372 = vunpack.c.h.b16 %v866
      %v3373 = vunpack.c.l.b16 %v867
      %v3374 = vunpack.c.h.b16 %v867
      %v3375 = vunpack.c.l.b16 %v868
      %v3376 = vunpack.c.h.b16 %v868
      %v3377 = vunpack.c.l.b16 %v869
      %v3378 = vunpack.c.h.b16 %v869
      %v3379 = vunpack.c.l.b16 %v870
      %v3380 = vunpack.c.h.b16 %v870
      %v3381 = vunpack.c.l.b16 %v871
      %v3382 = vunpack.c.h.b16 %v871
      %v3383 = vunpack.c.l.b16 %v872
      %v3384 = vunpack.c.h.b16 %v872
      %v3385 = vunpack.c.l.b16 %v873
      %v3386 = vunpack.c.h.b16 %v873
      %v3387 = vunpack.c.l.b16 %v874
      %v3388 = vunpack.c.h.b16 %v874
      %v3389 = vunpack.c.l.b16 %v875
      %v3390 = vunpack.c.h.b16 %v875
      %v3391 = vunpack.c.l.b16 %v876
      %v3392 = vunpack.c.h.b16 %v876
      %v3393 = vunpack.c.l.b16 %v877
      %v3394 = vunpack.c.h.b16 %v877
      %v3395 = vunpack.c.l.b16 %v878
      %v3396 = vunpack.c.h.b16 %v878
      %v3397 = vunpack.c.l.b16 %v879
      %v3398 = vunpack.c.h.b16 %v879
      %v3399 = vunpack.c.l.b16 %v880
      %v3400 = vunpack.c.h.b16 %v880
      %v3401 = vunpack.c.l.b16 %v881
      %v3402 = vunpack.c.h.b16 %v881
      %v3403 = vunpack.c.l.b16 %v882
      %v3404 = vunpack.c.h.b16 %v882
      %v3405 = vunpack.c.l.b16 %v883
      %v3406 = vunpack.c.h.b16 %v883
      %v3407 = vunpack.c.l.b16 %v884
      %v3408 = vunpack.c.h.b16 %v884
      %v3409 = vunpack.c.l.b16 %v885
      %v3410 = vunpack.c.h.b16 %v885
      %v3411 = vunpack.c.l.b16 %v886
      %v3412 = vunpack.c.h.b16 %v886
      %v3413 = vunpack.c.l.b16 %v887
      %v3414 = vunpack.c.h.b16 %v887
      %v3415 = vunpack.c.l.b16 %v888
      %v3416 = vunpack.c.h.b16 %v888
      %v3417 = vunpack.c.l.b16 %v889
      %v3418 = vunpack.c.h.b16 %v889
      %v3419 = vunpack.c.l.b16 %v890
      %v3420 = vunpack.c.h.b16 %v890
      %v3421 = vunpack.c.l.b16 %v891
      %v3422 = vunpack.c.h.b16 %v891
      %v3423 = vunpack.c.l.b16 %v892
      %v3424 = vunpack.c.h.b16 %v892
      %v3425 = vunpack.c.l.b16 %v893
      %v3426 = vunpack.c.h.b16 %v893
      %v3427 = vunpack.c.l.b16 %v894
      %v3428 = vunpack.c.h.b16 %v894
      %v3429 = vunpack.c.l.b16 %v895
      %v3430 = vunpack.c.h.b16 %v895
      %v3431 = vunpack.c.l.b16 %v896
      %v3432 = vunpack.c.h.b16 %v896
      %v3433 = vunpack.c.l.b16 %v897
      %v3434 = vunpack.c.h.b16 %v897
      %v3435 = vunpack.c.l.b16 %v898
      %v3436 = vunpack.c.h.b16 %v898
      %v3437 = vunpack.c.l.b16 %v899
      %v3438 = vunpack.c.h.b16 %v899
      %v3439 = vunpack.c.l.b16 %v900
      %v3440 = vunpack.c.h.b16 %v900
      %v3441 = vunpack.c.l.b16 %v901
      %v3442 = vunpack.c.h.b16 %v901
      %v3443 = vunpack.c.l.b16 %v902
      %v3444 = vunpack.c.h.b16 %v902
      %v3445 = vunpack.c.l.b16 %v903
      %v3446 = vunpack.c.h.b16 %v903
      %v3447 = vunpack.c.l.b16 %v904
      %v3448 = vunpack.c.h.b16 %v904
      %v3449 = vunpack.c.l.b16 %v905
      %v3450 = vunpack.c.h.b16 %v905
      %v3451 = vunpack.c.l.b16 %v906
      %v3452 = vunpack.c.h.b16 %v906
      %v3453 = vunpack.c.l.b16 %v907
      %v3454 = vunpack.c.h.b16 %v907
      %v3455 = vunpack.c.l.b16 %v908
      %v3456 = vunpack.c.h.b16 %v908
      %v3457 = vunpack.c.l.b16 %v909
      %v3458 = vunpack.c.h.b16 %v909
      %v3459 = vunpack.c.l.b16 %v910
      %v3460 = vunpack.c.h.b16 %v910
      %v3461 = vunpack.c.l.b16 %v911
      %v3462 = vunpack.c.h.b16 %v911
      %v3463 = vunpack.c.l.b16 %v912
      %v3464 = vunpack.c.h.b16 %v912
      %v3465 = vunpack.c.l.b16 %v913
      %v3466 = vunpack.c.h.b16 %v913
      %v3467 = vunpack.c.l.b16 %v914
      %v3468 = vunpack.c.h.b16 %v914
      %v3469 = vunpack.c.l.b16 %v915
      %v3470 = vunpack.c.h.b16 %v915
      %v3471 = vunpack.c.l.b16 %v916
      %v3472 = vunpack.c.h.b16 %v916
      %v3473 = vunpack.c.l.b16 %v917
      %v3474 = vunpack.c.h.b16 %v917
      %v3475 = vunpack.c.l.b16 %v918
      %v3476 = vunpack.c.h.b16 %v918
      %v3477 = vunpack.c.l.b16 %v919
      %v3478 = vunpack.c.h.b16 %v919
      %v3479 = vunpack.c.l.b16 %v920
      %v3480 = vunpack.c.h.b16 %v920
      %v3481 = vunpack.c.l.b16 %v921
      %v3482 = vunpack.c.h.b16 %v921
      %v3483 = vunpack.c.l.b16 %v922
      %v3484 = vunpack.c.h.b16 %v922
      %v3485 = vunpack.c.l.b16 %v923
      %v3486 = vunpack.c.h.b16 %v923
      %v3487 = vunpack.c.l.b16 %v924
      %v3488 = vunpack.c.h.b16 %v924
      %v3489 = vunpack.c.l.b16 %v925
      %v3490 = vunpack.c.h.b16 %v925
      %v3491 = vunpack.c.l.b16 %v926
      %v3492 = vunpack.c.h.b16 %v926
      %v3493 = vunpack.c.l.b16 %v927
      %v3494 = vunpack.c.h.b16 %v927
      %v3495 = vunpack.c.l.b16 %v928
      %v3496 = vunpack.c.h.b16 %v928
      %v3497 = vunpack.c.l.b16 %v929
      %v3498 = vunpack.c.h.b16 %v929
      %v3499 = vunpack.c.l.b16 %v930
      %v3500 = vunpack.c.h.b16 %v930
      %v3501 = vunpack.c.l.b16 %v931
      %v3502 = vunpack.c.h.b16 %v931
      %v3503 = vunpack.c.l.b16 %v932
      %v3504 = vunpack.c.h.b16 %v932
      %v3505 = vunpack.c.l.b16 %v933
      %v3506 = vunpack.c.h.b16 %v933
      %v3507 = vunpack.c.l.b16 %v934
      %v3508 = vunpack.c.h.b16 %v934
      %v3509 = vunpack.c.l.b16 %v935
      %v3510 = vunpack.c.h.b16 %v935
      %v3511 = vunpack.c.l.b16 %v936
      %v3512 = vunpack.c.h.b16 %v936
      %v3513 = vunpack.c.l.b16 %v937
      %v3514 = vunpack.c.h.b16 %v937
      %v3515 = vunpack.c.l.b16 %v938
      %v3516 = vunpack.c.h.b16 %v938
      %v3517 = vunpack.c.l.b16 %v939
      %v3518 = vunpack.c.h.b16 %v939
      %v3519 = vunpack.c.l.b16 %v940
      %v3520 = vunpack.c.h.b16 %v940
      %v3521 = vunpack.c.l.b16 %v941
      %v3522 = vunpack.c.h.b16 %v941
      %v3523 = vunpack.c.l.b16 %v942
      %v3524 = vunpack.c.h.b16 %v942
      %v3525 = vunpack.c.l.b16 %v943
      %v3526 = vunpack.c.h.b16 %v943
      %v3527 = vunpack.c.l.b16 %v944
      %v3528 = vunpack.c.h.b16 %v944
      %v3529 = vunpack.c.l.b16 %v945
      %v3530 = vunpack.c.h.b16 %v945
      %v3531 = vunpack.c.l.b16 %v946
      %v3532 = vunpack.c.h.b16 %v946
      %v3533 = vunpack.c.l.b16 %v947
      %v3534 = vunpack.c.h.b16 %v947
      %v3535 = vunpack.c.l.b16 %v948
      %v3536 = vunpack.c.h.b16 %v948
      %v3537 = vunpack.c.l.b16 %v949
      %v3538 = vunpack.c.h.b16 %v949
      %v3539 = vunpack.c.l.b16 %v950
      %v3540 = vunpack.c.h.b16 %v950
      %v3541 = vunpack.c.l.b16 %v951
      %v3542 = vunpack.c.h.b16 %v951
      %v3543 = vunpack.c.l.b16 %v952
      %v3544 = vunpack.c.h.b16 %v952
      %v3545 = vunpack.c.l.b16 %v953
      %v3546 = vunpack.c.h.b16 %v953
      %v3547 = vunpack.c.l.b16 %v954
      %v3548 = vunpack.c.h.b16 %v954
      %v3549 = vunpack.c.l.b16 %v955
      %v3550 = vunpack.c.h.b16 %v955
      %v3551 = vunpack.c.l.b16 %v956
      %v3552 = vunpack.c.h.b16 %v956
      %v3553 = vunpack.c.l.b16 %v957
      %v3554 = vunpack.c.h.b16 %v957
      %v3555 = vunpack.c.l.b16 %v958
      %v3556 = vunpack.c.h.b16 %v958
      %v3557 = vunpack.c.l.b16 %v959
      %v3558 = vunpack.c.h.b16 %v959
      %v3559 = vunpack.c.l.b16 %v960
      %v3560 = vunpack.c.h.b16 %v960
      %v3561 = vunpack.c.l.b16 %v961
      %v3562 = vunpack.c.h.b16 %v961
      %v3563 = vunpack.c.l.b16 %v962
      %v3564 = vunpack.c.h.b16 %v962
      %v3565 = vunpack.c.l.b16 %v963
      %v3566 = vunpack.c.h.b16 %v963
      %v3567 = vunpack.c.l.b16 %v964
      %v3568 = vunpack.c.h.b16 %v964
      %v3569 = vunpack.c.l.b16 %v965
      %v3570 = vunpack.c.h.b16 %v965
      %v3571 = vunpack.c.l.b16 %v966
      %v3572 = vunpack.c.h.b16 %v966
      %v3573 = vunpack.c.l.b16 %v967
      %v3574 = vunpack.c.h.b16 %v967
      %v3575 = vunpack.c.l.b16 %v968
      %v3576 = vunpack.c.h.b16 %v968
      %v3577 = vunpack.c.l.b16 %v969
      %v3578 = vunpack.c.h.b16 %v969
      %v3579 = vunpack.c.l.b16 %v970
      %v3580 = vunpack.c.h.b16 %v970
      %v3581 = vunpack.c.l.b16 %v971
      %v3582 = vunpack.c.h.b16 %v971
      %v3583 = vunpack.c.l.b16 %v972
      %v3584 = vunpack.c.h.b16 %v972
      %v3585 = vunpack.c.l.b16 %v973
      %v3586 = vunpack.c.h.b16 %v973
      %v3587 = vunpack.c.l.b16 %v974
      %v3588 = vunpack.c.h.b16 %v974
      %v3589 = vunpack.c.l.b16 %v975
      %v3590 = vunpack.c.h.b16 %v975
      %v3591 = vunpack.c.l.b16 %v976
      %v3592 = vunpack.c.h.b16 %v976
      %v3593 = vunpack.c.l.b16 %v977
      %v3594 = vunpack.c.h.b16 %v977
      %v3595 = vunpack.c.l.b16 %v978
      %v3596 = vunpack.c.h.b16 %v978
      %v3597 = vunpack.c.l.b16 %v979
      %v3598 = vunpack.c.h.b16 %v979
      %v3599 = vunpack.c.l.b16 %v980
      %v3600 = vunpack.c.h.b16 %v980
      %v3601 = vunpack.c.l.b16 %v981
      %v3602 = vunpack.c.h.b16 %v981
      %v3603 = vunpack.c.l.b16 %v982
      %v3604 = vunpack.c.h.b16 %v982
      %v3605 = vunpack.c.l.b16 %v983
      %v3606 = vunpack.c.h.b16 %v983
      %v3607 = vunpack.c.l.b16 %v984
      %v3608 = vunpack.c.h.b16 %v984
      %v3609 = vunpack.c.l.b16 %v985
      %v3610 = vunpack.c.h.b16 %v985
      %v3611 = vunpack.c.l.b16 %v986
      %v3612 = vunpack.c.h.b16 %v986
      %v3613 = vunpack.c.l.b16 %v987
      %v3614 = vunpack.c.h.b16 %v987
      %v3615 = vunpack.c.l.b16 %v988
      %v3616 = vunpack.c.h.b16 %v988
      %v3617 = vunpack.c.l.b16 %v989
      %v3618 = vunpack.c.h.b16 %v989
      %v3619 = vunpack.c.l.b16 %v990
      %v3620 = vunpack.c.h.b16 %v990
      %v3621 = vunpack.c.l.b16 %v991
      %v3622 = vunpack.c.h.b16 %v991
      %v3623 = vunpack.c.l.b16 %v992
      %v3624 = vunpack.c.h.b16 %v992
      %v3625 = vunpack.c.l.b16 %v993
      %v3626 = vunpack.c.h.b16 %v993
      %v3627 = vunpack.c.l.b16 %v994
      %v3628 = vunpack.c.h.b16 %v994
      %v3629 = vunpack.c.l.b16 %v995
      %v3630 = vunpack.c.h.b16 %v995
      %v3631 = vunpack.c.l.b16 %v996
      %v3632 = vunpack.c.h.b16 %v996
      %v3633 = vunpack.c.l.b16 %v997
      %v3634 = vunpack.c.h.b16 %v997
      %v3635 = vunpack.c.l.b16 %v998
      %v3636 = vunpack.c.h.b16 %v998
      %v3637 = vunpack.c.l.b16 %v999
      %v3638 = vunpack.c.h.b16 %v999
      %v3639 = vunpack.c.l.b16 %v1000
      %v3640 = vunpack.c.h.b16 %v1000
      %v3641 = vunpack.c.l.b16 %v1001
      %v3642 = vunpack.c.h.b16 %v1001
      %v3643 = vunpack.c.l.b16 %v1002
      %v3644 = vunpack.c.h.b16 %v1002
      %v3645 = vunpack.c.l.b16 %v1003
      %v3646 = vunpack.c.h.b16 %v1003
      %v3647 = vunpack.c.l.b16 %v1004
      %v3648 = vunpack.c.h.b16 %v1004
      %v3649 = vunpack.c.l.b16 %v1005
      %v3650 = vunpack.c.h.b16 %v1005
      %v3651 = vunpack.c.l.b16 %v1006
      %v3652 = vunpack.c.h.b16 %v1006
      %v3653 = vunpack.c.l.b16 %v1007
      %v3654 = vunpack.c.h.b16 %v1007
      %v3655 = vunpack.c.l.b16 %v1008
      %v3656 = vunpack.c.h.b16 %v1008
      %v3657 = vunpack.c.l.b16 %v1009
      %v3658 = vunpack.c.h.b16 %v1009
      %v3659 = vunpack.c.l.b16 %v1010
      %v3660 = vunpack.c.h.b16 %v1010
      %v3661 = vunpack.c.l.b16 %v1011
      %v3662 = vunpack.c.h.b16 %v1011
      %v3663 = vunpack.c.l.b16 %v1012
      %v3664 = vunpack.c.h.b16 %v1012
      %v3665 = vunpack.c.l.b16 %v1013
      %v3666 = vunpack.c.h.b16 %v1013
      %v3667 = vunpack.c.l.b16 %v1014
      %v3668 = vunpack.c.h.b16 %v1014
      %v3669 = vunpack.c.l.b16 %v1015
      %v3670 = vunpack.c.h.b16 %v1015
      %v3671 = vunpack.c.l.b16 %v1016
      %v3672 = vunpack.c.h.b16 %v1016
      %v3673 = vunpack.c.l.b16 %v1017
      %v3674 = vunpack.c.h.b16 %v1017
      %v3675 = vunpack.c.l.b16 %v1018
      %v3676 = vunpack.c.h.b16 %v1018
      %v3677 = vunpack.c.l.b16 %v1019
      %v3678 = vunpack.c.h.b16 %v1019
      %v3679 = vunpack.c.l.b16 %v1020
      %v3680 = vunpack.c.h.b16 %v1020
      %v3681 = vunpack.c.l.b16 %v1021
      %v3682 = vunpack.c.h.b16 %v1021
      %v3683 = vunpack.c.l.b16 %v1022
      %v3684 = vunpack.c.h.b16 %v1022
      %v3685 = vunpack.c.l.b16 %v1023
      %v3686 = vunpack.c.h.b16 %v1023
      %v3687 = vunpack.c.l.b16 %v1024
      %v3688 = vunpack.c.h.b16 %v1024
      %v3689 = vunpack.c.l.b16 %v1025
      %v3690 = vunpack.c.h.b16 %v1025
      %v3691 = vunpack.c.l.b16 %v1026
      %v3692 = vunpack.c.h.b16 %v1026
      %v3693 = vunpack.c.l.b16 %v1027
      %v3694 = vunpack.c.h.b16 %v1027
      %v3695 = vunpack.c.l.b16 %v1028
      %v3696 = vunpack.c.h.b16 %v1028
      %v3697 = vunpack.c.l.b16 %v1029
      %v3698 = vunpack.c.h.b16 %v1029
      %v3699 = vunpack.c.l.b16 %v1030
      %v3700 = vunpack.c.h.b16 %v1030
      %v3701 = vunpack.c.l.b16 %v1031
      %v3702 = vunpack.c.h.b16 %v1031
      %v3703 = vunpack.c.l.b16 %v1032
      %v3704 = vunpack.c.h.b16 %v1032
      %v3705 = vunpack.c.l.b16 %v1033
      %v3706 = vunpack.c.h.b16 %v1033
      %v3707 = vunpack.c.l.b16 %v1034
      %v3708 = vunpack.c.h.b16 %v1034
      %v3709 = vunpack.c.l.b16 %v1035
      %v3710 = vunpack.c.h.b16 %v1035
      %v3711 = vunpack.c.l.b16 %v1036
      %v3712 = vunpack.c.h.b16 %v1036
      %v3713 = vunpack.c.l.b16 %v1037
      %v3714 = vunpack.c.h.b16 %v1037
      %v3715 = vunpack.c.l.b16 %v1038
      %v3716 = vunpack.c.h.b16 %v1038
      %v3717 = vunpack.c.l.b16 %v1039
      %v3718 = vunpack.c.h.b16 %v1039
      %v3719 = vunpack.c.l.b16 %v1040
      %v3720 = vunpack.c.h.b16 %v1040
      %v3721 = vunpack.c.l.b16 %v1041
      %v3722 = vunpack.c.h.b16 %v1041
      %v3723 = vunpack.c.l.b16 %v1042
      %v3724 = vunpack.c.h.b16 %v1042
      %v3725 = vunpack.c.l.b16 %v1043
      %v3726 = vunpack.c.h.b16 %v1043
      %v3727 = vunpack.c.l.b16 %v1044
      %v3728 = vunpack.c.h.b16 %v1044
      %v3729 = vunpack.c.l.b16 %v1045
      %v3730 = vunpack.c.h.b16 %v1045
      %v3731 = vunpack.c.l.b16 %v1046
      %v3732 = vunpack.c.h.b16 %v1046
      %v3733 = vunpack.c.l.b16 %v1047
      %v3734 = vunpack.c.h.b16 %v1047
      %v3735 = vunpack.c.l.b16 %v1048
      %v3736 = vunpack.c.h.b16 %v1048
      %v3737 = vunpack.c.l.b16 %v1049
      %v3738 = vunpack.c.h.b16 %v1049
      %v3739 = vunpack.c.l.b16 %v1050
      %v3740 = vunpack.c.h.b16 %v1050
      %v3741 = vunpack.c.l.b16 %v1051
      %v3742 = vunpack.c.h.b16 %v1051
      %v3743 = vunpack.c.l.b16 %v1052
      %v3744 = vunpack.c.h.b16 %v1052
      %v3745 = vunpack.c.l.b16 %v1053
      %v3746 = vunpack.c.h.b16 %v1053
      %v3747 = vunpack.c.l.b16 %v1054
      %v3748 = vunpack.c.h.b16 %v1054
      %v3749 = vunpack.c.l.b16 %v1055
      %v3750 = vunpack.c.h.b16 %v1055
      %v3751 = vunpack.c.l.b16 %v1056
      %v3752 = vunpack.c.h.b16 %v1056
      %v3753 = vunpack.c.l.b16 %v1057
      %v3754 = vunpack.c.h.b16 %v1057
      %v3755 = vunpack.c.l.b16 %v1058
      %v3756 = vunpack.c.h.b16 %v1058
      %v3757 = vunpack.c.l.b16 %v1059
      %v3758 = vunpack.c.h.b16 %v1059
      %v3759 = vunpack.c.l.b16 %v1060
      %v3760 = vunpack.c.h.b16 %v1060
      %v3761 = vunpack.c.l.b16 %v1061
      %v3762 = vunpack.c.h.b16 %v1061
      %v3763 = vunpack.c.l.b16 %v1062
      %v3764 = vunpack.c.h.b16 %v1062
      %v3765 = vunpack.c.l.b16 %v1063
      %v3766 = vunpack.c.h.b16 %v1063
      %v3767 = vunpack.c.l.b16 %v1064
      %v3768 = vunpack.c.h.b16 %v1064
      %v3769 = vunpack.c.l.b16 %v1065
      %v3770 = vunpack.c.h.b16 %v1065
      %v3771 = vunpack.c.l.b16 %v1066
      %v3772 = vunpack.c.h.b16 %v1066
      %v3773 = vunpack.c.l.b16 %v1067
      %v3774 = vunpack.c.h.b16 %v1067
      %v3775 = vunpack.c.l.b16 %v1068
      %v3776 = vunpack.c.h.b16 %v1068
      %v3777 = vunpack.c.l.b16 %v1069
      %v3778 = vunpack.c.h.b16 %v1069
      %v3779 = vunpack.c.l.b16 %v1070
      %v3780 = vunpack.c.h.b16 %v1070
      %v3781 = vunpack.c.l.b16 %v1071
      %v3782 = vunpack.c.h.b16 %v1071
      %v3783 = vunpack.c.l.b16 %v1072
      %v3784 = vunpack.c.h.b16 %v1072
      %v3785 = vunpack.c.l.b16 %v1073
      %v3786 = vunpack.c.h.b16 %v1073
      %v3787 = vunpack.c.l.b16 %v1074
      %v3788 = vunpack.c.h.b16 %v1074
      %v3789 = vunpack.c.l.b16 %v1075
      %v3790 = vunpack.c.h.b16 %v1075
      %v3791 = vunpack.c.l.b16 %v1076
      %v3792 = vunpack.c.h.b16 %v1076
      %v3793 = vunpack.c.l.b16 %v1077
      %v3794 = vunpack.c.h.b16 %v1077
      %v3795 = vunpack.c.l.b16 %v1078
      %v3796 = vunpack.c.h.b16 %v1078
      %v3797 = vunpack.c.l.b16 %v1079
      %v3798 = vunpack.c.h.b16 %v1079
      %v3799 = vunpack.c.l.b16 %v1080
      %v3800 = vunpack.c.h.b16 %v1080
      %v3801 = vunpack.c.l.b16 %v1081
      %v3802 = vunpack.c.h.b16 %v1081
      %v3803 = vunpack.c.l.b16 %v1082
      %v3804 = vunpack.c.h.b16 %v1082
      %v3805 = vunpack.c.l.b16 %v1083
      %v3806 = vunpack.c.h.b16 %v1083
      %v3807 = vunpack.c.l.b16 %v1084
      %v3808 = vunpack.c.h.b16 %v1084
      %v3809 = vunpack.c.l.b16 %v1085
      %v3810 = vunpack.c.h.b16 %v1085
      %v3811 = vunpack.c.l.b16 %v1086
      %v3812 = vunpack.c.h.b16 %v1086
      %v3813 = vunpack.c.l.b16 %v1087
      %v3814 = vunpack.c.h.b16 %v1087
      %v3815 = vunpack.c.l.b16 %v1088
      %v3816 = vunpack.c.h.b16 %v1088
      %v3817 = vunpack.c.l.b16 %v1089
      %v3818 = vunpack.c.h.b16 %v1089
      %v3819 = vunpack.c.l.b16 %v1090
      %v3820 = vunpack.c.h.b16 %v1090
      %v3821 = vunpack.c.l.b16 %v1091
      %v3822 = vunpack.c.h.b16 %v1091
      %v3823 = vunpack.c.l.b16 %v1092
      %v3824 = vunpack.c.h.b16 %v1092
      %v3825 = vunpack.c.l.b16 %v1093
      %v3826 = vunpack.c.h.b16 %v1093
      %v3827 = vunpack.c.l.b16 %v1094
      %v3828 = vunpack.c.h.b16 %v1094
      %v3829 = vunpack.c.l.b16 %v1095
      %v3830 = vunpack.c.h.b16 %v1095
      %v3831 = vunpack.c.l.b16 %v1096
      %v3832 = vunpack.c.h.b16 %v1096
      %v3833 = vunpack.c.l.b16 %v1097
      %v3834 = vunpack.c.h.b16 %v1097
      %v3835 = vunpack.c.l.b16 %v1098
      %v3836 = vunpack.c.h.b16 %v1098
      %v3837 = vunpack.c.l.b16 %v1099
      %v3838 = vunpack.c.h.b16 %v1099
      %v3839 = vunpack.c.l.b16 %v1100
      %v3840 = vunpack.c.h.b16 %v1100
      %v3841 = vunpack.c.l.b16 %v1101
      %v3842 = vunpack.c.h.b16 %v1101
      %v3843 = vunpack.c.l.b16 %v1102
      %v3844 = vunpack.c.h.b16 %v1102
      %v3845 = vunpack.c.l.b16 %v1103
      %v3846 = vunpack.c.h.b16 %v1103
      %v3847 = vunpack.c.l.b16 %v1104
      %v3848 = vunpack.c.h.b16 %v1104
      %v3849 = vunpack.c.l.b16 %v1105
      %v3850 = vunpack.c.h.b16 %v1105
      %v3851 = vunpack.c.l.b16 %v1106
      %v3852 = vunpack.c.h.b16 %v1106
      %v3853 = vunpack.c.l.b16 %v1107
      %v3854 = vunpack.c.h.b16 %v1107
      %v3855 = vunpack.c.l.b16 %v1108
      %v3856 = vunpack.c.h.b16 %v1108
      %v3857 = vunpack.c.l.b16 %v1109
      %v3858 = vunpack.c.h.b16 %v1109
      %v3859 = vunpack.c.l.b16 %v1110
      %v3860 = vunpack.c.h.b16 %v1110
      %v3861 = vunpack.c.l.b16 %v1111
      %v3862 = vunpack.c.h.b16 %v1111
      %v3863 = vunpack.c.l.b16 %v1112
      %v3864 = vunpack.c.h.b16 %v1112
      %v3865 = vunpack.c.l.b16 %v1113
      %v3866 = vunpack.c.h.b16 %v1113
      %v3867 = vunpack.c.l.b16 %v1114
      %v3868 = vunpack.c.h.b16 %v1114
      %v3869 = vunpack.c.l.b16 %v1115
      %v3870 = vunpack.c.h.b16 %v1115
      %v3871 = vunpack.c.l.b16 %v1116
      %v3872 = vunpack.c.h.b16 %v1116
      %v3873 = vunpack.c.l.b16 %v1117
      %v3874 = vunpack.c.h.b16 %v1117
      %v3875 = vunpack.c.l.b16 %v1118
      %v3876 = vunpack.c.h.b16 %v1118
      %v3877 = vunpack.c.l.b16 %v1119
      %v3878 = vunpack.c.h.b16 %v1119
      %v3879 = vunpack.c.l.b16 %v1120
      %v3880 = vunpack.c.h.b16 %v1120
      %v3881 = vunpack.c.l.b16 %v1121
      %v3882 = vunpack.c.h.b16 %v1121
      %v3883 = vunpack.c.l.b16 %v1122
      %v3884 = vunpack.c.h.b16 %v1122
      %v3885 = vunpack.c.l.b16 %v1123
      %v3886 = vunpack.c.h.b16 %v1123
      %v3887 = vunpack.c.l.b16 %v1124
      %v3888 = vunpack.c.h.b16 %v1124
      %v3889 = vunpack.c.l.b16 %v1125
      %v3890 = vunpack.c.h.b16 %v1125
      %v3891 = vunpack.c.l.b16 %v1126
      %v3892 = vunpack.c.h.b16 %v1126
      %v3893 = vunpack.c.l.b16 %v1127
      %v3894 = vunpack.c.h.b16 %v1127
      %v3895 = vunpack.c.l.b16 %v1128
      %v3896 = vunpack.c.h.b16 %v1128
      %v3897 = vunpack.c.l.b16 %v1129
      %v3898 = vunpack.c.h.b16 %v1129
      %v3899 = vunpack.c.l.b16 %v1130
      %v3900 = vunpack.c.h.b16 %v1130
      %v3901 = vunpack.c.l.b16 %v1131
      %v3902 = vunpack.c.h.b16 %v1131
      %v3903 = vunpack.c.l.b16 %v1132
      %v3904 = vunpack.c.h.b16 %v1132
      %v3905 = vunpack.c.l.b16 %v1133
      %v3906 = vunpack.c.h.b16 %v1133
      %v3907 = vunpack.c.l.b16 %v1134
      %v3908 = vunpack.c.h.b16 %v1134
      %v3909 = vunpack.c.l.b16 %v1135
      %v3910 = vunpack.c.h.b16 %v1135
      %v3911 = vunpack.c.l.b16 %v1136
      %v3912 = vunpack.c.h.b16 %v1136
      %v3913 = vunpack.c.l.b16 %v1137
      %v3914 = vunpack.c.h.b16 %v1137
      %v3915 = vunpack.c.l.b16 %v1138
      %v3916 = vunpack.c.h.b16 %v1138
      %v3917 = vunpack.c.l.b16 %v1139
      %v3918 = vunpack.c.h.b16 %v1139
      %v3919 = vunpack.c.l.b16 %v1140
      %v3920 = vunpack.c.h.b16 %v1140
      %v3921 = vunpack.c.l.b16 %v1141
      %v3922 = vunpack.c.h.b16 %v1141
      %v3923 = vunpack.c.l.b16 %v1142
      %v3924 = vunpack.c.h.b16 %v1142
      %v3925 = vunpack.c.l.b16 %v1143
      %v3926 = vunpack.c.h.b16 %v1143
      %v3927 = vunpack.c.l.b16 %v1144
      %v3928 = vunpack.c.h.b16 %v1144
      %v3929 = vunpack.c.l.b16 %v1145
      %v3930 = vunpack.c.h.b16 %v1145
      %v3931 = vunpack.c.l.b16 %v1146
      %v3932 = vunpack.c.h.b16 %v1146
      %v3933 = vunpack.c.l.b16 %v1147
      %v3934 = vunpack.c.h.b16 %v1147
      %v3935 = vunpack.c.l.b16 %v1148
      %v3936 = vunpack.c.h.b16 %v1148
      %v3937 = vunpack.c.l.b16 %v1149
      %v3938 = vunpack.c.h.b16 %v1149
      %v3939 = vunpack.c.l.b16 %v1150
      %v3940 = vunpack.c.h.b16 %v1150
      %v3941 = vunpack.c.l.b16 %v1151
      %v3942 = vunpack.c.h.b16 %v1151
      %v3943 = vunpack.c.l.b16 %v1152
      %v3944 = vunpack.c.h.b16 %v1152
      %v3945 = vunpack.c.l.b16 %v1153
      %v3946 = vunpack.c.h.b16 %v1153
      %v3947 = vunpack.c.l.b16 %v1154
      %v3948 = vunpack.c.h.b16 %v1154
      %v3949 = vunpack.c.l.b16 %v1155
      %v3950 = vunpack.c.h.b16 %v1155
      %v3951 = vunpack.c.l.b16 %v1156
      %v3952 = vunpack.c.h.b16 %v1156
      %v3953 = vunpack.c.l.b16 %v1157
      %v3954 = vunpack.c.h.b16 %v1157
      %v3955 = vunpack.c.l.b16 %v1158
      %v3956 = vunpack.c.h.b16 %v1158
      %v3957 = vunpack.c.l.b16 %v1159
      %v3958 = vunpack.c.h.b16 %v1159
      %v3959 = vunpack.c.l.b16 %v1160
      %v3960 = vunpack.c.h.b16 %v1160
      %v3961 = vunpack.c.l.b16 %v1161
      %v3962 = vunpack.c.h.b16 %v1161
      %v3963 = vunpack.c.l.b16 %v1162
      %v3964 = vunpack.c.h.b16 %v1162
      %v3965 = vunpack.c.l.b16 %v1163
      %v3966 = vunpack.c.h.b16 %v1163
      %v3967 = vunpack.c.l.b16 %v1164
      %v3968 = vunpack.c.h.b16 %v1164
      %v3969 = vunpack.c.l.b16 %v1165
      %v3970 = vunpack.c.h.b16 %v1165
      %v3971 = vunpack.c.l.b16 %v1166
      %v3972 = vunpack.c.h.b16 %v1166
      %v3973 = vunpack.c.l.b16 %v1167
      %v3974 = vunpack.c.h.b16 %v1167
      %v3975 = vunpack.c.l.b16 %v1168
      %v3976 = vunpack.c.h.b16 %v1168
      %v3977 = vunpack.c.l.b16 %v1169
      %v3978 = vunpack.c.h.b16 %v1169
      %v3979 = vunpack.c.l.b16 %v1170
      %v3980 = vunpack.c.h.b16 %v1170
      %v3981 = vunpack.c.l.b16 %v1171
      %v3982 = vunpack.c.h.b16 %v1171
      %v3983 = vunpack.c.l.b16 %v1172
      %v3984 = vunpack.c.h.b16 %v1172
      %v3985 = vunpack.c.l.b16 %v1173
      %v3986 = vunpack.c.h.b16 %v1173
      %v3987 = vunpack.c.l.b16 %v1174
      %v3988 = vunpack.c.h.b16 %v1174
      %v3989 = vunpack.c.l.b16 %v1175
      %v3990 = vunpack.c.h.b16 %v1175
      %v3991 = vunpack.c.l.b16 %v1176
      %v3992 = vunpack.c.h.b16 %v1176
      %v3993 = vunpack.c.l.b16 %v1177
      %v3994 = vunpack.c.h.b16 %v1177
      %v3995 = vunpack.c.l.b16 %v1178
      %v3996 = vunpack.c.h.b16 %v1178
      %v3997 = vunpack.c.l.b16 %v1179
      %v3998 = vunpack.c.h.b16 %v1179
      %v3999 = vunpack.c.l.b16 %v1180
      %v4000 = vunpack.c.h.b16 %v1180
      %v4001 = vunpack.c.l.b16 %v1181
      %v4002 = vunpack.c.h.b16 %v1181
      %v4003 = vunpack.c.l.b16 %v1182
      %v4004 = vunpack.c.h.b16 %v1182
      %v4005 = vunpack.c.l.b16 %v1183
      %v4006 = vunpack.c.h.b16 %v1183
      %v4007 = vunpack.c.l.b16 %v1184
      %v4008 = vunpack.c.h.b16 %v1184
      %v4009 = vunpack.c.l.b16 %v1185
      %v4010 = vunpack.c.h.b16 %v1185
      %v4011 = vunpack.c.l.b16 %v1186
      %v4012 = vunpack.c.h.b16 %v1186
      %v4013 = vunpack.c.l.b16 %v1187
      %v4014 = vunpack.c.h.b16 %v1187
      %v4015 = vunpack.c.l.b16 %v1188
      %v4016 = vunpack.c.h.b16 %v1188
      %v4017 = vunpack.c.l.b16 %v1189
      %v4018 = vunpack.c.h.b16 %v1189
      %v4019 = vunpack.c.l.b16 %v1190
      %v4020 = vunpack.c.h.b16 %v1190
      %v4021 = vunpack.c.l.b16 %v1191
      %v4022 = vunpack.c.h.b16 %v1191
      %v4023 = vunpack.c.l.b16 %v1192
      %v4024 = vunpack.c.h.b16 %v1192
      %v4025 = vunpack.c.l.b16 %v1193
      %v4026 = vunpack.c.h.b16 %v1193
      %v4027 = vunpack.c.l.b16 %v1194
      %v4028 = vunpack.c.h.b16 %v1194
      %v4029 = vunpack.c.l.b16 %v1195
      %v4030 = vunpack.c.h.b16 %v1195
      %v4031 = vunpack.c.l.b16 %v1196
      %v4032 = vunpack.c.h.b16 %v1196
      %v4033 = vunpack.c.l.b16 %v1197
      %v4034 = vunpack.c.h.b16 %v1197
      %v4035 = vunpack.c.l.b16 %v1198
      %v4036 = vunpack.c.h.b16 %v1198
      %v4037 = vunpack.c.l.b16 %v1199
      %v4038 = vunpack.c.h.b16 %v1199
      %v4039 = vunpack.c.l.b16 %v1200
      %v4040 = vunpack.c.h.b16 %v1200
      %v4041 = vunpack.c.l.b16 %v1201
      %v4042 = vunpack.c.h.b16 %v1201
      %v4043 = vunpack.c.l.b16 %v1202
      %v4044 = vunpack.c.h.b16 %v1202
      %v4045 = vunpack.c.l.b16 %v1203
      %v4046 = vunpack.c.h.b16 %v1203
      %v4047 = vunpack.c.l.b16 %v1204
      %v4048 = vunpack.c.h.b16 %v1204
      %v4049 = vunpack.c.l.b16 %v1205
      %v4050 = vunpack.c.h.b16 %v1205
      %v4051 = vunpack.c.l.b16 %v1206
      %v4052 = vunpack.c.h.b16 %v1206
      %v4053 = vunpack.c.l.b16 %v1207
      %v4054 = vunpack.c.h.b16 %v1207
      %v4055 = vunpack.c.l.b16 %v1208
      %v4056 = vunpack.c.h.b16 %v1208
      %v4057 = vunpack.c.l.b16 %v1209
      %v4058 = vunpack.c.h.b16 %v1209
      %v4059 = vunpack.c.l.b16 %v1210
      %v4060 = vunpack.c.h.b16 %v1210
      %v4061 = vunpack.c.l.b16 %v1211
      %v4062 = vunpack.c.h.b16 %v1211
      %v4063 = vunpack.c.l.b16 %v1212
      %v4064 = vunpack.c.h.b16 %v1212
      %v4065 = vunpack.c.l.b16 %v1213
      %v4066 = vunpack.c.h.b16 %v1213
      %v4067 = vunpack.c.l.b16 %v1214
      %v4068 = vunpack.c.h.b16 %v1214
      %v4069 = vunpack.c.l.b16 %v1215
      %v4070 = vunpack.c.h.b16 %v1215
      %v4071 = vunpack.c.l.b16 %v1216
      %v4072 = vunpack.c.h.b16 %v1216
      %v4073 = vunpack.c.l.b16 %v1217
      %v4074 = vunpack.c.h.b16 %v1217
      %v4075 = vunpack.c.l.b16 %v1218
      %v4076 = vunpack.c.h.b16 %v1218
      %v4077 = vunpack.c.l.b16 %v1219
      %v4078 = vunpack.c.h.b16 %v1219
      %v4079 = vunpack.c.l.b16 %v1220
      %v4080 = vunpack.c.h.b16 %v1220
      %v4081 = vunpack.c.l.b16 %v1221
      %v4082 = vunpack.c.h.b16 %v1221
      %v4083 = vunpack.c.l.b16 %v1222
      %v4084 = vunpack.c.h.b16 %v1222
      %v4085 = vunpack.c.l.b16 %v1223
      %v4086 = vunpack.c.h.b16 %v1223
      %v4087 = vunpack.c.l.b16 %v1224
      %v4088 = vunpack.c.h.b16 %v1224
      %v4089 = vunpack.c.l.b16 %v1225
      %v4090 = vunpack.c.h.b16 %v1225
      %v4091 = vunpack.c.l.b16 %v1226
      %v4092 = vunpack.c.h.b16 %v1226
      %v4093 = vunpack.c.l.b16 %v1227
      %v4094 = vunpack.c.h.b16 %v1227
      %v4095 = vunpack.c.l.b16 %v1228
      %v4096 = vunpack.c.h.b16 %v1228
      %v4097 = vunpack.c.l.b16 %v1229
      %v4098 = vunpack.c.h.b16 %v1229
      %v4099 = vunpack.c.l.b16 %v1230
      %v4100 = vunpack.c.h.b16 %v1230
      %v4101 = vunpack.c.l.b16 %v1231
      %v4102 = vunpack.c.h.b16 %v1231
      %v4103 = vunpack.c.l.b16 %v1232
      %v4104 = vunpack.c.h.b16 %v1232
      %v4105 = vunpack.c.l.b16 %v1233
      %v4106 = vunpack.c.h.b16 %v1233
      %v4107 = vunpack.c.l.b16 %v1234
      %v4108 = vunpack.c.h.b16 %v1234
      %v4109 = vunpack.c.l.b16 %v1235
      %v4110 = vunpack.c.h.b16 %v1235
      %v4111 = vunpack.c.l.b16 %v1236
      %v4112 = vunpack.c.h.b16 %v1236
      %v4113 = vunpack.c.l.b16 %v1237
      %v4114 = vunpack.c.h.b16 %v1237
      %v4115 = vunpack.c.l.b16 %v1238
      %v4116 = vunpack.c.h.b16 %v1238
      %v4117 = vunpack.c.l.b16 %v1239
      %v4118 = vunpack.c.h.b16 %v1239
      %v4119 = vunpack.c.l.b16 %v1240
      %v4120 = vunpack.c.h.b16 %v1240
      %v4121 = vunpack.c.l.b16 %v1241
      %v4122 = vunpack.c.h.b16 %v1241
      %v4123 = vunpack.c.l.b16 %v1242
      %v4124 = vunpack.c.h.b16 %v1242
      %v4125 = vunpack.c.l.b16 %v1243
      %v4126 = vunpack.c.h.b16 %v1243
      %v4127 = vunpack.c.l.b16 %v1244
      %v4128 = vunpack.c.h.b16 %v1244
      %v4129 = vunpack.c.l.b16 %v1245
      %v4130 = vunpack.c.h.b16 %v1245
      %v4131 = vunpack.c.l.b16 %v1246
      %v4132 = vunpack.c.h.b16 %v1246
      %v4133 = vunpack.c.l.b16 %v1247
      %v4134 = vunpack.c.h.b16 %v1247
      %v4135 = vunpack.c.l.b16 %v1248
      %v4136 = vunpack.c.h.b16 %v1248
      %v4137 = vunpack.c.l.b16 %v1249
      %v4138 = vunpack.c.h.b16 %v1249
      %v4139 = vunpack.c.l.b16 %v1250
      %v4140 = vunpack.c.h.b16 %v1250
      %v4141 = vunpack.c.l.b16 %v1251
      %v4142 = vunpack.c.h.b16 %v1251
      %v4143 = vunpack.c.l.b16 %v1252
      %v4144 = vunpack.c.h.b16 %v1252
      %v4145 = vunpack.c.l.b16 %v1253
      %v4146 = vunpack.c.h.b16 %v1253
      %v4147 = vunpack.c.l.b16 %v1254
      %v4148 = vunpack.c.h.b16 %v1254
      %v4149 = vunpack.c.l.b16 %v1255
      %v4150 = vunpack.c.h.b16 %v1255
      %v4151 = vunpack.c.l.b16 %v1256
      %v4152 = vunpack.c.h.b16 %v1256
      %v4153 = vunpack.c.l.b16 %v1257
      %v4154 = vunpack.c.h.b16 %v1257
      %v4155 = vunpack.c.l.b16 %v1258
      %v4156 = vunpack.c.h.b16 %v1258
      %v4157 = vunpack.c.l.b16 %v1259
      %v4158 = vunpack.c.h.b16 %v1259
      %v4159 = vunpack.c.l.b16 %v1260
      %v4160 = vunpack.c.h.b16 %v1260
      %v4161 = vunpack.c.l.b16 %v1261
      %v4162 = vunpack.c.h.b16 %v1261
      %v4163 = vunpack.c.l.b16 %v1262
      %v4164 = vunpack.c.h.b16 %v1262
      %v4165 = vunpack.c.l.b16 %v1263
      %v4166 = vunpack.c.h.b16 %v1263
      %v4167 = vunpack.c.l.b16 %v1264
      %v4168 = vunpack.c.h.b16 %v1264
      %v4169 = vunpack.c.l.b16 %v1265
      %v4170 = vunpack.c.h.b16 %v1265
      %v4171 = vunpack.c.l.b16 %v1266
      %v4172 = vunpack.c.h.b16 %v1266
      %v4173 = vunpack.c.l.b16 %v1267
      %v4174 = vunpack.c.h.b16 %v1267
      %v4175 = vunpack.c.l.b16 %v1268
      %v4176 = vunpack.c.h.b16 %v1268
      %v4177 = vunpack.c.l.b16 %v1269
      %v4178 = vunpack.c.h.b16 %v1269
      %v4179 = vunpack.c.l.b16 %v1270
      %v4180 = vunpack.c.h.b16 %v1270
      %v4181 = vunpack.c.l.b16 %v1271
      %v4182 = vunpack.c.h.b16 %v1271
      %v4183 = vunpack.c.l.b16 %v1272
      %v4184 = vunpack.c.h.b16 %v1272
      %v4185 = vunpack.c.l.b16 %v1273
      %v4186 = vunpack.c.h.b16 %v1273
      %v4187 = vunpack.c.l.b16 %v1274
      %v4188 = vunpack.c.h.b16 %v1274
      %v4189 = vunpack.c.l.b16 %v1275
      %v4190 = vunpack.c.h.b16 %v1275
      %v4191 = vunpack.c.l.b16 %v1276
      %v4192 = vunpack.c.h.b16 %v1276
      %v4193 = vunpack.c.l.b16 %v1277
      %v4194 = vunpack.c.h.b16 %v1277
      %v4195 = vunpack.c.l.b16 %v1278
      %v4196 = vunpack.c.h.b16 %v1278
      %v4197 = vunpack.c.l.b16 %v1279
      %v4198 = vunpack.c.h.b16 %v1279
      %v4199 = vunpack.c.l.b16 %v1280
      %v4200 = vunpack.c.h.b16 %v1280
      %v4201 = vunpack.c.l.b16 %v1281
      %v4202 = vunpack.c.h.b16 %v1281
      %v4203 = vunpack.c.l.b16 %v1282
      %v4204 = vunpack.c.h.b16 %v1282
      %v4205 = vunpack.c.l.b16 %v1283
      %v4206 = vunpack.c.h.b16 %v1283
      %v4207 = vunpack.c.l.b16 %v1284
      %v4208 = vunpack.c.h.b16 %v1284
      %v4209 = vunpack.c.l.b16 %v1285
      %v4210 = vunpack.c.h.b16 %v1285
      %v4211 = vunpack.c.l.b16 %v1286
      %v4212 = vunpack.c.h.b16 %v1286
      %v4213 = vunpack.c.l.b16 %v1287
      %v4214 = vunpack.c.h.b16 %v1287
      %v4215 = vunpack.c.l.b16 %v1288
      %v4216 = vunpack.c.h.b16 %v1288
      %v4217 = vunpack.c.l.b16 %v1289
      %v4218 = vunpack.c.h.b16 %v1289
      %v4219 = vunpack.c.l.b16 %v1290
      %v4220 = vunpack.c.h.b16 %v1290
      %v4221 = vunpack.c.l.b16 %v1291
      %v4222 = vunpack.c.h.b16 %v1291
      %v4223 = vunpack.c.l.b16 %v1292
      %v4224 = vunpack.c.h.b16 %v1292
      %v4225 = vunpack.c.l.b16 %v1293
      %v4226 = vunpack.c.h.b16 %v1293
      %v4227 = vunpack.c.l.b16 %v1294
      %v4228 = vunpack.c.h.b16 %v1294
      %v4229 = vunpack.c.l.b16 %v1295
      %v4230 = vunpack.c.h.b16 %v1295
      %v4231 = vunpack.c.l.b16 %v1296
      %v4232 = vunpack.c.h.b16 %v1296
      %v4233 = vunpack.c.l.b16 %v1297
      %v4234 = vunpack.c.h.b16 %v1297
      %v4235 = vunpack.c.l.b16 %v1298
      %v4236 = vunpack.c.h.b16 %v1298
      %v4237 = vunpack.c.l.b16 %v1299
      %v4238 = vunpack.c.h.b16 %v1299
      %v4239 = vunpack.c.l.b16 %v1300
      %v4240 = vunpack.c.h.b16 %v1300
      %v4241 = vunpack.c.l.b16 %v1301
      %v4242 = vunpack.c.h.b16 %v1301
      %v4243 = vunpack.c.l.b16 %v1302
      %v4244 = vunpack.c.h.b16 %v1302
      %v4245 = vunpack.c.l.b16 %v1303
      %v4246 = vunpack.c.h.b16 %v1303
      %v4247 = vunpack.c.l.b16 %v1304
      %v4248 = vunpack.c.h.b16 %v1304
      %v4249 = vunpack.c.l.b16 %v1305
      %v4250 = vunpack.c.h.b16 %v1305
      %v4251 = vunpack.c.l.b16 %v1306
      %v4252 = vunpack.c.h.b16 %v1306
      %v4253 = vunpack.c.l.b16 %v1307
      %v4254 = vunpack.c.h.b16 %v1307
      %v4255 = vunpack.c.l.b16 %v1308
      %v4256 = vunpack.c.h.b16 %v1308
      %v4257 = vunpack.c.l.b16 %v1309
      %v4258 = vunpack.c.h.b16 %v1309
      %v4259 = vunpack.c.l.b16 %v1310
      %v4260 = vunpack.c.h.b16 %v1310
      %v4261 = vunpack.c.l.b16 %v1311
      %v4262 = vunpack.c.h.b16 %v1311
      %v4263 = vunpack.c.l.b16 %v1312
      %v4264 = vunpack.c.h.b16 %v1312
      %v4265 = vunpack.c.l.b16 %v1313
      %v4266 = vunpack.c.h.b16 %v1313
      %v4267 = vunpack.c.l.b16 %v1314
      %v4268 = vunpack.c.h.b16 %v1314
      %v4269 = vunpack.c.l.b16 %v1315
      %v4270 = vunpack.c.h.b16 %v1315
      %v4271 = vunpack.c.l.b16 %v1316
      %v4272 = vunpack.c.h.b16 %v1316
      %v4273 = vunpack.c.l.b16 %v1317
      %v4274 = vunpack.c.h.b16 %v1317
      %v4275 = vunpack.c.l.b16 %v1318
      %v4276 = vunpack.c.h.b16 %v1318
      %v4277 = vunpack.c.l.b16 %v1319
      %v4278 = vunpack.c.h.b16 %v1319
      %v4279 = vunpack.c.l.b16 %v1320
      %v4280 = vunpack.c.h.b16 %v1320
      %v4281 = vunpack.c.l.b16 %v1321
      %v4282 = vunpack.c.h.b16 %v1321
      %v4283 = vunpack.c.l.b16 %v1322
      %v4284 = vunpack.c.h.b16 %v1322
      %v4285 = vunpack.c.l.b16 %v1323
      %v4286 = vunpack.c.h.b16 %v1323
      %v4287 = vunpack.c.l.b16 %v1324
      %v4288 = vunpack.c.h.b16 %v1324
      %v4289 = vunpack.c.l.b16 %v1325
      %v4290 = vunpack.c.h.b16 %v1325
      %v4291 = vunpack.c.l.b16 %v1326
      %v4292 = vunpack.c.h.b16 %v1326
      %v4293 = vunpack.c.l.b16 %v1327
      %v4294 = vunpack.c.h.b16 %v1327
      %v4295 = vunpack.c.l.b16 %v1328
      %v4296 = vunpack.c.h.b16 %v1328
      %v4297 = vunpack.c.l.b16 %v1329
      %v4298 = vunpack.c.h.b16 %v1329
      %v4299 = vunpack.c.l.b16 %v1330
      %v4300 = vunpack.c.h.b16 %v1330
      %v4301 = vunpack.c.l.b16 %v1331
      %v4302 = vunpack.c.h.b16 %v1331
      %v4303 = vunpack.c.l.b16 %v1332
      %v4304 = vunpack.c.h.b16 %v1332
      %v4305 = vunpack.c.l.b16 %v1333
      %v4306 = vunpack.c.h.b16 %v1333
      %v4307 = vunpack.c.l.b16 %v1334
      %v4308 = vunpack.c.h.b16 %v1334
      %v4309 = vunpack.c.l.b16 %v1335
      %v4310 = vunpack.c.h.b16 %v1335
      %v4311 = vunpack.c.l.b16 %v1336
      %v4312 = vunpack.c.h.b16 %v1336
      %v4313 = vunpack.c.l.b16 %v1337
      %v4314 = vunpack.c.h.b16 %v1337
      %v4315 = vunpack.c.l.b16 %v1338
      %v4316 = vunpack.c.h.b16 %v1338
      %v4317 = vunpack.c.l.b16 %v1339
      %v4318 = vunpack.c.h.b16 %v1339
      %v4319 = vunpack.c.l.b16 %v1340
      %v4320 = vunpack.c.h.b16 %v1340
      %v4321 = vunpack.c.l.b16 %v1341
      %v4322 = vunpack.c.h.b16 %v1341
      %v4323 = vunpack.c.l.b16 %v1342
      %v4324 = vunpack.c.h.b16 %v1342
      %v4325 = vunpack.c.l.b16 %v1343
      %v4326 = vunpack.c.h.b16 %v1343
      %v4327 = vunpack.c.l.b16 %v1344
      %v4328 = vunpack.c.h.b16 %v1344
      %v4329 = vunpack.c.l.b16 %v1345
      %v4330 = vunpack.c.h.b16 %v1345
      %v4331 = vunpack.c.l.b16 %v1346
      %v4332 = vunpack.c.h.b16 %v1346
      %v4333 = vunpack.c.l.b16 %v1347
      %v4334 = vunpack.c.h.b16 %v1347
      %v4335 = vunpack.c.l.b16 %v1348
      %v4336 = vunpack.c.h.b16 %v1348
      %v4337 = vunpack.c.l.b16 %v1349
      %v4338 = vunpack.c.h.b16 %v1349
      %v4339 = vunpack.c.l.b16 %v1350
      %v4340 = vunpack.c.h.b16 %v1350
      %v4341 = vunpack.c.l.b16 %v1351
      %v4342 = vunpack.c.h.b16 %v1351
      %v4343 = vunpack.c.l.b16 %v1352
      %v4344 = vunpack.c.h.b16 %v1352
      %v4345 = vunpack.c.l.b16 %v1353
      %v4346 = vunpack.c.h.b16 %v1353
      %v4347 = vunpack.c.l.b16 %v1354
      %v4348 = vunpack.c.h.b16 %v1354
      %v4349 = vunpack.c.l.b16 %v1355
      %v4350 = vunpack.c.h.b16 %v1355
      %v4351 = vunpack.c.l.b16 %v1356
      %v4352 = vunpack.c.h.b16 %v1356
      %v4353 = vunpack.c.l.b16 %v1357
      %v4354 = vunpack.c.h.b16 %v1357
      %v4355 = vunpack.c.l.b16 %v1358
      %v4356 = vunpack.c.h.b16 %v1358
      %v4357 = vunpack.c.l.b16 %v1359
      %v4358 = vunpack.c.h.b16 %v1359
      %v4359 = vunpack.c.l.b16 %v1360
      %v4360 = vunpack.c.h.b16 %v1360
      %v4361 = vunpack.c.l.b16 %v1361
      %v4362 = vunpack.c.h.b16 %v1361
      %v4363 = vunpack.c.l.b16 %v1362
      %v4364 = vunpack.c.h.b16 %v1362
      %v4365 = vunpack.c.l.b16 %v1363
      %v4366 = vunpack.c.h.b16 %v1363
      %v4367 = vunpack.c.l.b16 %v1364
      %v4368 = vunpack.c.h.b16 %v1364
      %v4369 = vunpack.c.l.b16 %v1365
      %v4370 = vunpack.c.h.b16 %v1365
      %v4371 = vunpack.c.l.b16 %v1366
      %v4372 = vunpack.c.h.b16 %v1366
      %v4373 = vunpack.c.l.b16 %v1367
      %v4374 = vunpack.c.h.b16 %v1367
      %v4375 = vunpack.c.l.b16 %v1368
      %v4376 = vunpack.c.h.b16 %v1368
      %v4377 = vunpack.c.l.b16 %v1369
      %v4378 = vunpack.c.h.b16 %v1369
      %v4379 = vunpack.c.l.b16 %v1370
      %v4380 = vunpack.c.h.b16 %v1370
      %v4381 = vunpack.c.l.b16 %v1371
      %v4382 = vunpack.c.h.b16 %v1371
      %v4383 = vunpack.c.l.b16 %v1372
      %v4384 = vunpack.c.h.b16 %v1372
      %v4385 = vunpack.c.l.b16 %v1373
      %v4386 = vunpack.c.h.b16 %v1373
      %v4387 = vunpack.c.l.b16 %v1374
      %v4388 = vunpack.c.h.b16 %v1374
      %v4389 = vunpack.c.l.b16 %v1375
      %v4390 = vunpack.c.h.b16 %v1375
      %v4391 = vunpack.c.l.b16 %v1376
      %v4392 = vunpack.c.h.b16 %v1376
      %v4393 = vunpack.c.l.b16 %v1377
      %v4394 = vunpack.c.h.b16 %v1377
      %v4395 = vunpack.c.l.b16 %v1378
      %v4396 = vunpack.c.h.b16 %v1378
      %v4397 = vunpack.c.l.b16 %v1379
      %v4398 = vunpack.c.h.b16 %v1379
      %v4399 = vunpack.c.l.b16 %v1380
      %v4400 = vunpack.c.h.b16 %v1380
      %v4401 = vunpack.c.l.b16 %v1381
      %v4402 = vunpack.c.h.b16 %v1381
      %v4403 = vunpack.c.l.b16 %v1382
      %v4404 = vunpack.c.h.b16 %v1382
      %v4405 = vunpack.c.l.b16 %v1383
      %v4406 = vunpack.c.h.b16 %v1383
      %v4407 = vunpack.c.l.b16 %v1384
      %v4408 = vunpack.c.h.b16 %v1384
      %v4409 = vunpack.c.l.b16 %v1385
      %v4410 = vunpack.c.h.b16 %v1385
      %v4411 = vunpack.c.l.b16 %v1386
      %v4412 = vunpack.c.h.b16 %v1386
      %v4413 = vunpack.c.l.b16 %v1387
      %v4414 = vunpack.c.h.b16 %v1387
      %v4415 = vunpack.c.l.b16 %v1388
      %v4416 = vunpack.c.h.b16 %v1388
      %v4417 = vunpack.c.l.b16 %v1389
      %v4418 = vunpack.c.h.b16 %v1389
      %v4419 = vunpack.c.l.b16 %v1390
      %v4420 = vunpack.c.h.b16 %v1390
      %v4421 = vunpack.c.l.b16 %v1391
      %v4422 = vunpack.c.h.b16 %v1391
      %v4423 = vunpack.c.l.b16 %v1392
      %v4424 = vunpack.c.h.b16 %v1392
      %v4425 = vunpack.c.l.b16 %v1393
      %v4426 = vunpack.c.h.b16 %v1393
      %v4427 = vunpack.c.l.b16 %v1394
      %v4428 = vunpack.c.h.b16 %v1394
      %v4429 = vunpack.c.l.b16 %v1395
      %v4430 = vunpack.c.h.b16 %v1395
      %v4431 = vunpack.c.l.b16 %v1396
      %v4432 = vunpack.c.h.b16 %v1396
      %v4433 = vunpack.c.l.b16 %v1397
      %v4434 = vunpack.c.h.b16 %v1397
      %v4435 = vunpack.c.l.b16 %v1398
      %v4436 = vunpack.c.h.b16 %v1398
      %v4437 = vunpack.c.l.b16 %v1399
      %v4438 = vunpack.c.h.b16 %v1399
      %v4439 = vunpack.c.l.b16 %v1400
      %v4440 = vunpack.c.h.b16 %v1400
      %v4441 = vunpack.c.l.b16 %v1401
      %v4442 = vunpack.c.h.b16 %v1401
      %v4443 = vunpack.c.l.b16 %v1402
      %v4444 = vunpack.c.h.b16 %v1402
      %v4445 = vunpack.c.l.b16 %v1403
      %v4446 = vunpack.c.h.b16 %v1403
      %v4447 = vunpack.c.l.b16 %v1404
      %v4448 = vunpack.c.h.b16 %v1404
      %v4449 = vunpack.c.l.b16 %v1405
      %v4450 = vunpack.c.h.b16 %v1405
      %v4451 = vunpack.c.l.b16 %v1406
      %v4452 = vunpack.c.h.b16 %v1406
      %v4453 = vunpack.c.l.b16 %v1407
      %v4454 = vunpack.c.h.b16 %v1407
      %v4455 = vunpack.c.l.b16 %v1408
      %v4456 = vunpack.c.h.b16 %v1408
      %v4457 = vunpack.c.l.b16 %v1409
      %v4458 = vunpack.c.h.b16 %v1409
      %v4459 = vunpack.c.l.b16 %v1410
      %v4460 = vunpack.c.h.b16 %v1410
      %v4461 = vunpack.c.l.b16 %v1411
      %v4462 = vunpack.c.h.b16 %v1411
      %v4463 = vunpack.c.l.b16 %v1412
      %v4464 = vunpack.c.h.b16 %v1412
      %v4465 = vunpack.c.l.b16 %v1413
      %v4466 = vunpack.c.h.b16 %v1413
      %v4467 = vunpack.c.l.b16 %v1414
      %v4468 = vunpack.c.h.b16 %v1414
      %v4469 = vunpack.c.l.b16 %v1415
      %v4470 = vunpack.c.h.b16 %v1415
      %v4471 = vunpack.c.l.b16 %v1416
      %v4472 = vunpack.c.h.b16 %v1416
      %v4473 = vunpack.c.l.b16 %v1417
      %v4474 = vunpack.c.h.b16 %v1417
      %v4475 = vunpack.c.l.b16 %v1418
      %v4476 = vunpack.c.h.b16 %v1418
      %v4477 = vunpack.c.l.b16 %v1419
      %v4478 = vunpack.c.h.b16 %v1419
      %v4479 = vunpack.c.l.b16 %v1420
      %v4480 = vunpack.c.h.b16 %v1420
      %v4481 = vunpack.c.l.b16 %v1421
      %v4482 = vunpack.c.h.b16 %v1421
      %v4483 = vunpack.c.l.b16 %v1422
      %v4484 = vunpack.c.h.b16 %v1422
      %v4485 = vunpack.c.l.b16 %v1423
      %v4486 = vunpack.c.h.b16 %v1423
      %v4487 = vunpack.c.l.b16 %v1424
      %v4488 = vunpack.c.h.b16 %v1424
      %v4489 = vunpack.c.l.b16 %v1425
      %v4490 = vunpack.c.h.b16 %v1425
      %v4491 = vunpack.c.l.b16 %v1426
      %v4492 = vunpack.c.h.b16 %v1426
      %v4493 = vunpack.c.l.b16 %v1427
      %v4494 = vunpack.c.h.b16 %v1427
      %v4495 = vunpack.c.l.b16 %v1428
      %v4496 = vunpack.c.h.b16 %v1428
      %v4497 = vunpack.c.l.b16 %v1429
      %v4498 = vunpack.c.h.b16 %v1429
      %v4499 = vunpack.c.l.b16 %v1430
      %v4500 = vunpack.c.h.b16 %v1430
      %v4501 = vunpack.c.l.b16 %v1431
      %v4502 = vunpack.c.h.b16 %v1431
      %v4503 = vunpack.c.l.b16 %v1432
      %v4504 = vunpack.c.h.b16 %v1432
      %v4505 = vunpack.c.l.b16 %v1433
      %v4506 = vunpack.c.h.b16 %v1433
      %v4507 = vunpack.c.l.b16 %v1434
      %v4508 = vunpack.c.h.b16 %v1434
      %v4509 = vunpack.c.l.b16 %v1435
      %v4510 = vunpack.c.h.b16 %v1435
      %v4511 = vunpack.c.l.b16 %v1436
      %v4512 = vunpack.c.h.b16 %v1436
      %v4513 = vunpack.c.l.b16 %v1437
      %v4514 = vunpack.c.h.b16 %v1437
      %v4515 = vunpack.c.l.b16 %v1438
      %v4516 = vunpack.c.h.b16 %v1438
      %v4517 = vunpack.c.l.b16 %v1439
      %v4518 = vunpack.c.h.b16 %v1439
      %v4519 = vunpack.c.l.b16 %v1440
      %v4520 = vunpack.c.h.b16 %v1440
      %v4521 = vunpack.c.l.b16 %v1441
      %v4522 = vunpack.c.h.b16 %v1441
      %v4523 = vunpack.c.l.b16 %v1442
      %v4524 = vunpack.c.h.b16 %v1442
      %v4525 = vunpack.c.l.b16 %v1443
      %v4526 = vunpack.c.h.b16 %v1443
      %v4527 = vunpack.c.l.b16 %v1444
      %v4528 = vunpack.c.h.b16 %v1444
      %v4529 = vunpack.c.l.b16 %v1445
      %v4530 = vunpack.c.h.b16 %v1445
      %v4531 = vunpack.c.l.b16 %v1446
      %v4532 = vunpack.c.h.b16 %v1446
      %v4533 = vunpack.c.l.b16 %v1447
      %v4534 = vunpack.c.h.b16 %v1447
      %v4535 = vunpack.c.l.b16 %v1448
      %v4536 = vunpack.c.h.b16 %v1448
      %v4537 = vunpack.c.l.b16 %v1449
      %v4538 = vunpack.c.h.b16 %v1449
      %v4539 = vunpack.c.l.b16 %v1450
      %v4540 = vunpack.c.h.b16 %v1450
      %v4541 = vunpack.c.l.b16 %v1451
      %v4542 = vunpack.c.h.b16 %v1451
      %v4543 = vunpack.c.l.b16 %v1452
      %v4544 = vunpack.c.h.b16 %v1452
      %v4545 = vunpack.c.l.b16 %v1453
      %v4546 = vunpack.c.h.b16 %v1453
      %v4547 = vunpack.c.l.b16 %v1454
      %v4548 = vunpack.c.h.b16 %v1454
      %v4549 = vpack.c.b16 %v2505, %v2501
      %v4550 = vpack.c.b16 %v2506, %v2502
      %v4551 = vpack.c.b16 %v2507, %v2503
      %v4552 = vpack.c.b16 %v2508, %v2504
      %v4553 = vpack.c.b16 %v2513, %v2509
      %v4554 = vpack.c.b16 %v2514, %v2510
      %v4555 = vpack.c.b16 %v2515, %v2511
      %v4556 = vpack.c.b16 %v2516, %v2512
      %v4557 = vpack.c.b16 %v2521, %v2517
      %v4558 = vpack.c.b16 %v2522, %v2518
      %v4559 = vpack.c.b16 %v2523, %v2519
      %v4560 = vpack.c.b16 %v2524, %v2520
      %v4561 = vpack.c.b16 %v2529, %v2525
      %v4562 = vpack.c.b16 %v2530, %v2526
      %v4563 = vpack.c.b16 %v2531, %v2527
      %v4564 = vpack.c.b16 %v2532, %v2528
      %v4565 = vpack.c.b16 %v2537, %v2533
      %v4566 = vpack.c.b16 %v2538, %v2534
      %v4567 = vpack.c.b16 %v2539, %v2535
      %v4568 = vpack.c.b16 %v2540, %v2536
      %v4569 = vpack.c.b16 %v2545, %v2541
      %v4570 = vpack.c.b16 %v2546, %v2542
      %v4571 = vpack.c.b16 %v2547, %v2543
      %v4572 = vpack.c.b16 %v2548, %v2544
      %v4573 = vpack.c.b16 %v2553, %v2549
      %v4574 = vpack.c.b16 %v2554, %v2550
      %v4575 = vpack.c.b16 %v2555, %v2551
      %v4576 = vpack.c.b16 %v2556, %v2552
      %v4577 = vpack.c.b16 %v2561, %v2557
      %v4578 = vpack.c.b16 %v2562, %v2558
      %v4579 = vpack.c.b16 %v2563, %v2559
      %v4580 = vpack.c.b16 %v2564, %v2560
      %v4581 = vpack.c.b16 %v2569, %v2565
      %v4582 = vpack.c.b16 %v2570, %v2566
      %v4583 = vpack.c.b16 %v2571, %v2567
      %v4584 = vpack.c.b16 %v2572, %v2568
      %v4585 = vpack.c.b16 %v2577, %v2573
      %v4586 = vpack.c.b16 %v2578, %v2574
      %v4587 = vpack.c.b16 %v2579, %v2575
      %v4588 = vpack.c.b16 %v2580, %v2576
      %v4589 = vpack.c.b16 %v2585, %v2581
      %v4590 = vpack.c.b16 %v2586, %v2582
      %v4591 = vpack.c.b16 %v2587, %v2583
      %v4592 = vpack.c.b16 %v2588, %v2584
      %v4593 = vpack.c.b16 %v2593, %v2589
      %v4594 = vpack.c.b16 %v2594, %v2590
      %v4595 = vpack.c.b16 %v2595, %v2591
      %v4596 = vpack.c.b16 %v2596, %v2592
      %v4597 = vpack.c.b16 %v2601, %v2597
      %v4598 = vpack.c.b16 %v2602, %v2598
      %v4599 = vpack.c.b16 %v2603, %v2599
      %v4600 = vpack.c.b16 %v2604, %v2600
      %v4601 = vpack.c.b16 %v2609, %v2605
      %v4602 = vpack.c.b16 %v2610, %v2606
      %v4603 = vpack.c.b16 %v2611, %v2607
      %v4604 = vpack.c.b16 %v2612, %v2608
      %v4605 = vpack.c.b16 %v2617, %v2613
      %v4606 = vpack.c.b16 %v2618, %v2614
      %v4607 = vpack.c.b16 %v2619, %v2615
      %v4608 = vpack.c.b16 %v2620, %v2616
      %v4609 = vpack.c.b16 %v2625, %v2621
      %v4610 = vpack.c.b16 %v2626, %v2622
      %v4611 = vpack.c.b16 %v2627, %v2623
      %v4612 = vpack.c.b16 %v2628, %v2624
      %v4613 = vpack.c.b16 %v2633, %v2629
      %v4614 = vpack.c.b16 %v2634, %v2630
      %v4615 = vpack.c.b16 %v2635, %v2631
      %v4616 = vpack.c.b16 %v2636, %v2632
      %v4617 = vpack.c.b16 %v2641, %v2637
      %v4618 = vpack.c.b16 %v2642, %v2638
      %v4619 = vpack.c.b16 %v2643, %v2639
      %v4620 = vpack.c.b16 %v2644, %v2640
      %v4621 = vpack.c.b16 %v2649, %v2645
      %v4622 = vpack.c.b16 %v2650, %v2646
      %v4623 = vpack.c.b16 %v2651, %v2647
      %v4624 = vpack.c.b16 %v2652, %v2648
      %v4625 = vpack.c.b16 %v2657, %v2653
      %v4626 = vpack.c.b16 %v2658, %v2654
      %v4627 = vpack.c.b16 %v2659, %v2655
      %v4628 = vpack.c.b16 %v2660, %v2656
      %v4629 = vpack.c.b16 %v2665, %v2661
      %v4630 = vpack.c.b16 %v2666, %v2662
      %v4631 = vpack.c.b16 %v2667, %v2663
      %v4632 = vpack.c.b16 %v2668, %v2664
      %v4633 = vpack.c.b16 %v2673, %v2669
      %v4634 = vpack.c.b16 %v2674, %v2670
      %v4635 = vpack.c.b16 %v2675, %v2671
      %v4636 = vpack.c.b16 %v2676, %v2672
      %v4637 = vpack.c.b16 %v2681, %v2677
      %v4638 = vpack.c.b16 %v2682, %v2678
      %v4639 = vpack.c.b16 %v2683, %v2679
      %v4640 = vpack.c.b16 %v2684, %v2680
      %v4641 = vpack.c.b16 %v2689, %v2685
      %v4642 = vpack.c.b16 %v2690, %v2686
      %v4643 = vpack.c.b16 %v2691, %v2687
      %v4644 = vpack.c.b16 %v2692, %v2688
      %v4645 = vpack.c.b16 %v2697, %v2693
      %v4646 = vpack.c.b16 %v2698, %v2694
      %v4647 = vpack.c.b16 %v2699, %v2695
      %v4648 = vpack.c.b16 %v2700, %v2696
      %v4649 = vpack.c.b16 %v2705, %v2701
      %v4650 = vpack.c.b16 %v2706, %v2702
      %v4651 = vpack.c.b16 %v2707, %v2703
      %v4652 = vpack.c.b16 %v2708, %v2704
      %v4653 = vpack.c.b16 %v2713, %v2709
      %v4654 = vpack.c.b16 %v2714, %v2710
      %v4655 = vpack.c.b16 %v2715, %v2711
      %v4656 = vpack.c.b16 %v2716, %v2712
      %v4657 = vpack.c.b16 %v2721, %v2717
      %v4658 = vpack.c.b16 %v2722, %v2718
      %v4659 = vpack.c.b16 %v2723, %v2719
      %v4660 = vpack.c.b16 %v2724, %v2720
      %v4661 = vpack.c.b16 %v2729, %v2725
      %v4662 = vpack.c.b16 %v2730, %v2726
      %v4663 = vpack.c.b16 %v2731, %v2727
      %v4664 = vpack.c.b16 %v2732, %v2728
      %v4665 = vpack.c.b16 %v2737, %v2733
      %v4666 = vpack.c.b16 %v2738, %v2734
      %v4667 = vpack.c.b16 %v2739, %v2735
      %v4668 = vpack.c.b16 %v2740, %v2736
      %v4669 = vpack.c.b16 %v2745, %v2741
      %v4670 = vpack.c.b16 %v2746, %v2742
      %v4671 = vpack.c.b16 %v2747, %v2743
      %v4672 = vpack.c.b16 %v2748, %v2744
      %v4673 = vpack.c.b16 %v2753, %v2749
      %v4674 = vpack.c.b16 %v2754, %v2750
      %v4675 = vpack.c.b16 %v2755, %v2751
      %v4676 = vpack.c.b16 %v2756, %v2752
      %v4677 = vpack.c.b16 %v2761, %v2757
      %v4678 = vpack.c.b16 %v2762, %v2758
      %v4679 = vpack.c.b16 %v2763, %v2759
      %v4680 = vpack.c.b16 %v2764, %v2760
      %v4681 = vpack.c.b16 %v2769, %v2765
      %v4682 = vpack.c.b16 %v2770, %v2766
      %v4683 = vpack.c.b16 %v2771, %v2767
      %v4684 = vpack.c.b16 %v2772, %v2768
      %v4685 = vpack.c.b16 %v2777, %v2773
      %v4686 = vpack.c.b16 %v2778, %v2774
      %v4687 = vpack.c.b16 %v2779, %v2775
      %v4688 = vpack.c.b16 %v2780, %v2776
      %v4689 = vpack.c.b16 %v2785, %v2781
      %v4690 = vpack.c.b16 %v2786, %v2782
      %v4691 = vpack.c.b16 %v2787, %v2783
      %v4692 = vpack.c.b16 %v2788, %v2784
      %v4693 = vpack.c.b16 %v2793, %v2789
      %v4694 = vpack.c.b16 %v2794, %v2790
      %v4695 = vpack.c.b16 %v2795, %v2791
      %v4696 = vpack.c.b16 %v2796, %v2792
      %v4697 = vpack.c.b16 %v2801, %v2797
      %v4698 = vpack.c.b16 %v2802, %v2798
      %v4699 = vpack.c.b16 %v2803, %v2799
      %v4700 = vpack.c.b16 %v2804, %v2800
      %v4701 = vpack.c.b16 %v2809, %v2805
      %v4702 = vpack.c.b16 %v2810, %v2806
      %v4703 = vpack.c.b16 %v2811, %v2807
      %v4704 = vpack.c.b16 %v2812, %v2808
      %v4705 = vpack.c.b16 %v2817, %v2813
      %v4706 = vpack.c.b16 %v2818, %v2814
      %v4707 = vpack.c.b16 %v2819, %v2815
      %v4708 = vpack.c.b16 %v2820, %v2816
      %v4709 = vpack.c.b16 %v2825, %v2821
      %v4710 = vpack.c.b16 %v2826, %v2822
      %v4711 = vpack.c.b16 %v2827, %v2823
      %v4712 = vpack.c.b16 %v2828, %v2824
      %v4713 = vpack.c.b16 %v2833, %v2829
      %v4714 = vpack.c.b16 %v2834, %v2830
      %v4715 = vpack.c.b16 %v2835, %v2831
      %v4716 = vpack.c.b16 %v2836, %v2832
      %v4717 = vpack.c.b16 %v2841, %v2837
      %v4718 = vpack.c.b16 %v2842, %v2838
      %v4719 = vpack.c.b16 %v2843, %v2839
      %v4720 = vpack.c.b16 %v2844, %v2840
      %v4721 = vpack.c.b16 %v2849, %v2845
      %v4722 = vpack.c.b16 %v2850, %v2846
      %v4723 = vpack.c.b16 %v2851, %v2847
      %v4724 = vpack.c.b16 %v2852, %v2848
      %v4725 = vpack.c.b16 %v2857, %v2853
      %v4726 = vpack.c.b16 %v2858, %v2854
      %v4727 = vpack.c.b16 %v2859, %v2855
      %v4728 = vpack.c.b16 %v2860, %v2856
      %v4729 = vpack.c.b16 %v2865, %v2861
      %v4730 = vpack.c.b16 %v2866, %v2862
      %v4731 = vpack.c.b16 %v2867, %v2863
      %v4732 = vpack.c.b16 %v2868, %v2864
      %v4733 = vpack.c.b16 %v2873, %v2869
      %v4734 = vpack.c.b16 %v2874, %v2870
      %v4735 = vpack.c.b16 %v2875, %v2871
      %v4736 = vpack.c.b16 %v2876, %v2872
      %v4737 = vpack.c.b16 %v2881, %v2877
      %v4738 = vpack.c.b16 %v2882, %v2878
      %v4739 = vpack.c.b16 %v2883, %v2879
      %v4740 = vpack.c.b16 %v2884, %v2880
      %v4741 = vpack.c.b16 %v2889, %v2885
      %v4742 = vpack.c.b16 %v2890, %v2886
      %v4743 = vpack.c.b16 %v2891, %v2887
      %v4744 = vpack.c.b16 %v2892, %v2888
      %v4745 = vpack.c.b16 %v2897, %v2893
      %v4746 = vpack.c.b16 %v2898, %v2894
      %v4747 = vpack.c.b16 %v2899, %v2895
      %v4748 = vpack.c.b16 %v2900, %v2896
      %v4749 = vpack.c.b16 %v2905, %v2901
      %v4750 = vpack.c.b16 %v2906, %v2902
      %v4751 = vpack.c.b16 %v2907, %v2903
      %v4752 = vpack.c.b16 %v2908, %v2904
      %v4753 = vpack.c.b16 %v2913, %v2909
      %v4754 = vpack.c.b16 %v2914, %v2910
      %v4755 = vpack.c.b16 %v2915, %v2911
      %v4756 = vpack.c.b16 %v2916, %v2912
      %v4757 = vpack.c.b16 %v2921, %v2917
      %v4758 = vpack.c.b16 %v2922, %v2918
      %v4759 = vpack.c.b16 %v2923, %v2919
      %v4760 = vpack.c.b16 %v2924, %v2920
      %v4761 = vpack.c.b16 %v2929, %v2925
      %v4762 = vpack.c.b16 %v2930, %v2926
      %v4763 = vpack.c.b16 %v2931, %v2927
      %v4764 = vpack.c.b16 %v2932, %v2928
      %v4765 = vpack.c.b16 %v2937, %v2933
      %v4766 = vpack.c.b16 %v2938, %v2934
      %v4767 = vpack.c.b16 %v2939, %v2935
      %v4768 = vpack.c.b16 %v2940, %v2936
      %v4769 = vpack.c.b16 %v2945, %v2941
      %v4770 = vpack.c.b16 %v2946, %v2942
      %v4771 = vpack.c.b16 %v2947, %v2943
      %v4772 = vpack.c.b16 %v2948, %v2944
      %v4773 = vpack.c.b16 %v2953, %v2949
      %v4774 = vpack.c.b16 %v2954, %v2950
      %v4775 = vpack.c.b16 %v2955, %v2951
      %v4776 = vpack.c.b16 %v2956, %v2952
      %v4777 = vpack.c.b16 %v2961, %v2957
      %v4778 = vpack.c.b16 %v2962, %v2958
      %v4779 = vpack.c.b16 %v2963, %v2959
      %v4780 = vpack.c.b16 %v2964, %v2960
      %v4781 = vpack.c.b16 %v2969, %v2965
      %v4782 = vpack.c.b16 %v2970, %v2966
      %v4783 = vpack.c.b16 %v2971, %v2967
      %v4784 = vpack.c.b16 %v2972, %v2968
      %v4785 = vpack.c.b16 %v2977, %v2973
      %v4786 = vpack.c.b16 %v2978, %v2974
      %v4787 = vpack.c.b16 %v2979, %v2975
      %v4788 = vpack.c.b16 %v2980, %v2976
      %v4789 = vpack.c.b16 %v2985, %v2981
      %v4790 = vpack.c.b16 %v2986, %v2982
      %v4791 = vpack.c.b16 %v2987, %v2983
      %v4792 = vpack.c.b16 %v2988, %v2984
      %v4793 = vpack.c.b16 %v2993, %v2989
      %v4794 = vpack.c.b16 %v2994, %v2990
      %v4795 = vpack.c.b16 %v2995, %v2991
      %v4796 = vpack.c.b16 %v2996, %v2992
      %v4797 = vpack.c.b16 %v3001, %v2997
      %v4798 = vpack.c.b16 %v3002, %v2998
      %v4799 = vpack.c.b16 %v3003, %v2999
      %v4800 = vpack.c.b16 %v3004, %v3000
      %v4801 = vpack.c.b16 %v3009, %v3005
      %v4802 = vpack.c.b16 %v3010, %v3006
      %v4803 = vpack.c.b16 %v3011, %v3007
      %v4804 = vpack.c.b16 %v3012, %v3008
      %v4805 = vpack.c.b16 %v3017, %v3013
      %v4806 = vpack.c.b16 %v3018, %v3014
      %v4807 = vpack.c.b16 %v3019, %v3015
      %v4808 = vpack.c.b16 %v3020, %v3016
      %v4809 = vpack.c.b16 %v3025, %v3021
      %v4810 = vpack.c.b16 %v3026, %v3022
      %v4811 = vpack.c.b16 %v3027, %v3023
      %v4812 = vpack.c.b16 %v3028, %v3024
      %v4813 = vpack.c.b16 %v3033, %v3029
      %v4814 = vpack.c.b16 %v3034, %v3030
      %v4815 = vpack.c.b16 %v3035, %v3031
      %v4816 = vpack.c.b16 %v3036, %v3032
      %v4817 = vpack.c.b16 %v3041, %v3037
      %v4818 = vpack.c.b16 %v3042, %v3038
      %v4819 = vpack.c.b16 %v3043, %v3039
      %v4820 = vpack.c.b16 %v3044, %v3040
      %v4821 = vpack.c.b16 %v3049, %v3045
      %v4822 = vpack.c.b16 %v3050, %v3046
      %v4823 = vpack.c.b16 %v3051, %v3047
      %v4824 = vpack.c.b16 %v3052, %v3048
      %v4825 = vpack.c.b16 %v3057, %v3053
      %v4826 = vpack.c.b16 %v3058, %v3054
      %v4827 = vpack.c.b16 %v3059, %v3055
      %v4828 = vpack.c.b16 %v3060, %v3056
      %v4829 = vpack.c.b16 %v3065, %v3061
      %v4830 = vpack.c.b16 %v3066, %v3062
      %v4831 = vpack.c.b16 %v3067, %v3063
      %v4832 = vpack.c.b16 %v3068, %v3064
      %v4833 = vpack.c.b16 %v3073, %v3069
      %v4834 = vpack.c.b16 %v3074, %v3070
      %v4835 = vpack.c.b16 %v3075, %v3071
      %v4836 = vpack.c.b16 %v3076, %v3072
      %v4837 = vpack.c.b16 %v3081, %v3077
      %v4838 = vpack.c.b16 %v3082, %v3078
      %v4839 = vpack.c.b16 %v3083, %v3079
      %v4840 = vpack.c.b16 %v3084, %v3080
      %v4841 = vpack.c.b16 %v3089, %v3085
      %v4842 = vpack.c.b16 %v3090, %v3086
      %v4843 = vpack.c.b16 %v3091, %v3087
      %v4844 = vpack.c.b16 %v3092, %v3088
      %v4845 = vpack.c.b16 %v3097, %v3093
      %v4846 = vpack.c.b16 %v3098, %v3094
      %v4847 = vpack.c.b16 %v3099, %v3095
      %v4848 = vpack.c.b16 %v3100, %v3096
      %v4849 = vpack.c.b16 %v3105, %v3101
      %v4850 = vpack.c.b16 %v3106, %v3102
      %v4851 = vpack.c.b16 %v3107, %v3103
      %v4852 = vpack.c.b16 %v3108, %v3104
      %v4853 = vpack.c.b16 %v3113, %v3109
      %v4854 = vpack.c.b16 %v3114, %v3110
      %v4855 = vpack.c.b16 %v3115, %v3111
      %v4856 = vpack.c.b16 %v3116, %v3112
      %v4857 = vpack.c.b16 %v3121, %v3117
      %v4858 = vpack.c.b16 %v3122, %v3118
      %v4859 = vpack.c.b16 %v3123, %v3119
      %v4860 = vpack.c.b16 %v3124, %v3120
      %v4861 = vpack.c.b16 %v3129, %v3125
      %v4862 = vpack.c.b16 %v3130, %v3126
      %v4863 = vpack.c.b16 %v3131, %v3127
      %v4864 = vpack.c.b16 %v3132, %v3128
      %v4865 = vpack.c.b16 %v3137, %v3133
      %v4866 = vpack.c.b16 %v3138, %v3134
      %v4867 = vpack.c.b16 %v3139, %v3135
      %v4868 = vpack.c.b16 %v3140, %v3136
      %v4869 = vpack.c.b16 %v3145, %v3141
      %v4870 = vpack.c.b16 %v3146, %v3142
      %v4871 = vpack.c.b16 %v3147, %v3143
      %v4872 = vpack.c.b16 %v3148, %v3144
      %v4873 = vpack.c.b16 %v3153, %v3149
      %v4874 = vpack.c.b16 %v3154, %v3150
      %v4875 = vpack.c.b16 %v3155, %v3151
      %v4876 = vpack.c.b16 %v3156, %v3152
      %v4877 = vpack.c.b16 %v3161, %v3157
      %v4878 = vpack.c.b16 %v3162, %v3158
      %v4879 = vpack.c.b16 %v3163, %v3159
      %v4880 = vpack.c.b16 %v3164, %v3160
      %v4881 = vpack.c.b16 %v3169, %v3165
      %v4882 = vpack.c.b16 %v3170, %v3166
      %v4883 = vpack.c.b16 %v3171, %v3167
      %v4884 = vpack.c.b16 %v3172, %v3168
      %v4885 = vpack.c.b16 %v3177, %v3173
      %v4886 = vpack.c.b16 %v3178, %v3174
      %v4887 = vpack.c.b16 %v3179, %v3175
      %v4888 = vpack.c.b16 %v3180, %v3176
      %v4889 = vpack.c.b16 %v3185, %v3181
      %v4890 = vpack.c.b16 %v3186, %v3182
      %v4891 = vpack.c.b16 %v3187, %v3183
      %v4892 = vpack.c.b16 %v3188, %v3184
      %v4893 = vpack.c.b16 %v3193, %v3189
      %v4894 = vpack.c.b16 %v3194, %v3190
      %v4895 = vpack.c.b16 %v3195, %v3191
      %v4896 = vpack.c.b16 %v3196, %v3192
      %v4897 = vpack.c.b16 %v3201, %v3197
      %v4898 = vpack.c.b16 %v3202, %v3198
      %v4899 = vpack.c.b16 %v3203, %v3199
      %v4900 = vpack.c.b16 %v3204, %v3200
      %v4901 = vpack.c.b16 %v3209, %v3205
      %v4902 = vpack.c.b16 %v3210, %v3206
      %v4903 = vpack.c.b16 %v3211, %v3207
      %v4904 = vpack.c.b16 %v3212, %v3208
      %v4905 = vpack.c.b16 %v3217, %v3213
      %v4906 = vpack.c.b16 %v3218, %v3214
      %v4907 = vpack.c.b16 %v3219, %v3215
      %v4908 = vpack.c.b16 %v3220, %v3216
      %v4909 = vpack.c.b16 %v3225, %v3221
      %v4910 = vpack.c.b16 %v3226, %v3222
      %v4911 = vpack.c.b16 %v3227, %v3223
      %v4912 = vpack.c.b16 %v3228, %v3224
      %v4913 = vpack.c.b16 %v3233, %v3229
      %v4914 = vpack.c.b16 %v3234, %v3230
      %v4915 = vpack.c.b16 %v3235, %v3231
      %v4916 = vpack.c.b16 %v3236, %v3232
      %v4917 = vpack.c.b16 %v3241, %v3237
      %v4918 = vpack.c.b16 %v3242, %v3238
      %v4919 = vpack.c.b16 %v3243, %v3239
      %v4920 = vpack.c.b16 %v3244, %v3240
      %v4921 = vpack.c.b16 %v3249, %v3245
      %v4922 = vpack.c.b16 %v3250, %v3246
      %v4923 = vpack.c.b16 %v3251, %v3247
      %v4924 = vpack.c.b16 %v3252, %v3248
      %v4925 = vpack.c.b16 %v3257, %v3253
      %v4926 = vpack.c.b16 %v3258, %v3254
      %v4927 = vpack.c.b16 %v3259, %v3255
      %v4928 = vpack.c.b16 %v3260, %v3256
      %v4929 = vpack.c.b16 %v3265, %v3261
      %v4930 = vpack.c.b16 %v3266, %v3262
      %v4931 = vpack.c.b16 %v3267, %v3263
      %v4932 = vpack.c.b16 %v3268, %v3264
      %v4933 = vpack.c.b16 %v3273, %v3269
      %v4934 = vpack.c.b16 %v3274, %v3270
      %v4935 = vpack.c.b16 %v3275, %v3271
      %v4936 = vpack.c.b16 %v3276, %v3272
      %v4937 = vpack.c.b16 %v3281, %v3277
      %v4938 = vpack.c.b16 %v3282, %v3278
      %v4939 = vpack.c.b16 %v3283, %v3279
      %v4940 = vpack.c.b16 %v3284, %v3280
      %v4941 = vpack.c.b16 %v3289, %v3285
      %v4942 = vpack.c.b16 %v3290, %v3286
      %v4943 = vpack.c.b16 %v3291, %v3287
      %v4944 = vpack.c.b16 %v3292, %v3288
      %v4945 = vpack.c.b16 %v3297, %v3293
      %v4946 = vpack.c.b16 %v3298, %v3294
      %v4947 = vpack.c.b16 %v3299, %v3295
      %v4948 = vpack.c.b16 %v3300, %v3296
      %v4949 = vpack.c.b16 %v3305, %v3301
      %v4950 = vpack.c.b16 %v3306, %v3302
      %v4951 = vpack.c.b16 %v3307, %v3303
      %v4952 = vpack.c.b16 %v3308, %v3304
      %v4953 = vpack.c.b16 %v3313, %v3309
      %v4954 = vpack.c.b16 %v3314, %v3310
      %v4955 = vpack.c.b16 %v3315, %v3311
      %v4956 = vpack.c.b16 %v3316, %v3312
      %v4957 = vpack.c.b16 %v3321, %v3317
      %v4958 = vpack.c.b16 %v3322, %v3318
      %v4959 = vpack.c.b16 %v3323, %v3319
      %v4960 = vpack.c.b16 %v3324, %v3320
      %v4961 = vpack.c.b16 %v3329, %v3325
      %v4962 = vpack.c.b16 %v3330, %v3326
      %v4963 = vpack.c.b16 %v3331, %v3327
      %v4964 = vpack.c.b16 %v3332, %v3328
      %v4965 = vpack.c.b16 %v3337, %v3333
      %v4966 = vpack.c.b16 %v3338, %v3334
      %v4967 = vpack.c.b16 %v3339, %v3335
      %v4968 = vpack.c.b16 %v3340, %v3336
      %v4969 = vpack.c.b16 %v3345, %v3341
      %v4970 = vpack.c.b16 %v3346, %v3342
      %v4971 = vpack.c.b16 %v3347, %v3343
      %v4972 = vpack.c.b16 %v3348, %v3344
      %v4973 = vpack.c.b16 %v3353, %v3349
      %v4974 = vpack.c.b16 %v3354, %v3350
      %v4975 = vpack.c.b16 %v3355, %v3351
      %v4976 = vpack.c.b16 %v3356, %v3352
      %v4977 = vpack.c.b16 %v3361, %v3357
      %v4978 = vpack.c.b16 %v3362, %v3358
      %v4979 = vpack.c.b16 %v3363, %v3359
      %v4980 = vpack.c.b16 %v3364, %v3360
      %v4981 = vpack.c.b16 %v3369, %v3365
      %v4982 = vpack.c.b16 %v3370, %v3366
      %v4983 = vpack.c.b16 %v3371, %v3367
      %v4984 = vpack.c.b16 %v3372, %v3368
      %v4985 = vpack.c.b16 %v3377, %v3373
      %v4986 = vpack.c.b16 %v3378, %v3374
      %v4987 = vpack.c.b16 %v3379, %v3375
      %v4988 = vpack.c.b16 %v3380, %v3376
      %v4989 = vpack.c.b16 %v3385, %v3381
      %v4990 = vpack.c.b16 %v3386, %v3382
      %v4991 = vpack.c.b16 %v3387, %v3383
      %v4992 = vpack.c.b16 %v3388, %v3384
      %v4993 = vpack.c.b16 %v3393, %v3389
      %v4994 = vpack.c.b16 %v3394, %v3390
      %v4995 = vpack.c.b16 %v3395, %v3391
      %v4996 = vpack.c.b16 %v3396, %v3392
      %v4997 = vpack.c.b16 %v3401, %v3397
      %v4998 = vpack.c.b16 %v3402, %v3398
      %v4999 = vpack.c.b16 %v3403, %v3399
      %v5000 = vpack.c.b16 %v3404, %v3400
      %v5001 = vpack.c.b16 %v3409, %v3405
      %v5002 = vpack.c.b16 %v3410, %v3406
      %v5003 = vpack.c.b16 %v3411, %v3407
      %v5004 = vpack.c.b16 %v3412, %v3408
      %v5005 = vpack.c.b16 %v3417, %v3413
      %v5006 = vpack.c.b16 %v3418, %v3414
      %v5007 = vpack.c.b16 %v3419, %v3415
      %v5008 = vpack.c.b16 %v3420, %v3416
      %v5009 = vpack.c.b16 %v3425, %v3421
      %v5010 = vpack.c.b16 %v3426, %v3422
      %v5011 = vpack.c.b16 %v3427, %v3423
      %v5012 = vpack.c.b16 %v3428, %v3424
      %v5013 = vpack.c.b16 %v3433, %v3429
      %v5014 = vpack.c.b16 %v3434, %v3430
      %v5015 = vpack.c.b16 %v3435, %v3431
      %v5016 = vpack.c.b16 %v3436, %v3432
      %v5017 = vpack.c.b16 %v3441, %v3437
      %v5018 = vpack.c.b16 %v3442, %v3438
      %v5019 = vpack.c.b16 %v3443, %v3439
      %v5020 = vpack.c.b16 %v3444, %v3440
      %v5021 = vpack.c.b16 %v3449, %v3445
      %v5022 = vpack.c.b16 %v3450, %v3446
      %v5023 = vpack.c.b16 %v3451, %v3447
      %v5024 = vpack.c.b16 %v3452, %v3448
      %v5025 = vpack.c.b16 %v3457, %v3453
      %v5026 = vpack.c.b16 %v3458, %v3454
      %v5027 = vpack.c.b16 %v3459, %v3455
      %v5028 = vpack.c.b16 %v3460, %v3456
      %v5029 = vpack.c.b16 %v3465, %v3461
      %v5030 = vpack.c.b16 %v3466, %v3462
      %v5031 = vpack.c.b16 %v3467, %v3463
      %v5032 = vpack.c.b16 %v3468, %v3464
      %v5033 = vpack.c.b16 %v3473, %v3469
      %v5034 = vpack.c.b16 %v3474, %v3470
      %v5035 = vpack.c.b16 %v3475, %v3471
      %v5036 = vpack.c.b16 %v3476, %v3472
      %v5037 = vpack.c.b16 %v3481, %v3477
      %v5038 = vpack.c.b16 %v3482, %v3478
      %v5039 = vpack.c.b16 %v3483, %v3479
      %v5040 = vpack.c.b16 %v3484, %v3480
      %v5041 = vpack.c.b16 %v3489, %v3485
      %v5042 = vpack.c.b16 %v3490, %v3486
      %v5043 = vpack.c.b16 %v3491, %v3487
      %v5044 = vpack.c.b16 %v3492, %v3488
      %v5045 = vpack.c.b16 %v3497, %v3493
      %v5046 = vpack.c.b16 %v3498, %v3494
      %v5047 = vpack.c.b16 %v3499, %v3495
      %v5048 = vpack.c.b16 %v3500, %v3496
      %v5049 = vpack.c.b16 %v3505, %v3501
      %v5050 = vpack.c.b16 %v3506, %v3502
      %v5051 = vpack.c.b16 %v3507, %v3503
      %v5052 = vpack.c.b16 %v3508, %v3504
      %v5053 = vpack.c.b16 %v3513, %v3509
      %v5054 = vpack.c.b16 %v3514, %v3510
      %v5055 = vpack.c.b16 %v3515, %v3511
      %v5056 = vpack.c.b16 %v3516, %v3512
      %v5057 = vpack.c.b16 %v3521, %v3517
      %v5058 = vpack.c.b16 %v3522, %v3518
      %v5059 = vpack.c.b16 %v3523, %v3519
      %v5060 = vpack.c.b16 %v3524, %v3520
      %v5061 = vpack.c.b16 %v3529, %v3525
      %v5062 = vpack.c.b16 %v3530, %v3526
      %v5063 = vpack.c.b16 %v3531, %v3527
      %v5064 = vpack.c.b16 %v3532, %v3528
      %v5065 = vpack.c.b16 %v3537, %v3533
      %v5066 = vpack.c.b16 %v3538, %v3534
      %v5067 = vpack.c.b16 %v3539, %v3535
      %v5068 = vpack.c.b16 %v3540, %v3536
      %v5069 = vpack.c.b16 %v3545, %v3541
      %v5070 = vpack.c.b16 %v3546, %v3542
      %v5071 = vpack.c.b16 %v3547, %v3543
      %v5072 = vpack.c.b16 %v3548, %v3544
      %v5073 = vpack.c.b16 %v3553, %v3549
      %v5074 = vpack.c.b16 %v3554, %v3550
      %v5075 = vpack.c.b16 %v3555, %v3551
      %v5076 = vpack.c.b16 %v3556, %v3552
      %v5077 = vpack.c.b16 %v3561, %v3557
      %v5078 = vpack.c.b16 %v3562, %v3558
      %v5079 = vpack.c.b16 %v3563, %v3559
      %v5080 = vpack.c.b16 %v3564, %v3560
      %v5081 = vpack.c.b16 %v3569, %v3565
      %v5082 = vpack.c.b16 %v3570, %v3566
      %v5083 = vpack.c.b16 %v3571, %v3567
      %v5084 = vpack.c.b16 %v3572, %v3568
      %v5085 = vpack.c.b16 %v3577, %v3573
      %v5086 = vpack.c.b16 %v3578, %v3574
      %v5087 = vpack.c.b16 %v3579, %v3575
      %v5088 = vpack.c.b16 %v3580, %v3576
      %v5089 = vpack.c.b16 %v3585, %v3581
      %v5090 = vpack.c.b16 %v3586, %v3582
      %v5091 = vpack.c.b16 %v3587, %v3583
      %v5092 = vpack.c.b16 %v3588, %v3584
      %v5093 = vpack.c.b16 %v3593, %v3589
      %v5094 = vpack.c.b16 %v3594, %v3590
      %v5095 = vpack.c.b16 %v3595, %v3591
      %v5096 = vpack.c.b16 %v3596, %v3592
      %v5097 = vpack.c.b16 %v3601, %v3597
      %v5098 = vpack.c.b16 %v3602, %v3598
      %v5099 = vpack.c.b16 %v3603, %v3599
      %v5100 = vpack.c.b16 %v3604, %v3600
      %v5101 = vpack.c.b16 %v3609, %v3605
      %v5102 = vpack.c.b16 %v3610, %v3606
      %v5103 = vpack.c.b16 %v3611, %v3607
      %v5104 = vpack.c.b16 %v3612, %v3608
      %v5105 = vpack.c.b16 %v3617, %v3613
      %v5106 = vpack.c.b16 %v3618, %v3614
      %v5107 = vpack.c.b16 %v3619, %v3615
      %v5108 = vpack.c.b16 %v3620, %v3616
      %v5109 = vpack.c.b16 %v3625, %v3621
      %v5110 = vpack.c.b16 %v3626, %v3622
      %v5111 = vpack.c.b16 %v3627, %v3623
      %v5112 = vpack.c.b16 %v3628, %v3624
      %v5113 = vpack.c.b16 %v3633, %v3629
      %v5114 = vpack.c.b16 %v3634, %v3630
      %v5115 = vpack.c.b16 %v3635, %v3631
      %v5116 = vpack.c.b16 %v3636, %v3632
      %v5117 = vpack.c.b16 %v3641, %v3637
      %v5118 = vpack.c.b16 %v3642, %v3638
      %v5119 = vpack.c.b16 %v3643, %v3639
      %v5120 = vpack.c.b16 %v3644, %v3640
      %v5121 = vpack.c.b16 %v3649, %v3645
      %v5122 = vpack.c.b16 %v3650, %v3646
      %v5123 = vpack.c.b16 %v3651, %v3647
      %v5124 = vpack.c.b16 %v3652, %v3648
      %v5125 = vpack.c.b16 %v3657, %v3653
      %v5126 = vpack.c.b16 %v3658, %v3654
      %v5127 = vpack.c.b16 %v3659, %v3655
      %v5128 = vpack.c.b16 %v3660, %v3656
      %v5129 = vpack.c.b16 %v3665, %v3661
      %v5130 = vpack.c.b16 %v3666, %v3662
      %v5131 = vpack.c.b16 %v3667, %v3663
      %v5132 = vpack.c.b16 %v3668, %v3664
      %v5133 = vpack.c.b16 %v3673, %v3669
      %v5134 = vpack.c.b16 %v3674, %v3670
      %v5135 = vpack.c.b16 %v3675, %v3671
      %v5136 = vpack.c.b16 %v3676, %v3672
      %v5137 = vpack.c.b16 %v3681, %v3677
      %v5138 = vpack.c.b16 %v3682, %v3678
      %v5139 = vpack.c.b16 %v3683, %v3679
      %v5140 = vpack.c.b16 %v3684, %v3680
      %v5141 = vpack.c.b16 %v3689, %v3685
      %v5142 = vpack.c.b16 %v3690, %v3686
      %v5143 = vpack.c.b16 %v3691, %v3687
      %v5144 = vpack.c.b16 %v3692, %v3688
      %v5145 = vpack.c.b16 %v3697, %v3693
      %v5146 = vpack.c.b16 %v3698, %v3694
      %v5147 = vpack.c.b16 %v3699, %v3695
      %v5148 = vpack.c.b16 %v3700, %v3696
      %v5149 = vpack.c.b16 %v3705, %v3701
      %v5150 = vpack.c.b16 %v3706, %v3702
      %v5151 = vpack.c.b16 %v3707, %v3703
      %v5152 = vpack.c.b16 %v3708, %v3704
      %v5153 = vpack.c.b16 %v3713, %v3709
      %v5154 = vpack.c.b16 %v3714, %v3710
      %v5155 = vpack.c.b16 %v3715, %v3711
      %v5156 = vpack.c.b16 %v3716, %v3712
      %v5157 = vpack.c.b16 %v3721, %v3717
      %v5158 = vpack.c.b16 %v3722, %v3718
      %v5159 = vpack.c.b16 %v3723, %v3719
      %v5160 = vpack.c.b16 %v3724, %v3720
      %v5161 = vpack.c.b16 %v3729, %v3725
      %v5162 = vpack.c.b16 %v3730, %v3726
      %v5163 = vpack.c.b16 %v3731, %v3727
      %v5164 = vpack.c.b16 %v3732, %v3728
      %v5165 = vpack.c.b16 %v3737, %v3733
      %v5166 = vpack.c.b16 %v3738, %v3734
      %v5167 = vpack.c.b16 %v3739, %v3735
      %v5168 = vpack.c.b16 %v3740, %v3736
      %v5169 = vpack.c.b16 %v3745, %v3741
      %v5170 = vpack.c.b16 %v3746, %v3742
      %v5171 = vpack.c.b16 %v3747, %v3743
      %v5172 = vpack.c.b16 %v3748, %v3744
      %v5173 = vpack.c.b16 %v3753, %v3749
      %v5174 = vpack.c.b16 %v3754, %v3750
      %v5175 = vpack.c.b16 %v3755, %v3751
      %v5176 = vpack.c.b16 %v3756, %v3752
      %v5177 = vpack.c.b16 %v3761, %v3757
      %v5178 = vpack.c.b16 %v3762, %v3758
      %v5179 = vpack.c.b16 %v3763, %v3759
      %v5180 = vpack.c.b16 %v3764, %v3760
      %v5181 = vpack.c.b16 %v3769, %v3765
      %v5182 = vpack.c.b16 %v3770, %v3766
      %v5183 = vpack.c.b16 %v3771, %v3767
      %v5184 = vpack.c.b16 %v3772, %v3768
      %v5185 = vpack.c.b16 %v3777, %v3773
      %v5186 = vpack.c.b16 %v3778, %v3774
      %v5187 = vpack.c.b16 %v3779, %v3775
      %v5188 = vpack.c.b16 %v3780, %v3776
      %v5189 = vpack.c.b16 %v3785, %v3781
      %v5190 = vpack.c.b16 %v3786, %v3782
      %v5191 = vpack.c.b16 %v3787, %v3783
      %v5192 = vpack.c.b16 %v3788, %v3784
      %v5193 = vpack.c.b16 %v3793, %v3789
      %v5194 = vpack.c.b16 %v3794, %v3790
      %v5195 = vpack.c.b16 %v3795, %v3791
      %v5196 = vpack.c.b16 %v3796, %v3792
      %v5197 = vpack.c.b16 %v3801, %v3797
      %v5198 = vpack.c.b16 %v3802, %v3798
      %v5199 = vpack.c.b16 %v3803, %v3799
      %v5200 = vpack.c.b16 %v3804, %v3800
      %v5201 = vpack.c.b16 %v3809, %v3805
      %v5202 = vpack.c.b16 %v3810, %v3806
      %v5203 = vpack.c.b16 %v3811, %v3807
      %v5204 = vpack.c.b16 %v3812, %v3808
      %v5205 = vpack.c.b16 %v3817, %v3813
      %v5206 = vpack.c.b16 %v3818, %v3814
      %v5207 = vpack.c.b16 %v3819, %v3815
      %v5208 = vpack.c.b16 %v3820, %v3816
      %v5209 = vpack.c.b16 %v3825, %v3821
      %v5210 = vpack.c.b16 %v3826, %v3822
      %v5211 = vpack.c.b16 %v3827, %v3823
      %v5212 = vpack.c.b16 %v3828, %v3824
      %v5213 = vpack.c.b16 %v3833, %v3829
      %v5214 = vpack.c.b16 %v3834, %v3830
      %v5215 = vpack.c.b16 %v3835, %v3831
      %v5216 = vpack.c.b16 %v3836, %v3832
      %v5217 = vpack.c.b16 %v3841, %v3837
      %v5218 = vpack.c.b16 %v3842, %v3838
      %v5219 = vpack.c.b16 %v3843, %v3839
      %v5220 = vpack.c.b16 %v3844, %v3840
      %v5221 = vpack.c.b16 %v3849, %v3845
      %v5222 = vpack.c.b16 %v3850, %v3846
      %v5223 = vpack.c.b16 %v3851, %v3847
      %v5224 = vpack.c.b16 %v3852, %v3848
      %v5225 = vpack.c.b16 %v3857, %v3853
      %v5226 = vpack.c.b16 %v3858, %v3854
      %v5227 = vpack.c.b16 %v3859, %v3855
      %v5228 = vpack.c.b16 %v3860, %v3856
      %v5229 = vpack.c.b16 %v3865, %v3861
      %v5230 = vpack.c.b16 %v3866, %v3862
      %v5231 = vpack.c.b16 %v3867, %v3863
      %v5232 = vpack.c.b16 %v3868, %v3864
      %v5233 = vpack.c.b16 %v3873, %v3869
      %v5234 = vpack.c.b16 %v3874, %v3870
      %v5235 = vpack.c.b16 %v3875, %v3871
      %v5236 = vpack.c.b16 %v3876, %v3872
      %v5237 = vpack.c.b16 %v3881, %v3877
      %v5238 = vpack.c.b16 %v3882, %v3878
      %v5239 = vpack.c.b16 %v3883, %v3879
      %v5240 = vpack.c.b16 %v3884, %v3880
      %v5241 = vpack.c.b16 %v3889, %v3885
      %v5242 = vpack.c.b16 %v3890, %v3886
      %v5243 = vpack.c.b16 %v3891, %v3887
      %v5244 = vpack.c.b16 %v3892, %v3888
      %v5245 = vpack.c.b16 %v3897, %v3893
      %v5246 = vpack.c.b16 %v3898, %v3894
      %v5247 = vpack.c.b16 %v3899, %v3895
      %v5248 = vpack.c.b16 %v3900, %v3896
      %v5249 = vpack.c.b16 %v3905, %v3901
      %v5250 = vpack.c.b16 %v3906, %v3902
      %v5251 = vpack.c.b16 %v3907, %v3903
      %v5252 = vpack.c.b16 %v3908, %v3904
      %v5253 = vpack.c.b16 %v3913, %v3909
      %v5254 = vpack.c.b16 %v3914, %v3910
      %v5255 = vpack.c.b16 %v3915, %v3911
      %v5256 = vpack.c.b16 %v3916, %v3912
      %v5257 = vpack.c.b16 %v3921, %v3917
      %v5258 = vpack.c.b16 %v3922, %v3918
      %v5259 = vpack.c.b16 %v3923, %v3919
      %v5260 = vpack.c.b16 %v3924, %v3920
      %v5261 = vpack.c.b16 %v3929, %v3925
      %v5262 = vpack.c.b16 %v3930, %v3926
      %v5263 = vpack.c.b16 %v3931, %v3927
      %v5264 = vpack.c.b16 %v3932, %v3928
      %v5265 = vpack.c.b16 %v3937, %v3933
      %v5266 = vpack.c.b16 %v3938, %v3934
      %v5267 = vpack.c.b16 %v3939, %v3935
      %v5268 = vpack.c.b16 %v3940, %v3936
      %v5269 = vpack.c.b16 %v3945, %v3941
      %v5270 = vpack.c.b16 %v3946, %v3942
      %v5271 = vpack.c.b16 %v3947, %v3943
      %v5272 = vpack.c.b16 %v3948, %v3944
      %v5273 = vpack.c.b16 %v3953, %v3949
      %v5274 = vpack.c.b16 %v3954, %v3950
      %v5275 = vpack.c.b16 %v3955, %v3951
      %v5276 = vpack.c.b16 %v3956, %v3952
      %v5277 = vpack.c.b16 %v3961, %v3957
      %v5278 = vpack.c.b16 %v3962, %v3958
      %v5279 = vpack.c.b16 %v3963, %v3959
      %v5280 = vpack.c.b16 %v3964, %v3960
      %v5281 = vpack.c.b16 %v3969, %v3965
      %v5282 = vpack.c.b16 %v3970, %v3966
      %v5283 = vpack.c.b16 %v3971, %v3967
      %v5284 = vpack.c.b16 %v3972, %v3968
      %v5285 = vpack.c.b16 %v3977, %v3973
      %v5286 = vpack.c.b16 %v3978, %v3974
      %v5287 = vpack.c.b16 %v3979, %v3975
      %v5288 = vpack.c.b16 %v3980, %v3976
      %v5289 = vpack.c.b16 %v3985, %v3981
      %v5290 = vpack.c.b16 %v3986, %v3982
      %v5291 = vpack.c.b16 %v3987, %v3983
      %v5292 = vpack.c.b16 %v3988, %v3984
      %v5293 = vpack.c.b16 %v3993, %v3989
      %v5294 = vpack.c.b16 %v3994, %v3990
      %v5295 = vpack.c.b16 %v3995, %v3991
      %v5296 = vpack.c.b16 %v3996, %v3992
      %v5297 = vpack.c.b16 %v4001, %v3997
      %v5298 = vpack.c.b16 %v4002, %v3998
      %v5299 = vpack.c.b16 %v4003, %v3999
      %v5300 = vpack.c.b16 %v4004, %v4000
      %v5301 = vpack.c.b16 %v4009, %v4005
      %v5302 = vpack.c.b16 %v4010, %v4006
      %v5303 = vpack.c.b16 %v4011, %v4007
      %v5304 = vpack.c.b16 %v4012, %v4008
      %v5305 = vpack.c.b16 %v4017, %v4013
      %v5306 = vpack.c.b16 %v4018, %v4014
      %v5307 = vpack.c.b16 %v4019, %v4015
      %v5308 = vpack.c.b16 %v4020, %v4016
      %v5309 = vpack.c.b16 %v4025, %v4021
      %v5310 = vpack.c.b16 %v4026, %v4022
      %v5311 = vpack.c.b16 %v4027, %v4023
      %v5312 = vpack.c.b16 %v4028, %v4024
      %v5313 = vpack.c.b16 %v4033, %v4029
      %v5314 = vpack.c.b16 %v4034, %v4030
      %v5315 = vpack.c.b16 %v4035, %v4031
      %v5316 = vpack.c.b16 %v4036, %v4032
      %v5317 = vpack.c.b16 %v4041, %v4037
      %v5318 = vpack.c.b16 %v4042, %v4038
      %v5319 = vpack.c.b16 %v4043, %v4039
      %v5320 = vpack.c.b16 %v4044, %v4040
      %v5321 = vpack.c.b16 %v4049, %v4045
      %v5322 = vpack.c.b16 %v4050, %v4046
      %v5323 = vpack.c.b16 %v4051, %v4047
      %v5324 = vpack.c.b16 %v4052, %v4048
      %v5325 = vpack.c.b16 %v4057, %v4053
      %v5326 = vpack.c.b16 %v4058, %v4054
      %v5327 = vpack.c.b16 %v4059, %v4055
      %v5328 = vpack.c.b16 %v4060, %v4056
      %v5329 = vpack.c.b16 %v4065, %v4061
      %v5330 = vpack.c.b16 %v4066, %v4062
      %v5331 = vpack.c.b16 %v4067, %v4063
      %v5332 = vpack.c.b16 %v4068, %v4064
      %v5333 = vpack.c.b16 %v4073, %v4069
      %v5334 = vpack.c.b16 %v4074, %v4070
      %v5335 = vpack.c.b16 %v4075, %v4071
      %v5336 = vpack.c.b16 %v4076, %v4072
      %v5337 = vpack.c.b16 %v4081, %v4077
      %v5338 = vpack.c.b16 %v4082, %v4078
      %v5339 = vpack.c.b16 %v4083, %v4079
      %v5340 = vpack.c.b16 %v4084, %v4080
      %v5341 = vpack.c.b16 %v4089, %v4085
      %v5342 = vpack.c.b16 %v4090, %v4086
      %v5343 = vpack.c.b16 %v4091, %v4087
      %v5344 = vpack.c.b16 %v4092, %v4088
      %v5345 = vpack.c.b16 %v4097, %v4093
      %v5346 = vpack.c.b16 %v4098, %v4094
      %v5347 = vpack.c.b16 %v4099, %v4095
      %v5348 = vpack.c.b16 %v4100, %v4096
      %v5349 = vpack.c.b16 %v4105, %v4101
      %v5350 = vpack.c.b16 %v4106, %v4102
      %v5351 = vpack.c.b16 %v4107, %v4103
      %v5352 = vpack.c.b16 %v4108, %v4104
      %v5353 = vpack.c.b16 %v4113, %v4109
      %v5354 = vpack.c.b16 %v4114, %v4110
      %v5355 = vpack.c.b16 %v4115, %v4111
      %v5356 = vpack.c.b16 %v4116, %v4112
      %v5357 = vpack.c.b16 %v4121, %v4117
      %v5358 = vpack.c.b16 %v4122, %v4118
      %v5359 = vpack.c.b16 %v4123, %v4119
      %v5360 = vpack.c.b16 %v4124, %v4120
      %v5361 = vpack.c.b16 %v4129, %v4125
      %v5362 = vpack.c.b16 %v4130, %v4126
      %v5363 = vpack.c.b16 %v4131, %v4127
      %v5364 = vpack.c.b16 %v4132, %v4128
      %v5365 = vpack.c.b16 %v4137, %v4133
      %v5366 = vpack.c.b16 %v4138, %v4134
      %v5367 = vpack.c.b16 %v4139, %v4135
      %v5368 = vpack.c.b16 %v4140, %v4136
      %v5369 = vpack.c.b16 %v4145, %v4141
      %v5370 = vpack.c.b16 %v4146, %v4142
      %v5371 = vpack.c.b16 %v4147, %v4143
      %v5372 = vpack.c.b16 %v4148, %v4144
      %v5373 = vpack.c.b16 %v4153, %v4149
      %v5374 = vpack.c.b16 %v4154, %v4150
      %v5375 = vpack.c.b16 %v4155, %v4151
      %v5376 = vpack.c.b16 %v4156, %v4152
      %v5377 = vpack.c.b16 %v4161, %v4157
      %v5378 = vpack.c.b16 %v4162, %v4158
      %v5379 = vpack.c.b16 %v4163, %v4159
      %v5380 = vpack.c.b16 %v4164, %v4160
      %v5381 = vpack.c.b16 %v4169, %v4165
      %v5382 = vpack.c.b16 %v4170, %v4166
      %v5383 = vpack.c.b16 %v4171, %v4167
      %v5384 = vpack.c.b16 %v4172, %v4168
      %v5385 = vpack.c.b16 %v4177, %v4173
      %v5386 = vpack.c.b16 %v4178, %v4174
      %v5387 = vpack.c.b16 %v4179, %v4175
      %v5388 = vpack.c.b16 %v4180, %v4176
      %v5389 = vpack.c.b16 %v4185, %v4181
      %v5390 = vpack.c.b16 %v4186, %v4182
      %v5391 = vpack.c.b16 %v4187, %v4183
      %v5392 = vpack.c.b16 %v4188, %v4184
      %v5393 = vpack.c.b16 %v4193, %v4189
      %v5394 = vpack.c.b16 %v4194, %v4190
      %v5395 = vpack.c.b16 %v4195, %v4191
      %v5396 = vpack.c.b16 %v4196, %v4192
      %v5397 = vpack.c.b16 %v4201, %v4197
      %v5398 = vpack.c.b16 %v4202, %v4198
      %v5399 = vpack.c.b16 %v4203, %v4199
      %v5400 = vpack.c.b16 %v4204, %v4200
      %v5401 = vpack.c.b16 %v4209, %v4205
      %v5402 = vpack.c.b16 %v4210, %v4206
      %v5403 = vpack.c.b16 %v4211, %v4207
      %v5404 = vpack.c.b16 %v4212, %v4208
      %v5405 = vpack.c.b16 %v4217, %v4213
      %v5406 = vpack.c.b16 %v4218, %v4214
      %v5407 = vpack.c.b16 %v4219, %v4215
      %v5408 = vpack.c.b16 %v4220, %v4216
      %v5409 = vpack.c.b16 %v4225, %v4221
      %v5410 = vpack.c.b16 %v4226, %v4222
      %v5411 = vpack.c.b16 %v4227, %v4223
      %v5412 = vpack.c.b16 %v4228, %v4224
      %v5413 = vpack.c.b16 %v4233, %v4229
      %v5414 = vpack.c.b16 %v4234, %v4230
      %v5415 = vpack.c.b16 %v4235, %v4231
      %v5416 = vpack.c.b16 %v4236, %v4232
      %v5417 = vpack.c.b16 %v4241, %v4237
      %v5418 = vpack.c.b16 %v4242, %v4238
      %v5419 = vpack.c.b16 %v4243, %v4239
      %v5420 = vpack.c.b16 %v4244, %v4240
      %v5421 = vpack.c.b16 %v4249, %v4245
      %v5422 = vpack.c.b16 %v4250, %v4246
      %v5423 = vpack.c.b16 %v4251, %v4247
      %v5424 = vpack.c.b16 %v4252, %v4248
      %v5425 = vpack.c.b16 %v4257, %v4253
      %v5426 = vpack.c.b16 %v4258, %v4254
      %v5427 = vpack.c.b16 %v4259, %v4255
      %v5428 = vpack.c.b16 %v4260, %v4256
      %v5429 = vpack.c.b16 %v4265, %v4261
      %v5430 = vpack.c.b16 %v4266, %v4262
      %v5431 = vpack.c.b16 %v4267, %v4263
      %v5432 = vpack.c.b16 %v4268, %v4264
      %v5433 = vpack.c.b16 %v4273, %v4269
      %v5434 = vpack.c.b16 %v4274, %v4270
      %v5435 = vpack.c.b16 %v4275, %v4271
      %v5436 = vpack.c.b16 %v4276, %v4272
      %v5437 = vpack.c.b16 %v4281, %v4277
      %v5438 = vpack.c.b16 %v4282, %v4278
      %v5439 = vpack.c.b16 %v4283, %v4279
      %v5440 = vpack.c.b16 %v4284, %v4280
      %v5441 = vpack.c.b16 %v4289, %v4285
      %v5442 = vpack.c.b16 %v4290, %v4286
      %v5443 = vpack.c.b16 %v4291, %v4287
      %v5444 = vpack.c.b16 %v4292, %v4288
      %v5445 = vpack.c.b16 %v4297, %v4293
      %v5446 = vpack.c.b16 %v4298, %v4294
      %v5447 = vpack.c.b16 %v4299, %v4295
      %v5448 = vpack.c.b16 %v4300, %v4296
      %v5449 = vpack.c.b16 %v4305, %v4301
      %v5450 = vpack.c.b16 %v4306, %v4302
      %v5451 = vpack.c.b16 %v4307, %v4303
      %v5452 = vpack.c.b16 %v4308, %v4304
      %v5453 = vpack.c.b16 %v4313, %v4309
      %v5454 = vpack.c.b16 %v4314, %v4310
      %v5455 = vpack.c.b16 %v4315, %v4311
      %v5456 = vpack.c.b16 %v4316, %v4312
      %v5457 = vpack.c.b16 %v4321, %v4317
      %v5458 = vpack.c.b16 %v4322, %v4318
      %v5459 = vpack.c.b16 %v4323, %v4319
      %v5460 = vpack.c.b16 %v4324, %v4320
      %v5461 = vpack.c.b16 %v4329, %v4325
      %v5462 = vpack.c.b16 %v4330, %v4326
      %v5463 = vpack.c.b16 %v4331, %v4327
      %v5464 = vpack.c.b16 %v4332, %v4328
      %v5465 = vpack.c.b16 %v4337, %v4333
      %v5466 = vpack.c.b16 %v4338, %v4334
      %v5467 = vpack.c.b16 %v4339, %v4335
      %v5468 = vpack.c.b16 %v4340, %v4336
      %v5469 = vpack.c.b16 %v4345, %v4341
      %v5470 = vpack.c.b16 %v4346, %v4342
      %v5471 = vpack.c.b16 %v4347, %v4343
      %v5472 = vpack.c.b16 %v4348, %v4344
      %v5473 = vpack.c.b16 %v4353, %v4349
      %v5474 = vpack.c.b16 %v4354, %v4350
      %v5475 = vpack.c.b16 %v4355, %v4351
      %v5476 = vpack.c.b16 %v4356, %v4352
      %v5477 = vpack.c.b16 %v4361, %v4357
      %v5478 = vpack.c.b16 %v4362, %v4358
      %v5479 = vpack.c.b16 %v4363, %v4359
      %v5480 = vpack.c.b16 %v4364, %v4360
      %v5481 = vpack.c.b16 %v4369, %v4365
      %v5482 = vpack.c.b16 %v4370, %v4366
      %v5483 = vpack.c.b16 %v4371, %v4367
      %v5484 = vpack.c.b16 %v4372, %v4368
      %v5485 = vpack.c.b16 %v4377, %v4373
      %v5486 = vpack.c.b16 %v4378, %v4374
      %v5487 = vpack.c.b16 %v4379, %v4375
      %v5488 = vpack.c.b16 %v4380, %v4376
      %v5489 = vpack.c.b16 %v4385, %v4381
      %v5490 = vpack.c.b16 %v4386, %v4382
      %v5491 = vpack.c.b16 %v4387, %v4383
      %v5492 = vpack.c.b16 %v4388, %v4384
      %v5493 = vpack.c.b16 %v4393, %v4389
      %v5494 = vpack.c.b16 %v4394, %v4390
      %v5495 = vpack.c.b16 %v4395, %v4391
      %v5496 = vpack.c.b16 %v4396, %v4392
      %v5497 = vpack.c.b16 %v4401, %v4397
      %v5498 = vpack.c.b16 %v4402, %v4398
      %v5499 = vpack.c.b16 %v4403, %v4399
      %v5500 = vpack.c.b16 %v4404, %v4400
      %v5501 = vpack.c.b16 %v4409, %v4405
      %v5502 = vpack.c.b16 %v4410, %v4406
      %v5503 = vpack.c.b16 %v4411, %v4407
      %v5504 = vpack.c.b16 %v4412, %v4408
      %v5505 = vpack.c.b16 %v4417, %v4413
      %v5506 = vpack.c.b16 %v4418, %v4414
      %v5507 = vpack.c.b16 %v4419, %v4415
      %v5508 = vpack.c.b16 %v4420, %v4416
      %v5509 = vpack.c.b16 %v4425, %v4421
      %v5510 = vpack.c.b16 %v4426, %v4422
      %v5511 = vpack.c.b16 %v4427, %v4423
      %v5512 = vpack.c.b16 %v4428, %v4424
      %v5513 = vpack.c.b16 %v4433, %v4429
      %v5514 = vpack.c.b16 %v4434, %v4430
      %v5515 = vpack.c.b16 %v4435, %v4431
      %v5516 = vpack.c.b16 %v4436, %v4432
      %v5517 = vpack.c.b16 %v4441, %v4437
      %v5518 = vpack.c.b16 %v4442, %v4438
      %v5519 = vpack.c.b16 %v4443, %v4439
      %v5520 = vpack.c.b16 %v4444, %v4440
      %v5521 = vpack.c.b16 %v4449, %v4445
      %v5522 = vpack.c.b16 %v4450, %v4446
      %v5523 = vpack.c.b16 %v4451, %v4447
      %v5524 = vpack.c.b16 %v4452, %v4448
      %v5525 = vpack.c.b16 %v4457, %v4453
      %v5526 = vpack.c.b16 %v4458, %v4454
      %v5527 = vpack.c.b16 %v4459, %v4455
      %v5528 = vpack.c.b16 %v4460, %v4456
      %v5529 = vpack.c.b16 %v4465, %v4461
      %v5530 = vpack.c.b16 %v4466, %v4462
      %v5531 = vpack.c.b16 %v4467, %v4463
      %v5532 = vpack.c.b16 %v4468, %v4464
      %v5533 = vpack.c.b16 %v4473, %v4469
      %v5534 = vpack.c.b16 %v4474, %v4470
      %v5535 = vpack.c.b16 %v4475, %v4471
      %v5536 = vpack.c.b16 %v4476, %v4472
      %v5537 = vpack.c.b16 %v4481, %v4477
      %v5538 = vpack.c.b16 %v4482, %v4478
      %v5539 = vpack.c.b16 %v4483, %v4479
      %v5540 = vpack.c.b16 %v4484, %v4480
      %v5541 = vpack.c.b16 %v4489, %v4485
      %v5542 = vpack.c.b16 %v4490, %v4486
      %v5543 = vpack.c.b16 %v4491, %v4487
      %v5544 = vpack.c.b16 %v4492, %v4488
      %v5545 = vpack.c.b16 %v4497, %v4493
      %v5546 = vpack.c.b16 %v4498, %v4494
      %v5547 = vpack.c.b16 %v4499, %v4495
      %v5548 = vpack.c.b16 %v4500, %v4496
      %v5549 = vpack.c.b16 %v4505, %v4501
      %v5550 = vpack.c.b16 %v4506, %v4502
      %v5551 = vpack.c.b16 %v4507, %v4503
      %v5552 = vpack.c.b16 %v4508, %v4504
      %v5553 = vpack.c.b16 %v4513, %v4509
      %v5554 = vpack.c.b16 %v4514, %v4510
      %v5555 = vpack.c.b16 %v4515, %v4511
      %v5556 = vpack.c.b16 %v4516, %v4512
      %v5557 = vpack.c.b16 %v4521, %v4517
      %v5558 = vpack.c.b16 %v4522, %v4518
      %v5559 = vpack.c.b16 %v4523, %v4519
      %v5560 = vpack.c.b16 %v4524, %v4520
      %v5561 = vpack.c.b16 %v4529, %v4525
      %v5562 = vpack.c.b16 %v4530, %v4526
      %v5563 = vpack.c.b16 %v4531, %v4527
      %v5564 = vpack.c.b16 %v4532, %v4528
      %v5565 = vpack.c.b16 %v4537, %v4533
      %v5566 = vpack.c.b16 %v4538, %v4534
      %v5567 = vpack.c.b16 %v4539, %v4535
      %v5568 = vpack.c.b16 %v4540, %v4536
      %v5569 = vpack.c.b16 %v4545, %v4541
      %v5570 = vpack.c.b16 %v4546, %v4542
      %v5571 = vpack.c.b16 %v4547, %v4543
      %v5572 = vpack.c.b16 %v4548, %v4544
      %6597 = vmatprep.subr.bf16.mxu0 %v4578
      %6598 = vmatpush1.bf16.msra.mxu0 %v4577
      %6599 = vmatprep.subr.bf16.mxu0 %v4574
      %6600 = vmatpush1.bf16.msra.mxu0 %v4573
      %6601 = vmatprep.subr.bf16.mxu0 %v4570
      %6602 = vmatpush1.bf16.msra.mxu0 %v4569
      %6603 = vmatprep.subr.bf16.mxu0 %v4566
      %6604 = vmatpush1.bf16.msra.mxu0 %v4565
      %6605 = vmatprep.subr.bf16.mxu0 %v4562
      %6606 = vmatpush1.bf16.msra.mxu0 %v4561
      %6607 = vmatprep.subr.bf16.mxu0 %v4558
      %6608 = vmatpush1.bf16.msra.mxu0 %v4557
      %6609 = vmatprep.subr.bf16.mxu0 %v4554
      %6610 = vmatpush1.bf16.msra.mxu0 %v4553
      %6611 = vmatprep.subr.bf16.mxu0 %v4550
      %6612 = vmatpush1.bf16.msra.mxu0 %v4549
      %6613 = vmatprep.subr.bf16.mxu0 %v4610
      %6614 = vmatpush2.bf16.msra.mxu0 %v4609
      %6615 = vmatprep.subr.bf16.mxu0 %v4606
      %6616 = vmatpush2.bf16.msra.mxu0 %v4605
      %6617 = vmatprep.subr.bf16.mxu0 %v4602
      %6618 = vmatpush2.bf16.msra.mxu0 %v4601
      %6619 = vmatprep.subr.bf16.mxu0 %v4598
      %6620 = vmatpush2.bf16.msra.mxu0 %v4597
      %6621 = vmatprep.subr.bf16.mxu0 %v4594
      %6622 = vmatpush2.bf16.msra.mxu0 %v4593
      %6623 = vmatprep.subr.bf16.mxu0 %v4590
      %6624 = vmatpush2.bf16.msra.mxu0 %v4589
      %6625 = vmatprep.subr.bf16.mxu0 %v4586
      %6626 = vmatpush2.bf16.msra.mxu0 %v4585
      %6627 = vmatprep.subr.bf16.mxu0 %v4582
      %6628 = vmatpush2.bf16.msra.mxu0 %v4581
      %6629 = vmatprep.mubr.bf16.mxu0 %v400
      %6630 = vmatmul.mubr.bf16.gmra.mxu0 %v399
      %v6631 = vpop.f32.mrf.mxu0
      %v6632 = vadd.f32 %v1460, %v6631
      %v6633 = vpop.f32.mrf.mxu0
      %v6634 = vadd.f32 %v1464, %v6633
      %v6635 = vpop.f32.mrf.mxu0
      %v6636 = vpop.f32.mrf.mxu0
      %6637 = vdwg.mxu0
      %6638 = vmatprep.subr.bf16.mxu0 %v4642
      %6639 = vmatpush1.bf16.msra.mxu0 %v4641
      %6640 = vmatprep.subr.bf16.mxu0 %v4638
      %6641 = vmatpush1.bf16.msra.mxu0 %v4637
      %6642 = vmatprep.subr.bf16.mxu0 %v4634
      %6643 = vmatpush1.bf16.msra.mxu0 %v4633
      %6644 = vmatprep.subr.bf16.mxu0 %v4630
      %6645 = vmatpush1.bf16.msra.mxu0 %v4629
      %6646 = vmatprep.subr.bf16.mxu0 %v4626
      %6647 = vmatpush1.bf16.msra.mxu0 %v4625
      %6648 = vmatprep.subr.bf16.mxu0 %v4622
      %6649 = vmatpush1.bf16.msra.mxu0 %v4621
      %6650 = vmatprep.subr.bf16.mxu0 %v4618
      %6651 = vmatpush1.bf16.msra.mxu0 %v4617
      %6652 = vmatprep.subr.bf16.mxu0 %v4614
      %6653 = vmatpush1.bf16.msra.mxu0 %v4613
      %6654 = vmatprep.subr.bf16.mxu0 %v4674
      %6655 = vmatpush2.bf16.msra.mxu0 %v4673
      %6656 = vmatprep.subr.bf16.mxu0 %v4670
      %6657 = vmatpush2.bf16.msra.mxu0 %v4669
      %6658 = vmatprep.subr.bf16.mxu0 %v4666
      %6659 = vmatpush2.bf16.msra.mxu0 %v4665
      %6660 = vmatprep.subr.bf16.mxu0 %v4662
      %6661 = vmatpush2.bf16.msra.mxu0 %v4661
      %6662 = vmatprep.subr.bf16.mxu0 %v4658
      %6663 = vmatpush2.bf16.msra.mxu0 %v4657
      %6664 = vmatprep.subr.bf16.mxu0 %v4654
      %6665 = vmatpush2.bf16.msra.mxu0 %v4653
      %6666 = vmatprep.subr.bf16.mxu0 %v4650
      %6667 = vmatpush2.bf16.msra.mxu0 %v4649
      %6668 = vmatprep.subr.bf16.mxu0 %v4646
      %6669 = vmatpush2.bf16.msra.mxu0 %v4645
      %6670 = vmatprep.mubr.bf16.mxu0 %v402
      %6671 = vmatmul.mubr.bf16.gmra.mxu0 %v401
      %v6672 = vpop.f32.mrf.mxu0
      %v6673 = vadd.f32 %v6632, %v6672
      %v6674 = vpop.f32.mrf.mxu0
      %v6675 = vadd.f32 %v6634, %v6674
      %v6676 = vpop.f32.mrf.mxu0
      %v6677 = vpop.f32.mrf.mxu0
      %6678 = vdwg.mxu0
      %6679 = vmatprep.subr.bf16.mxu0 %v4706
      %6680 = vmatpush1.bf16.msra.mxu0 %v4705
      %6681 = vmatprep.subr.bf16.mxu0 %v4702
      %6682 = vmatpush1.bf16.msra.mxu0 %v4701
      %6683 = vmatprep.subr.bf16.mxu0 %v4698
      %6684 = vmatpush1.bf16.msra.mxu0 %v4697
      %6685 = vmatprep.subr.bf16.mxu0 %v4694
      %6686 = vmatpush1.bf16.msra.mxu0 %v4693
      %6687 = vmatprep.subr.bf16.mxu0 %v4690
      %6688 = vmatpush1.bf16.msra.mxu0 %v4689
      %6689 = vmatprep.subr.bf16.mxu0 %v4686
      %6690 = vmatpush1.bf16.msra.mxu0 %v4685
      %6691 = vmatprep.subr.bf16.mxu0 %v4682
      %6692 = vmatpush1.bf16.msra.mxu0 %v4681
      %6693 = vmatprep.subr.bf16.mxu0 %v4678
      %6694 = vmatpush1.bf16.msra.mxu0 %v4677
      %6695 = vmatprep.subr.bf16.mxu0 %v4738
      %6696 = vmatpush2.bf16.msra.mxu0 %v4737
      %6697 = vmatprep.subr.bf16.mxu0 %v4734
      %6698 = vmatpush2.bf16.msra.mxu0 %v4733
      %6699 = vmatprep.subr.bf16.mxu0 %v4730
      %6700 = vmatpush2.bf16.msra.mxu0 %v4729
      %6701 = vmatprep.subr.bf16.mxu0 %v4726
      %6702 = vmatpush2.bf16.msra.mxu0 %v4725
      %6703 = vmatprep.subr.bf16.mxu0 %v4722
      %6704 = vmatpush2.bf16.msra.mxu0 %v4721
      %6705 = vmatprep.subr.bf16.mxu0 %v4718
      %6706 = vmatpush2.bf16.msra.mxu0 %v4717
      %6707 = vmatprep.subr.bf16.mxu0 %v4714
      %6708 = vmatpush2.bf16.msra.mxu0 %v4713
      %6709 = vmatprep.subr.bf16.mxu0 %v4710
      %6710 = vmatpush2.bf16.msra.mxu0 %v4709
      %6711 = vmatprep.mubr.bf16.mxu0 %v404
      %6712 = vmatmul.mubr.bf16.gmra.mxu0 %v403
      %v6713 = vpop.f32.mrf.mxu0
      %v6714 = vadd.f32 %v6673, %v6713
      %v6715 = vpop.f32.mrf.mxu0
      %v6716 = vadd.f32 %v6675, %v6715
      %v6717 = vpop.f32.mrf.mxu0
      %v6718 = vpop.f32.mrf.mxu0
      %6719 = vdwg.mxu0
      %6720 = vmatprep.subr.bf16.mxu0 %v4770
      %6721 = vmatpush1.bf16.msra.mxu0 %v4769
      %6722 = vmatprep.subr.bf16.mxu0 %v4766
      %6723 = vmatpush1.bf16.msra.mxu0 %v4765
      %6724 = vmatprep.subr.bf16.mxu0 %v4762
      %6725 = vmatpush1.bf16.msra.mxu0 %v4761
      %6726 = vmatprep.subr.bf16.mxu0 %v4758
      %6727 = vmatpush1.bf16.msra.mxu0 %v4757
      %6728 = vmatprep.subr.bf16.mxu0 %v4754
      %6729 = vmatpush1.bf16.msra.mxu0 %v4753
      %6730 = vmatprep.subr.bf16.mxu0 %v4750
      %6731 = vmatpush1.bf16.msra.mxu0 %v4749
      %6732 = vmatprep.subr.bf16.mxu0 %v4746
      %6733 = vmatpush1.bf16.msra.mxu0 %v4745
      %6734 = vmatprep.subr.bf16.mxu0 %v4742
      %6735 = vmatpush1.bf16.msra.mxu0 %v4741
      %6736 = vmatprep.subr.bf16.mxu0 %v4802
      %6737 = vmatpush2.bf16.msra.mxu0 %v4801
      %6738 = vmatprep.subr.bf16.mxu0 %v4798
      %6739 = vmatpush2.bf16.msra.mxu0 %v4797
      %6740 = vmatprep.subr.bf16.mxu0 %v4794
      %6741 = vmatpush2.bf16.msra.mxu0 %v4793
      %6742 = vmatprep.subr.bf16.mxu0 %v4790
      %6743 = vmatpush2.bf16.msra.mxu0 %v4789
      %6744 = vmatprep.subr.bf16.mxu0 %v4786
      %6745 = vmatpush2.bf16.msra.mxu0 %v4785
      %6746 = vmatprep.subr.bf16.mxu0 %v4782
      %6747 = vmatpush2.bf16.msra.mxu0 %v4781
      %6748 = vmatprep.subr.bf16.mxu0 %v4778
      %6749 = vmatpush2.bf16.msra.mxu0 %v4777
      %6750 = vmatprep.subr.bf16.mxu0 %v4774
      %6751 = vmatpush2.bf16.msra.mxu0 %v4773
      %6752 = vmatprep.mubr.bf16.mxu0 %v406
      %6753 = vmatmul.mubr.bf16.gmra.mxu0 %v405
      %v6754 = vpop.f32.mrf.mxu0
      %v6755 = vadd.f32 %v6714, %v6754
      %v6756 = vpop.f32.mrf.mxu0
      %v6757 = vadd.f32 %v6716, %v6756
      %v6758 = vpop.f32.mrf.mxu0
      %v6759 = vpop.f32.mrf.mxu0
      %6760 = vdwg.mxu0
      %6761 = vmatprep.subr.bf16.mxu0 %v4834
      %6762 = vmatpush1.bf16.msra.mxu0 %v4833
      %6763 = vmatprep.subr.bf16.mxu0 %v4830
      %6764 = vmatpush1.bf16.msra.mxu0 %v4829
      %6765 = vmatprep.subr.bf16.mxu0 %v4826
      %6766 = vmatpush1.bf16.msra.mxu0 %v4825
      %6767 = vmatprep.subr.bf16.mxu0 %v4822
      %6768 = vmatpush1.bf16.msra.mxu0 %v4821
      %6769 = vmatprep.subr.bf16.mxu0 %v4818
      %6770 = vmatpush1.bf16.msra.mxu0 %v4817
      %6771 = vmatprep.subr.bf16.mxu0 %v4814
      %6772 = vmatpush1.bf16.msra.mxu0 %v4813
      %6773 = vmatprep.subr.bf16.mxu0 %v4810
      %6774 = vmatpush1.bf16.msra.mxu0 %v4809
      %6775 = vmatprep.subr.bf16.mxu0 %v4806
      %6776 = vmatpush1.bf16.msra.mxu0 %v4805
      %6777 = vmatprep.subr.bf16.mxu0 %v4866
      %6778 = vmatpush2.bf16.msra.mxu0 %v4865
      %6779 = vmatprep.subr.bf16.mxu0 %v4862
      %6780 = vmatpush2.bf16.msra.mxu0 %v4861
      %6781 = vmatprep.subr.bf16.mxu0 %v4858
      %6782 = vmatpush2.bf16.msra.mxu0 %v4857
      %6783 = vmatprep.subr.bf16.mxu0 %v4854
      %6784 = vmatpush2.bf16.msra.mxu0 %v4853
      %6785 = vmatprep.subr.bf16.mxu0 %v4850
      %6786 = vmatpush2.bf16.msra.mxu0 %v4849
      %6787 = vmatprep.subr.bf16.mxu0 %v4846
      %6788 = vmatpush2.bf16.msra.mxu0 %v4845
      %6789 = vmatprep.subr.bf16.mxu0 %v4842
      %6790 = vmatpush2.bf16.msra.mxu0 %v4841
      %6791 = vmatprep.subr.bf16.mxu0 %v4838
      %6792 = vmatpush2.bf16.msra.mxu0 %v4837
      %6793 = vmatprep.mubr.bf16.mxu0 %v408
      %6794 = vmatmul.mubr.bf16.gmra.mxu0 %v407
      %v6795 = vpop.f32.mrf.mxu0
      %v6796 = vadd.f32 %v6755, %v6795
      %v6797 = vpop.f32.mrf.mxu0
      %v6798 = vadd.f32 %v6757, %v6797
      %v6799 = vpop.f32.mrf.mxu0
      %v6800 = vpop.f32.mrf.mxu0
      %6801 = vdwg.mxu0
      %6802 = vmatprep.subr.bf16.mxu0 %v4898
      %6803 = vmatpush1.bf16.msra.mxu0 %v4897
      %6804 = vmatprep.subr.bf16.mxu0 %v4894
      %6805 = vmatpush1.bf16.msra.mxu0 %v4893
      %6806 = vmatprep.subr.bf16.mxu0 %v4890
      %6807 = vmatpush1.bf16.msra.mxu0 %v4889
      %6808 = vmatprep.subr.bf16.mxu0 %v4886
      %6809 = vmatpush1.bf16.msra.mxu0 %v4885
      %6810 = vmatprep.subr.bf16.mxu0 %v4882
      %6811 = vmatpush1.bf16.msra.mxu0 %v4881
      %6812 = vmatprep.subr.bf16.mxu0 %v4878
      %6813 = vmatpush1.bf16.msra.mxu0 %v4877
      %6814 = vmatprep.subr.bf16.mxu0 %v4874
      %6815 = vmatpush1.bf16.msra.mxu0 %v4873
      %6816 = vmatprep.subr.bf16.mxu0 %v4870
      %6817 = vmatpush1.bf16.msra.mxu0 %v4869
      %6818 = vmatprep.subr.bf16.mxu0 %v4930
      %6819 = vmatpush2.bf16.msra.mxu0 %v4929
      %6820 = vmatprep.subr.bf16.mxu0 %v4926
      %6821 = vmatpush2.bf16.msra.mxu0 %v4925
      %6822 = vmatprep.subr.bf16.mxu0 %v4922
      %6823 = vmatpush2.bf16.msra.mxu0 %v4921
      %6824 = vmatprep.subr.bf16.mxu0 %v4918
      %6825 = vmatpush2.bf16.msra.mxu0 %v4917
      %6826 = vmatprep.subr.bf16.mxu0 %v4914
      %6827 = vmatpush2.bf16.msra.mxu0 %v4913
      %6828 = vmatprep.subr.bf16.mxu0 %v4910
      %6829 = vmatpush2.bf16.msra.mxu0 %v4909
      %6830 = vmatprep.subr.bf16.mxu0 %v4906
      %6831 = vmatpush2.bf16.msra.mxu0 %v4905
      %6832 = vmatprep.subr.bf16.mxu0 %v4902
      %6833 = vmatpush2.bf16.msra.mxu0 %v4901
      %6834 = vmatprep.mubr.bf16.mxu0 %v410
      %6835 = vmatmul.mubr.bf16.gmra.mxu0 %v409
      %v6836 = vpop.f32.mrf.mxu0
      %v6837 = vadd.f32 %v6796, %v6836
      %v6838 = vpop.f32.mrf.mxu0
      %v6839 = vadd.f32 %v6798, %v6838
      %v6840 = vpop.f32.mrf.mxu0
      %v6841 = vpop.f32.mrf.mxu0
      %6842 = vdwg.mxu0
      %6843 = vmatprep.subr.bf16.mxu0 %v4962
      %6844 = vmatpush1.bf16.msra.mxu0 %v4961
      %6845 = vmatprep.subr.bf16.mxu0 %v4958
      %6846 = vmatpush1.bf16.msra.mxu0 %v4957
      %6847 = vmatprep.subr.bf16.mxu0 %v4954
      %6848 = vmatpush1.bf16.msra.mxu0 %v4953
      %6849 = vmatprep.subr.bf16.mxu0 %v4950
      %6850 = vmatpush1.bf16.msra.mxu0 %v4949
      %6851 = vmatprep.subr.bf16.mxu0 %v4946
      %6852 = vmatpush1.bf16.msra.mxu0 %v4945
      %6853 = vmatprep.subr.bf16.mxu0 %v4942
      %6854 = vmatpush1.bf16.msra.mxu0 %v4941
      %6855 = vmatprep.subr.bf16.mxu0 %v4938
      %6856 = vmatpush1.bf16.msra.mxu0 %v4937
      %6857 = vmatprep.subr.bf16.mxu0 %v4934
      %6858 = vmatpush1.bf16.msra.mxu0 %v4933
      %6859 = vmatprep.subr.bf16.mxu0 %v4994
      %6860 = vmatpush2.bf16.msra.mxu0 %v4993
      %6861 = vmatprep.subr.bf16.mxu0 %v4990
      %6862 = vmatpush2.bf16.msra.mxu0 %v4989
      %6863 = vmatprep.subr.bf16.mxu0 %v4986
      %6864 = vmatpush2.bf16.msra.mxu0 %v4985
      %6865 = vmatprep.subr.bf16.mxu0 %v4982
      %6866 = vmatpush2.bf16.msra.mxu0 %v4981
      %6867 = vmatprep.subr.bf16.mxu0 %v4978
      %6868 = vmatpush2.bf16.msra.mxu0 %v4977
      %6869 = vmatprep.subr.bf16.mxu0 %v4974
      %6870 = vmatpush2.bf16.msra.mxu0 %v4973
      %6871 = vmatprep.subr.bf16.mxu0 %v4970
      %6872 = vmatpush2.bf16.msra.mxu0 %v4969
      %6873 = vmatprep.subr.bf16.mxu0 %v4966
      %6874 = vmatpush2.bf16.msra.mxu0 %v4965
      %6875 = vmatprep.mubr.bf16.mxu0 %v412
      %6876 = vmatmul.mubr.bf16.gmra.mxu0 %v411
      %v6877 = vpop.f32.mrf.mxu0
      %v6878 = vadd.f32 %v6837, %v6877
      %v6879 = vpop.f32.mrf.mxu0
      %v6880 = vadd.f32 %v6839, %v6879
      %v6881 = vpop.f32.mrf.mxu0
      %v6882 = vpop.f32.mrf.mxu0
      %6883 = vdwg.mxu0
      %6884 = vmatprep.subr.bf16.mxu0 %v5026
      %6885 = vmatpush1.bf16.msra.mxu0 %v5025
      %6886 = vmatprep.subr.bf16.mxu0 %v5022
      %6887 = vmatpush1.bf16.msra.mxu0 %v5021
      %6888 = vmatprep.subr.bf16.mxu0 %v5018
      %6889 = vmatpush1.bf16.msra.mxu0 %v5017
      %6890 = vmatprep.subr.bf16.mxu0 %v5014
      %6891 = vmatpush1.bf16.msra.mxu0 %v5013
      %6892 = vmatprep.subr.bf16.mxu0 %v5010
      %6893 = vmatpush1.bf16.msra.mxu0 %v5009
      %6894 = vmatprep.subr.bf16.mxu0 %v5006
      %6895 = vmatpush1.bf16.msra.mxu0 %v5005
      %6896 = vmatprep.subr.bf16.mxu0 %v5002
      %6897 = vmatpush1.bf16.msra.mxu0 %v5001
      %6898 = vmatprep.subr.bf16.mxu0 %v4998
      %6899 = vmatpush1.bf16.msra.mxu0 %v4997
      %6900 = vmatprep.subr.bf16.mxu0 %v5058
      %6901 = vmatpush2.bf16.msra.mxu0 %v5057
      %6902 = vmatprep.subr.bf16.mxu0 %v5054
      %6903 = vmatpush2.bf16.msra.mxu0 %v5053
      %6904 = vmatprep.subr.bf16.mxu0 %v5050
      %6905 = vmatpush2.bf16.msra.mxu0 %v5049
      %6906 = vmatprep.subr.bf16.mxu0 %v5046
      %6907 = vmatpush2.bf16.msra.mxu0 %v5045
      %6908 = vmatprep.subr.bf16.mxu0 %v5042
      %6909 = vmatpush2.bf16.msra.mxu0 %v5041
      %6910 = vmatprep.subr.bf16.mxu0 %v5038
      %6911 = vmatpush2.bf16.msra.mxu0 %v5037
      %6912 = vmatprep.subr.bf16.mxu0 %v5034
      %6913 = vmatpush2.bf16.msra.mxu0 %v5033
      %6914 = vmatprep.subr.bf16.mxu0 %v5030
      %6915 = vmatpush2.bf16.msra.mxu0 %v5029
      %6916 = vmatprep.mubr.bf16.mxu0 %v414
      %6917 = vmatmul.mubr.bf16.gmra.mxu0 %v413
      %v6918 = vpop.f32.mrf.mxu0
      %v6919 = vadd.f32 %v6878, %v6918
      %v6920 = vpop.f32.mrf.mxu0
      %v6921 = vadd.f32 %v6880, %v6920
      %v6922 = vpop.f32.mrf.mxu0
      %v6923 = vpop.f32.mrf.mxu0
      %6924 = vdwg.mxu0
      %6925 = vmatprep.subr.bf16.mxu0 %v5090
      %6926 = vmatpush1.bf16.msra.mxu0 %v5089
      %6927 = vmatprep.subr.bf16.mxu0 %v5086
      %6928 = vmatpush1.bf16.msra.mxu0 %v5085
      %6929 = vmatprep.subr.bf16.mxu0 %v5082
      %6930 = vmatpush1.bf16.msra.mxu0 %v5081
      %6931 = vmatprep.subr.bf16.mxu0 %v5078
      %6932 = vmatpush1.bf16.msra.mxu0 %v5077
      %6933 = vmatprep.subr.bf16.mxu0 %v5074
      %6934 = vmatpush1.bf16.msra.mxu0 %v5073
      %6935 = vmatprep.subr.bf16.mxu0 %v5070
      %6936 = vmatpush1.bf16.msra.mxu0 %v5069
      %6937 = vmatprep.subr.bf16.mxu0 %v5066
      %6938 = vmatpush1.bf16.msra.mxu0 %v5065
      %6939 = vmatprep.subr.bf16.mxu0 %v5062
      %6940 = vmatpush1.bf16.msra.mxu0 %v5061
      %6941 = vmatprep.subr.bf16.mxu0 %v5122
      %6942 = vmatpush2.bf16.msra.mxu0 %v5121
      %6943 = vmatprep.subr.bf16.mxu0 %v5118
      %6944 = vmatpush2.bf16.msra.mxu0 %v5117
      %6945 = vmatprep.subr.bf16.mxu0 %v5114
      %6946 = vmatpush2.bf16.msra.mxu0 %v5113
      %6947 = vmatprep.subr.bf16.mxu0 %v5110
      %6948 = vmatpush2.bf16.msra.mxu0 %v5109
      %6949 = vmatprep.subr.bf16.mxu0 %v5106
      %6950 = vmatpush2.bf16.msra.mxu0 %v5105
      %6951 = vmatprep.subr.bf16.mxu0 %v5102
      %6952 = vmatpush2.bf16.msra.mxu0 %v5101
      %6953 = vmatprep.subr.bf16.mxu0 %v5098
      %6954 = vmatpush2.bf16.msra.mxu0 %v5097
      %6955 = vmatprep.subr.bf16.mxu0 %v5094
      %6956 = vmatpush2.bf16.msra.mxu0 %v5093
      %6957 = vmatprep.mubr.bf16.mxu0 %v416
      %6958 = vmatmul.mubr.bf16.gmra.mxu0 %v415
      %v6959 = vpop.f32.mrf.mxu0
      %v6960 = vadd.f32 %v6919, %v6959
      %v6961 = vpop.f32.mrf.mxu0
      %v6962 = vadd.f32 %v6921, %v6961
      %v6963 = vpop.f32.mrf.mxu0
      %v6964 = vpop.f32.mrf.mxu0
      %6965 = vdwg.mxu0
      %6966 = vmatprep.subr.bf16.mxu0 %v5154
      %6967 = vmatpush1.bf16.msra.mxu0 %v5153
      %6968 = vmatprep.subr.bf16.mxu0 %v5150
      %6969 = vmatpush1.bf16.msra.mxu0 %v5149
      %6970 = vmatprep.subr.bf16.mxu0 %v5146
      %6971 = vmatpush1.bf16.msra.mxu0 %v5145
      %6972 = vmatprep.subr.bf16.mxu0 %v5142
      %6973 = vmatpush1.bf16.msra.mxu0 %v5141
      %6974 = vmatprep.subr.bf16.mxu0 %v5138
      %6975 = vmatpush1.bf16.msra.mxu0 %v5137
      %6976 = vmatprep.subr.bf16.mxu0 %v5134
      %6977 = vmatpush1.bf16.msra.mxu0 %v5133
      %6978 = vmatprep.subr.bf16.mxu0 %v5130
      %6979 = vmatpush1.bf16.msra.mxu0 %v5129
      %6980 = vmatprep.subr.bf16.mxu0 %v5126
      %6981 = vmatpush1.bf16.msra.mxu0 %v5125
      %6982 = vmatprep.subr.bf16.mxu0 %v5186
      %6983 = vmatpush2.bf16.msra.mxu0 %v5185
      %6984 = vmatprep.subr.bf16.mxu0 %v5182
      %6985 = vmatpush2.bf16.msra.mxu0 %v5181
      %6986 = vmatprep.subr.bf16.mxu0 %v5178
      %6987 = vmatpush2.bf16.msra.mxu0 %v5177
      %6988 = vmatprep.subr.bf16.mxu0 %v5174
      %6989 = vmatpush2.bf16.msra.mxu0 %v5173
      %6990 = vmatprep.subr.bf16.mxu0 %v5170
      %6991 = vmatpush2.bf16.msra.mxu0 %v5169
      %6992 = vmatprep.subr.bf16.mxu0 %v5166
      %6993 = vmatpush2.bf16.msra.mxu0 %v5165
      %6994 = vmatprep.subr.bf16.mxu0 %v5162
      %6995 = vmatpush2.bf16.msra.mxu0 %v5161
      %6996 = vmatprep.subr.bf16.mxu0 %v5158
      %6997 = vmatpush2.bf16.msra.mxu0 %v5157
      %6998 = vmatprep.mubr.bf16.mxu0 %v418
      %6999 = vmatmul.mubr.bf16.gmra.mxu0 %v417
      %v7000 = vpop.f32.mrf.mxu0
      %v7001 = vadd.f32 %v6960, %v7000
      %v7002 = vpop.f32.mrf.mxu0
      %v7003 = vadd.f32 %v6962, %v7002
      %v7004 = vpop.f32.mrf.mxu0
      %v7005 = vpop.f32.mrf.mxu0
      %7006 = vdwg.mxu0
      %7007 = vmatprep.subr.bf16.mxu0 %v5218
      %7008 = vmatpush1.bf16.msra.mxu0 %v5217
      %7009 = vmatprep.subr.bf16.mxu0 %v5214
      %7010 = vmatpush1.bf16.msra.mxu0 %v5213
      %7011 = vmatprep.subr.bf16.mxu0 %v5210
      %7012 = vmatpush1.bf16.msra.mxu0 %v5209
      %7013 = vmatprep.subr.bf16.mxu0 %v5206
      %7014 = vmatpush1.bf16.msra.mxu0 %v5205
      %7015 = vmatprep.subr.bf16.mxu0 %v5202
      %7016 = vmatpush1.bf16.msra.mxu0 %v5201
      %7017 = vmatprep.subr.bf16.mxu0 %v5198
      %7018 = vmatpush1.bf16.msra.mxu0 %v5197
      %7019 = vmatprep.subr.bf16.mxu0 %v5194
      %7020 = vmatpush1.bf16.msra.mxu0 %v5193
      %7021 = vmatprep.subr.bf16.mxu0 %v5190
      %7022 = vmatpush1.bf16.msra.mxu0 %v5189
      %7023 = vmatprep.subr.bf16.mxu0 %v5250
      %7024 = vmatpush2.bf16.msra.mxu0 %v5249
      %7025 = vmatprep.subr.bf16.mxu0 %v5246
      %7026 = vmatpush2.bf16.msra.mxu0 %v5245
      %7027 = vmatprep.subr.bf16.mxu0 %v5242
      %7028 = vmatpush2.bf16.msra.mxu0 %v5241
      %7029 = vmatprep.subr.bf16.mxu0 %v5238
      %7030 = vmatpush2.bf16.msra.mxu0 %v5237
      %7031 = vmatprep.subr.bf16.mxu0 %v5234
      %7032 = vmatpush2.bf16.msra.mxu0 %v5233
      %7033 = vmatprep.subr.bf16.mxu0 %v5230
      %7034 = vmatpush2.bf16.msra.mxu0 %v5229
      %7035 = vmatprep.subr.bf16.mxu0 %v5226
      %7036 = vmatpush2.bf16.msra.mxu0 %v5225
      %7037 = vmatprep.subr.bf16.mxu0 %v5222
      %7038 = vmatpush2.bf16.msra.mxu0 %v5221
      %7039 = vmatprep.mubr.bf16.mxu0 %v420
      %7040 = vmatmul.mubr.bf16.gmra.mxu0 %v419
      %v7041 = vpop.f32.mrf.mxu0
      %v7042 = vadd.f32 %v7001, %v7041
      %v7043 = vpop.f32.mrf.mxu0
      %v7044 = vadd.f32 %v7003, %v7043
      %v7045 = vpop.f32.mrf.mxu0
      %v7046 = vpop.f32.mrf.mxu0
      %7047 = vdwg.mxu0
      %7048 = vmatprep.subr.bf16.mxu0 %v5282
      %7049 = vmatpush1.bf16.msra.mxu0 %v5281
      %7050 = vmatprep.subr.bf16.mxu0 %v5278
      %7051 = vmatpush1.bf16.msra.mxu0 %v5277
      %7052 = vmatprep.subr.bf16.mxu0 %v5274
      %7053 = vmatpush1.bf16.msra.mxu0 %v5273
      %7054 = vmatprep.subr.bf16.mxu0 %v5270
      %7055 = vmatpush1.bf16.msra.mxu0 %v5269
      %7056 = vmatprep.subr.bf16.mxu0 %v5266
      %7057 = vmatpush1.bf16.msra.mxu0 %v5265
      %7058 = vmatprep.subr.bf16.mxu0 %v5262
      %7059 = vmatpush1.bf16.msra.mxu0 %v5261
      %7060 = vmatprep.subr.bf16.mxu0 %v5258
      %7061 = vmatpush1.bf16.msra.mxu0 %v5257
      %7062 = vmatprep.subr.bf16.mxu0 %v5254
      %7063 = vmatpush1.bf16.msra.mxu0 %v5253
      %7064 = vmatprep.subr.bf16.mxu0 %v5314
      %7065 = vmatpush2.bf16.msra.mxu0 %v5313
      %7066 = vmatprep.subr.bf16.mxu0 %v5310
      %7067 = vmatpush2.bf16.msra.mxu0 %v5309
      %7068 = vmatprep.subr.bf16.mxu0 %v5306
      %7069 = vmatpush2.bf16.msra.mxu0 %v5305
      %7070 = vmatprep.subr.bf16.mxu0 %v5302
      %7071 = vmatpush2.bf16.msra.mxu0 %v5301
      %7072 = vmatprep.subr.bf16.mxu0 %v5298
      %7073 = vmatpush2.bf16.msra.mxu0 %v5297
      %7074 = vmatprep.subr.bf16.mxu0 %v5294
      %7075 = vmatpush2.bf16.msra.mxu0 %v5293
      %7076 = vmatprep.subr.bf16.mxu0 %v5290
      %7077 = vmatpush2.bf16.msra.mxu0 %v5289
      %7078 = vmatprep.subr.bf16.mxu0 %v5286
      %7079 = vmatpush2.bf16.msra.mxu0 %v5285
      %7080 = vmatprep.mubr.bf16.mxu0 %v422
      %7081 = vmatmul.mubr.bf16.gmra.mxu0 %v421
      %v7082 = vpop.f32.mrf.mxu0
      %v7083 = vadd.f32 %v7042, %v7082
      %v7084 = vpop.f32.mrf.mxu0
      %v7085 = vadd.f32 %v7044, %v7084
      %v7086 = vpop.f32.mrf.mxu0
      %v7087 = vpop.f32.mrf.mxu0
      %7088 = vdwg.mxu0
      %7089 = vmatprep.subr.bf16.mxu0 %v5346
      %7090 = vmatpush1.bf16.msra.mxu0 %v5345
      %7091 = vmatprep.subr.bf16.mxu0 %v5342
      %7092 = vmatpush1.bf16.msra.mxu0 %v5341
      %7093 = vmatprep.subr.bf16.mxu0 %v5338
      %7094 = vmatpush1.bf16.msra.mxu0 %v5337
      %7095 = vmatprep.subr.bf16.mxu0 %v5334
      %7096 = vmatpush1.bf16.msra.mxu0 %v5333
      %7097 = vmatprep.subr.bf16.mxu0 %v5330
      %7098 = vmatpush1.bf16.msra.mxu0 %v5329
      %7099 = vmatprep.subr.bf16.mxu0 %v5326
      %7100 = vmatpush1.bf16.msra.mxu0 %v5325
      %7101 = vmatprep.subr.bf16.mxu0 %v5322
      %7102 = vmatpush1.bf16.msra.mxu0 %v5321
      %7103 = vmatprep.subr.bf16.mxu0 %v5318
      %7104 = vmatpush1.bf16.msra.mxu0 %v5317
      %7105 = vmatprep.subr.bf16.mxu0 %v5378
      %7106 = vmatpush2.bf16.msra.mxu0 %v5377
      %7107 = vmatprep.subr.bf16.mxu0 %v5374
      %7108 = vmatpush2.bf16.msra.mxu0 %v5373
      %7109 = vmatprep.subr.bf16.mxu0 %v5370
      %7110 = vmatpush2.bf16.msra.mxu0 %v5369
      %7111 = vmatprep.subr.bf16.mxu0 %v5366
      %7112 = vmatpush2.bf16.msra.mxu0 %v5365
      %7113 = vmatprep.subr.bf16.mxu0 %v5362
      %7114 = vmatpush2.bf16.msra.mxu0 %v5361
      %7115 = vmatprep.subr.bf16.mxu0 %v5358
      %7116 = vmatpush2.bf16.msra.mxu0 %v5357
      %7117 = vmatprep.subr.bf16.mxu0 %v5354
      %7118 = vmatpush2.bf16.msra.mxu0 %v5353
      %7119 = vmatprep.subr.bf16.mxu0 %v5350
      %7120 = vmatpush2.bf16.msra.mxu0 %v5349
      %7121 = vmatprep.mubr.bf16.mxu0 %v424
      %7122 = vmatmul.mubr.bf16.gmra.mxu0 %v423
      %v7123 = vpop.f32.mrf.mxu0
      %v7124 = vadd.f32 %v7083, %v7123
      %v7125 = vpop.f32.mrf.mxu0
      %v7126 = vadd.f32 %v7085, %v7125
      %v7127 = vpop.f32.mrf.mxu0
      %v7128 = vpop.f32.mrf.mxu0
      %7129 = vdwg.mxu0
      %7130 = vmatprep.subr.bf16.mxu0 %v5410
      %7131 = vmatpush1.bf16.msra.mxu0 %v5409
      %7132 = vmatprep.subr.bf16.mxu0 %v5406
      %7133 = vmatpush1.bf16.msra.mxu0 %v5405
      %7134 = vmatprep.subr.bf16.mxu0 %v5402
      %7135 = vmatpush1.bf16.msra.mxu0 %v5401
      %7136 = vmatprep.subr.bf16.mxu0 %v5398
      %7137 = vmatpush1.bf16.msra.mxu0 %v5397
      %7138 = vmatprep.subr.bf16.mxu0 %v5394
      %7139 = vmatpush1.bf16.msra.mxu0 %v5393
      %7140 = vmatprep.subr.bf16.mxu0 %v5390
      %7141 = vmatpush1.bf16.msra.mxu0 %v5389
      %7142 = vmatprep.subr.bf16.mxu0 %v5386
      %7143 = vmatpush1.bf16.msra.mxu0 %v5385
      %7144 = vmatprep.subr.bf16.mxu0 %v5382
      %7145 = vmatpush1.bf16.msra.mxu0 %v5381
      %7146 = vmatprep.subr.bf16.mxu0 %v5442
      %7147 = vmatpush2.bf16.msra.mxu0 %v5441
      %7148 = vmatprep.subr.bf16.mxu0 %v5438
      %7149 = vmatpush2.bf16.msra.mxu0 %v5437
      %7150 = vmatprep.subr.bf16.mxu0 %v5434
      %7151 = vmatpush2.bf16.msra.mxu0 %v5433
      %7152 = vmatprep.subr.bf16.mxu0 %v5430
      %7153 = vmatpush2.bf16.msra.mxu0 %v5429
      %7154 = vmatprep.subr.bf16.mxu0 %v5426
      %7155 = vmatpush2.bf16.msra.mxu0 %v5425
      %7156 = vmatprep.subr.bf16.mxu0 %v5422
      %7157 = vmatpush2.bf16.msra.mxu0 %v5421
      %7158 = vmatprep.subr.bf16.mxu0 %v5418
      %7159 = vmatpush2.bf16.msra.mxu0 %v5417
      %7160 = vmatprep.subr.bf16.mxu0 %v5414
      %7161 = vmatpush2.bf16.msra.mxu0 %v5413
      %7162 = vmatprep.mubr.bf16.mxu0 %v426
      %7163 = vmatmul.mubr.bf16.gmra.mxu0 %v425
      %v7164 = vpop.f32.mrf.mxu0
      %v7165 = vadd.f32 %v7124, %v7164
      %v7166 = vpop.f32.mrf.mxu0
      %v7167 = vadd.f32 %v7126, %v7166
      %v7168 = vpop.f32.mrf.mxu0
      %v7169 = vpop.f32.mrf.mxu0
      %7170 = vdwg.mxu0
      %7171 = vmatprep.subr.bf16.mxu0 %v5474
      %7172 = vmatpush1.bf16.msra.mxu0 %v5473
      %7173 = vmatprep.subr.bf16.mxu0 %v5470
      %7174 = vmatpush1.bf16.msra.mxu0 %v5469
      %7175 = vmatprep.subr.bf16.mxu0 %v5466
      %7176 = vmatpush1.bf16.msra.mxu0 %v5465
      %7177 = vmatprep.subr.bf16.mxu0 %v5462
      %7178 = vmatpush1.bf16.msra.mxu0 %v5461
      %7179 = vmatprep.subr.bf16.mxu0 %v5458
      %7180 = vmatpush1.bf16.msra.mxu0 %v5457
      %7181 = vmatprep.subr.bf16.mxu0 %v5454
      %7182 = vmatpush1.bf16.msra.mxu0 %v5453
      %7183 = vmatprep.subr.bf16.mxu0 %v5450
      %7184 = vmatpush1.bf16.msra.mxu0 %v5449
      %7185 = vmatprep.subr.bf16.mxu0 %v5446
      %7186 = vmatpush1.bf16.msra.mxu0 %v5445
      %7187 = vmatprep.subr.bf16.mxu0 %v5506
      %7188 = vmatpush2.bf16.msra.mxu0 %v5505
      %7189 = vmatprep.subr.bf16.mxu0 %v5502
      %7190 = vmatpush2.bf16.msra.mxu0 %v5501
      %7191 = vmatprep.subr.bf16.mxu0 %v5498
      %7192 = vmatpush2.bf16.msra.mxu0 %v5497
      %7193 = vmatprep.subr.bf16.mxu0 %v5494
      %7194 = vmatpush2.bf16.msra.mxu0 %v5493
      %7195 = vmatprep.subr.bf16.mxu0 %v5490
      %7196 = vmatpush2.bf16.msra.mxu0 %v5489
      %7197 = vmatprep.subr.bf16.mxu0 %v5486
      %7198 = vmatpush2.bf16.msra.mxu0 %v5485
      %7199 = vmatprep.subr.bf16.mxu0 %v5482
      %7200 = vmatpush2.bf16.msra.mxu0 %v5481
      %7201 = vmatprep.subr.bf16.mxu0 %v5478
      %7202 = vmatpush2.bf16.msra.mxu0 %v5477
      %7203 = vmatprep.mubr.bf16.mxu0 %v428
      %7204 = vmatmul.mubr.bf16.gmra.mxu0 %v427
      %v7205 = vpop.f32.mrf.mxu0
      %v7206 = vadd.f32 %v7165, %v7205
      %v7207 = vpop.f32.mrf.mxu0
      %v7208 = vadd.f32 %v7167, %v7207
      %v7209 = vpop.f32.mrf.mxu0
      %v7210 = vpop.f32.mrf.mxu0
      %7211 = vdwg.mxu0
      %7212 = vmatprep.subr.bf16.mxu0 %v5538
      %7213 = vmatpush1.bf16.msra.mxu0 %v5537
      %7214 = vmatprep.subr.bf16.mxu0 %v5534
      %7215 = vmatpush1.bf16.msra.mxu0 %v5533
      %7216 = vmatprep.subr.bf16.mxu0 %v5530
      %7217 = vmatpush1.bf16.msra.mxu0 %v5529
      %7218 = vmatprep.subr.bf16.mxu0 %v5526
      %7219 = vmatpush1.bf16.msra.mxu0 %v5525
      %7220 = vmatprep.subr.bf16.mxu0 %v5522
      %7221 = vmatpush1.bf16.msra.mxu0 %v5521
      %7222 = vmatprep.subr.bf16.mxu0 %v5518
      %7223 = vmatpush1.bf16.msra.mxu0 %v5517
      %7224 = vmatprep.subr.bf16.mxu0 %v5514
      %7225 = vmatpush1.bf16.msra.mxu0 %v5513
      %7226 = vmatprep.subr.bf16.mxu0 %v5510
      %7227 = vmatpush1.bf16.msra.mxu0 %v5509
      %7228 = vmatprep.subr.bf16.mxu0 %v5570
      %7229 = vmatpush2.bf16.msra.mxu0 %v5569
      %7230 = vmatprep.subr.bf16.mxu0 %v5566
      %7231 = vmatpush2.bf16.msra.mxu0 %v5565
      %7232 = vmatprep.subr.bf16.mxu0 %v5562
      %7233 = vmatpush2.bf16.msra.mxu0 %v5561
      %7234 = vmatprep.subr.bf16.mxu0 %v5558
      %7235 = vmatpush2.bf16.msra.mxu0 %v5557
      %7236 = vmatprep.subr.bf16.mxu0 %v5554
      %7237 = vmatpush2.bf16.msra.mxu0 %v5553
      %7238 = vmatprep.subr.bf16.mxu0 %v5550
      %7239 = vmatpush2.bf16.msra.mxu0 %v5549
      %7240 = vmatprep.subr.bf16.mxu0 %v5546
      %7241 = vmatpush2.bf16.msra.mxu0 %v5545
      %7242 = vmatprep.subr.bf16.mxu0 %v5542
      %7243 = vmatpush2.bf16.msra.mxu0 %v5541
      %7244 = vmatprep.mubr.bf16.mxu0 %v430
      %7245 = vmatmul.mubr.bf16.gmra.mxu0 %v429
      %v7246 = vpop.f32.mrf.mxu0
      %v7247 = vadd.f32 %v7206, %v7246
      %v7248 = vpop.f32.mrf.mxu0
      %v7249 = vadd.f32 %v7208, %v7248
      %v7250 = vpop.f32.mrf.mxu0
      %v7251 = vpop.f32.mrf.mxu0
      %7252 = vdwg.mxu0
      %7253 = vmatprep.subr.bf16.mxu0 %v4580
      %7254 = vmatpush1.bf16.msra.mxu0 %v4579
      %7255 = vmatprep.subr.bf16.mxu0 %v4576
      %7256 = vmatpush1.bf16.msra.mxu0 %v4575
      %7257 = vmatprep.subr.bf16.mxu0 %v4572
      %7258 = vmatpush1.bf16.msra.mxu0 %v4571
      %7259 = vmatprep.subr.bf16.mxu0 %v4568
      %7260 = vmatpush1.bf16.msra.mxu0 %v4567
      %7261 = vmatprep.subr.bf16.mxu0 %v4564
      %7262 = vmatpush1.bf16.msra.mxu0 %v4563
      %7263 = vmatprep.subr.bf16.mxu0 %v4560
      %7264 = vmatpush1.bf16.msra.mxu0 %v4559
      %7265 = vmatprep.subr.bf16.mxu0 %v4556
      %7266 = vmatpush1.bf16.msra.mxu0 %v4555
      %7267 = vmatprep.subr.bf16.mxu0 %v4552
      %7268 = vmatpush1.bf16.msra.mxu0 %v4551
      %7269 = vmatprep.subr.bf16.mxu0 %v4612
      %7270 = vmatpush2.bf16.msra.mxu0 %v4611
      %7271 = vmatprep.subr.bf16.mxu0 %v4608
      %7272 = vmatpush2.bf16.msra.mxu0 %v4607
      %7273 = vmatprep.subr.bf16.mxu0 %v4604
      %7274 = vmatpush2.bf16.msra.mxu0 %v4603
      %7275 = vmatprep.subr.bf16.mxu0 %v4600
      %7276 = vmatpush2.bf16.msra.mxu0 %v4599
      %7277 = vmatprep.subr.bf16.mxu0 %v4596
      %7278 = vmatpush2.bf16.msra.mxu0 %v4595
      %7279 = vmatprep.subr.bf16.mxu0 %v4592
      %7280 = vmatpush2.bf16.msra.mxu0 %v4591
      %7281 = vmatprep.subr.bf16.mxu0 %v4588
      %7282 = vmatpush2.bf16.msra.mxu0 %v4587
      %7283 = vmatprep.subr.bf16.mxu0 %v4584
      %7284 = vmatpush2.bf16.msra.mxu0 %v4583
      %7285 = vmatprep.mubr.bf16.mxu0 %v400
      %7286 = vmatmul.mubr.bf16.gmra.mxu0 %v399
      %v7287 = vpop.f32.mrf.mxu0
      %v7288 = vadd.f32 %v1468, %v7287
      %v7289 = vpop.f32.mrf.mxu0
      %v7290 = vadd.f32 %v1472, %v7289
      %v7291 = vpop.f32.mrf.mxu0
      %v7292 = vpop.f32.mrf.mxu0
      %7293 = vdwg.mxu0
      %7294 = vmatprep.subr.bf16.mxu0 %v4644
      %7295 = vmatpush1.bf16.msra.mxu0 %v4643
      %7296 = vmatprep.subr.bf16.mxu0 %v4640
      %7297 = vmatpush1.bf16.msra.mxu0 %v4639
      %7298 = vmatprep.subr.bf16.mxu0 %v4636
      %7299 = vmatpush1.bf16.msra.mxu0 %v4635
      %7300 = vmatprep.subr.bf16.mxu0 %v4632
      %7301 = vmatpush1.bf16.msra.mxu0 %v4631
      %7302 = vmatprep.subr.bf16.mxu0 %v4628
      %7303 = vmatpush1.bf16.msra.mxu0 %v4627
      %7304 = vmatprep.subr.bf16.mxu0 %v4624
      %7305 = vmatpush1.bf16.msra.mxu0 %v4623
      %7306 = vmatprep.subr.bf16.mxu0 %v4620
      %7307 = vmatpush1.bf16.msra.mxu0 %v4619
      %7308 = vmatprep.subr.bf16.mxu0 %v4616
      %7309 = vmatpush1.bf16.msra.mxu0 %v4615
      %7310 = vmatprep.subr.bf16.mxu0 %v4676
      %7311 = vmatpush2.bf16.msra.mxu0 %v4675
      %7312 = vmatprep.subr.bf16.mxu0 %v4672
      %7313 = vmatpush2.bf16.msra.mxu0 %v4671
      %7314 = vmatprep.subr.bf16.mxu0 %v4668
      %7315 = vmatpush2.bf16.msra.mxu0 %v4667
      %7316 = vmatprep.subr.bf16.mxu0 %v4664
      %7317 = vmatpush2.bf16.msra.mxu0 %v4663
      %7318 = vmatprep.subr.bf16.mxu0 %v4660
      %7319 = vmatpush2.bf16.msra.mxu0 %v4659
      %7320 = vmatprep.subr.bf16.mxu0 %v4656
      %7321 = vmatpush2.bf16.msra.mxu0 %v4655
      %7322 = vmatprep.subr.bf16.mxu0 %v4652
      %7323 = vmatpush2.bf16.msra.mxu0 %v4651
      %7324 = vmatprep.subr.bf16.mxu0 %v4648
      %7325 = vmatpush2.bf16.msra.mxu0 %v4647
      %7326 = vmatprep.mubr.bf16.mxu0 %v402
      %7327 = vmatmul.mubr.bf16.gmra.mxu0 %v401
      %v7328 = vpop.f32.mrf.mxu0
      %v7329 = vadd.f32 %v7288, %v7328
      %v7330 = vpop.f32.mrf.mxu0
      %v7331 = vadd.f32 %v7290, %v7330
      %v7332 = vpop.f32.mrf.mxu0
      %v7333 = vpop.f32.mrf.mxu0
      %7334 = vdwg.mxu0
      %7335 = vmatprep.subr.bf16.mxu0 %v4708
      %7336 = vmatpush1.bf16.msra.mxu0 %v4707
      %7337 = vmatprep.subr.bf16.mxu0 %v4704
      %7338 = vmatpush1.bf16.msra.mxu0 %v4703
      %7339 = vmatprep.subr.bf16.mxu0 %v4700
      %7340 = vmatpush1.bf16.msra.mxu0 %v4699
      %7341 = vmatprep.subr.bf16.mxu0 %v4696
      %7342 = vmatpush1.bf16.msra.mxu0 %v4695
      %7343 = vmatprep.subr.bf16.mxu0 %v4692
      %7344 = vmatpush1.bf16.msra.mxu0 %v4691
      %7345 = vmatprep.subr.bf16.mxu0 %v4688
      %7346 = vmatpush1.bf16.msra.mxu0 %v4687
      %7347 = vmatprep.subr.bf16.mxu0 %v4684
      %7348 = vmatpush1.bf16.msra.mxu0 %v4683
      %7349 = vmatprep.subr.bf16.mxu0 %v4680
      %7350 = vmatpush1.bf16.msra.mxu0 %v4679
      %7351 = vmatprep.subr.bf16.mxu0 %v4740
      %7352 = vmatpush2.bf16.msra.mxu0 %v4739
      %7353 = vmatprep.subr.bf16.mxu0 %v4736
      %7354 = vmatpush2.bf16.msra.mxu0 %v4735
      %7355 = vmatprep.subr.bf16.mxu0 %v4732
      %7356 = vmatpush2.bf16.msra.mxu0 %v4731
      %7357 = vmatprep.subr.bf16.mxu0 %v4728
      %7358 = vmatpush2.bf16.msra.mxu0 %v4727
      %7359 = vmatprep.subr.bf16.mxu0 %v4724
      %7360 = vmatpush2.bf16.msra.mxu0 %v4723
      %7361 = vmatprep.subr.bf16.mxu0 %v4720
      %7362 = vmatpush2.bf16.msra.mxu0 %v4719
      %7363 = vmatprep.subr.bf16.mxu0 %v4716
      %7364 = vmatpush2.bf16.msra.mxu0 %v4715
      %7365 = vmatprep.subr.bf16.mxu0 %v4712
      %7366 = vmatpush2.bf16.msra.mxu0 %v4711
      %7367 = vmatprep.mubr.bf16.mxu0 %v404
      %7368 = vmatmul.mubr.bf16.gmra.mxu0 %v403
      %v7369 = vpop.f32.mrf.mxu0
      %v7370 = vadd.f32 %v7329, %v7369
      %v7371 = vpop.f32.mrf.mxu0
      %v7372 = vadd.f32 %v7331, %v7371
      %v7373 = vpop.f32.mrf.mxu0
      %v7374 = vpop.f32.mrf.mxu0
      %7375 = vdwg.mxu0
      %7376 = vmatprep.subr.bf16.mxu0 %v4772
      %7377 = vmatpush1.bf16.msra.mxu0 %v4771
      %7378 = vmatprep.subr.bf16.mxu0 %v4768
      %7379 = vmatpush1.bf16.msra.mxu0 %v4767
      %7380 = vmatprep.subr.bf16.mxu0 %v4764
      %7381 = vmatpush1.bf16.msra.mxu0 %v4763
      %7382 = vmatprep.subr.bf16.mxu0 %v4760
      %7383 = vmatpush1.bf16.msra.mxu0 %v4759
      %7384 = vmatprep.subr.bf16.mxu0 %v4756
      %7385 = vmatpush1.bf16.msra.mxu0 %v4755
      %7386 = vmatprep.subr.bf16.mxu0 %v4752
      %7387 = vmatpush1.bf16.msra.mxu0 %v4751
      %7388 = vmatprep.subr.bf16.mxu0 %v4748
      %7389 = vmatpush1.bf16.msra.mxu0 %v4747
      %7390 = vmatprep.subr.bf16.mxu0 %v4744
      %7391 = vmatpush1.bf16.msra.mxu0 %v4743
      %7392 = vmatprep.subr.bf16.mxu0 %v4804
      %7393 = vmatpush2.bf16.msra.mxu0 %v4803
      %7394 = vmatprep.subr.bf16.mxu0 %v4800
      %7395 = vmatpush2.bf16.msra.mxu0 %v4799
      %7396 = vmatprep.subr.bf16.mxu0 %v4796
      %7397 = vmatpush2.bf16.msra.mxu0 %v4795
      %7398 = vmatprep.subr.bf16.mxu0 %v4792
      %7399 = vmatpush2.bf16.msra.mxu0 %v4791
      %7400 = vmatprep.subr.bf16.mxu0 %v4788
      %7401 = vmatpush2.bf16.msra.mxu0 %v4787
      %7402 = vmatprep.subr.bf16.mxu0 %v4784
      %7403 = vmatpush2.bf16.msra.mxu0 %v4783
      %7404 = vmatprep.subr.bf16.mxu0 %v4780
      %7405 = vmatpush2.bf16.msra.mxu0 %v4779
      %7406 = vmatprep.subr.bf16.mxu0 %v4776
      %7407 = vmatpush2.bf16.msra.mxu0 %v4775
      %7408 = vmatprep.mubr.bf16.mxu0 %v406
      %7409 = vmatmul.mubr.bf16.gmra.mxu0 %v405
      %v7410 = vpop.f32.mrf.mxu0
      %v7411 = vadd.f32 %v7370, %v7410
      %v7412 = vpop.f32.mrf.mxu0
      %v7413 = vadd.f32 %v7372, %v7412
      %v7414 = vpop.f32.mrf.mxu0
      %v7415 = vpop.f32.mrf.mxu0
      %7416 = vdwg.mxu0
      %7417 = vmatprep.subr.bf16.mxu0 %v4836
      %7418 = vmatpush1.bf16.msra.mxu0 %v4835
      %7419 = vmatprep.subr.bf16.mxu0 %v4832
      %7420 = vmatpush1.bf16.msra.mxu0 %v4831
      %7421 = vmatprep.subr.bf16.mxu0 %v4828
      %7422 = vmatpush1.bf16.msra.mxu0 %v4827
      %7423 = vmatprep.subr.bf16.mxu0 %v4824
      %7424 = vmatpush1.bf16.msra.mxu0 %v4823
      %7425 = vmatprep.subr.bf16.mxu0 %v4820
      %7426 = vmatpush1.bf16.msra.mxu0 %v4819
      %7427 = vmatprep.subr.bf16.mxu0 %v4816
      %7428 = vmatpush1.bf16.msra.mxu0 %v4815
      %7429 = vmatprep.subr.bf16.mxu0 %v4812
      %7430 = vmatpush1.bf16.msra.mxu0 %v4811
      %7431 = vmatprep.subr.bf16.mxu0 %v4808
      %7432 = vmatpush1.bf16.msra.mxu0 %v4807
      %7433 = vmatprep.subr.bf16.mxu0 %v4868
      %7434 = vmatpush2.bf16.msra.mxu0 %v4867
      %7435 = vmatprep.subr.bf16.mxu0 %v4864
      %7436 = vmatpush2.bf16.msra.mxu0 %v4863
      %7437 = vmatprep.subr.bf16.mxu0 %v4860
      %7438 = vmatpush2.bf16.msra.mxu0 %v4859
      %7439 = vmatprep.subr.bf16.mxu0 %v4856
      %7440 = vmatpush2.bf16.msra.mxu0 %v4855
      %7441 = vmatprep.subr.bf16.mxu0 %v4852
      %7442 = vmatpush2.bf16.msra.mxu0 %v4851
      %7443 = vmatprep.subr.bf16.mxu0 %v4848
      %7444 = vmatpush2.bf16.msra.mxu0 %v4847
      %7445 = vmatprep.subr.bf16.mxu0 %v4844
      %7446 = vmatpush2.bf16.msra.mxu0 %v4843
      %7447 = vmatprep.subr.bf16.mxu0 %v4840
      %7448 = vmatpush2.bf16.msra.mxu0 %v4839
      %7449 = vmatprep.mubr.bf16.mxu0 %v408
      %7450 = vmatmul.mubr.bf16.gmra.mxu0 %v407
      %v7451 = vpop.f32.mrf.mxu0
      %v7452 = vadd.f32 %v7411, %v7451
      %v7453 = vpop.f32.mrf.mxu0
      %v7454 = vadd.f32 %v7413, %v7453
      %v7455 = vpop.f32.mrf.mxu0
      %v7456 = vpop.f32.mrf.mxu0
      %7457 = vdwg.mxu0
      %7458 = vmatprep.subr.bf16.mxu0 %v4900
      %7459 = vmatpush1.bf16.msra.mxu0 %v4899
      %7460 = vmatprep.subr.bf16.mxu0 %v4896
      %7461 = vmatpush1.bf16.msra.mxu0 %v4895
      %7462 = vmatprep.subr.bf16.mxu0 %v4892
      %7463 = vmatpush1.bf16.msra.mxu0 %v4891
      %7464 = vmatprep.subr.bf16.mxu0 %v4888
      %7465 = vmatpush1.bf16.msra.mxu0 %v4887
      %7466 = vmatprep.subr.bf16.mxu0 %v4884
      %7467 = vmatpush1.bf16.msra.mxu0 %v4883
      %7468 = vmatprep.subr.bf16.mxu0 %v4880
      %7469 = vmatpush1.bf16.msra.mxu0 %v4879
      %7470 = vmatprep.subr.bf16.mxu0 %v4876
      %7471 = vmatpush1.bf16.msra.mxu0 %v4875
      %7472 = vmatprep.subr.bf16.mxu0 %v4872
      %7473 = vmatpush1.bf16.msra.mxu0 %v4871
      %7474 = vmatprep.subr.bf16.mxu0 %v4932
      %7475 = vmatpush2.bf16.msra.mxu0 %v4931
      %7476 = vmatprep.subr.bf16.mxu0 %v4928
      %7477 = vmatpush2.bf16.msra.mxu0 %v4927
      %7478 = vmatprep.subr.bf16.mxu0 %v4924
      %7479 = vmatpush2.bf16.msra.mxu0 %v4923
      %7480 = vmatprep.subr.bf16.mxu0 %v4920
      %7481 = vmatpush2.bf16.msra.mxu0 %v4919
      %7482 = vmatprep.subr.bf16.mxu0 %v4916
      %7483 = vmatpush2.bf16.msra.mxu0 %v4915
      %7484 = vmatprep.subr.bf16.mxu0 %v4912
      %7485 = vmatpush2.bf16.msra.mxu0 %v4911
      %7486 = vmatprep.subr.bf16.mxu0 %v4908
      %7487 = vmatpush2.bf16.msra.mxu0 %v4907
      %7488 = vmatprep.subr.bf16.mxu0 %v4904
      %7489 = vmatpush2.bf16.msra.mxu0 %v4903
      %7490 = vmatprep.mubr.bf16.mxu0 %v410
      %7491 = vmatmul.mubr.bf16.gmra.mxu0 %v409
      %v7492 = vpop.f32.mrf.mxu0
      %v7493 = vadd.f32 %v7452, %v7492
      %v7494 = vpop.f32.mrf.mxu0
      %v7495 = vadd.f32 %v7454, %v7494
      %v7496 = vpop.f32.mrf.mxu0
      %v7497 = vpop.f32.mrf.mxu0
      %7498 = vdwg.mxu0
      %7499 = vmatprep.subr.bf16.mxu0 %v4964
      %7500 = vmatpush1.bf16.msra.mxu0 %v4963
      %7501 = vmatprep.subr.bf16.mxu0 %v4960
      %7502 = vmatpush1.bf16.msra.mxu0 %v4959
      %7503 = vmatprep.subr.bf16.mxu0 %v4956
      %7504 = vmatpush1.bf16.msra.mxu0 %v4955
      %7505 = vmatprep.subr.bf16.mxu0 %v4952
      %7506 = vmatpush1.bf16.msra.mxu0 %v4951
      %7507 = vmatprep.subr.bf16.mxu0 %v4948
      %7508 = vmatpush1.bf16.msra.mxu0 %v4947
      %7509 = vmatprep.subr.bf16.mxu0 %v4944
      %7510 = vmatpush1.bf16.msra.mxu0 %v4943
      %7511 = vmatprep.subr.bf16.mxu0 %v4940
      %7512 = vmatpush1.bf16.msra.mxu0 %v4939
      %7513 = vmatprep.subr.bf16.mxu0 %v4936
      %7514 = vmatpush1.bf16.msra.mxu0 %v4935
      %7515 = vmatprep.subr.bf16.mxu0 %v4996
      %7516 = vmatpush2.bf16.msra.mxu0 %v4995
      %7517 = vmatprep.subr.bf16.mxu0 %v4992
      %7518 = vmatpush2.bf16.msra.mxu0 %v4991
      %7519 = vmatprep.subr.bf16.mxu0 %v4988
      %7520 = vmatpush2.bf16.msra.mxu0 %v4987
      %7521 = vmatprep.subr.bf16.mxu0 %v4984
      %7522 = vmatpush2.bf16.msra.mxu0 %v4983
      %7523 = vmatprep.subr.bf16.mxu0 %v4980
      %7524 = vmatpush2.bf16.msra.mxu0 %v4979
      %7525 = vmatprep.subr.bf16.mxu0 %v4976
      %7526 = vmatpush2.bf16.msra.mxu0 %v4975
      %7527 = vmatprep.subr.bf16.mxu0 %v4972
      %7528 = vmatpush2.bf16.msra.mxu0 %v4971
      %7529 = vmatprep.subr.bf16.mxu0 %v4968
      %7530 = vmatpush2.bf16.msra.mxu0 %v4967
      %7531 = vmatprep.mubr.bf16.mxu0 %v412
      %7532 = vmatmul.mubr.bf16.gmra.mxu0 %v411
      %v7533 = vpop.f32.mrf.mxu0
      %v7534 = vadd.f32 %v7493, %v7533
      %v7535 = vpop.f32.mrf.mxu0
      %v7536 = vadd.f32 %v7495, %v7535
      %v7537 = vpop.f32.mrf.mxu0
      %v7538 = vpop.f32.mrf.mxu0
      %7539 = vdwg.mxu0
      %7540 = vmatprep.subr.bf16.mxu0 %v5028
      %7541 = vmatpush1.bf16.msra.mxu0 %v5027
      %7542 = vmatprep.subr.bf16.mxu0 %v5024
      %7543 = vmatpush1.bf16.msra.mxu0 %v5023
      %7544 = vmatprep.subr.bf16.mxu0 %v5020
      %7545 = vmatpush1.bf16.msra.mxu0 %v5019
      %7546 = vmatprep.subr.bf16.mxu0 %v5016
      %7547 = vmatpush1.bf16.msra.mxu0 %v5015
      %7548 = vmatprep.subr.bf16.mxu0 %v5012
      %7549 = vmatpush1.bf16.msra.mxu0 %v5011
      %7550 = vmatprep.subr.bf16.mxu0 %v5008
      %7551 = vmatpush1.bf16.msra.mxu0 %v5007
      %7552 = vmatprep.subr.bf16.mxu0 %v5004
      %7553 = vmatpush1.bf16.msra.mxu0 %v5003
      %7554 = vmatprep.subr.bf16.mxu0 %v5000
      %7555 = vmatpush1.bf16.msra.mxu0 %v4999
      %7556 = vmatprep.subr.bf16.mxu0 %v5060
      %7557 = vmatpush2.bf16.msra.mxu0 %v5059
      %7558 = vmatprep.subr.bf16.mxu0 %v5056
      %7559 = vmatpush2.bf16.msra.mxu0 %v5055
      %7560 = vmatprep.subr.bf16.mxu0 %v5052
      %7561 = vmatpush2.bf16.msra.mxu0 %v5051
      %7562 = vmatprep.subr.bf16.mxu0 %v5048
      %7563 = vmatpush2.bf16.msra.mxu0 %v5047
      %7564 = vmatprep.subr.bf16.mxu0 %v5044
      %7565 = vmatpush2.bf16.msra.mxu0 %v5043
      %7566 = vmatprep.subr.bf16.mxu0 %v5040
      %7567 = vmatpush2.bf16.msra.mxu0 %v5039
      %7568 = vmatprep.subr.bf16.mxu0 %v5036
      %7569 = vmatpush2.bf16.msra.mxu0 %v5035
      %7570 = vmatprep.subr.bf16.mxu0 %v5032
      %7571 = vmatpush2.bf16.msra.mxu0 %v5031
      %7572 = vmatprep.mubr.bf16.mxu0 %v414
      %7573 = vmatmul.mubr.bf16.gmra.mxu0 %v413
      %v7574 = vpop.f32.mrf.mxu0
      %v7575 = vadd.f32 %v7534, %v7574
      %v7576 = vpop.f32.mrf.mxu0
      %v7577 = vadd.f32 %v7536, %v7576
      %v7578 = vpop.f32.mrf.mxu0
      %v7579 = vpop.f32.mrf.mxu0
      %7580 = vdwg.mxu0
      %7581 = vmatprep.subr.bf16.mxu0 %v5092
      %7582 = vmatpush1.bf16.msra.mxu0 %v5091
      %7583 = vmatprep.subr.bf16.mxu0 %v5088
      %7584 = vmatpush1.bf16.msra.mxu0 %v5087
      %7585 = vmatprep.subr.bf16.mxu0 %v5084
      %7586 = vmatpush1.bf16.msra.mxu0 %v5083
      %7587 = vmatprep.subr.bf16.mxu0 %v5080
      %7588 = vmatpush1.bf16.msra.mxu0 %v5079
      %7589 = vmatprep.subr.bf16.mxu0 %v5076
      %7590 = vmatpush1.bf16.msra.mxu0 %v5075
      %7591 = vmatprep.subr.bf16.mxu0 %v5072
      %7592 = vmatpush1.bf16.msra.mxu0 %v5071
      %7593 = vmatprep.subr.bf16.mxu0 %v5068
      %7594 = vmatpush1.bf16.msra.mxu0 %v5067
      %7595 = vmatprep.subr.bf16.mxu0 %v5064
      %7596 = vmatpush1.bf16.msra.mxu0 %v5063
      %7597 = vmatprep.subr.bf16.mxu0 %v5124
      %7598 = vmatpush2.bf16.msra.mxu0 %v5123
      %7599 = vmatprep.subr.bf16.mxu0 %v5120
      %7600 = vmatpush2.bf16.msra.mxu0 %v5119
      %7601 = vmatprep.subr.bf16.mxu0 %v5116
      %7602 = vmatpush2.bf16.msra.mxu0 %v5115
      %7603 = vmatprep.subr.bf16.mxu0 %v5112
      %7604 = vmatpush2.bf16.msra.mxu0 %v5111
      %7605 = vmatprep.subr.bf16.mxu0 %v5108
      %7606 = vmatpush2.bf16.msra.mxu0 %v5107
      %7607 = vmatprep.subr.bf16.mxu0 %v5104
      %7608 = vmatpush2.bf16.msra.mxu0 %v5103
      %7609 = vmatprep.subr.bf16.mxu0 %v5100
      %7610 = vmatpush2.bf16.msra.mxu0 %v5099
      %7611 = vmatprep.subr.bf16.mxu0 %v5096
      %7612 = vmatpush2.bf16.msra.mxu0 %v5095
      %7613 = vmatprep.mubr.bf16.mxu0 %v416
      %7614 = vmatmul.mubr.bf16.gmra.mxu0 %v415
      %v7615 = vpop.f32.mrf.mxu0
      %v7616 = vadd.f32 %v7575, %v7615
      %v7617 = vpop.f32.mrf.mxu0
      %v7618 = vadd.f32 %v7577, %v7617
      %v7619 = vpop.f32.mrf.mxu0
      %v7620 = vpop.f32.mrf.mxu0
      %7621 = vdwg.mxu0
      %7622 = vmatprep.subr.bf16.mxu0 %v5156
      %7623 = vmatpush1.bf16.msra.mxu0 %v5155
      %7624 = vmatprep.subr.bf16.mxu0 %v5152
      %7625 = vmatpush1.bf16.msra.mxu0 %v5151
      %7626 = vmatprep.subr.bf16.mxu0 %v5148
      %7627 = vmatpush1.bf16.msra.mxu0 %v5147
      %7628 = vmatprep.subr.bf16.mxu0 %v5144
      %7629 = vmatpush1.bf16.msra.mxu0 %v5143
      %7630 = vmatprep.subr.bf16.mxu0 %v5140
      %7631 = vmatpush1.bf16.msra.mxu0 %v5139
      %7632 = vmatprep.subr.bf16.mxu0 %v5136
      %7633 = vmatpush1.bf16.msra.mxu0 %v5135
      %7634 = vmatprep.subr.bf16.mxu0 %v5132
      %7635 = vmatpush1.bf16.msra.mxu0 %v5131
      %7636 = vmatprep.subr.bf16.mxu0 %v5128
      %7637 = vmatpush1.bf16.msra.mxu0 %v5127
      %7638 = vmatprep.subr.bf16.mxu0 %v5188
      %7639 = vmatpush2.bf16.msra.mxu0 %v5187
      %7640 = vmatprep.subr.bf16.mxu0 %v5184
      %7641 = vmatpush2.bf16.msra.mxu0 %v5183
      %7642 = vmatprep.subr.bf16.mxu0 %v5180
      %7643 = vmatpush2.bf16.msra.mxu0 %v5179
      %7644 = vmatprep.subr.bf16.mxu0 %v5176
      %7645 = vmatpush2.bf16.msra.mxu0 %v5175
      %7646 = vmatprep.subr.bf16.mxu0 %v5172
      %7647 = vmatpush2.bf16.msra.mxu0 %v5171
      %7648 = vmatprep.subr.bf16.mxu0 %v5168
      %7649 = vmatpush2.bf16.msra.mxu0 %v5167
      %7650 = vmatprep.subr.bf16.mxu0 %v5164
      %7651 = vmatpush2.bf16.msra.mxu0 %v5163
      %7652 = vmatprep.subr.bf16.mxu0 %v5160
      %7653 = vmatpush2.bf16.msra.mxu0 %v5159
      %7654 = vmatprep.mubr.bf16.mxu0 %v418
      %7655 = vmatmul.mubr.bf16.gmra.mxu0 %v417
      %v7656 = vpop.f32.mrf.mxu0
      %v7657 = vadd.f32 %v7616, %v7656
      %v7658 = vpop.f32.mrf.mxu0
      %v7659 = vadd.f32 %v7618, %v7658
      %v7660 = vpop.f32.mrf.mxu0
      %v7661 = vpop.f32.mrf.mxu0
      %7662 = vdwg.mxu0
      %7663 = vmatprep.subr.bf16.mxu0 %v5220
      %7664 = vmatpush1.bf16.msra.mxu0 %v5219
      %7665 = vmatprep.subr.bf16.mxu0 %v5216
      %7666 = vmatpush1.bf16.msra.mxu0 %v5215
      %7667 = vmatprep.subr.bf16.mxu0 %v5212
      %7668 = vmatpush1.bf16.msra.mxu0 %v5211
      %7669 = vmatprep.subr.bf16.mxu0 %v5208
      %7670 = vmatpush1.bf16.msra.mxu0 %v5207
      %7671 = vmatprep.subr.bf16.mxu0 %v5204
      %7672 = vmatpush1.bf16.msra.mxu0 %v5203
      %7673 = vmatprep.subr.bf16.mxu0 %v5200
      %7674 = vmatpush1.bf16.msra.mxu0 %v5199
      %7675 = vmatprep.subr.bf16.mxu0 %v5196
      %7676 = vmatpush1.bf16.msra.mxu0 %v5195
      %7677 = vmatprep.subr.bf16.mxu0 %v5192
      %7678 = vmatpush1.bf16.msra.mxu0 %v5191
      %7679 = vmatprep.subr.bf16.mxu0 %v5252
      %7680 = vmatpush2.bf16.msra.mxu0 %v5251
      %7681 = vmatprep.subr.bf16.mxu0 %v5248
      %7682 = vmatpush2.bf16.msra.mxu0 %v5247
      %7683 = vmatprep.subr.bf16.mxu0 %v5244
      %7684 = vmatpush2.bf16.msra.mxu0 %v5243
      %7685 = vmatprep.subr.bf16.mxu0 %v5240
      %7686 = vmatpush2.bf16.msra.mxu0 %v5239
      %7687 = vmatprep.subr.bf16.mxu0 %v5236
      %7688 = vmatpush2.bf16.msra.mxu0 %v5235
      %7689 = vmatprep.subr.bf16.mxu0 %v5232
      %7690 = vmatpush2.bf16.msra.mxu0 %v5231
      %7691 = vmatprep.subr.bf16.mxu0 %v5228
      %7692 = vmatpush2.bf16.msra.mxu0 %v5227
      %7693 = vmatprep.subr.bf16.mxu0 %v5224
      %7694 = vmatpush2.bf16.msra.mxu0 %v5223
      %7695 = vmatprep.mubr.bf16.mxu0 %v420
      %7696 = vmatmul.mubr.bf16.gmra.mxu0 %v419
      %v7697 = vpop.f32.mrf.mxu0
      %v7698 = vadd.f32 %v7657, %v7697
      %v7699 = vpop.f32.mrf.mxu0
      %v7700 = vadd.f32 %v7659, %v7699
      %v7701 = vpop.f32.mrf.mxu0
      %v7702 = vpop.f32.mrf.mxu0
      %7703 = vdwg.mxu0
      %7704 = vmatprep.subr.bf16.mxu0 %v5284
      %7705 = vmatpush1.bf16.msra.mxu0 %v5283
      %7706 = vmatprep.subr.bf16.mxu0 %v5280
      %7707 = vmatpush1.bf16.msra.mxu0 %v5279
      %7708 = vmatprep.subr.bf16.mxu0 %v5276
      %7709 = vmatpush1.bf16.msra.mxu0 %v5275
      %7710 = vmatprep.subr.bf16.mxu0 %v5272
      %7711 = vmatpush1.bf16.msra.mxu0 %v5271
      %7712 = vmatprep.subr.bf16.mxu0 %v5268
      %7713 = vmatpush1.bf16.msra.mxu0 %v5267
      %7714 = vmatprep.subr.bf16.mxu0 %v5264
      %7715 = vmatpush1.bf16.msra.mxu0 %v5263
      %7716 = vmatprep.subr.bf16.mxu0 %v5260
      %7717 = vmatpush1.bf16.msra.mxu0 %v5259
      %7718 = vmatprep.subr.bf16.mxu0 %v5256
      %7719 = vmatpush1.bf16.msra.mxu0 %v5255
      %7720 = vmatprep.subr.bf16.mxu0 %v5316
      %7721 = vmatpush2.bf16.msra.mxu0 %v5315
      %7722 = vmatprep.subr.bf16.mxu0 %v5312
      %7723 = vmatpush2.bf16.msra.mxu0 %v5311
      %7724 = vmatprep.subr.bf16.mxu0 %v5308
      %7725 = vmatpush2.bf16.msra.mxu0 %v5307
      %7726 = vmatprep.subr.bf16.mxu0 %v5304
      %7727 = vmatpush2.bf16.msra.mxu0 %v5303
      %7728 = vmatprep.subr.bf16.mxu0 %v5300
      %7729 = vmatpush2.bf16.msra.mxu0 %v5299
      %7730 = vmatprep.subr.bf16.mxu0 %v5296
      %7731 = vmatpush2.bf16.msra.mxu0 %v5295
      %7732 = vmatprep.subr.bf16.mxu0 %v5292
      %7733 = vmatpush2.bf16.msra.mxu0 %v5291
      %7734 = vmatprep.subr.bf16.mxu0 %v5288
      %7735 = vmatpush2.bf16.msra.mxu0 %v5287
      %7736 = vmatprep.mubr.bf16.mxu0 %v422
      %7737 = vmatmul.mubr.bf16.gmra.mxu0 %v421
      %v7738 = vpop.f32.mrf.mxu0
      %v7739 = vadd.f32 %v7698, %v7738
      %v7740 = vpop.f32.mrf.mxu0
      %v7741 = vadd.f32 %v7700, %v7740
      %v7742 = vpop.f32.mrf.mxu0
      %v7743 = vpop.f32.mrf.mxu0
      %7744 = vdwg.mxu0
      %7745 = vmatprep.subr.bf16.mxu0 %v5348
      %7746 = vmatpush1.bf16.msra.mxu0 %v5347
      %7747 = vmatprep.subr.bf16.mxu0 %v5344
      %7748 = vmatpush1.bf16.msra.mxu0 %v5343
      %7749 = vmatprep.subr.bf16.mxu0 %v5340
      %7750 = vmatpush1.bf16.msra.mxu0 %v5339
      %7751 = vmatprep.subr.bf16.mxu0 %v5336
      %7752 = vmatpush1.bf16.msra.mxu0 %v5335
      %7753 = vmatprep.subr.bf16.mxu0 %v5332
      %7754 = vmatpush1.bf16.msra.mxu0 %v5331
      %7755 = vmatprep.subr.bf16.mxu0 %v5328
      %7756 = vmatpush1.bf16.msra.mxu0 %v5327
      %7757 = vmatprep.subr.bf16.mxu0 %v5324
      %7758 = vmatpush1.bf16.msra.mxu0 %v5323
      %7759 = vmatprep.subr.bf16.mxu0 %v5320
      %7760 = vmatpush1.bf16.msra.mxu0 %v5319
      %7761 = vmatprep.subr.bf16.mxu0 %v5380
      %7762 = vmatpush2.bf16.msra.mxu0 %v5379
      %7763 = vmatprep.subr.bf16.mxu0 %v5376
      %7764 = vmatpush2.bf16.msra.mxu0 %v5375
      %7765 = vmatprep.subr.bf16.mxu0 %v5372
      %7766 = vmatpush2.bf16.msra.mxu0 %v5371
      %7767 = vmatprep.subr.bf16.mxu0 %v5368
      %7768 = vmatpush2.bf16.msra.mxu0 %v5367
      %7769 = vmatprep.subr.bf16.mxu0 %v5364
      %7770 = vmatpush2.bf16.msra.mxu0 %v5363
      %7771 = vmatprep.subr.bf16.mxu0 %v5360
      %7772 = vmatpush2.bf16.msra.mxu0 %v5359
      %7773 = vmatprep.subr.bf16.mxu0 %v5356
      %7774 = vmatpush2.bf16.msra.mxu0 %v5355
      %7775 = vmatprep.subr.bf16.mxu0 %v5352
      %7776 = vmatpush2.bf16.msra.mxu0 %v5351
      %7777 = vmatprep.mubr.bf16.mxu0 %v424
      %7778 = vmatmul.mubr.bf16.gmra.mxu0 %v423
      %v7779 = vpop.f32.mrf.mxu0
      %v7780 = vadd.f32 %v7739, %v7779
      %v7781 = vpop.f32.mrf.mxu0
      %v7782 = vadd.f32 %v7741, %v7781
      %v7783 = vpop.f32.mrf.mxu0
      %v7784 = vpop.f32.mrf.mxu0
      %7785 = vdwg.mxu0
      %7786 = vmatprep.subr.bf16.mxu0 %v5412
      %7787 = vmatpush1.bf16.msra.mxu0 %v5411
      %7788 = vmatprep.subr.bf16.mxu0 %v5408
      %7789 = vmatpush1.bf16.msra.mxu0 %v5407
      %7790 = vmatprep.subr.bf16.mxu0 %v5404
      %7791 = vmatpush1.bf16.msra.mxu0 %v5403
      %7792 = vmatprep.subr.bf16.mxu0 %v5400
      %7793 = vmatpush1.bf16.msra.mxu0 %v5399
      %7794 = vmatprep.subr.bf16.mxu0 %v5396
      %7795 = vmatpush1.bf16.msra.mxu0 %v5395
      %7796 = vmatprep.subr.bf16.mxu0 %v5392
      %7797 = vmatpush1.bf16.msra.mxu0 %v5391
      %7798 = vmatprep.subr.bf16.mxu0 %v5388
      %7799 = vmatpush1.bf16.msra.mxu0 %v5387
      %7800 = vmatprep.subr.bf16.mxu0 %v5384
      %7801 = vmatpush1.bf16.msra.mxu0 %v5383
      %7802 = vmatprep.subr.bf16.mxu0 %v5444
      %7803 = vmatpush2.bf16.msra.mxu0 %v5443
      %7804 = vmatprep.subr.bf16.mxu0 %v5440
      %7805 = vmatpush2.bf16.msra.mxu0 %v5439
      %7806 = vmatprep.subr.bf16.mxu0 %v5436
      %7807 = vmatpush2.bf16.msra.mxu0 %v5435
      %7808 = vmatprep.subr.bf16.mxu0 %v5432
      %7809 = vmatpush2.bf16.msra.mxu0 %v5431
      %7810 = vmatprep.subr.bf16.mxu0 %v5428
      %7811 = vmatpush2.bf16.msra.mxu0 %v5427
      %7812 = vmatprep.subr.bf16.mxu0 %v5424
      %7813 = vmatpush2.bf16.msra.mxu0 %v5423
      %7814 = vmatprep.subr.bf16.mxu0 %v5420
      %7815 = vmatpush2.bf16.msra.mxu0 %v5419
      %7816 = vmatprep.subr.bf16.mxu0 %v5416
      %7817 = vmatpush2.bf16.msra.mxu0 %v5415
      %7818 = vmatprep.mubr.bf16.mxu0 %v426
      %7819 = vmatmul.mubr.bf16.gmra.mxu0 %v425
      %v7820 = vpop.f32.mrf.mxu0
      %v7821 = vadd.f32 %v7780, %v7820
      %v7822 = vpop.f32.mrf.mxu0
      %v7823 = vadd.f32 %v7782, %v7822
      %v7824 = vpop.f32.mrf.mxu0
      %v7825 = vpop.f32.mrf.mxu0
      %7826 = vdwg.mxu0
      %7827 = vmatprep.subr.bf16.mxu0 %v5476
      %7828 = vmatpush1.bf16.msra.mxu0 %v5475
      %7829 = vmatprep.subr.bf16.mxu0 %v5472
      %7830 = vmatpush1.bf16.msra.mxu0 %v5471
      %7831 = vmatprep.subr.bf16.mxu0 %v5468
      %7832 = vmatpush1.bf16.msra.mxu0 %v5467
      %7833 = vmatprep.subr.bf16.mxu0 %v5464
      %7834 = vmatpush1.bf16.msra.mxu0 %v5463
      %7835 = vmatprep.subr.bf16.mxu0 %v5460
      %7836 = vmatpush1.bf16.msra.mxu0 %v5459
      %7837 = vmatprep.subr.bf16.mxu0 %v5456
      %7838 = vmatpush1.bf16.msra.mxu0 %v5455
      %7839 = vmatprep.subr.bf16.mxu0 %v5452
      %7840 = vmatpush1.bf16.msra.mxu0 %v5451
      %7841 = vmatprep.subr.bf16.mxu0 %v5448
      %7842 = vmatpush1.bf16.msra.mxu0 %v5447
      %7843 = vmatprep.subr.bf16.mxu0 %v5508
      %7844 = vmatpush2.bf16.msra.mxu0 %v5507
      %7845 = vmatprep.subr.bf16.mxu0 %v5504
      %7846 = vmatpush2.bf16.msra.mxu0 %v5503
      %7847 = vmatprep.subr.bf16.mxu0 %v5500
      %7848 = vmatpush2.bf16.msra.mxu0 %v5499
      %7849 = vmatprep.subr.bf16.mxu0 %v5496
      %7850 = vmatpush2.bf16.msra.mxu0 %v5495
      %7851 = vmatprep.subr.bf16.mxu0 %v5492
      %7852 = vmatpush2.bf16.msra.mxu0 %v5491
      %7853 = vmatprep.subr.bf16.mxu0 %v5488
      %7854 = vmatpush2.bf16.msra.mxu0 %v5487
      %7855 = vmatprep.subr.bf16.mxu0 %v5484
      %7856 = vmatpush2.bf16.msra.mxu0 %v5483
      %7857 = vmatprep.subr.bf16.mxu0 %v5480
      %7858 = vmatpush2.bf16.msra.mxu0 %v5479
      %7859 = vmatprep.mubr.bf16.mxu0 %v428
      %7860 = vmatmul.mubr.bf16.gmra.mxu0 %v427
      %v7861 = vpop.f32.mrf.mxu0
      %v7862 = vadd.f32 %v7821, %v7861
      %v7863 = vpop.f32.mrf.mxu0
      %v7864 = vadd.f32 %v7823, %v7863
      %v7865 = vpop.f32.mrf.mxu0
      %v7866 = vpop.f32.mrf.mxu0
      %7867 = vdwg.mxu0
      %7868 = vmatprep.subr.bf16.mxu0 %v5540
      %7869 = vmatpush1.bf16.msra.mxu0 %v5539
      %7870 = vmatprep.subr.bf16.mxu0 %v5536
      %7871 = vmatpush1.bf16.msra.mxu0 %v5535
      %7872 = vmatprep.subr.bf16.mxu0 %v5532
      %7873 = vmatpush1.bf16.msra.mxu0 %v5531
      %7874 = vmatprep.subr.bf16.mxu0 %v5528
      %7875 = vmatpush1.bf16.msra.mxu0 %v5527
      %7876 = vmatprep.subr.bf16.mxu0 %v5524
      %7877 = vmatpush1.bf16.msra.mxu0 %v5523
      %7878 = vmatprep.subr.bf16.mxu0 %v5520
      %7879 = vmatpush1.bf16.msra.mxu0 %v5519
      %7880 = vmatprep.subr.bf16.mxu0 %v5516
      %7881 = vmatpush1.bf16.msra.mxu0 %v5515
      %7882 = vmatprep.subr.bf16.mxu0 %v5512
      %7883 = vmatpush1.bf16.msra.mxu0 %v5511
      %7884 = vmatprep.subr.bf16.mxu0 %v5572
      %7885 = vmatpush2.bf16.msra.mxu0 %v5571
      %7886 = vmatprep.subr.bf16.mxu0 %v5568
      %7887 = vmatpush2.bf16.msra.mxu0 %v5567
      %7888 = vmatprep.subr.bf16.mxu0 %v5564
      %7889 = vmatpush2.bf16.msra.mxu0 %v5563
      %7890 = vmatprep.subr.bf16.mxu0 %v5560
      %7891 = vmatpush2.bf16.msra.mxu0 %v5559
      %7892 = vmatprep.subr.bf16.mxu0 %v5556
      %7893 = vmatpush2.bf16.msra.mxu0 %v5555
      %7894 = vmatprep.subr.bf16.mxu0 %v5552
      %7895 = vmatpush2.bf16.msra.mxu0 %v5551
      %7896 = vmatprep.subr.bf16.mxu0 %v5548
      %7897 = vmatpush2.bf16.msra.mxu0 %v5547
      %7898 = vmatprep.subr.bf16.mxu0 %v5544
      %7899 = vmatpush2.bf16.msra.mxu0 %v5543
      %7900 = vmatprep.mubr.bf16.mxu0 %v430
      %7901 = vmatmul.mubr.bf16.gmra.mxu0 %v429
      %v7902 = vpop.f32.mrf.mxu0
      %v7903 = vadd.f32 %v7862, %v7902
      %v7904 = vpop.f32.mrf.mxu0
      %v7905 = vadd.f32 %v7864, %v7904
      %v7906 = vpop.f32.mrf.mxu0
      %v7907 = vpop.f32.mrf.mxu0
      %7908 = vdwg.mxu0
      %v7909 = vmax.f32 %v7247, 0.0
      %v7910 = vmax.f32 %v7249, 0.0
      %v7911 = vmax.f32 %v7903, 0.0
      %v7912 = vmax.f32 %v7905, 0.0
      %s7913 = smul.u32 %s15, 512
      %s7914 = scalar_lea.vmem %s3, %s7913
      %v7915 = vld [vmem:[%s7914] sm:$0xff]
      %v7916 = vld [vmem:[%s7914 + $0x8] sm:$0xff]
      %v7917 = vld [vmem:[%s7914 + $0x10] sm:$0xff]
      %v7918 = vld [vmem:[%s7914 + $0x18] sm:$0xff]
      %v7919 = vld [vmem:[%s7914 + $0x20] sm:$0xff]
      %v7920 = vld [vmem:[%s7914 + $0x28] sm:$0xff]
      %v7921 = vld [vmem:[%s7914 + $0x30] sm:$0xff]
      %v7922 = vld [vmem:[%s7914 + $0x38] sm:$0xff]
      %v7923 = vld [vmem:[%s7914 + $0x40] sm:$0xff]
      %v7924 = vld [vmem:[%s7914 + $0x48] sm:$0xff]
      %v7925 = vld [vmem:[%s7914 + $0x50] sm:$0xff]
      %v7926 = vld [vmem:[%s7914 + $0x58] sm:$0xff]
      %v7927 = vld [vmem:[%s7914 + $0x60] sm:$0xff]
      %v7928 = vld [vmem:[%s7914 + $0x68] sm:$0xff]
      %v7929 = vld [vmem:[%s7914 + $0x70] sm:$0xff]
      %v7930 = vld [vmem:[%s7914 + $0x78] sm:$0xff]
      %v7931 = vld [vmem:[%s7914 + $0x80] sm:$0xff]
      %v7932 = vld [vmem:[%s7914 + $0x88] sm:$0xff]
      %v7933 = vld [vmem:[%s7914 + $0x90] sm:$0xff]
      %v7934 = vld [vmem:[%s7914 + $0x98] sm:$0xff]
      %v7935 = vld [vmem:[%s7914 + $0xa0] sm:$0xff]
      %v7936 = vld [vmem:[%s7914 + $0xa8] sm:$0xff]
      %v7937 = vld [vmem:[%s7914 + $0xb0] sm:$0xff]
      %v7938 = vld [vmem:[%s7914 + $0xb8] sm:$0xff]
      %v7939 = vld [vmem:[%s7914 + $0xc0] sm:$0xff]
      %v7940 = vld [vmem:[%s7914 + $0xc8] sm:$0xff]
      %v7941 = vld [vmem:[%s7914 + $0xd0] sm:$0xff]
      %v7942 = vld [vmem:[%s7914 + $0xd8] sm:$0xff]
      %v7943 = vld [vmem:[%s7914 + $0xe0] sm:$0xff]
      %v7944 = vld [vmem:[%s7914 + $0xe8] sm:$0xff]
      %v7945 = vld [vmem:[%s7914 + $0xf0] sm:$0xff]
      %v7946 = vld [vmem:[%s7914 + $0xf8] sm:$0xff]
      %v7947 = vld [vmem:[%s7914 + $0x100] sm:$0xff]
      %v7948 = vld [vmem:[%s7914 + $0x108] sm:$0xff]
      %v7949 = vld [vmem:[%s7914 + $0x110] sm:$0xff]
      %v7950 = vld [vmem:[%s7914 + $0x118] sm:$0xff]
      %v7951 = vld [vmem:[%s7914 + $0x120] sm:$0xff]
      %v7952 = vld [vmem:[%s7914 + $0x128] sm:$0xff]
      %v7953 = vld [vmem:[%s7914 + $0x130] sm:$0xff]
      %v7954 = vld [vmem:[%s7914 + $0x138] sm:$0xff]
      %v7955 = vld [vmem:[%s7914 + $0x140] sm:$0xff]
      %v7956 = vld [vmem:[%s7914 + $0x148] sm:$0xff]
      %v7957 = vld [vmem:[%s7914 + $0x150] sm:$0xff]
      %v7958 = vld [vmem:[%s7914 + $0x158] sm:$0xff]
      %v7959 = vld [vmem:[%s7914 + $0x160] sm:$0xff]
      %v7960 = vld [vmem:[%s7914 + $0x168] sm:$0xff]
      %v7961 = vld [vmem:[%s7914 + $0x170] sm:$0xff]
      %v7962 = vld [vmem:[%s7914 + $0x178] sm:$0xff]
      %v7963 = vld [vmem:[%s7914 + $0x180] sm:$0xff]
      %v7964 = vld [vmem:[%s7914 + $0x188] sm:$0xff]
      %v7965 = vld [vmem:[%s7914 + $0x190] sm:$0xff]
      %v7966 = vld [vmem:[%s7914 + $0x198] sm:$0xff]
      %v7967 = vld [vmem:[%s7914 + $0x1a0] sm:$0xff]
      %v7968 = vld [vmem:[%s7914 + $0x1a8] sm:$0xff]
      %v7969 = vld [vmem:[%s7914 + $0x1b0] sm:$0xff]
      %v7970 = vld [vmem:[%s7914 + $0x1b8] sm:$0xff]
      %v7971 = vld [vmem:[%s7914 + $0x1c0] sm:$0xff]
      %v7972 = vld [vmem:[%s7914 + $0x1c8] sm:$0xff]
      %v7973 = vld [vmem:[%s7914 + $0x1d0] sm:$0xff]
      %v7974 = vld [vmem:[%s7914 + $0x1d8] sm:$0xff]
      %v7975 = vld [vmem:[%s7914 + $0x1e0] sm:$0xff]
      %v7976 = vld [vmem:[%s7914 + $0x1e8] sm:$0xff]
      %v7977 = vld [vmem:[%s7914 + $0x1f0] sm:$0xff]
      %v7978 = vld [vmem:[%s7914 + $0x1f8] sm:$0xff]
      %7979 = vmatprep.subr.mxu0 0.0
      %7980 = vmatpush1.msra.mxu0 %v7930
      %7981 = vmatprep.subr.mxu0 0.0
      %7982 = vmatpush1.msra.mxu0 %v7929
      %7983 = vmatprep.subr.mxu0 0.0
      %7984 = vmatpush1.msra.mxu0 %v7928
      %7985 = vmatprep.subr.mxu0 0.0
      %7986 = vmatpush1.msra.mxu0 %v7927
      %7987 = vmatprep.subr.mxu0 0.0
      %7988 = vmatpush1.msra.mxu0 %v7926
      %7989 = vmatprep.subr.mxu0 0.0
      %7990 = vmatpush1.msra.mxu0 %v7925
      %7991 = vmatprep.subr.mxu0 0.0
      %7992 = vmatpush1.msra.mxu0 %v7924
      %7993 = vmatprep.subr.mxu0 0.0
      %7994 = vmatpush1.msra.mxu0 %v7923
      %7995 = vmatprep.subr.mxu0 0.0
      %7996 = vmatpush1.msra.mxu0 %v7922
      %7997 = vmatprep.subr.mxu0 0.0
      %7998 = vmatpush1.msra.mxu0 %v7921
      %7999 = vmatprep.subr.mxu0 0.0
      %8000 = vmatpush1.msra.mxu0 %v7920
      %8001 = vmatprep.subr.mxu0 0.0
      %8002 = vmatpush1.msra.mxu0 %v7919
      %8003 = vmatprep.subr.mxu0 0.0
      %8004 = vmatpush1.msra.mxu0 %v7918
      %8005 = vmatprep.subr.mxu0 0.0
      %8006 = vmatpush1.msra.mxu0 %v7917
      %8007 = vmatprep.subr.mxu0 0.0
      %8008 = vmatpush1.msra.mxu0 %v7916
      %8009 = vmatprep.subr.mxu0 0.0
      %8010 = vmatpush1.msra.mxu0 %v7915
      %8011 = vmatprep.subr.mxu0 0.0
      %8012 = vmatpush2.msra.mxu0 %v7946
      %8013 = vmatprep.subr.mxu0 0.0
      %8014 = vmatpush2.msra.mxu0 %v7945
      %8015 = vmatprep.subr.mxu0 0.0
      %8016 = vmatpush2.msra.mxu0 %v7944
      %8017 = vmatprep.subr.mxu0 0.0
      %8018 = vmatpush2.msra.mxu0 %v7943
      %8019 = vmatprep.subr.mxu0 0.0
      %8020 = vmatpush2.msra.mxu0 %v7942
      %8021 = vmatprep.subr.mxu0 0.0
      %8022 = vmatpush2.msra.mxu0 %v7941
      %8023 = vmatprep.subr.mxu0 0.0
      %8024 = vmatpush2.msra.mxu0 %v7940
      %8025 = vmatprep.subr.mxu0 0.0
      %8026 = vmatpush2.msra.mxu0 %v7939
      %8027 = vmatprep.subr.mxu0 0.0
      %8028 = vmatpush2.msra.mxu0 %v7938
      %8029 = vmatprep.subr.mxu0 0.0
      %8030 = vmatpush2.msra.mxu0 %v7937
      %8031 = vmatprep.subr.mxu0 0.0
      %8032 = vmatpush2.msra.mxu0 %v7936
      %8033 = vmatprep.subr.mxu0 0.0
      %8034 = vmatpush2.msra.mxu0 %v7935
      %8035 = vmatprep.subr.mxu0 0.0
      %8036 = vmatpush2.msra.mxu0 %v7934
      %8037 = vmatprep.subr.mxu0 0.0
      %8038 = vmatpush2.msra.mxu0 %v7933
      %8039 = vmatprep.subr.mxu0 0.0
      %8040 = vmatpush2.msra.mxu0 %v7932
      %8041 = vmatprep.subr.mxu0 0.0
      %8042 = vmatpush2.msra.mxu0 %v7931
      %8043 = vmatprep.mubr.f32.mxu0 %v7910
      %8044 = vmatmul.mubr.f32.gmra.mxu0 %v7909
      %v8045 = vpop.f32.mrf.mxu0
      %v8046 = vadd.f32 0.0, %v8045
      %v8047 = vpop.f32.mrf.mxu0
      %8048 = vdwg.mxu0
      %8049 = vmatprep.subr.mxu0 0.0
      %8050 = vmatpush1.msra.mxu0 %v7962
      %8051 = vmatprep.subr.mxu0 0.0
      %8052 = vmatpush1.msra.mxu0 %v7961
      %8053 = vmatprep.subr.mxu0 0.0
      %8054 = vmatpush1.msra.mxu0 %v7960
      %8055 = vmatprep.subr.mxu0 0.0
      %8056 = vmatpush1.msra.mxu0 %v7959
      %8057 = vmatprep.subr.mxu0 0.0
      %8058 = vmatpush1.msra.mxu0 %v7958
      %8059 = vmatprep.subr.mxu0 0.0
      %8060 = vmatpush1.msra.mxu0 %v7957
      %8061 = vmatprep.subr.mxu0 0.0
      %8062 = vmatpush1.msra.mxu0 %v7956
      %8063 = vmatprep.subr.mxu0 0.0
      %8064 = vmatpush1.msra.mxu0 %v7955
      %8065 = vmatprep.subr.mxu0 0.0
      %8066 = vmatpush1.msra.mxu0 %v7954
      %8067 = vmatprep.subr.mxu0 0.0
      %8068 = vmatpush1.msra.mxu0 %v7953
      %8069 = vmatprep.subr.mxu0 0.0
      %8070 = vmatpush1.msra.mxu0 %v7952
      %8071 = vmatprep.subr.mxu0 0.0
      %8072 = vmatpush1.msra.mxu0 %v7951
      %8073 = vmatprep.subr.mxu0 0.0
      %8074 = vmatpush1.msra.mxu0 %v7950
      %8075 = vmatprep.subr.mxu0 0.0
      %8076 = vmatpush1.msra.mxu0 %v7949
      %8077 = vmatprep.subr.mxu0 0.0
      %8078 = vmatpush1.msra.mxu0 %v7948
      %8079 = vmatprep.subr.mxu0 0.0
      %8080 = vmatpush1.msra.mxu0 %v7947
      %8081 = vmatprep.subr.mxu0 0.0
      %8082 = vmatpush2.msra.mxu0 %v7978
      %8083 = vmatprep.subr.mxu0 0.0
      %8084 = vmatpush2.msra.mxu0 %v7977
      %8085 = vmatprep.subr.mxu0 0.0
      %8086 = vmatpush2.msra.mxu0 %v7976
      %8087 = vmatprep.subr.mxu0 0.0
      %8088 = vmatpush2.msra.mxu0 %v7975
      %8089 = vmatprep.subr.mxu0 0.0
      %8090 = vmatpush2.msra.mxu0 %v7974
      %8091 = vmatprep.subr.mxu0 0.0
      %8092 = vmatpush2.msra.mxu0 %v7973
      %8093 = vmatprep.subr.mxu0 0.0
      %8094 = vmatpush2.msra.mxu0 %v7972
      %8095 = vmatprep.subr.mxu0 0.0
      %8096 = vmatpush2.msra.mxu0 %v7971
      %8097 = vmatprep.subr.mxu0 0.0
      %8098 = vmatpush2.msra.mxu0 %v7970
      %8099 = vmatprep.subr.mxu0 0.0
      %8100 = vmatpush2.msra.mxu0 %v7969
      %8101 = vmatprep.subr.mxu0 0.0
      %8102 = vmatpush2.msra.mxu0 %v7968
      %8103 = vmatprep.subr.mxu0 0.0
      %8104 = vmatpush2.msra.mxu0 %v7967
      %8105 = vmatprep.subr.mxu0 0.0
      %8106 = vmatpush2.msra.mxu0 %v7966
      %8107 = vmatprep.subr.mxu0 0.0
      %8108 = vmatpush2.msra.mxu0 %v7965
      %8109 = vmatprep.subr.mxu0 0.0
      %8110 = vmatpush2.msra.mxu0 %v7964
      %8111 = vmatprep.subr.mxu0 0.0
      %8112 = vmatpush2.msra.mxu0 %v7963
      %8113 = vmatprep.mubr.f32.mxu0 %v7912
      %8114 = vmatmul.mubr.f32.gmra.mxu0 %v7911
      %v8115 = vpop.f32.mrf.mxu0
      %v8116 = vadd.f32 %v8046, %v8115
      %v8117 = vpop.f32.mrf.mxu0
      %8118 = vdwg.mxu0
      %vm8119 = vcmask 9216
      %8120 = vst.msk [vmem:[%s214] sm:$0x3] %vm8119, %v8116
      %p8121 = scmp.lt.s32.totalorder %s15, 3
      %s8122 = scalar_select %p8121, %s15, 3
      %s8123 = smul.addr %s8122, 2
      %s8124 = scalar_lea.vmem %s4, %s8123
      // Predicated region
      $region37: #{encoder_forward.9} parent=35 // pred_check
        %p8125 = pneg %p127
      $region38: #{encoder_forward.9} parent=35 // pred_check_branch
        %8127 = sbr.rel (%p8125) target = $region40
      $region39: #{encoder_forward.9} parent=35 // pred_region
        _
      $region40: #{encoder_forward.9} parent=35 // pred_fallthru
        _
    $region36: #{encoder_forward.9} parent=5 // pred_fallthru
      _
    %p8128 = scmp.le.s32.totalorder 2, %s10
    // Predicated region
    $region41: #{encoder_forward.9} parent=5 // pred_check
      %p8129 = pneg %p8128
    $region42: #{encoder_forward.9} parent=5 // pred_check_branch
      %8131 = sbr.rel (%p8129) target = $region44
    $region43: #{encoder_forward.9} parent=5 // pred_region
      %s8132 = ssub.s32 %s10, 2
      // Predicated region
      $region45: #{encoder_forward.9} parent=43 // pred_check
        %p8133 = pneg %p133
      $region46: #{encoder_forward.9} parent=43 // pred_check_branch
        %8135 = sbr.rel (%p8133) target = $region48
      $region47: #{encoder_forward.9} parent=43 // pred_region
        %p8136 = scmp.lt.s32.totalorder %s16, 3
        %s8137 = scalar_select %p8136, %s16, 3
        %s8138 = smul.addr %s8137, 2
        %s8139 = scalar_lea.vmem %s4, %s8138
      $region48: #{encoder_forward.9} parent=43 // pred_fallthru
        _
    $region44: #{encoder_forward.9} parent=5 // pred_fallthru
      _
  $region6: #{encoder_forward.9} parent=0 // loop_footer
    %s14 = sadd.s32 1, %s10
  $region7: #{encoder_forward.9} parent=0 // loop_footer_branch
    %9 = sbr.rel target = $region3
  $region8: #{encoder_forward.9} parent=0 // loop_exit
    _

</llo_original>
